<compile_context>
chip_gen: v6e
topology: v6e:2x2x1
jax: 0.10.0
libtpu: 0.0.40
codegen_flags: <defaults>
</compile_context>

<pallas_src>
import numpy as np
import jax
import jax.numpy as jnp
from jax.experimental import pallas as pl
from jax.experimental.pallas import tpu as pltpu


# ----------------------------- elementwise helpers ---------------------------
def _leaky(v):
    return jnp.where(v > 0, v, 0.01 * v)


def _elu(v):
    # exp only on the non-positive branch so the unselected lane never overflows
    return jnp.where(v > 0, v, jnp.exp(jnp.minimum(v, 0.0)) - 1.0)


def _mm(a, b):
    return jnp.dot(a, b, preferred_element_type=jnp.float32)


# ------------------------- shared forward math -------------------------------
def forward_math(x, ea, ssrc, sdst, bmat, bmat_t, getp, recip, *, dim, num_layers):
    """Pure jnp forward; used both inside the Pallas kernel (params read via
    `getp` from the packed VMEM slab) and as the plain-JAX reference.
    All activations are lane-padded to 128 columns (pad lanes stay exactly 0)."""
    G = bmat.shape[0]

    rep = getp("Rep")                # [128,128] channel-replication (0/1)
    block_sum = getp("BlockSum")     # [128,128] per-channel block sum (0/1)

    xc = x                           # [N, 128]
    xagg = None
    for l in range(num_layers):
        # fused edge MLPs (all channels): Linear(A,8C)+LeakyReLU, blockdiag Linear(8C,C)+ELU
        h = _leaky(_mm(ea, getp(f"L{l}_W1")) + getp(f"L{l}_b1"))    # [E,128] (8C valid)
        w = _elu(_mm(h, getp(f"L{l}_W2")) + getp(f"L{l}_b2"))       # [E,128] (C valid)
        w_rep = _mm(w, rep)                                         # [E,128] (C*dim valid)
        # project once per node, then gather projected rows per edge
        proj = _mm(xc, getp(f"L{l}_Wa_msg"))                        # [N,128] (C*dim valid)
        proj_j = _mm(ssrc, proj)                                    # [E,128] gather x_j proj
        msg = w_rep * proj_j                                        # weighted messages
        agg = _mm(_mm(sdst, msg), block_sum)                        # [N,128] scatter-add+sum_c
        self_term = _mm(xc, getp(f"L{l}_Wa_self"))                  # (1+eps_c) folded in
        y = _leaky(agg + self_term + getp(f"L{l}_ba"))              # MCNWMConv.nn Linear1+Leaky
        y = _mm(y, getp(f"L{l}_Wb")) + getp(f"L{l}_bb")             # MCNWMConv.nn Linear2
        y = _leaky(y)                                               # F.leaky_relu(conv(x))
        y = y * getp(f"L{l}_bns") + getp(f"L{l}_bnsh")              # BatchNorm1d (eval, folded)
        xagg = y if xagg is None else jnp.maximum(xagg, y)          # jumping-knowledge max
        xc = y

    # ------------------- Set2Set (processing_steps=5, 2-layer LSTM) ----------
    Wih1_q, Wih1_r = getp("s2s_Wih1_q"), getp("s2s_Wih1_r")
    Whh1, b1 = getp("s2s_Whh1"), getp("s2s_b1")
    Wih2, Whh2, b2 = getp("s2s_Wih2"), getp("s2s_Whh2"), getp("s2s_b2")
    fc1_Wq, fc1_Wr, fc1_b = getp("fc1_Wq"), getp("fc1_Wr"), getp("fc1_b")
    fc2_W, fc2_b = getp("fc2_W"), getp("fc2_b")

    node_mask = bmat_t > 0.5          # [N, G]  hoisted out of the 5-step loop
    xagg_d = xagg[:, :dim]            # [N, dim] single hoisted lane slice

    def lstm_gates(g):                # full-width [G, 4*dim]=128 lanes on the EUP
        s = jax.nn.sigmoid(g)
        t = jnp.tanh(g)
        return (s[:, 0:dim], s[:, dim:2 * dim],
                t[:, 2 * dim:3 * dim], s[:, 3 * dim:4 * dim])

    h1 = jnp.zeros((G, dim), jnp.float32)
    c1 = jnp.zeros((G, dim), jnp.float32)
    h2 = jnp.zeros((G, dim), jnp.float32)
    c2 = jnp.zeros((G, dim), jnp.float32)
    q = jnp.zeros((G, dim), jnp.float32)     # q_star = [q | r] never materialized
    r = jnp.zeros((G, 128), jnp.float32)     # lane-padded readout

    for _ in range(5):
        g1 = _mm(q, Wih1_q) + _mm(r, Wih1_r) + _mm(h1, Whh1) + b1   # [G, 4*dim]
        i, f, gg, o = lstm_gates(g1)
        c1 = f * c1 + i * gg
        h1 = o * jnp.tanh(c1)
        g2 = _mm(h1, Wih2) + _mm(h2, Whh2) + b2
        i, f, gg, o = lstm_gates(g2)
        c2 = f * c2 + i * gg
        h2 = o * jnp.tanh(c2)
        q = h2                                                      # [G, dim]
        qb = _mm(bmat_t, q)                                         # q[batch] -> [N, dim]
        e = jnp.sum(xagg_d * qb, axis=1, keepdims=True)             # [N, 1]
        # segment softmax over nodes of each graph
        masked = jnp.where(node_mask, e, -1e30)                     # [N, G]
        m = jnp.max(masked, axis=0, keepdims=True)                  # [1, G]
        m_node = jnp.sum(bmat_t * m, axis=1, keepdims=True)         # [N, 1] per-node max
        a = jnp.exp(e - m_node)                                     # [N, 1]
        denom = _mm(bmat, a)                                        # [G, 1] segment sum (MXU)
        denom_node = _mm(bmat_t, denom)                             # [N, 1]
        a = a * recip(denom_node + 1e-16)
        r = _mm(bmat, a * xagg)                                     # [G, 128] readout

    # ------------------- classifier head (dropout = identity) ----------------
    hcls = _leaky(_mm(q, fc1_Wq) + _mm(r, fc1_Wr) + fc1_b)          # [G, 128]
    out = _mm(hcls, fc2_W) + fc2_b                                  # [G, 128] (classes valid)
    return out


# ------------------------------ Pallas kernel ---------------------------------
def build_graphsite_kernel(offsets, *, dim, num_layers, num_classes, G):
    """Builds (once) the jitted pallas_call; reuse the returned callable."""

    def kernel(x_ref, ea_ref, ssrc_ref, sdst_ref, bmat_ref, bmat_t_ref,
               slab_ref, out_ref):
        def getp(name):
            o, rows = offsets[name]
            return slab_ref[pl.ds(o, rows), :]    # lane-dense, no column slicing

        out = forward_math(
            x_ref[...], ea_ref[...], ssrc_ref[...], sdst_ref[...],
            bmat_ref[...], bmat_t_ref[...], getp,
            lambda v: pl.reciprocal(v, approx=True),
            dim=dim, num_layers=num_layers)
        out_ref[...] = out

    fn = pl.pallas_call(
        kernel,
        out_shape=jax.ShapeDtypeStruct((G, 128), jnp.float32),
        in_specs=[pl.BlockSpec(memory_space=pltpu.MemorySpace.VMEM)] * 7,
        out_specs=pl.BlockSpec(memory_space=pltpu.MemorySpace.VMEM),
        # whole problem (~2 MiB) resident in VMEM; 16 MiB fits every generation
        # including v7x's 64 MiB physical VMEM with ample headroom.
        compiler_params=pltpu.CompilerParams(vmem_limit_bytes=16 * 1024 * 1024),
    )
    return jax.jit(lambda *args: fn(*args)[:, :num_classes])


# -------------------------- parameter init / fold / pack ----------------------
def init_raw_params(key, num_features, num_edge_attr, dim, num_layers,
                    num_channels, num_classes):
    """Random parameters with PyTorch-native layouts."""
    keys = iter(jax.random.split(key, 256))

    def lin(fan_in, shape):
        return (jax.random.normal(next(keys), shape, jnp.float32)
                / np.sqrt(fan_in)).astype(jnp.float32)

    raw = {"layers": []}
    for l in range(num_layers):
        in_dim = num_features if l == 0 else dim
        chans = []
        for _ in range(num_channels):
            chans.append(dict(
                W1=lin(num_edge_attr, (8, num_edge_attr)),   # edge_nn Linear(A,8)
                b1=lin(num_edge_attr, (8,)),
                W2=lin(8, (1, 8)),                           # edge_nn Linear(8,1)
                b2=lin(8, (1,)),
                eps=0.1 * jax.random.normal(next(keys), (), jnp.float32),
            ))
        raw["layers"].append(dict(
            chans=chans,
            Wa=lin(in_dim * num_channels, (dim, in_dim * num_channels)),  # nn Linear1
            ba=lin(in_dim * num_channels, (dim,)),
            Wb=lin(dim, (dim, dim)),                                      # nn Linear2
            bb=lin(dim, (dim,)),
            gamma=1.0 + 0.1 * jax.random.normal(next(keys), (dim,), jnp.float32),
            beta=0.1 * jax.random.normal(next(keys), (dim,), jnp.float32),
            mean=0.1 * jax.random.normal(next(keys), (dim,), jnp.float32),
            var=1.0 + 0.1 * jnp.abs(jax.random.normal(next(keys), (dim,), jnp.float32)),
        ))

    # Set2Set 2-layer LSTM (torch.nn.LSTM(2*dim, dim, num_layers=2)); gates [i,f,g,o]
    lstm = []
    for insz in (2 * dim, dim):
        lstm.append(dict(
            Wih=lin(insz, (4 * dim, insz)),
            Whh=lin(dim, (4 * dim, dim)),
            bih=lin(dim, (4 * dim,)),
            bhh=lin(dim, (4 * dim,)),
        ))
    raw["lstm"] = lstm
    raw["fc1_W"] = lin(2 * dim, (dim, 2 * dim))
    raw["fc1_b"] = lin(2 * dim, (dim,))
    raw["fc2_W"] = lin(dim, (num_classes, dim))
    raw["fc2_b"] = lin(dim, (num_classes,))
    return raw


def _pad(a, rows, cols=128):
    a = np.asarray(a, np.float32)
    out = np.zeros((rows, cols), np.float32)
    out[:a.shape[0], :a.shape[1]] = a
    return out


def prep_params(raw, *, num_features, dim, num_channels):
    """Host-side fusion/folding + zero-padding -> {name: [rows,128] f32}.
    Contraction dims are padded so the kernel never slices weight columns:
    weights that multiply 128-lane-padded activations get 128 rows; weights
    that multiply the 32-lane LSTM state get `dim` rows."""
    C = num_channels
    p = {}
    for l, lay in enumerate(raw["layers"]):
        in_dim = num_features if l == 0 else dim
        W1cat = np.concatenate([np.asarray(c["W1"], np.float32).T for c in lay["chans"]],
                               axis=1)                                          # [A, 8C]
        b1cat = np.concatenate([np.asarray(c["b1"], np.float32)
                                for c in lay["chans"]])[None, :]                # [1, 8C]
        W2blk = np.zeros((8 * C, C), np.float32)
        b2cat = np.zeros((1, C), np.float32)
        for c, ch in enumerate(lay["chans"]):
            W2blk[8 * c:8 * (c + 1), c] = np.asarray(ch["W2"], np.float32)[0]
            b2cat[0, c] = float(np.asarray(ch["b2"], np.float32)[0])
        Wa = np.asarray(lay["Wa"], np.float32).T                                # [in_dim*C, dim]
        Wa_blocks = [Wa[c * in_dim:(c + 1) * in_dim] for c in range(C)]
        Wa_msg = np.concatenate(Wa_blocks, axis=1)                              # [in_dim, C*dim]
        Wa_self = sum((1.0 + float(lay["chans"][c]["eps"])) * Wa_blocks[c]
                      for c in range(C))
        gamma = np.asarray(lay["gamma"], np.float32)
        beta = np.asarray(lay["beta"], np.float32)
        mean = np.asarray(lay["mean"], np.float32)
        var = np.asarray(lay["var"], np.float32)
        bn_scale = gamma / np.sqrt(var + 1e-5)
        bn_shift = beta - mean * bn_scale

        p[f"L{l}_W1"] = _pad(W1cat, 128)
        p[f"L{l}_b1"] = _pad(b1cat, 1)
        p[f"L{l}_W2"] = _pad(W2blk, 128)
        p[f"L{l}_b2"] = _pad(b2cat, 1)
        p[f"L{l}_Wa_msg"] = _pad(Wa_msg, 128)
        p[f"L{l}_Wa_self"] = _pad(Wa_self, 128)
        p[f"L{l}_ba"] = _pad(np.asarray(lay["ba"], np.float32)[None, :], 1)
        p[f"L{l}_Wb"] = _pad(np.asarray(lay["Wb"], np.float32).T, 128)
        p[f"L{l}_bb"] = _pad(np.asarray(lay["bb"], np.float32)[None, :], 1)
        p[f"L{l}_bns"] = _pad(bn_scale[None, :], 1)
        p[f"L{l}_bnsh"] = _pad(bn_shift[None, :], 1)

    # channel replication / per-channel block-sum (push channel mixing onto the MXU)
    Rep = np.zeros((C, C * dim), np.float32)
    BS = np.zeros((C * dim, dim), np.float32)
    for c in range(C):
        Rep[c, c * dim:(c + 1) * dim] = 1.0
        BS[c * dim:(c + 1) * dim, :] = np.eye(dim, dtype=np.float32)
    p["Rep"] = _pad(Rep, 128)
    p["BlockSum"] = _pad(BS, 128)

    l0, l1 = raw["lstm"]
    Wih1 = np.asarray(l0["Wih"], np.float32).T            # [2*dim, 4*dim]
    p["s2s_Wih1_q"] = _pad(Wih1[:dim], dim)               # multiplies 32-lane q state
    p["s2s_Wih1_r"] = _pad(Wih1[dim:], 128)               # multiplies 128-lane padded r
    p["s2s_Whh1"] = _pad(np.asarray(l0["Whh"], np.float32).T, dim)
    p["s2s_b1"] = _pad((np.asarray(l0["bih"], np.float32)
                        + np.asarray(l0["bhh"], np.float32))[None, :], 1)
    p["s2s_Wih2"] = _pad(np.asarray(l1["Wih"], np.float32).T, dim)
    p["s2s_Whh2"] = _pad(np.asarray(l1["Whh"], np.float32).T, dim)
    p["s2s_b2"] = _pad((np.asarray(l1["bih"], np.float32)
                        + np.asarray(l1["bhh"], np.float32))[None, :], 1)

    fc1 = np.asarray(raw["fc1_W"], np.float32).T           # [2*dim, dim]
    p["fc1_Wq"] = _pad(fc1[:dim], dim)
    p["fc1_Wr"] = _pad(fc1[dim:], 128)
    p["fc1_b"] = _pad(np.asarray(raw["fc1_b"], np.float32)[None, :], 1)
    p["fc2_W"] = _pad(np.asarray(raw["fc2_W"], np.float32).T, 128)
    p["fc2_b"] = _pad(np.asarray(raw["fc2_b"], np.float32)[None, :], 1)
    return p


def pack_slab(named):
    """Pack {name: [rows,128] f32} into a single [R,128] slab; each entry starts
    at an 8-aligned (sublane-tile-aligned) row offset."""
    offsets = {}
    blocks = []
    row = 0
    for name, m in named.items():
        m = np.asarray(m, np.float32)
        r = m.shape[0]
        rpad = ((r + 7) // 8) * 8
        buf = np.zeros((rpad, 128), np.float32)
        buf[:r] = m
        blocks.append(buf)
        offsets[name] = (row, r)
        row += rpad
    slab = jnp.asarray(np.concatenate(blocks, axis=0))
    return slab, offsets


# ----------------------------------- main --------------------------------------
if __name__ == "__main__":
    # small, module-consistent shapes; large enough to fill the 8-sublane tile
    NODES_PER_G, EDGES_PER_G, G = 8, 20, 8
    N, E = NODES_PER_G * G, EDGES_PER_G * G                 # 64 nodes, 160 edges
    num_features, num_edge_attr = 8, 4
    dim, num_layers, num_channels, num_classes = 32, 3, 2, 3

    root = jax.random.PRNGKey(0)
    k_x, k_ea, k_e, k_p = jax.random.split(root, 4)

    x = 0.1 * jax.random.normal(k_x, (N, num_features), jnp.float32)
    edge_attr = 0.1 * jax.random.normal(k_ea, (E, num_edge_attr), jnp.float32)
    # PyG-style batched graph: edges stay within their own graph
    ks, kd = jax.random.split(k_e)
    src_local = jax.random.randint(ks, (G, EDGES_PER_G), 0, NODES_PER_G)
    dst_local = jax.random.randint(kd, (G, EDGES_PER_G), 0, NODES_PER_G)
    offs = (jnp.arange(G, dtype=jnp.int32) * NODES_PER_G)[:, None]
    src = (src_local + offs).reshape(-1)
    dst = (dst_local + offs).reshape(-1)
    batch = jnp.repeat(jnp.arange(G, dtype=jnp.int32), NODES_PER_G)

    # lane-pad activations to 128 columns (pad lanes are exact zeros)
    x_pad = jnp.zeros((N, 128), jnp.float32).at[:, :num_features].set(x)
    ea_pad = jnp.zeros((E, 128), jnp.float32).at[:, :num_edge_attr].set(edge_attr)

    # structural one-hot gather/scatter matrices (f32: exact index semantics)
    ssrc = jax.nn.one_hot(src, N, dtype=jnp.float32)                     # [E, N]
    sdst = jnp.transpose(jax.nn.one_hot(dst, N, dtype=jnp.float32))      # [N, E]
    bmat = jnp.transpose(jax.nn.one_hot(batch, G, dtype=jnp.float32))    # [G, N]
    bmat_t = jnp.transpose(bmat)                                         # [N, G]

    raw = init_raw_params(k_p, num_features, num_edge_attr, dim, num_layers,
                          num_channels, num_classes)
    prepped = prep_params(raw, num_features=num_features, dim=dim,
                          num_channels=num_channels)
    slab, offsets = pack_slab(prepped)

    run = build_graphsite_kernel(offsets, dim=dim, num_layers=num_layers,
                                 num_classes=num_classes, G=G)
    out = jax.block_until_ready(run(x_pad, ea_pad, ssrc, sdst, bmat, bmat_t, slab))

    # plain-JAX reference (identical math, exact reciprocal, un-packed params)
    ref = forward_math(x_pad, ea_pad, ssrc, sdst, bmat, bmat_t,
                       lambda n: prepped[n], lambda v: 1.0 / v,
                       dim=dim, num_layers=num_layers)[:, :num_classes]
    ref = jax.block_until_ready(ref)
    np.testing.assert_allclose(np.asarray(out), np.asarray(ref), rtol=1e-2, atol=1e-2)

    print("KERNEL_OK")
</pallas_src>

<mosaic_0001>
module attributes {stable_mosaic.version = 11 : i64} {
  func.func @kernel(%arg0: memref<64x128xf32, #tpu.memory_space<vmem>>, %arg1: memref<160x128xf32, #tpu.memory_space<vmem>>, %arg2: memref<160x64xf32, #tpu.memory_space<vmem>>, %arg3: memref<64x160xf32, #tpu.memory_space<vmem>>, %arg4: memref<8x64xf32, #tpu.memory_space<vmem>>, %arg5: memref<64x8xf32, #tpu.memory_space<vmem>>, %arg6: memref<2896x128xf32, #tpu.memory_space<vmem>>, %arg7: memref<8x128xf32, #tpu.memory_space<vmem>>) attributes {dimension_semantics = [], scalar_prefetch = 0 : i64, scratch_operands = 0 : i64, tpu.core_type = #tpu.core_type<tc>} {
    %c0 = arith.constant 0 : index
    %c0_0 = arith.constant 0 : index
    %0 = vector.load %arg0[%c0, %c0_0] : memref<64x128xf32, #tpu.memory_space<vmem>>, vector<64x128xf32>
    %c0_1 = arith.constant 0 : index
    %c0_2 = arith.constant 0 : index
    %1 = vector.load %arg1[%c0_1, %c0_2] : memref<160x128xf32, #tpu.memory_space<vmem>>, vector<160x128xf32>
    %c0_3 = arith.constant 0 : index
    %c0_4 = arith.constant 0 : index
    %2 = vector.load %arg2[%c0_3, %c0_4] : memref<160x64xf32, #tpu.memory_space<vmem>>, vector<160x64xf32>
    %c0_5 = arith.constant 0 : index
    %c0_6 = arith.constant 0 : index
    %3 = vector.load %arg3[%c0_5, %c0_6] : memref<64x160xf32, #tpu.memory_space<vmem>>, vector<64x160xf32>
    %c0_7 = arith.constant 0 : index
    %c0_8 = arith.constant 0 : index
    %4 = vector.load %arg4[%c0_7, %c0_8] : memref<8x64xf32, #tpu.memory_space<vmem>>, vector<8x64xf32>
    %c0_9 = arith.constant 0 : index
    %c0_10 = arith.constant 0 : index
    %5 = vector.load %arg5[%c0_9, %c0_10] : memref<64x8xf32, #tpu.memory_space<vmem>>, vector<64x8xf32>
    %c2064 = arith.constant 2064 : index
    %c0_11 = arith.constant 0 : index
    %6 = vector.load %arg6[%c2064, %c0_11] : memref<2896x128xf32, #tpu.memory_space<vmem>>, vector<128x128xf32>
    %c2192 = arith.constant 2192 : index
    %c0_12 = arith.constant 0 : index
    %7 = vector.load %arg6[%c2192, %c0_12] : memref<2896x128xf32, #tpu.memory_space<vmem>>, vector<128x128xf32>
    %c0_13 = arith.constant 0 : index
    %c0_14 = arith.constant 0 : index
    %8 = vector.load %arg6[%c0_13, %c0_14] : memref<2896x128xf32, #tpu.memory_space<vmem>>, vector<128x128xf32>
    %cst = arith.constant dense<0.000000e+00> : vector<160x128xf32>
    %9 = tpu.matmul %1, %8, %cst {dimension_numbers = #tpu.dot_dimension_numbers<[1], [0], [0], [1], [0, 0, 1, 1], [], []>} : vector<160x128xf32>, vector<128x128xf32>, vector<160x128xf32> -> vector<160x128xf32>
    %c128 = arith.constant 128 : index
    %c0_15 = arith.constant 0 : index
    %10 = vector.load %arg6[%c128, %c0_15] : memref<2896x128xf32, #tpu.memory_space<vmem>>, vector<1x128xf32>
    %11 = vector.broadcast %10 : vector<1x128xf32> to vector<160x128xf32>
    %12 = arith.addf %9, %11 : vector<160x128xf32>
    %cst_16 = arith.constant 0.000000e+00 : f32
    %13 = vector.broadcast %cst_16 : f32 to vector<160x128xf32>
    %14 = arith.cmpf ogt, %12, %13 : vector<160x128xf32>
    %cst_17 = arith.constant 0.00999999977 : f32
    %15 = vector.broadcast %cst_17 : f32 to vector<160x128xf32>
    %16 = arith.mulf %15, %12 : vector<160x128xf32>
    %17 = arith.select %14, %12, %16 : vector<160x128xi1>, vector<160x128xf32>
    %c136 = arith.constant 136 : index
    %c0_18 = arith.constant 0 : index
    %18 = vector.load %arg6[%c136, %c0_18] : memref<2896x128xf32, #tpu.memory_space<vmem>>, vector<128x128xf32>
    %cst_19 = arith.constant dense<0.000000e+00> : vector<160x128xf32>
    %19 = tpu.matmul %17, %18, %cst_19 {dimension_numbers = #tpu.dot_dimension_numbers<[1], [0], [0], [1], [0, 0, 1, 1], [], []>} : vector<160x128xf32>, vector<128x128xf32>, vector<160x128xf32> -> vector<160x128xf32>
    %c264 = arith.constant 264 : index
    %c0_20 = arith.constant 0 : index
    %20 = vector.load %arg6[%c264, %c0_20] : memref<2896x128xf32, #tpu.memory_space<vmem>>, vector<1x128xf32>
    %21 = vector.broadcast %20 : vector<1x128xf32> to vector<160x128xf32>
    %22 = arith.addf %19, %21 : vector<160x128xf32>
    %cst_21 = arith.constant 0.000000e+00 : f32
    %23 = vector.broadcast %cst_21 : f32 to vector<160x128xf32>
    %24 = arith.cmpf ogt, %22, %23 : vector<160x128xf32>
    %cst_22 = arith.constant 0.000000e+00 : f32
    %25 = vector.broadcast %cst_22 : f32 to vector<160x128xf32>
    %26 = arith.minimumf %22, %25 : vector<160x128xf32>
    %27 = math.exp %26 : vector<160x128xf32>
    %cst_23 = arith.constant 1.000000e+00 : f32
    %28 = vector.broadcast %cst_23 : f32 to vector<160x128xf32>
    %29 = arith.subf %27, %28 : vector<160x128xf32>
    %30 = arith.select %24, %22, %29 : vector<160x128xi1>, vector<160x128xf32>
    %cst_24 = arith.constant dense<0.000000e+00> : vector<160x128xf32>
    %31 = tpu.matmul %30, %6, %cst_24 {dimension_numbers = #tpu.dot_dimension_numbers<[1], [0], [0], [1], [0, 0, 1, 1], [], []>} : vector<160x128xf32>, vector<128x128xf32>, vector<160x128xf32> -> vector<160x128xf32>
    %c272 = arith.constant 272 : index
    %c0_25 = arith.constant 0 : index
    %32 = vector.load %arg6[%c272, %c0_25] : memref<2896x128xf32, #tpu.memory_space<vmem>>, vector<128x128xf32>
    %cst_26 = arith.constant dense<0.000000e+00> : vector<64x128xf32>
    %33 = tpu.matmul %0, %32, %cst_26 {dimension_numbers = #tpu.dot_dimension_numbers<[1], [0], [0], [1], [0, 0, 1, 1], [], []>} : vector<64x128xf32>, vector<128x128xf32>, vector<64x128xf32> -> vector<64x128xf32>
    %cst_27 = arith.constant dense<0.000000e+00> : vector<160x128xf32>
    %34 = tpu.matmul %2, %33, %cst_27 {dimension_numbers = #tpu.dot_dimension_numbers<[1], [0], [0], [1], [0, 0, 1, 1], [], []>} : vector<160x64xf32>, vector<64x128xf32>, vector<160x128xf32> -> vector<160x128xf32>
    %35 = arith.mulf %31, %34 : vector<160x128xf32>
    %cst_28 = arith.constant dense<0.000000e+00> : vector<64x128xf32>
    %36 = tpu.matmul %3, %35, %cst_28 {dimension_numbers = #tpu.dot_dimension_numbers<[1], [0], [0], [1], [0, 0, 1, 1], [], []>} : vector<64x160xf32>, vector<160x128xf32>, vector<64x128xf32> -> vector<64x128xf32>
    %cst_29 = arith.constant dense<0.000000e+00> : vector<64x128xf32>
    %37 = tpu.matmul %36, %7, %cst_29 {dimension_numbers = #tpu.dot_dimension_numbers<[1], [0], [0], [1], [0, 0, 1, 1], [], []>} : vector<64x128xf32>, vector<128x128xf32>, vector<64x128xf32> -> vector<64x128xf32>
    %c400 = arith.constant 400 : index
    %c0_30 = arith.constant 0 : index
    %38 = vector.load %arg6[%c400, %c0_30] : memref<2896x128xf32, #tpu.memory_space<vmem>>, vector<128x128xf32>
    %cst_31 = arith.constant dense<0.000000e+00> : vector<64x128xf32>
    %39 = tpu.matmul %0, %38, %cst_31 {dimension_numbers = #tpu.dot_dimension_numbers<[1], [0], [0], [1], [0, 0, 1, 1], [], []>} : vector<64x128xf32>, vector<128x128xf32>, vector<64x128xf32> -> vector<64x128xf32>
    %40 = arith.addf %37, %39 : vector<64x128xf32>
    %c528 = arith.constant 528 : index
    %c0_32 = arith.constant 0 : index
    %41 = vector.load %arg6[%c528, %c0_32] : memref<2896x128xf32, #tpu.memory_space<vmem>>, vector<1x128xf32>
    %42 = vector.broadcast %41 : vector<1x128xf32> to vector<64x128xf32>
    %43 = arith.addf %40, %42 : vector<64x128xf32>
    %cst_33 = arith.constant 0.000000e+00 : f32
    %44 = vector.broadcast %cst_33 : f32 to vector<64x128xf32>
    %45 = arith.cmpf ogt, %43, %44 : vector<64x128xf32>
    %cst_34 = arith.constant 0.00999999977 : f32
    %46 = vector.broadcast %cst_34 : f32 to vector<64x128xf32>
    %47 = arith.mulf %46, %43 : vector<64x128xf32>
    %48 = arith.select %45, %43, %47 : vector<64x128xi1>, vector<64x128xf32>
    %c536 = arith.constant 536 : index
    %c0_35 = arith.constant 0 : index
    %49 = vector.load %arg6[%c536, %c0_35] : memref<2896x128xf32, #tpu.memory_space<vmem>>, vector<128x128xf32>
    %cst_36 = arith.constant dense<0.000000e+00> : vector<64x128xf32>
    %50 = tpu.matmul %48, %49, %cst_36 {dimension_numbers = #tpu.dot_dimension_numbers<[1], [0], [0], [1], [0, 0, 1, 1], [], []>} : vector<64x128xf32>, vector<128x128xf32>, vector<64x128xf32> -> vector<64x128xf32>
    %c664 = arith.constant 664 : index
    %c0_37 = arith.constant 0 : index
    %51 = vector.load %arg6[%c664, %c0_37] : memref<2896x128xf32, #tpu.memory_space<vmem>>, vector<1x128xf32>
    %52 = vector.broadcast %51 : vector<1x128xf32> to vector<64x128xf32>
    %53 = arith.addf %50, %52 : vector<64x128xf32>
    %cst_38 = arith.constant 0.000000e+00 : f32
    %54 = vector.broadcast %cst_38 : f32 to vector<64x128xf32>
    %55 = arith.cmpf ogt, %53, %54 : vector<64x128xf32>
    %cst_39 = arith.constant 0.00999999977 : f32
    %56 = vector.broadcast %cst_39 : f32 to vector<64x128xf32>
    %57 = arith.mulf %56, %53 : vector<64x128xf32>
    %58 = arith.select %55, %53, %57 : vector<64x128xi1>, vector<64x128xf32>
    %c672 = arith.constant 672 : index
    %c0_40 = arith.constant 0 : index
    %59 = vector.load %arg6[%c672, %c0_40] : memref<2896x128xf32, #tpu.memory_space<vmem>>, vector<1x128xf32>
    %60 = vector.broadcast %59 : vector<1x128xf32> to vector<64x128xf32>
    %61 = arith.mulf %58, %60 : vector<64x128xf32>
    %c680 = arith.constant 680 : index
    %c0_41 = arith.constant 0 : index
    %62 = vector.load %arg6[%c680, %c0_41] : memref<2896x128xf32, #tpu.memory_space<vmem>>, vector<1x128xf32>
    %63 = vector.broadcast %62 : vector<1x128xf32> to vector<64x128xf32>
    %64 = arith.addf %61, %63 : vector<64x128xf32>
    %c688 = arith.constant 688 : index
    %c0_42 = arith.constant 0 : index
    %65 = vector.load %arg6[%c688, %c0_42] : memref<2896x128xf32, #tpu.memory_space<vmem>>, vector<128x128xf32>
    %cst_43 = arith.constant dense<0.000000e+00> : vector<160x128xf32>
    %66 = tpu.matmul %1, %65, %cst_43 {dimension_numbers = #tpu.dot_dimension_numbers<[1], [0], [0], [1], [0, 0, 1, 1], [], []>} : vector<160x128xf32>, vector<128x128xf32>, vector<160x128xf32> -> vector<160x128xf32>
    %c816 = arith.constant 816 : index
    %c0_44 = arith.constant 0 : index
    %67 = vector.load %arg6[%c816, %c0_44] : memref<2896x128xf32, #tpu.memory_space<vmem>>, vector<1x128xf32>
    %68 = vector.broadcast %67 : vector<1x128xf32> to vector<160x128xf32>
    %69 = arith.addf %66, %68 : vector<160x128xf32>
    %cst_45 = arith.constant 0.000000e+00 : f32
    %70 = vector.broadcast %cst_45 : f32 to vector<160x128xf32>
    %71 = arith.cmpf ogt, %69, %70 : vector<160x128xf32>
    %cst_46 = arith.constant 0.00999999977 : f32
    %72 = vector.broadcast %cst_46 : f32 to vector<160x128xf32>
    %73 = arith.mulf %72, %69 : vector<160x128xf32>
    %74 = arith.select %71, %69, %73 : vector<160x128xi1>, vector<160x128xf32>
    %c824 = arith.constant 824 : index
    %c0_47 = arith.constant 0 : index
    %75 = vector.load %arg6[%c824, %c0_47] : memref<2896x128xf32, #tpu.memory_space<vmem>>, vector<128x128xf32>
    %cst_48 = arith.constant dense<0.000000e+00> : vector<160x128xf32>
    %76 = tpu.matmul %74, %75, %cst_48 {dimension_numbers = #tpu.dot_dimension_numbers<[1], [0], [0], [1], [0, 0, 1, 1], [], []>} : vector<160x128xf32>, vector<128x128xf32>, vector<160x128xf32> -> vector<160x128xf32>
    %c952 = arith.constant 952 : index
    %c0_49 = arith.constant 0 : index
    %77 = vector.load %arg6[%c952, %c0_49] : memref<2896x128xf32, #tpu.memory_space<vmem>>, vector<1x128xf32>
    %78 = vector.broadcast %77 : vector<1x128xf32> to vector<160x128xf32>
    %79 = arith.addf %76, %78 : vector<160x128xf32>
    %cst_50 = arith.constant 0.000000e+00 : f32
    %80 = vector.broadcast %cst_50 : f32 to vector<160x128xf32>
    %81 = arith.cmpf ogt, %79, %80 : vector<160x128xf32>
    %cst_51 = arith.constant 0.000000e+00 : f32
    %82 = vector.broadcast %cst_51 : f32 to vector<160x128xf32>
    %83 = arith.minimumf %79, %82 : vector<160x128xf32>
    %84 = math.exp %83 : vector<160x128xf32>
    %cst_52 = arith.constant 1.000000e+00 : f32
    %85 = vector.broadcast %cst_52 : f32 to vector<160x128xf32>
    %86 = arith.subf %84, %85 : vector<160x128xf32>
    %87 = arith.select %81, %79, %86 : vector<160x128xi1>, vector<160x128xf32>
    %cst_53 = arith.constant dense<0.000000e+00> : vector<160x128xf32>
    %88 = tpu.matmul %87, %6, %cst_53 {dimension_numbers = #tpu.dot_dimension_numbers<[1], [0], [0], [1], [0, 0, 1, 1], [], []>} : vector<160x128xf32>, vector<128x128xf32>, vector<160x128xf32> -> vector<160x128xf32>
    %c960 = arith.constant 960 : index
    %c0_54 = arith.constant 0 : index
    %89 = vector.load %arg6[%c960, %c0_54] : memref<2896x128xf32, #tpu.memory_space<vmem>>, vector<128x128xf32>
    %cst_55 = arith.constant dense<0.000000e+00> : vector<64x128xf32>
    %90 = tpu.matmul %64, %89, %cst_55 {dimension_numbers = #tpu.dot_dimension_numbers<[1], [0], [0], [1], [0, 0, 1, 1], [], []>} : vector<64x128xf32>, vector<128x128xf32>, vector<64x128xf32> -> vector<64x128xf32>
    %cst_56 = arith.constant dense<0.000000e+00> : vector<160x128xf32>
    %91 = tpu.matmul %2, %90, %cst_56 {dimension_numbers = #tpu.dot_dimension_numbers<[1], [0], [0], [1], [0, 0, 1, 1], [], []>} : vector<160x64xf32>, vector<64x128xf32>, vector<160x128xf32> -> vector<160x128xf32>
    %92 = arith.mulf %88, %91 : vector<160x128xf32>
    %cst_57 = arith.constant dense<0.000000e+00> : vector<64x128xf32>
    %93 = tpu.matmul %3, %92, %cst_57 {dimension_numbers = #tpu.dot_dimension_numbers<[1], [0], [0], [1], [0, 0, 1, 1], [], []>} : vector<64x160xf32>, vector<160x128xf32>, vector<64x128xf32> -> vector<64x128xf32>
    %cst_58 = arith.constant dense<0.000000e+00> : vector<64x128xf32>
    %94 = tpu.matmul %93, %7, %cst_58 {dimension_numbers = #tpu.dot_dimension_numbers<[1], [0], [0], [1], [0, 0, 1, 1], [], []>} : vector<64x128xf32>, vector<128x128xf32>, vector<64x128xf32> -> vector<64x128xf32>
    %c1088 = arith.constant 1088 : index
    %c0_59 = arith.constant 0 : index
    %95 = vector.load %arg6[%c1088, %c0_59] : memref<2896x128xf32, #tpu.memory_space<vmem>>, vector<128x128xf32>
    %cst_60 = arith.constant dense<0.000000e+00> : vector<64x128xf32>
    %96 = tpu.matmul %64, %95, %cst_60 {dimension_numbers = #tpu.dot_dimension_numbers<[1], [0], [0], [1], [0, 0, 1, 1], [], []>} : vector<64x128xf32>, vector<128x128xf32>, vector<64x128xf32> -> vector<64x128xf32>
    %97 = arith.addf %94, %96 : vector<64x128xf32>
    %c1216 = arith.constant 1216 : index
    %c0_61 = arith.constant 0 : index
    %98 = vector.load %arg6[%c1216, %c0_61] : memref<2896x128xf32, #tpu.memory_space<vmem>>, vector<1x128xf32>
    %99 = vector.broadcast %98 : vector<1x128xf32> to vector<64x128xf32>
    %100 = arith.addf %97, %99 : vector<64x128xf32>
    %cst_62 = arith.constant 0.000000e+00 : f32
    %101 = vector.broadcast %cst_62 : f32 to vector<64x128xf32>
    %102 = arith.cmpf ogt, %100, %101 : vector<64x128xf32>
    %cst_63 = arith.constant 0.00999999977 : f32
    %103 = vector.broadcast %cst_63 : f32 to vector<64x128xf32>
    %104 = arith.mulf %103, %100 : vector<64x128xf32>
    %105 = arith.select %102, %100, %104 : vector<64x128xi1>, vector<64x128xf32>
    %c1224 = arith.constant 1224 : index
    %c0_64 = arith.constant 0 : index
    %106 = vector.load %arg6[%c1224, %c0_64] : memref<2896x128xf32, #tpu.memory_space<vmem>>, vector<128x128xf32>
    %cst_65 = arith.constant dense<0.000000e+00> : vector<64x128xf32>
    %107 = tpu.matmul %105, %106, %cst_65 {dimension_numbers = #tpu.dot_dimension_numbers<[1], [0], [0], [1], [0, 0, 1, 1], [], []>} : vector<64x128xf32>, vector<128x128xf32>, vector<64x128xf32> -> vector<64x128xf32>
    %c1352 = arith.constant 1352 : index
    %c0_66 = arith.constant 0 : index
    %108 = vector.load %arg6[%c1352, %c0_66] : memref<2896x128xf32, #tpu.memory_space<vmem>>, vector<1x128xf32>
    %109 = vector.broadcast %108 : vector<1x128xf32> to vector<64x128xf32>
    %110 = arith.addf %107, %109 : vector<64x128xf32>
    %cst_67 = arith.constant 0.000000e+00 : f32
    %111 = vector.broadcast %cst_67 : f32 to vector<64x128xf32>
    %112 = arith.cmpf ogt, %110, %111 : vector<64x128xf32>
    %cst_68 = arith.constant 0.00999999977 : f32
    %113 = vector.broadcast %cst_68 : f32 to vector<64x128xf32>
    %114 = arith.mulf %113, %110 : vector<64x128xf32>
    %115 = arith.select %112, %110, %114 : vector<64x128xi1>, vector<64x128xf32>
    %c1360 = arith.constant 1360 : index
    %c0_69 = arith.constant 0 : index
    %116 = vector.load %arg6[%c1360, %c0_69] : memref<2896x128xf32, #tpu.memory_space<vmem>>, vector<1x128xf32>
    %117 = vector.broadcast %116 : vector<1x128xf32> to vector<64x128xf32>
    %118 = arith.mulf %115, %117 : vector<64x128xf32>
    %c1368 = arith.constant 1368 : index
    %c0_70 = arith.constant 0 : index
    %119 = vector.load %arg6[%c1368, %c0_70] : memref<2896x128xf32, #tpu.memory_space<vmem>>, vector<1x128xf32>
    %120 = vector.broadcast %119 : vector<1x128xf32> to vector<64x128xf32>
    %121 = arith.addf %118, %120 : vector<64x128xf32>
    %122 = arith.maximumf %64, %121 : vector<64x128xf32>
    %c1376 = arith.constant 1376 : index
    %c0_71 = arith.constant 0 : index
    %123 = vector.load %arg6[%c1376, %c0_71] : memref<2896x128xf32, #tpu.memory_space<vmem>>, vector<128x128xf32>
    %cst_72 = arith.constant dense<0.000000e+00> : vector<160x128xf32>
    %124 = tpu.matmul %1, %123, %cst_72 {dimension_numbers = #tpu.dot_dimension_numbers<[1], [0], [0], [1], [0, 0, 1, 1], [], []>} : vector<160x128xf32>, vector<128x128xf32>, vector<160x128xf32> -> vector<160x128xf32>
    %c1504 = arith.constant 1504 : index
    %c0_73 = arith.constant 0 : index
    %125 = vector.load %arg6[%c1504, %c0_73] : memref<2896x128xf32, #tpu.memory_space<vmem>>, vector<1x128xf32>
    %126 = vector.broadcast %125 : vector<1x128xf32> to vector<160x128xf32>
    %127 = arith.addf %124, %126 : vector<160x128xf32>
    %cst_74 = arith.constant 0.000000e+00 : f32
    %128 = vector.broadcast %cst_74 : f32 to vector<160x128xf32>
    %129 = arith.cmpf ogt, %127, %128 : vector<160x128xf32>
    %cst_75 = arith.constant 0.00999999977 : f32
    %130 = vector.broadcast %cst_75 : f32 to vector<160x128xf32>
    %131 = arith.mulf %130, %127 : vector<160x128xf32>
    %132 = arith.select %129, %127, %131 : vector<160x128xi1>, vector<160x128xf32>
    %c1512 = arith.constant 1512 : index
    %c0_76 = arith.constant 0 : index
    %133 = vector.load %arg6[%c1512, %c0_76] : memref<2896x128xf32, #tpu.memory_space<vmem>>, vector<128x128xf32>
    %cst_77 = arith.constant dense<0.000000e+00> : vector<160x128xf32>
    %134 = tpu.matmul %132, %133, %cst_77 {dimension_numbers = #tpu.dot_dimension_numbers<[1], [0], [0], [1], [0, 0, 1, 1], [], []>} : vector<160x128xf32>, vector<128x128xf32>, vector<160x128xf32> -> vector<160x128xf32>
    %c1640 = arith.constant 1640 : index
    %c0_78 = arith.constant 0 : index
    %135 = vector.load %arg6[%c1640, %c0_78] : memref<2896x128xf32, #tpu.memory_space<vmem>>, vector<1x128xf32>
    %136 = vector.broadcast %135 : vector<1x128xf32> to vector<160x128xf32>
    %137 = arith.addf %134, %136 : vector<160x128xf32>
    %cst_79 = arith.constant 0.000000e+00 : f32
    %138 = vector.broadcast %cst_79 : f32 to vector<160x128xf32>
    %139 = arith.cmpf ogt, %137, %138 : vector<160x128xf32>
    %cst_80 = arith.constant 0.000000e+00 : f32
    %140 = vector.broadcast %cst_80 : f32 to vector<160x128xf32>
    %141 = arith.minimumf %137, %140 : vector<160x128xf32>
    %142 = math.exp %141 : vector<160x128xf32>
    %cst_81 = arith.constant 1.000000e+00 : f32
    %143 = vector.broadcast %cst_81 : f32 to vector<160x128xf32>
    %144 = arith.subf %142, %143 : vector<160x128xf32>
    %145 = arith.select %139, %137, %144 : vector<160x128xi1>, vector<160x128xf32>
    %cst_82 = arith.constant dense<0.000000e+00> : vector<160x128xf32>
    %146 = tpu.matmul %145, %6, %cst_82 {dimension_numbers = #tpu.dot_dimension_numbers<[1], [0], [0], [1], [0, 0, 1, 1], [], []>} : vector<160x128xf32>, vector<128x128xf32>, vector<160x128xf32> -> vector<160x128xf32>
    %c1648 = arith.constant 1648 : index
    %c0_83 = arith.constant 0 : index
    %147 = vector.load %arg6[%c1648, %c0_83] : memref<2896x128xf32, #tpu.memory_space<vmem>>, vector<128x128xf32>
    %cst_84 = arith.constant dense<0.000000e+00> : vector<64x128xf32>
    %148 = tpu.matmul %121, %147, %cst_84 {dimension_numbers = #tpu.dot_dimension_numbers<[1], [0], [0], [1], [0, 0, 1, 1], [], []>} : vector<64x128xf32>, vector<128x128xf32>, vector<64x128xf32> -> vector<64x128xf32>
    %cst_85 = arith.constant dense<0.000000e+00> : vector<160x128xf32>
    %149 = tpu.matmul %2, %148, %cst_85 {dimension_numbers = #tpu.dot_dimension_numbers<[1], [0], [0], [1], [0, 0, 1, 1], [], []>} : vector<160x64xf32>, vector<64x128xf32>, vector<160x128xf32> -> vector<160x128xf32>
    %150 = arith.mulf %146, %149 : vector<160x128xf32>
    %cst_86 = arith.constant dense<0.000000e+00> : vector<64x128xf32>
    %151 = tpu.matmul %3, %150, %cst_86 {dimension_numbers = #tpu.dot_dimension_numbers<[1], [0], [0], [1], [0, 0, 1, 1], [], []>} : vector<64x160xf32>, vector<160x128xf32>, vector<64x128xf32> -> vector<64x128xf32>
    %cst_87 = arith.constant dense<0.000000e+00> : vector<64x128xf32>
    %152 = tpu.matmul %151, %7, %cst_87 {dimension_numbers = #tpu.dot_dimension_numbers<[1], [0], [0], [1], [0, 0, 1, 1], [], []>} : vector<64x128xf32>, vector<128x128xf32>, vector<64x128xf32> -> vector<64x128xf32>
    %c1776 = arith.constant 1776 : index
    %c0_88 = arith.constant 0 : index
    %153 = vector.load %arg6[%c1776, %c0_88] : memref<2896x128xf32, #tpu.memory_space<vmem>>, vector<128x128xf32>
    %cst_89 = arith.constant dense<0.000000e+00> : vector<64x128xf32>
    %154 = tpu.matmul %121, %153, %cst_89 {dimension_numbers = #tpu.dot_dimension_numbers<[1], [0], [0], [1], [0, 0, 1, 1], [], []>} : vector<64x128xf32>, vector<128x128xf32>, vector<64x128xf32> -> vector<64x128xf32>
    %155 = arith.addf %152, %154 : vector<64x128xf32>
    %c1904 = arith.constant 1904 : index
    %c0_90 = arith.constant 0 : index
    %156 = vector.load %arg6[%c1904, %c0_90] : memref<2896x128xf32, #tpu.memory_space<vmem>>, vector<1x128xf32>
    %157 = vector.broadcast %156 : vector<1x128xf32> to vector<64x128xf32>
    %158 = arith.addf %155, %157 : vector<64x128xf32>
    %cst_91 = arith.constant 0.000000e+00 : f32
    %159 = vector.broadcast %cst_91 : f32 to vector<64x128xf32>
    %160 = arith.cmpf ogt, %158, %159 : vector<64x128xf32>
    %cst_92 = arith.constant 0.00999999977 : f32
    %161 = vector.broadcast %cst_92 : f32 to vector<64x128xf32>
    %162 = arith.mulf %161, %158 : vector<64x128xf32>
    %163 = arith.select %160, %158, %162 : vector<64x128xi1>, vector<64x128xf32>
    %c1912 = arith.constant 1912 : index
    %c0_93 = arith.constant 0 : index
    %164 = vector.load %arg6[%c1912, %c0_93] : memref<2896x128xf32, #tpu.memory_space<vmem>>, vector<128x128xf32>
    %cst_94 = arith.constant dense<0.000000e+00> : vector<64x128xf32>
    %165 = tpu.matmul %163, %164, %cst_94 {dimension_numbers = #tpu.dot_dimension_numbers<[1], [0], [0], [1], [0, 0, 1, 1], [], []>} : vector<64x128xf32>, vector<128x128xf32>, vector<64x128xf32> -> vector<64x128xf32>
    %c2040 = arith.constant 2040 : index
    %c0_95 = arith.constant 0 : index
    %166 = vector.load %arg6[%c2040, %c0_95] : memref<2896x128xf32, #tpu.memory_space<vmem>>, vector<1x128xf32>
    %167 = vector.broadcast %166 : vector<1x128xf32> to vector<64x128xf32>
    %168 = arith.addf %165, %167 : vector<64x128xf32>
    %cst_96 = arith.constant 0.000000e+00 : f32
    %169 = vector.broadcast %cst_96 : f32 to vector<64x128xf32>
    %170 = arith.cmpf ogt, %168, %169 : vector<64x128xf32>
    %cst_97 = arith.constant 0.00999999977 : f32
    %171 = vector.broadcast %cst_97 : f32 to vector<64x128xf32>
    %172 = arith.mulf %171, %168 : vector<64x128xf32>
    %173 = arith.select %170, %168, %172 : vector<64x128xi1>, vector<64x128xf32>
    %c2048 = arith.constant 2048 : index
    %c0_98 = arith.constant 0 : index
    %174 = vector.load %arg6[%c2048, %c0_98] : memref<2896x128xf32, #tpu.memory_space<vmem>>, vector<1x128xf32>
    %175 = vector.broadcast %174 : vector<1x128xf32> to vector<64x128xf32>
    %176 = arith.mulf %173, %175 : vector<64x128xf32>
    %c2056 = arith.constant 2056 : index
    %c0_99 = arith.constant 0 : index
    %177 = vector.load %arg6[%c2056, %c0_99] : memref<2896x128xf32, #tpu.memory_space<vmem>>, vector<1x128xf32>
    %178 = vector.broadcast %177 : vector<1x128xf32> to vector<64x128xf32>
    %179 = arith.addf %176, %178 : vector<64x128xf32>
    %180 = arith.maximumf %122, %179 : vector<64x128xf32>
    %c2320 = arith.constant 2320 : index
    %c0_100 = arith.constant 0 : index
    %181 = vector.load %arg6[%c2320, %c0_100] : memref<2896x128xf32, #tpu.memory_space<vmem>>, vector<32x128xf32>
    %c2352 = arith.constant 2352 : index
    %c0_101 = arith.constant 0 : index
    %182 = vector.load %arg6[%c2352, %c0_101] : memref<2896x128xf32, #tpu.memory_space<vmem>>, vector<128x128xf32>
    %c2480 = arith.constant 2480 : index
    %c0_102 = arith.constant 0 : index
    %183 = vector.load %arg6[%c2480, %c0_102] : memref<2896x128xf32, #tpu.memory_space<vmem>>, vector<32x128xf32>
    %c2512 = arith.constant 2512 : index
    %c0_103 = arith.constant 0 : index
    %184 = vector.load %arg6[%c2512, %c0_103] : memref<2896x128xf32, #tpu.memory_space<vmem>>, vector<1x128xf32>
    %c2520 = arith.constant 2520 : index
    %c0_104 = arith.constant 0 : index
    %185 = vector.load %arg6[%c2520, %c0_104] : memref<2896x128xf32, #tpu.memory_space<vmem>>, vector<32x128xf32>
    %c2552 = arith.constant 2552 : index
    %c0_105 = arith.constant 0 : index
    %186 = vector.load %arg6[%c2552, %c0_105] : memref<2896x128xf32, #tpu.memory_space<vmem>>, vector<32x128xf32>
    %c2584 = arith.constant 2584 : index
    %c0_106 = arith.constant 0 : index
    %187 = vector.load %arg6[%c2584, %c0_106] : memref<2896x128xf32, #tpu.memory_space<vmem>>, vector<1x128xf32>
    %c2592 = arith.constant 2592 : index
    %c0_107 = arith.constant 0 : index
    %188 = vector.load %arg6[%c2592, %c0_107] : memref<2896x128xf32, #tpu.memory_space<vmem>>, vector<32x128xf32>
    %c2624 = arith.constant 2624 : index
    %c0_108 = arith.constant 0 : index
    %189 = vector.load %arg6[%c2624, %c0_108] : memref<2896x128xf32, #tpu.memory_space<vmem>>, vector<128x128xf32>
    %c2752 = arith.constant 2752 : index
    %c0_109 = arith.constant 0 : index
    %190 = vector.load %arg6[%c2752, %c0_109] : memref<2896x128xf32, #tpu.memory_space<vmem>>, vector<1x128xf32>
    %c2760 = arith.constant 2760 : index
    %c0_110 = arith.constant 0 : index
    %191 = vector.load %arg6[%c2760, %c0_110] : memref<2896x128xf32, #tpu.memory_space<vmem>>, vector<128x128xf32>
    %c2888 = arith.constant 2888 : index
    %c0_111 = arith.constant 0 : index
    %192 = vector.load %arg6[%c2888, %c0_111] : memref<2896x128xf32, #tpu.memory_space<vmem>>, vector<1x128xf32>
    %cst_112 = arith.constant 5.000000e-01 : f32
    %193 = vector.broadcast %cst_112 : f32 to vector<64x8xf32>
    %194 = arith.cmpf ogt, %5, %193 : vector<64x8xf32>
    %195 = vector.extract_strided_slice %180 {offsets = [0, 0], sizes = [64, 32], strides = [1, 1]} : vector<64x128xf32> to vector<64x32xf32>
    %cst_113 = arith.constant 0.000000e+00 : f32
    %196 = vector.broadcast %cst_113 : f32 to vector<8x32xf32>
    %cst_114 = arith.constant 0.000000e+00 : f32
    %197 = vector.broadcast %cst_114 : f32 to vector<8x32xf32>
    %cst_115 = arith.constant 0.000000e+00 : f32
    %198 = vector.broadcast %cst_115 : f32 to vector<8x32xf32>
    %cst_116 = arith.constant 0.000000e+00 : f32
    %199 = vector.broadcast %cst_116 : f32 to vector<8x32xf32>
    %cst_117 = arith.constant 0.000000e+00 : f32
    %200 = vector.broadcast %cst_117 : f32 to vector<8x32xf32>
    %cst_118 = arith.constant 0.000000e+00 : f32
    %201 = vector.broadcast %cst_118 : f32 to vector<8x128xf32>
    %cst_119 = arith.constant dense<0.000000e+00> : vector<8x128xf32>
    %202 = tpu.matmul %200, %181, %cst_119 {dimension_numbers = #tpu.dot_dimension_numbers<[1], [0], [0], [1], [0, 0, 1, 1], [], []>} : vector<8x32xf32>, vector<32x128xf32>, vector<8x128xf32> -> vector<8x128xf32>
    %cst_120 = arith.constant dense<0.000000e+00> : vector<8x128xf32>
    %203 = tpu.matmul %201, %182, %cst_120 {dimension_numbers = #tpu.dot_dimension_numbers<[1], [0], [0], [1], [0, 0, 1, 1], [], []>} : vector<8x128xf32>, vector<128x128xf32>, vector<8x128xf32> -> vector<8x128xf32>
    %204 = arith.addf %202, %203 : vector<8x128xf32>
    %cst_121 = arith.constant dense<0.000000e+00> : vector<8x128xf32>
    %205 = tpu.matmul %196, %183, %cst_121 {dimension_numbers = #tpu.dot_dimension_numbers<[1], [0], [0], [1], [0, 0, 1, 1], [], []>} : vector<8x32xf32>, vector<32x128xf32>, vector<8x128xf32> -> vector<8x128xf32>
    %206 = arith.addf %204, %205 : vector<8x128xf32>
    %207 = vector.broadcast %184 : vector<1x128xf32> to vector<8x128xf32>
    %208 = arith.addf %206, %207 : vector<8x128xf32>
    %209 = arith.negf %208 : vector<8x128xf32>
    %210 = math.exp %209 : vector<8x128xf32>
    %cst_122 = arith.constant 1.000000e+00 : f32
    %211 = vector.broadcast %cst_122 : f32 to vector<8x128xf32>
    %212 = arith.addf %211, %210 : vector<8x128xf32>
    %213 = arith.divf %211, %212 : vector<8x128xf32>
    %214 = math.tanh %208 : vector<8x128xf32>
    %215 = vector.extract_strided_slice %213 {offsets = [0, 0], sizes = [8, 32], strides = [1, 1]} : vector<8x128xf32> to vector<8x32xf32>
    %216 = vector.extract_strided_slice %213 {offsets = [0, 32], sizes = [8, 32], strides = [1, 1]} : vector<8x128xf32> to vector<8x32xf32>
    %217 = vector.extract_strided_slice %214 {offsets = [0, 64], sizes = [8, 32], strides = [1, 1]} : vector<8x128xf32> to vector<8x32xf32>
    %218 = vector.extract_strided_slice %213 {offsets = [0, 96], sizes = [8, 32], strides = [1, 1]} : vector<8x128xf32> to vector<8x32xf32>
    %219 = arith.mulf %216, %197 : vector<8x32xf32>
    %220 = arith.mulf %215, %217 : vector<8x32xf32>
    %221 = arith.addf %219, %220 : vector<8x32xf32>
    %222 = math.tanh %221 : vector<8x32xf32>
    %223 = arith.mulf %218, %222 : vector<8x32xf32>
    %cst_123 = arith.constant dense<0.000000e+00> : vector<8x128xf32>
    %224 = tpu.matmul %223, %185, %cst_123 {dimension_numbers = #tpu.dot_dimension_numbers<[1], [0], [0], [1], [0, 0, 1, 1], [], []>} : vector<8x32xf32>, vector<32x128xf32>, vector<8x128xf32> -> vector<8x128xf32>
    %cst_124 = arith.constant dense<0.000000e+00> : vector<8x128xf32>
    %225 = tpu.matmul %198, %186, %cst_124 {dimension_numbers = #tpu.dot_dimension_numbers<[1], [0], [0], [1], [0, 0, 1, 1], [], []>} : vector<8x32xf32>, vector<32x128xf32>, vector<8x128xf32> -> vector<8x128xf32>
    %226 = arith.addf %224, %225 : vector<8x128xf32>
    %227 = vector.broadcast %187 : vector<1x128xf32> to vector<8x128xf32>
    %228 = arith.addf %226, %227 : vector<8x128xf32>
    %229 = arith.negf %228 : vector<8x128xf32>
    %230 = math.exp %229 : vector<8x128xf32>
    %cst_125 = arith.constant 1.000000e+00 : f32
    %231 = vector.broadcast %cst_125 : f32 to vector<8x128xf32>
    %232 = arith.addf %231, %230 : vector<8x128xf32>
    %233 = arith.divf %231, %232 : vector<8x128xf32>
    %234 = math.tanh %228 : vector<8x128xf32>
    %235 = vector.extract_strided_slice %233 {offsets = [0, 0], sizes = [8, 32], strides = [1, 1]} : vector<8x128xf32> to vector<8x32xf32>
    %236 = vector.extract_strided_slice %233 {offsets = [0, 32], sizes = [8, 32], strides = [1, 1]} : vector<8x128xf32> to vector<8x32xf32>
    %237 = vector.extract_strided_slice %234 {offsets = [0, 64], sizes = [8, 32], strides = [1, 1]} : vector<8x128xf32> to vector<8x32xf32>
    %238 = vector.extract_strided_slice %233 {offsets = [0, 96], sizes = [8, 32], strides = [1, 1]} : vector<8x128xf32> to vector<8x32xf32>
    %239 = arith.mulf %236, %199 : vector<8x32xf32>
    %240 = arith.mulf %235, %237 : vector<8x32xf32>
    %241 = arith.addf %239, %240 : vector<8x32xf32>
    %242 = math.tanh %241 : vector<8x32xf32>
    %243 = arith.mulf %238, %242 : vector<8x32xf32>
    %cst_126 = arith.constant dense<0.000000e+00> : vector<64x32xf32>
    %244 = tpu.matmul %5, %243, %cst_126 {dimension_numbers = #tpu.dot_dimension_numbers<[1], [0], [0], [1], [0, 0, 1, 1], [], []>} : vector<64x8xf32>, vector<8x32xf32>, vector<64x32xf32> -> vector<64x32xf32>
    %245 = arith.mulf %195, %244 : vector<64x32xf32>
    %cst_127 = arith.constant dense<0.000000e+00> : vector<64xf32>
    %246 = vector.multi_reduction <add>, %245, %cst_127 [1] : vector<64x32xf32> to vector<64xf32>
    %247 = vector.shape_cast %246 : vector<64xf32> to vector<64x1xf32>
    %cst_128 = arith.constant -1.000000e+30 : f32
    %248 = vector.shape_cast %247 : vector<64x1xf32> to vector<64x1xf32>
    %249 = vector.broadcast %248 : vector<64x1xf32> to vector<64x8xf32>
    %250 = vector.broadcast %cst_128 : f32 to vector<64x8xf32>
    %251 = arith.select %194, %249, %250 : vector<64x8xi1>, vector<64x8xf32>
    %cst_129 = arith.constant dense<0xFF800000> : vector<8xf32>
    %252 = vector.multi_reduction <maximumf>, %251, %cst_129 [0] : vector<64x8xf32> to vector<8xf32>
    %253 = vector.shape_cast %252 : vector<8xf32> to vector<1x8xf32>
    %254 = vector.broadcast %253 : vector<1x8xf32> to vector<64x8xf32>
    %255 = arith.mulf %5, %254 : vector<64x8xf32>
    %cst_130 = arith.constant dense<0.000000e+00> : vector<64xf32>
    %256 = vector.multi_reduction <add>, %255, %cst_130 [1] : vector<64x8xf32> to vector<64xf32>
    %257 = vector.shape_cast %256 : vector<64xf32> to vector<64x1xf32>
    %258 = arith.subf %247, %257 : vector<64x1xf32>
    %259 = math.exp %258 : vector<64x1xf32>
    %cst_131 = arith.constant dense<0.000000e+00> : vector<8x1xf32>
    %260 = tpu.matmul %4, %259, %cst_131 {dimension_numbers = #tpu.dot_dimension_numbers<[1], [0], [0], [1], [0, 0, 1, 1], [], []>} : vector<8x64xf32>, vector<64x1xf32>, vector<8x1xf32> -> vector<8x1xf32>
    %cst_132 = arith.constant dense<0.000000e+00> : vector<64x1xf32>
    %261 = tpu.matmul %5, %260, %cst_132 {dimension_numbers = #tpu.dot_dimension_numbers<[1], [0], [0], [1], [0, 0, 1, 1], [], []>} : vector<64x8xf32>, vector<8x1xf32>, vector<64x1xf32> -> vector<64x1xf32>
    %cst_133 = arith.constant 1.000000e-16 : f32
    %262 = vector.broadcast %cst_133 : f32 to vector<64x1xf32>
    %263 = arith.addf %261, %262 : vector<64x1xf32>
    %264 = tpu.reciprocal %263 {approx = true} : vector<64x1xf32> -> vector<64x1xf32>
    %265 = arith.mulf %259, %264 : vector<64x1xf32>
    %266 = vector.broadcast %265 : vector<64x1xf32> to vector<64x128xf32>
    %267 = arith.mulf %266, %180 : vector<64x128xf32>
    %cst_134 = arith.constant dense<0.000000e+00> : vector<8x128xf32>
    %268 = tpu.matmul %4, %267, %cst_134 {dimension_numbers = #tpu.dot_dimension_numbers<[1], [0], [0], [1], [0, 0, 1, 1], [], []>} : vector<8x64xf32>, vector<64x128xf32>, vector<8x128xf32> -> vector<8x128xf32>
    %cst_135 = arith.constant dense<0.000000e+00> : vector<8x128xf32>
    %269 = tpu.matmul %243, %181, %cst_135 {dimension_numbers = #tpu.dot_dimension_numbers<[1], [0], [0], [1], [0, 0, 1, 1], [], []>} : vector<8x32xf32>, vector<32x128xf32>, vector<8x128xf32> -> vector<8x128xf32>
    %cst_136 = arith.constant dense<0.000000e+00> : vector<8x128xf32>
    %270 = tpu.matmul %268, %182, %cst_136 {dimension_numbers = #tpu.dot_dimension_numbers<[1], [0], [0], [1], [0, 0, 1, 1], [], []>} : vector<8x128xf32>, vector<128x128xf32>, vector<8x128xf32> -> vector<8x128xf32>
    %271 = arith.addf %269, %270 : vector<8x128xf32>
    %cst_137 = arith.constant dense<0.000000e+00> : vector<8x128xf32>
    %272 = tpu.matmul %223, %183, %cst_137 {dimension_numbers = #tpu.dot_dimension_numbers<[1], [0], [0], [1], [0, 0, 1, 1], [], []>} : vector<8x32xf32>, vector<32x128xf32>, vector<8x128xf32> -> vector<8x128xf32>
    %273 = arith.addf %271, %272 : vector<8x128xf32>
    %274 = vector.broadcast %184 : vector<1x128xf32> to vector<8x128xf32>
    %275 = arith.addf %273, %274 : vector<8x128xf32>
    %276 = arith.negf %275 : vector<8x128xf32>
    %277 = math.exp %276 : vector<8x128xf32>
    %cst_138 = arith.constant 1.000000e+00 : f32
    %278 = vector.broadcast %cst_138 : f32 to vector<8x128xf32>
    %279 = arith.addf %278, %277 : vector<8x128xf32>
    %280 = arith.divf %278, %279 : vector<8x128xf32>
    %281 = math.tanh %275 : vector<8x128xf32>
    %282 = vector.extract_strided_slice %280 {offsets = [0, 0], sizes = [8, 32], strides = [1, 1]} : vector<8x128xf32> to vector<8x32xf32>
    %283 = vector.extract_strided_slice %280 {offsets = [0, 32], sizes = [8, 32], strides = [1, 1]} : vector<8x128xf32> to vector<8x32xf32>
    %284 = vector.extract_strided_slice %281 {offsets = [0, 64], sizes = [8, 32], strides = [1, 1]} : vector<8x128xf32> to vector<8x32xf32>
    %285 = vector.extract_strided_slice %280 {offsets = [0, 96], sizes = [8, 32], strides = [1, 1]} : vector<8x128xf32> to vector<8x32xf32>
    %286 = arith.mulf %283, %221 : vector<8x32xf32>
    %287 = arith.mulf %282, %284 : vector<8x32xf32>
    %288 = arith.addf %286, %287 : vector<8x32xf32>
    %289 = math.tanh %288 : vector<8x32xf32>
    %290 = arith.mulf %285, %289 : vector<8x32xf32>
    %cst_139 = arith.constant dense<0.000000e+00> : vector<8x128xf32>
    %291 = tpu.matmul %290, %185, %cst_139 {dimension_numbers = #tpu.dot_dimension_numbers<[1], [0], [0], [1], [0, 0, 1, 1], [], []>} : vector<8x32xf32>, vector<32x128xf32>, vector<8x128xf32> -> vector<8x128xf32>
    %cst_140 = arith.constant dense<0.000000e+00> : vector<8x128xf32>
    %292 = tpu.matmul %243, %186, %cst_140 {dimension_numbers = #tpu.dot_dimension_numbers<[1], [0], [0], [1], [0, 0, 1, 1], [], []>} : vector<8x32xf32>, vector<32x128xf32>, vector<8x128xf32> -> vector<8x128xf32>
    %293 = arith.addf %291, %292 : vector<8x128xf32>
    %294 = vector.broadcast %187 : vector<1x128xf32> to vector<8x128xf32>
    %295 = arith.addf %293, %294 : vector<8x128xf32>
    %296 = arith.negf %295 : vector<8x128xf32>
    %297 = math.exp %296 : vector<8x128xf32>
    %cst_141 = arith.constant 1.000000e+00 : f32
    %298 = vector.broadcast %cst_141 : f32 to vector<8x128xf32>
    %299 = arith.addf %298, %297 : vector<8x128xf32>
    %300 = arith.divf %298, %299 : vector<8x128xf32>
    %301 = math.tanh %295 : vector<8x128xf32>
    %302 = vector.extract_strided_slice %300 {offsets = [0, 0], sizes = [8, 32], strides = [1, 1]} : vector<8x128xf32> to vector<8x32xf32>
    %303 = vector.extract_strided_slice %300 {offsets = [0, 32], sizes = [8, 32], strides = [1, 1]} : vector<8x128xf32> to vector<8x32xf32>
    %304 = vector.extract_strided_slice %301 {offsets = [0, 64], sizes = [8, 32], strides = [1, 1]} : vector<8x128xf32> to vector<8x32xf32>
    %305 = vector.extract_strided_slice %300 {offsets = [0, 96], sizes = [8, 32], strides = [1, 1]} : vector<8x128xf32> to vector<8x32xf32>
    %306 = arith.mulf %303, %241 : vector<8x32xf32>
    %307 = arith.mulf %302, %304 : vector<8x32xf32>
    %308 = arith.addf %306, %307 : vector<8x32xf32>
    %309 = math.tanh %308 : vector<8x32xf32>
    %310 = arith.mulf %305, %309 : vector<8x32xf32>
    %cst_142 = arith.constant dense<0.000000e+00> : vector<64x32xf32>
    %311 = tpu.matmul %5, %310, %cst_142 {dimension_numbers = #tpu.dot_dimension_numbers<[1], [0], [0], [1], [0, 0, 1, 1], [], []>} : vector<64x8xf32>, vector<8x32xf32>, vector<64x32xf32> -> vector<64x32xf32>
    %312 = arith.mulf %195, %311 : vector<64x32xf32>
    %cst_143 = arith.constant dense<0.000000e+00> : vector<64xf32>
    %313 = vector.multi_reduction <add>, %312, %cst_143 [1] : vector<64x32xf32> to vector<64xf32>
    %314 = vector.shape_cast %313 : vector<64xf32> to vector<64x1xf32>
    %cst_144 = arith.constant -1.000000e+30 : f32
    %315 = vector.shape_cast %314 : vector<64x1xf32> to vector<64x1xf32>
    %316 = vector.broadcast %315 : vector<64x1xf32> to vector<64x8xf32>
    %317 = vector.broadcast %cst_144 : f32 to vector<64x8xf32>
    %318 = arith.select %194, %316, %317 : vector<64x8xi1>, vector<64x8xf32>
    %cst_145 = arith.constant dense<0xFF800000> : vector<8xf32>
    %319 = vector.multi_reduction <maximumf>, %318, %cst_145 [0] : vector<64x8xf32> to vector<8xf32>
    %320 = vector.shape_cast %319 : vector<8xf32> to vector<1x8xf32>
    %321 = vector.broadcast %320 : vector<1x8xf32> to vector<64x8xf32>
    %322 = arith.mulf %5, %321 : vector<64x8xf32>
    %cst_146 = arith.constant dense<0.000000e+00> : vector<64xf32>
    %323 = vector.multi_reduction <add>, %322, %cst_146 [1] : vector<64x8xf32> to vector<64xf32>
    %324 = vector.shape_cast %323 : vector<64xf32> to vector<64x1xf32>
    %325 = arith.subf %314, %324 : vector<64x1xf32>
    %326 = math.exp %325 : vector<64x1xf32>
    %cst_147 = arith.constant dense<0.000000e+00> : vector<8x1xf32>
    %327 = tpu.matmul %4, %326, %cst_147 {dimension_numbers = #tpu.dot_dimension_numbers<[1], [0], [0], [1], [0, 0, 1, 1], [], []>} : vector<8x64xf32>, vector<64x1xf32>, vector<8x1xf32> -> vector<8x1xf32>
    %cst_148 = arith.constant dense<0.000000e+00> : vector<64x1xf32>
    %328 = tpu.matmul %5, %327, %cst_148 {dimension_numbers = #tpu.dot_dimension_numbers<[1], [0], [0], [1], [0, 0, 1, 1], [], []>} : vector<64x8xf32>, vector<8x1xf32>, vector<64x1xf32> -> vector<64x1xf32>
    %cst_149 = arith.constant 1.000000e-16 : f32
    %329 = vector.broadcast %cst_149 : f32 to vector<64x1xf32>
    %330 = arith.addf %328, %329 : vector<64x1xf32>
    %331 = tpu.reciprocal %330 {approx = true} : vector<64x1xf32> -> vector<64x1xf32>
    %332 = arith.mulf %326, %331 : vector<64x1xf32>
    %333 = vector.broadcast %332 : vector<64x1xf32> to vector<64x128xf32>
    %334 = arith.mulf %333, %180 : vector<64x128xf32>
    %cst_150 = arith.constant dense<0.000000e+00> : vector<8x128xf32>
    %335 = tpu.matmul %4, %334, %cst_150 {dimension_numbers = #tpu.dot_dimension_numbers<[1], [0], [0], [1], [0, 0, 1, 1], [], []>} : vector<8x64xf32>, vector<64x128xf32>, vector<8x128xf32> -> vector<8x128xf32>
    %cst_151 = arith.constant dense<0.000000e+00> : vector<8x128xf32>
    %336 = tpu.matmul %310, %181, %cst_151 {dimension_numbers = #tpu.dot_dimension_numbers<[1], [0], [0], [1], [0, 0, 1, 1], [], []>} : vector<8x32xf32>, vector<32x128xf32>, vector<8x128xf32> -> vector<8x128xf32>
    %cst_152 = arith.constant dense<0.000000e+00> : vector<8x128xf32>
    %337 = tpu.matmul %335, %182, %cst_152 {dimension_numbers = #tpu.dot_dimension_numbers<[1], [0], [0], [1], [0, 0, 1, 1], [], []>} : vector<8x128xf32>, vector<128x128xf32>, vector<8x128xf32> -> vector<8x128xf32>
    %338 = arith.addf %336, %337 : vector<8x128xf32>
    %cst_153 = arith.constant dense<0.000000e+00> : vector<8x128xf32>
    %339 = tpu.matmul %290, %183, %cst_153 {dimension_numbers = #tpu.dot_dimension_numbers<[1], [0], [0], [1], [0, 0, 1, 1], [], []>} : vector<8x32xf32>, vector<32x128xf32>, vector<8x128xf32> -> vector<8x128xf32>
    %340 = arith.addf %338, %339 : vector<8x128xf32>
    %341 = vector.broadcast %184 : vector<1x128xf32> to vector<8x128xf32>
    %342 = arith.addf %340, %341 : vector<8x128xf32>
    %343 = arith.negf %342 : vector<8x128xf32>
    %344 = math.exp %343 : vector<8x128xf32>
    %cst_154 = arith.constant 1.000000e+00 : f32
    %345 = vector.broadcast %cst_154 : f32 to vector<8x128xf32>
    %346 = arith.addf %345, %344 : vector<8x128xf32>
    %347 = arith.divf %345, %346 : vector<8x128xf32>
    %348 = math.tanh %342 : vector<8x128xf32>
    %349 = vector.extract_strided_slice %347 {offsets = [0, 0], sizes = [8, 32], strides = [1, 1]} : vector<8x128xf32> to vector<8x32xf32>
    %350 = vector.extract_strided_slice %347 {offsets = [0, 32], sizes = [8, 32], strides = [1, 1]} : vector<8x128xf32> to vector<8x32xf32>
    %351 = vector.extract_strided_slice %348 {offsets = [0, 64], sizes = [8, 32], strides = [1, 1]} : vector<8x128xf32> to vector<8x32xf32>
    %352 = vector.extract_strided_slice %347 {offsets = [0, 96], sizes = [8, 32], strides = [1, 1]} : vector<8x128xf32> to vector<8x32xf32>
    %353 = arith.mulf %350, %288 : vector<8x32xf32>
    %354 = arith.mulf %349, %351 : vector<8x32xf32>
    %355 = arith.addf %353, %354 : vector<8x32xf32>
    %356 = math.tanh %355 : vector<8x32xf32>
    %357 = arith.mulf %352, %356 : vector<8x32xf32>
    %cst_155 = arith.constant dense<0.000000e+00> : vector<8x128xf32>
    %358 = tpu.matmul %357, %185, %cst_155 {dimension_numbers = #tpu.dot_dimension_numbers<[1], [0], [0], [1], [0, 0, 1, 1], [], []>} : vector<8x32xf32>, vector<32x128xf32>, vector<8x128xf32> -> vector<8x128xf32>
    %cst_156 = arith.constant dense<0.000000e+00> : vector<8x128xf32>
    %359 = tpu.matmul %310, %186, %cst_156 {dimension_numbers = #tpu.dot_dimension_numbers<[1], [0], [0], [1], [0, 0, 1, 1], [], []>} : vector<8x32xf32>, vector<32x128xf32>, vector<8x128xf32> -> vector<8x128xf32>
    %360 = arith.addf %358, %359 : vector<8x128xf32>
    %361 = vector.broadcast %187 : vector<1x128xf32> to vector<8x128xf32>
    %362 = arith.addf %360, %361 : vector<8x128xf32>
    %363 = arith.negf %362 : vector<8x128xf32>
    %364 = math.exp %363 : vector<8x128xf32>
    %cst_157 = arith.constant 1.000000e+00 : f32
    %365 = vector.broadcast %cst_157 : f32 to vector<8x128xf32>
    %366 = arith.addf %365, %364 : vector<8x128xf32>
    %367 = arith.divf %365, %366 : vector<8x128xf32>
    %368 = math.tanh %362 : vector<8x128xf32>
    %369 = vector.extract_strided_slice %367 {offsets = [0, 0], sizes = [8, 32], strides = [1, 1]} : vector<8x128xf32> to vector<8x32xf32>
    %370 = vector.extract_strided_slice %367 {offsets = [0, 32], sizes = [8, 32], strides = [1, 1]} : vector<8x128xf32> to vector<8x32xf32>
    %371 = vector.extract_strided_slice %368 {offsets = [0, 64], sizes = [8, 32], strides = [1, 1]} : vector<8x128xf32> to vector<8x32xf32>
    %372 = vector.extract_strided_slice %367 {offsets = [0, 96], sizes = [8, 32], strides = [1, 1]} : vector<8x128xf32> to vector<8x32xf32>
    %373 = arith.mulf %370, %308 : vector<8x32xf32>
    %374 = arith.mulf %369, %371 : vector<8x32xf32>
    %375 = arith.addf %373, %374 : vector<8x32xf32>
    %376 = math.tanh %375 : vector<8x32xf32>
    %377 = arith.mulf %372, %376 : vector<8x32xf32>
    %cst_158 = arith.constant dense<0.000000e+00> : vector<64x32xf32>
    %378 = tpu.matmul %5, %377, %cst_158 {dimension_numbers = #tpu.dot_dimension_numbers<[1], [0], [0], [1], [0, 0, 1, 1], [], []>} : vector<64x8xf32>, vector<8x32xf32>, vector<64x32xf32> -> vector<64x32xf32>
    %379 = arith.mulf %195, %378 : vector<64x32xf32>
    %cst_159 = arith.constant dense<0.000000e+00> : vector<64xf32>
    %380 = vector.multi_reduction <add>, %379, %cst_159 [1] : vector<64x32xf32> to vector<64xf32>
    %381 = vector.shape_cast %380 : vector<64xf32> to vector<64x1xf32>
    %cst_160 = arith.constant -1.000000e+30 : f32
    %382 = vector.shape_cast %381 : vector<64x1xf32> to vector<64x1xf32>
    %383 = vector.broadcast %382 : vector<64x1xf32> to vector<64x8xf32>
    %384 = vector.broadcast %cst_160 : f32 to vector<64x8xf32>
    %385 = arith.select %194, %383, %384 : vector<64x8xi1>, vector<64x8xf32>
    %cst_161 = arith.constant dense<0xFF800000> : vector<8xf32>
    %386 = vector.multi_reduction <maximumf>, %385, %cst_161 [0] : vector<64x8xf32> to vector<8xf32>
    %387 = vector.shape_cast %386 : vector<8xf32> to vector<1x8xf32>
    %388 = vector.broadcast %387 : vector<1x8xf32> to vector<64x8xf32>
    %389 = arith.mulf %5, %388 : vector<64x8xf32>
    %cst_162 = arith.constant dense<0.000000e+00> : vector<64xf32>
    %390 = vector.multi_reduction <add>, %389, %cst_162 [1] : vector<64x8xf32> to vector<64xf32>
    %391 = vector.shape_cast %390 : vector<64xf32> to vector<64x1xf32>
    %392 = arith.subf %381, %391 : vector<64x1xf32>
    %393 = math.exp %392 : vector<64x1xf32>
    %cst_163 = arith.constant dense<0.000000e+00> : vector<8x1xf32>
    %394 = tpu.matmul %4, %393, %cst_163 {dimension_numbers = #tpu.dot_dimension_numbers<[1], [0], [0], [1], [0, 0, 1, 1], [], []>} : vector<8x64xf32>, vector<64x1xf32>, vector<8x1xf32> -> vector<8x1xf32>
    %cst_164 = arith.constant dense<0.000000e+00> : vector<64x1xf32>
    %395 = tpu.matmul %5, %394, %cst_164 {dimension_numbers = #tpu.dot_dimension_numbers<[1], [0], [0], [1], [0, 0, 1, 1], [], []>} : vector<64x8xf32>, vector<8x1xf32>, vector<64x1xf32> -> vector<64x1xf32>
    %cst_165 = arith.constant 1.000000e-16 : f32
    %396 = vector.broadcast %cst_165 : f32 to vector<64x1xf32>
    %397 = arith.addf %395, %396 : vector<64x1xf32>
    %398 = tpu.reciprocal %397 {approx = true} : vector<64x1xf32> -> vector<64x1xf32>
    %399 = arith.mulf %393, %398 : vector<64x1xf32>
    %400 = vector.broadcast %399 : vector<64x1xf32> to vector<64x128xf32>
    %401 = arith.mulf %400, %180 : vector<64x128xf32>
    %cst_166 = arith.constant dense<0.000000e+00> : vector<8x128xf32>
    %402 = tpu.matmul %4, %401, %cst_166 {dimension_numbers = #tpu.dot_dimension_numbers<[1], [0], [0], [1], [0, 0, 1, 1], [], []>} : vector<8x64xf32>, vector<64x128xf32>, vector<8x128xf32> -> vector<8x128xf32>
    %cst_167 = arith.constant dense<0.000000e+00> : vector<8x128xf32>
    %403 = tpu.matmul %377, %181, %cst_167 {dimension_numbers = #tpu.dot_dimension_numbers<[1], [0], [0], [1], [0, 0, 1, 1], [], []>} : vector<8x32xf32>, vector<32x128xf32>, vector<8x128xf32> -> vector<8x128xf32>
    %cst_168 = arith.constant dense<0.000000e+00> : vector<8x128xf32>
    %404 = tpu.matmul %402, %182, %cst_168 {dimension_numbers = #tpu.dot_dimension_numbers<[1], [0], [0], [1], [0, 0, 1, 1], [], []>} : vector<8x128xf32>, vector<128x128xf32>, vector<8x128xf32> -> vector<8x128xf32>
    %405 = arith.addf %403, %404 : vector<8x128xf32>
    %cst_169 = arith.constant dense<0.000000e+00> : vector<8x128xf32>
    %406 = tpu.matmul %357, %183, %cst_169 {dimension_numbers = #tpu.dot_dimension_numbers<[1], [0], [0], [1], [0, 0, 1, 1], [], []>} : vector<8x32xf32>, vector<32x128xf32>, vector<8x128xf32> -> vector<8x128xf32>
    %407 = arith.addf %405, %406 : vector<8x128xf32>
    %408 = vector.broadcast %184 : vector<1x128xf32> to vector<8x128xf32>
    %409 = arith.addf %407, %408 : vector<8x128xf32>
    %410 = arith.negf %409 : vector<8x128xf32>
    %411 = math.exp %410 : vector<8x128xf32>
    %cst_170 = arith.constant 1.000000e+00 : f32
    %412 = vector.broadcast %cst_170 : f32 to vector<8x128xf32>
    %413 = arith.addf %412, %411 : vector<8x128xf32>
    %414 = arith.divf %412, %413 : vector<8x128xf32>
    %415 = math.tanh %409 : vector<8x128xf32>
    %416 = vector.extract_strided_slice %414 {offsets = [0, 0], sizes = [8, 32], strides = [1, 1]} : vector<8x128xf32> to vector<8x32xf32>
    %417 = vector.extract_strided_slice %414 {offsets = [0, 32], sizes = [8, 32], strides = [1, 1]} : vector<8x128xf32> to vector<8x32xf32>
    %418 = vector.extract_strided_slice %415 {offsets = [0, 64], sizes = [8, 32], strides = [1, 1]} : vector<8x128xf32> to vector<8x32xf32>
    %419 = vector.extract_strided_slice %414 {offsets = [0, 96], sizes = [8, 32], strides = [1, 1]} : vector<8x128xf32> to vector<8x32xf32>
    %420 = arith.mulf %417, %355 : vector<8x32xf32>
    %421 = arith.mulf %416, %418 : vector<8x32xf32>
    %422 = arith.addf %420, %421 : vector<8x32xf32>
    %423 = math.tanh %422 : vector<8x32xf32>
    %424 = arith.mulf %419, %423 : vector<8x32xf32>
    %cst_171 = arith.constant dense<0.000000e+00> : vector<8x128xf32>
    %425 = tpu.matmul %424, %185, %cst_171 {dimension_numbers = #tpu.dot_dimension_numbers<[1], [0], [0], [1], [0, 0, 1, 1], [], []>} : vector<8x32xf32>, vector<32x128xf32>, vector<8x128xf32> -> vector<8x128xf32>
    %cst_172 = arith.constant dense<0.000000e+00> : vector<8x128xf32>
    %426 = tpu.matmul %377, %186, %cst_172 {dimension_numbers = #tpu.dot_dimension_numbers<[1], [0], [0], [1], [0, 0, 1, 1], [], []>} : vector<8x32xf32>, vector<32x128xf32>, vector<8x128xf32> -> vector<8x128xf32>
    %427 = arith.addf %425, %426 : vector<8x128xf32>
    %428 = vector.broadcast %187 : vector<1x128xf32> to vector<8x128xf32>
    %429 = arith.addf %427, %428 : vector<8x128xf32>
    %430 = arith.negf %429 : vector<8x128xf32>
    %431 = math.exp %430 : vector<8x128xf32>
    %cst_173 = arith.constant 1.000000e+00 : f32
    %432 = vector.broadcast %cst_173 : f32 to vector<8x128xf32>
    %433 = arith.addf %432, %431 : vector<8x128xf32>
    %434 = arith.divf %432, %433 : vector<8x128xf32>
    %435 = math.tanh %429 : vector<8x128xf32>
    %436 = vector.extract_strided_slice %434 {offsets = [0, 0], sizes = [8, 32], strides = [1, 1]} : vector<8x128xf32> to vector<8x32xf32>
    %437 = vector.extract_strided_slice %434 {offsets = [0, 32], sizes = [8, 32], strides = [1, 1]} : vector<8x128xf32> to vector<8x32xf32>
    %438 = vector.extract_strided_slice %435 {offsets = [0, 64], sizes = [8, 32], strides = [1, 1]} : vector<8x128xf32> to vector<8x32xf32>
    %439 = vector.extract_strided_slice %434 {offsets = [0, 96], sizes = [8, 32], strides = [1, 1]} : vector<8x128xf32> to vector<8x32xf32>
    %440 = arith.mulf %437, %375 : vector<8x32xf32>
    %441 = arith.mulf %436, %438 : vector<8x32xf32>
    %442 = arith.addf %440, %441 : vector<8x32xf32>
    %443 = math.tanh %442 : vector<8x32xf32>
    %444 = arith.mulf %439, %443 : vector<8x32xf32>
    %cst_174 = arith.constant dense<0.000000e+00> : vector<64x32xf32>
    %445 = tpu.matmul %5, %444, %cst_174 {dimension_numbers = #tpu.dot_dimension_numbers<[1], [0], [0], [1], [0, 0, 1, 1], [], []>} : vector<64x8xf32>, vector<8x32xf32>, vector<64x32xf32> -> vector<64x32xf32>
    %446 = arith.mulf %195, %445 : vector<64x32xf32>
    %cst_175 = arith.constant dense<0.000000e+00> : vector<64xf32>
    %447 = vector.multi_reduction <add>, %446, %cst_175 [1] : vector<64x32xf32> to vector<64xf32>
    %448 = vector.shape_cast %447 : vector<64xf32> to vector<64x1xf32>
    %cst_176 = arith.constant -1.000000e+30 : f32
    %449 = vector.shape_cast %448 : vector<64x1xf32> to vector<64x1xf32>
    %450 = vector.broadcast %449 : vector<64x1xf32> to vector<64x8xf32>
    %451 = vector.broadcast %cst_176 : f32 to vector<64x8xf32>
    %452 = arith.select %194, %450, %451 : vector<64x8xi1>, vector<64x8xf32>
    %cst_177 = arith.constant dense<0xFF800000> : vector<8xf32>
    %453 = vector.multi_reduction <maximumf>, %452, %cst_177 [0] : vector<64x8xf32> to vector<8xf32>
    %454 = vector.shape_cast %453 : vector<8xf32> to vector<1x8xf32>
    %455 = vector.broadcast %454 : vector<1x8xf32> to vector<64x8xf32>
    %456 = arith.mulf %5, %455 : vector<64x8xf32>
    %cst_178 = arith.constant dense<0.000000e+00> : vector<64xf32>
    %457 = vector.multi_reduction <add>, %456, %cst_178 [1] : vector<64x8xf32> to vector<64xf32>
    %458 = vector.shape_cast %457 : vector<64xf32> to vector<64x1xf32>
    %459 = arith.subf %448, %458 : vector<64x1xf32>
    %460 = math.exp %459 : vector<64x1xf32>
    %cst_179 = arith.constant dense<0.000000e+00> : vector<8x1xf32>
    %461 = tpu.matmul %4, %460, %cst_179 {dimension_numbers = #tpu.dot_dimension_numbers<[1], [0], [0], [1], [0, 0, 1, 1], [], []>} : vector<8x64xf32>, vector<64x1xf32>, vector<8x1xf32> -> vector<8x1xf32>
    %cst_180 = arith.constant dense<0.000000e+00> : vector<64x1xf32>
    %462 = tpu.matmul %5, %461, %cst_180 {dimension_numbers = #tpu.dot_dimension_numbers<[1], [0], [0], [1], [0, 0, 1, 1], [], []>} : vector<64x8xf32>, vector<8x1xf32>, vector<64x1xf32> -> vector<64x1xf32>
    %cst_181 = arith.constant 1.000000e-16 : f32
    %463 = vector.broadcast %cst_181 : f32 to vector<64x1xf32>
    %464 = arith.addf %462, %463 : vector<64x1xf32>
    %465 = tpu.reciprocal %464 {approx = true} : vector<64x1xf32> -> vector<64x1xf32>
    %466 = arith.mulf %460, %465 : vector<64x1xf32>
    %467 = vector.broadcast %466 : vector<64x1xf32> to vector<64x128xf32>
    %468 = arith.mulf %467, %180 : vector<64x128xf32>
    %cst_182 = arith.constant dense<0.000000e+00> : vector<8x128xf32>
    %469 = tpu.matmul %4, %468, %cst_182 {dimension_numbers = #tpu.dot_dimension_numbers<[1], [0], [0], [1], [0, 0, 1, 1], [], []>} : vector<8x64xf32>, vector<64x128xf32>, vector<8x128xf32> -> vector<8x128xf32>
    %cst_183 = arith.constant dense<0.000000e+00> : vector<8x128xf32>
    %470 = tpu.matmul %444, %181, %cst_183 {dimension_numbers = #tpu.dot_dimension_numbers<[1], [0], [0], [1], [0, 0, 1, 1], [], []>} : vector<8x32xf32>, vector<32x128xf32>, vector<8x128xf32> -> vector<8x128xf32>
    %cst_184 = arith.constant dense<0.000000e+00> : vector<8x128xf32>
    %471 = tpu.matmul %469, %182, %cst_184 {dimension_numbers = #tpu.dot_dimension_numbers<[1], [0], [0], [1], [0, 0, 1, 1], [], []>} : vector<8x128xf32>, vector<128x128xf32>, vector<8x128xf32> -> vector<8x128xf32>
    %472 = arith.addf %470, %471 : vector<8x128xf32>
    %cst_185 = arith.constant dense<0.000000e+00> : vector<8x128xf32>
    %473 = tpu.matmul %424, %183, %cst_185 {dimension_numbers = #tpu.dot_dimension_numbers<[1], [0], [0], [1], [0, 0, 1, 1], [], []>} : vector<8x32xf32>, vector<32x128xf32>, vector<8x128xf32> -> vector<8x128xf32>
    %474 = arith.addf %472, %473 : vector<8x128xf32>
    %475 = vector.broadcast %184 : vector<1x128xf32> to vector<8x128xf32>
    %476 = arith.addf %474, %475 : vector<8x128xf32>
    %477 = arith.negf %476 : vector<8x128xf32>
    %478 = math.exp %477 : vector<8x128xf32>
    %cst_186 = arith.constant 1.000000e+00 : f32
    %479 = vector.broadcast %cst_186 : f32 to vector<8x128xf32>
    %480 = arith.addf %479, %478 : vector<8x128xf32>
    %481 = arith.divf %479, %480 : vector<8x128xf32>
    %482 = math.tanh %476 : vector<8x128xf32>
    %483 = vector.extract_strided_slice %481 {offsets = [0, 0], sizes = [8, 32], strides = [1, 1]} : vector<8x128xf32> to vector<8x32xf32>
    %484 = vector.extract_strided_slice %481 {offsets = [0, 32], sizes = [8, 32], strides = [1, 1]} : vector<8x128xf32> to vector<8x32xf32>
    %485 = vector.extract_strided_slice %482 {offsets = [0, 64], sizes = [8, 32], strides = [1, 1]} : vector<8x128xf32> to vector<8x32xf32>
    %486 = vector.extract_strided_slice %481 {offsets = [0, 96], sizes = [8, 32], strides = [1, 1]} : vector<8x128xf32> to vector<8x32xf32>
    %487 = arith.mulf %484, %422 : vector<8x32xf32>
    %488 = arith.mulf %483, %485 : vector<8x32xf32>
    %489 = arith.addf %487, %488 : vector<8x32xf32>
    %490 = math.tanh %489 : vector<8x32xf32>
    %491 = arith.mulf %486, %490 : vector<8x32xf32>
    %cst_187 = arith.constant dense<0.000000e+00> : vector<8x128xf32>
    %492 = tpu.matmul %491, %185, %cst_187 {dimension_numbers = #tpu.dot_dimension_numbers<[1], [0], [0], [1], [0, 0, 1, 1], [], []>} : vector<8x32xf32>, vector<32x128xf32>, vector<8x128xf32> -> vector<8x128xf32>
    %cst_188 = arith.constant dense<0.000000e+00> : vector<8x128xf32>
    %493 = tpu.matmul %444, %186, %cst_188 {dimension_numbers = #tpu.dot_dimension_numbers<[1], [0], [0], [1], [0, 0, 1, 1], [], []>} : vector<8x32xf32>, vector<32x128xf32>, vector<8x128xf32> -> vector<8x128xf32>
    %494 = arith.addf %492, %493 : vector<8x128xf32>
    %495 = vector.broadcast %187 : vector<1x128xf32> to vector<8x128xf32>
    %496 = arith.addf %494, %495 : vector<8x128xf32>
    %497 = arith.negf %496 : vector<8x128xf32>
    %498 = math.exp %497 : vector<8x128xf32>
    %cst_189 = arith.constant 1.000000e+00 : f32
    %499 = vector.broadcast %cst_189 : f32 to vector<8x128xf32>
    %500 = arith.addf %499, %498 : vector<8x128xf32>
    %501 = arith.divf %499, %500 : vector<8x128xf32>
    %502 = math.tanh %496 : vector<8x128xf32>
    %503 = vector.extract_strided_slice %501 {offsets = [0, 0], sizes = [8, 32], strides = [1, 1]} : vector<8x128xf32> to vector<8x32xf32>
    %504 = vector.extract_strided_slice %501 {offsets = [0, 32], sizes = [8, 32], strides = [1, 1]} : vector<8x128xf32> to vector<8x32xf32>
    %505 = vector.extract_strided_slice %502 {offsets = [0, 64], sizes = [8, 32], strides = [1, 1]} : vector<8x128xf32> to vector<8x32xf32>
    %506 = vector.extract_strided_slice %501 {offsets = [0, 96], sizes = [8, 32], strides = [1, 1]} : vector<8x128xf32> to vector<8x32xf32>
    %507 = arith.mulf %504, %442 : vector<8x32xf32>
    %508 = arith.mulf %503, %505 : vector<8x32xf32>
    %509 = arith.addf %507, %508 : vector<8x32xf32>
    %510 = math.tanh %509 : vector<8x32xf32>
    %511 = arith.mulf %506, %510 : vector<8x32xf32>
    %cst_190 = arith.constant dense<0.000000e+00> : vector<64x32xf32>
    %512 = tpu.matmul %5, %511, %cst_190 {dimension_numbers = #tpu.dot_dimension_numbers<[1], [0], [0], [1], [0, 0, 1, 1], [], []>} : vector<64x8xf32>, vector<8x32xf32>, vector<64x32xf32> -> vector<64x32xf32>
    %513 = arith.mulf %195, %512 : vector<64x32xf32>
    %cst_191 = arith.constant dense<0.000000e+00> : vector<64xf32>
    %514 = vector.multi_reduction <add>, %513, %cst_191 [1] : vector<64x32xf32> to vector<64xf32>
    %515 = vector.shape_cast %514 : vector<64xf32> to vector<64x1xf32>
    %cst_192 = arith.constant -1.000000e+30 : f32
    %516 = vector.shape_cast %515 : vector<64x1xf32> to vector<64x1xf32>
    %517 = vector.broadcast %516 : vector<64x1xf32> to vector<64x8xf32>
    %518 = vector.broadcast %cst_192 : f32 to vector<64x8xf32>
    %519 = arith.select %194, %517, %518 : vector<64x8xi1>, vector<64x8xf32>
    %cst_193 = arith.constant dense<0xFF800000> : vector<8xf32>
    %520 = vector.multi_reduction <maximumf>, %519, %cst_193 [0] : vector<64x8xf32> to vector<8xf32>
    %521 = vector.shape_cast %520 : vector<8xf32> to vector<1x8xf32>
    %522 = vector.broadcast %521 : vector<1x8xf32> to vector<64x8xf32>
    %523 = arith.mulf %5, %522 : vector<64x8xf32>
    %cst_194 = arith.constant dense<0.000000e+00> : vector<64xf32>
    %524 = vector.multi_reduction <add>, %523, %cst_194 [1] : vector<64x8xf32> to vector<64xf32>
    %525 = vector.shape_cast %524 : vector<64xf32> to vector<64x1xf32>
    %526 = arith.subf %515, %525 : vector<64x1xf32>
    %527 = math.exp %526 : vector<64x1xf32>
    %cst_195 = arith.constant dense<0.000000e+00> : vector<8x1xf32>
    %528 = tpu.matmul %4, %527, %cst_195 {dimension_numbers = #tpu.dot_dimension_numbers<[1], [0], [0], [1], [0, 0, 1, 1], [], []>} : vector<8x64xf32>, vector<64x1xf32>, vector<8x1xf32> -> vector<8x1xf32>
    %cst_196 = arith.constant dense<0.000000e+00> : vector<64x1xf32>
    %529 = tpu.matmul %5, %528, %cst_196 {dimension_numbers = #tpu.dot_dimension_numbers<[1], [0], [0], [1], [0, 0, 1, 1], [], []>} : vector<64x8xf32>, vector<8x1xf32>, vector<64x1xf32> -> vector<64x1xf32>
    %cst_197 = arith.constant 1.000000e-16 : f32
    %530 = vector.broadcast %cst_197 : f32 to vector<64x1xf32>
    %531 = arith.addf %529, %530 : vector<64x1xf32>
    %532 = tpu.reciprocal %531 {approx = true} : vector<64x1xf32> -> vector<64x1xf32>
    %533 = arith.mulf %527, %532 : vector<64x1xf32>
    %534 = vector.broadcast %533 : vector<64x1xf32> to vector<64x128xf32>
    %535 = arith.mulf %534, %180 : vector<64x128xf32>
    %cst_198 = arith.constant dense<0.000000e+00> : vector<8x128xf32>
    %536 = tpu.matmul %4, %535, %cst_198 {dimension_numbers = #tpu.dot_dimension_numbers<[1], [0], [0], [1], [0, 0, 1, 1], [], []>} : vector<8x64xf32>, vector<64x128xf32>, vector<8x128xf32> -> vector<8x128xf32>
    %cst_199 = arith.constant dense<0.000000e+00> : vector<8x128xf32>
    %537 = tpu.matmul %511, %188, %cst_199 {dimension_numbers = #tpu.dot_dimension_numbers<[1], [0], [0], [1], [0, 0, 1, 1], [], []>} : vector<8x32xf32>, vector<32x128xf32>, vector<8x128xf32> -> vector<8x128xf32>
    %cst_200 = arith.constant dense<0.000000e+00> : vector<8x128xf32>
    %538 = tpu.matmul %536, %189, %cst_200 {dimension_numbers = #tpu.dot_dimension_numbers<[1], [0], [0], [1], [0, 0, 1, 1], [], []>} : vector<8x128xf32>, vector<128x128xf32>, vector<8x128xf32> -> vector<8x128xf32>
    %539 = arith.addf %537, %538 : vector<8x128xf32>
    %540 = vector.broadcast %190 : vector<1x128xf32> to vector<8x128xf32>
    %541 = arith.addf %539, %540 : vector<8x128xf32>
    %cst_201 = arith.constant 0.000000e+00 : f32
    %542 = vector.broadcast %cst_201 : f32 to vector<8x128xf32>
    %543 = arith.cmpf ogt, %541, %542 : vector<8x128xf32>
    %cst_202 = arith.constant 0.00999999977 : f32
    %544 = vector.broadcast %cst_202 : f32 to vector<8x128xf32>
    %545 = arith.mulf %544, %541 : vector<8x128xf32>
    %546 = arith.select %543, %541, %545 : vector<8x128xi1>, vector<8x128xf32>
    %cst_203 = arith.constant dense<0.000000e+00> : vector<8x128xf32>
    %547 = tpu.matmul %546, %191, %cst_203 {dimension_numbers = #tpu.dot_dimension_numbers<[1], [0], [0], [1], [0, 0, 1, 1], [], []>} : vector<8x128xf32>, vector<128x128xf32>, vector<8x128xf32> -> vector<8x128xf32>
    %548 = vector.broadcast %192 : vector<1x128xf32> to vector<8x128xf32>
    %549 = arith.addf %547, %548 : vector<8x128xf32>
    %c0_204 = arith.constant 0 : index
    %c0_205 = arith.constant 0 : index
    %550 = vector.load %arg7[%c0_204, %c0_205] : memref<8x128xf32, #tpu.memory_space<vmem>>, vector<8x128xf32>
    tpu.vector_store %arg7[%c0_204, %c0_205], %549 {strides = array<i32>} : memref<8x128xf32, #tpu.memory_space<vmem>>, vector<8x128xf32>,
    return
  }
}

</mosaic_0001>

<llo_original>
// kernel: _lambda_.1
$region0: #{_lambda_.1}
  #allocation0 [shape = 'u32[]', space=smem, size = 0x4, offset = 0x4, fixed_abs, tag = 'smem constant byte address 0x4 - core index']
  #allocation1 [shape = 'u32[144,128]{1,0:T(1,128)}', space=vmem, size = 0x12000, scoped, tag = 'internal scratch']
  %s0 = inlined_call_operand.hbm [shape: f32[64,128], index: 0, kind: input, shape index: {}]
  %s1 = inlined_call_operand.hbm [shape: f32[160,128], index: 1, kind: input, shape index: {}]
  %s2 = inlined_call_operand.vmem [shape: f32[160,64], index: 2, kind: input, shape index: {}]
  %s3 = inlined_call_operand.hbm [shape: f32[64,160], index: 3, kind: input, shape index: {}]
  %s4 = inlined_call_operand.hbm [shape: f32[8,64], index: 4, kind: input, shape index: {}]
  %s5 = inlined_call_operand.vmem [shape: f32[64,8], index: 5, kind: input, shape index: {}]
  %s6 = inlined_call_operand.hbm [shape: f32[2896,128], index: 6, kind: input, shape index: {}]
  %s7 = inlined_call_operand.vmem [shape: f32[8,128], index: 7, kind: output, shape index: {}]
  %s8 = sld [smem:[#allocation0]]
  $region58: #{_lambda_.1} parent=0
    _
  %s10 = ssub.s32 1, %s8
  %s11 = scalar_select 0, %s10, %s8
  $region1: #{_lambda_.1} parent=0
    #allocation2 [shape = 'u8[32768]{0}', space=vmem, size = 0x8000, scoped, tag = 'input window, operand 0, single buffered']
    #allocation3 [shape = 's32[1]{0}', space=sflag, size = 0x4, scoped, tag = 'scoped memory for _lambda_.1']
    #allocation4 [shape = 'u8[81920]{0}', space=vmem, size = 0x14000, scoped, tag = 'input window, operand 1, single buffered']
    #allocation5 [shape = 's32[1]{0}', space=sflag, size = 0x4, scoped, tag = 'scoped memory for _lambda_.1']
    #allocation6 [shape = 'u8[65536]{0}', space=vmem, size = 0x10000, scoped, tag = 'input window, operand 3, single buffered']
    #allocation7 [shape = 'u8[4096]{0}', space=vmem, size = 0x1000, scoped, tag = 'input window, operand 4, single buffered']
    #allocation8 [shape = 's32[1]{0}', space=sflag, size = 0x4, scoped, tag = 'scoped memory for _lambda_.1']
    #allocation9 [shape = 'u8[1482752]{0}', space=vmem, size = 0x16a000, scoped, tag = 'input window, operand 6, single buffered']
    %12 = vsyncpa [#allocation3], 0
    %13 = vsyncpa [#allocation5], 0
    %14 = vsyncpa [#allocation8], 0
    // Predicated region
    $region2: #{_lambda_.1} parent=1 // pred_check
      _
    $region3: #{_lambda_.1} parent=1 // pred_check_branch
      %16 = sbr.rel (0) target = $region5
    $region4: #{_lambda_.1} parent=1 // pred_region
      %s18 = ssub.s32 1024, 1024
      %19 = vsyncadd [#allocation3], %s18
      %s20 = sshll.u32 [#allocation2], 4
      %s21 = int_to_ptr.vmem [resolvable:$true] %s20
      %26 = dma.hbm_to_vmem [thread:$0]  %s0, 1024, %s21, [#allocation3], 128, 128, 8
    $region5: #{_lambda_.1} parent=1 // pred_fallthru
      _
    // Predicated region
    $region6: #{_lambda_.1} parent=1 // pred_check
      _
    $region7: #{_lambda_.1} parent=1 // pred_check_branch
      %28 = sbr.rel (0) target = $region9
    $region8: #{_lambda_.1} parent=1 // pred_region
      %s30 = ssub.s32 2560, 2560
      %31 = vsyncadd [#allocation5], %s30
      %s32 = sshll.u32 [#allocation4], 4
      %s33 = int_to_ptr.vmem [resolvable:$true] %s32
      %38 = dma.hbm_to_vmem [thread:$0]  %s1, 2560, %s33, [#allocation5], 128, 128, 8
    $region9: #{_lambda_.1} parent=1 // pred_fallthru
      _
    // Predicated region
    $region10: #{_lambda_.1} parent=1 // pred_check
      _
    $region11: #{_lambda_.1} parent=1 // pred_check_branch
      %40 = sbr.rel (0) target = $region13
    $region12: #{_lambda_.1} parent=1 // pred_region
      _
    $region13: #{_lambda_.1} parent=1 // pred_fallthru
      _
    // Predicated region
    $region14: #{_lambda_.1} parent=1 // pred_check
      _
    $region15: #{_lambda_.1} parent=1 // pred_check_branch
      %42 = sbr.rel (0) target = $region17
    $region16: #{_lambda_.1} parent=1 // pred_region
      %s44 = ssub.s32 2048, 2048
      %45 = vsyncadd [#allocation5], %s44
      %s46 = sshll.u32 [#allocation6], 4
      %s47 = int_to_ptr.vmem [resolvable:$true] %s46
      %52 = dma.hbm_to_vmem [thread:$0]  %s3, 2048, %s47, [#allocation5], 256, 256, 16
    $region17: #{_lambda_.1} parent=1 // pred_fallthru
      _
    // Predicated region
    $region18: #{_lambda_.1} parent=1 // pred_check
      _
    $region19: #{_lambda_.1} parent=1 // pred_check_branch
      %54 = sbr.rel (0) target = $region21
    $region20: #{_lambda_.1} parent=1 // pred_region
      %s56 = ssub.s32 128, 128
      %57 = vsyncadd [#allocation8], %s56
      %s59 = sshll.u32 [#allocation7], 4
      %s60 = int_to_ptr.vmem [resolvable:$true] %s59
      %62 = dma.hbm_to_vmem [thread:$0]  %s4, 128, %s60, [#allocation8]
    $region21: #{_lambda_.1} parent=1 // pred_fallthru
      _
    // Predicated region
    $region22: #{_lambda_.1} parent=1 // pred_check
      _
    $region23: #{_lambda_.1} parent=1 // pred_check_branch
      %64 = sbr.rel (0) target = $region25
    $region24: #{_lambda_.1} parent=1 // pred_region
      _
    $region25: #{_lambda_.1} parent=1 // pred_fallthru
      _
    // Predicated region
    $region26: #{_lambda_.1} parent=1 // pred_check
      _
    $region27: #{_lambda_.1} parent=1 // pred_check_branch
      %66 = sbr.rel (0) target = $region29
    $region28: #{_lambda_.1} parent=1 // pred_region
      %s68 = ssub.s32 46336, 46336
      %69 = vsyncadd [#allocation8], %s68
      %s70 = sshll.u32 [#allocation9], 4
      %s71 = int_to_ptr.vmem [resolvable:$true] %s70
      %76 = dma.hbm_to_vmem [thread:$0]  %s6, 46336, %s71, [#allocation8], 128, 128, 8
    $region29: #{_lambda_.1} parent=1 // pred_fallthru
      _
    // Predicated region
    $region30: #{_lambda_.1} parent=1 // pred_check
      _
    $region31: #{_lambda_.1} parent=1 // pred_check_branch
      %78 = sbr.rel (0) target = $region33
    $region32: #{_lambda_.1} parent=1 // pred_region
      %79 = dma.done [#allocation3], 1024
    $region33: #{_lambda_.1} parent=1 // pred_fallthru
      _
    // Predicated region
    $region34: #{_lambda_.1} parent=1 // pred_check
      _
    $region35: #{_lambda_.1} parent=1 // pred_check_branch
      %81 = sbr.rel (0) target = $region37
    $region36: #{_lambda_.1} parent=1 // pred_region
      %82 = dma.done [#allocation5], 2560
    $region37: #{_lambda_.1} parent=1 // pred_fallthru
      _
    // Predicated region
    $region38: #{_lambda_.1} parent=1 // pred_check
      _
    $region39: #{_lambda_.1} parent=1 // pred_check_branch
      %84 = sbr.rel (0) target = $region41
    $region40: #{_lambda_.1} parent=1 // pred_region
      %85 = dma.done [#allocation5], 2048
    $region41: #{_lambda_.1} parent=1 // pred_fallthru
      _
    // Predicated region
    $region42: #{_lambda_.1} parent=1 // pred_check
      _
    $region43: #{_lambda_.1} parent=1 // pred_check_branch
      %87 = sbr.rel (0) target = $region45
    $region44: #{_lambda_.1} parent=1 // pred_region
      %88 = dma.done [#allocation8], 128
    $region45: #{_lambda_.1} parent=1 // pred_fallthru
      _
    // Predicated region
    $region46: #{_lambda_.1} parent=1 // pred_check
      _
    $region47: #{_lambda_.1} parent=1 // pred_check_branch
      %90 = sbr.rel (0) target = $region49
    $region48: #{_lambda_.1} parent=1 // pred_region
      %91 = dma.done [#allocation8], 46336
    $region49: #{_lambda_.1} parent=1 // pred_fallthru
      _
    %v92 = vld [vmem:[#allocation2] sm:$0xff]
    %v93 = vld [vmem:[#allocation2 + $0x8] sm:$0xff]
    %v94 = vld [vmem:[#allocation2 + $0x10] sm:$0xff]
    %v95 = vld [vmem:[#allocation2 + $0x18] sm:$0xff]
    %v96 = vld [vmem:[#allocation2 + $0x20] sm:$0xff]
    %v97 = vld [vmem:[#allocation2 + $0x28] sm:$0xff]
    %v98 = vld [vmem:[#allocation2 + $0x30] sm:$0xff]
    %v99 = vld [vmem:[#allocation2 + $0x38] sm:$0xff]
    %v100 = vld [vmem:[#allocation4] sm:$0xff]
    %v101 = vld [vmem:[#allocation4 + $0x8] sm:$0xff]
    %v102 = vld [vmem:[#allocation4 + $0x10] sm:$0xff]
    %v103 = vld [vmem:[#allocation4 + $0x18] sm:$0xff]
    %v104 = vld [vmem:[#allocation4 + $0x20] sm:$0xff]
    %v105 = vld [vmem:[#allocation4 + $0x28] sm:$0xff]
    %v106 = vld [vmem:[#allocation4 + $0x30] sm:$0xff]
    %v107 = vld [vmem:[#allocation4 + $0x38] sm:$0xff]
    %v108 = vld [vmem:[#allocation4 + $0x40] sm:$0xff]
    %v109 = vld [vmem:[#allocation4 + $0x48] sm:$0xff]
    %v110 = vld [vmem:[#allocation4 + $0x50] sm:$0xff]
    %v111 = vld [vmem:[#allocation4 + $0x58] sm:$0xff]
    %v112 = vld [vmem:[#allocation4 + $0x60] sm:$0xff]
    %v113 = vld [vmem:[#allocation4 + $0x68] sm:$0xff]
    %v114 = vld [vmem:[#allocation4 + $0x70] sm:$0xff]
    %v115 = vld [vmem:[#allocation4 + $0x78] sm:$0xff]
    %v116 = vld [vmem:[#allocation4 + $0x80] sm:$0xff]
    %v117 = vld [vmem:[#allocation4 + $0x88] sm:$0xff]
    %v118 = vld [vmem:[#allocation4 + $0x90] sm:$0xff]
    %v119 = vld [vmem:[#allocation4 + $0x98] sm:$0xff]
    %v120 = vld [vmem:[%s2] sm:$0xff]
    %v121 = vld [vmem:[%s2 + $0x8] sm:$0xff]
    %v122 = vld [vmem:[%s2 + $0x10] sm:$0xff]
    %v123 = vld [vmem:[%s2 + $0x18] sm:$0xff]
    %v124 = vld [vmem:[%s2 + $0x20] sm:$0xff]
    %v125 = vld [vmem:[%s2 + $0x28] sm:$0xff]
    %v126 = vld [vmem:[%s2 + $0x30] sm:$0xff]
    %v127 = vld [vmem:[%s2 + $0x38] sm:$0xff]
    %v128 = vld [vmem:[%s2 + $0x40] sm:$0xff]
    %v129 = vld [vmem:[%s2 + $0x48] sm:$0xff]
    %v130 = vld [vmem:[%s2 + $0x50] sm:$0xff]
    %v131 = vld [vmem:[%s2 + $0x58] sm:$0xff]
    %v132 = vld [vmem:[%s2 + $0x60] sm:$0xff]
    %v133 = vld [vmem:[%s2 + $0x68] sm:$0xff]
    %v134 = vld [vmem:[%s2 + $0x70] sm:$0xff]
    %v135 = vld [vmem:[%s2 + $0x78] sm:$0xff]
    %v136 = vld [vmem:[%s2 + $0x80] sm:$0xff]
    %v137 = vld [vmem:[%s2 + $0x88] sm:$0xff]
    %v138 = vld [vmem:[%s2 + $0x90] sm:$0xff]
    %v139 = vld [vmem:[%s2 + $0x98] sm:$0xff]
    %v140 = vld [vmem:[#allocation6] sm:$0xff]
    %v141 = vld [vmem:[#allocation6 + $0x8] sm:$0xff]
    %v142 = vld [vmem:[#allocation6 + $0x10] sm:$0xff]
    %v143 = vld [vmem:[#allocation6 + $0x18] sm:$0xff]
    %v144 = vld [vmem:[#allocation6 + $0x20] sm:$0xff]
    %v145 = vld [vmem:[#allocation6 + $0x28] sm:$0xff]
    %v146 = vld [vmem:[#allocation6 + $0x30] sm:$0xff]
    %v147 = vld [vmem:[#allocation6 + $0x38] sm:$0xff]
    %v148 = vld [vmem:[#allocation6 + $0x40] sm:$0xff]
    %v149 = vld [vmem:[#allocation6 + $0x48] sm:$0xff]
    %v150 = vld [vmem:[#allocation6 + $0x50] sm:$0xff]
    %v151 = vld [vmem:[#allocation6 + $0x58] sm:$0xff]
    %v152 = vld [vmem:[#allocation6 + $0x60] sm:$0xff]
    %v153 = vld [vmem:[#allocation6 + $0x68] sm:$0xff]
    %v154 = vld [vmem:[#allocation6 + $0x70] sm:$0xff]
    %v155 = vld [vmem:[#allocation6 + $0x78] sm:$0xff]
    %v156 = vld [vmem:[#allocation7] sm:$0xff]
    %v157 = vld [vmem:[%s5] sm:$0xff]
    %v158 = vld [vmem:[%s5 + $0x8] sm:$0xff]
    %v159 = vld [vmem:[%s5 + $0x10] sm:$0xff]
    %v160 = vld [vmem:[%s5 + $0x18] sm:$0xff]
    %v161 = vld [vmem:[%s5 + $0x20] sm:$0xff]
    %v162 = vld [vmem:[%s5 + $0x28] sm:$0xff]
    %v163 = vld [vmem:[%s5 + $0x30] sm:$0xff]
    %v164 = vld [vmem:[%s5 + $0x38] sm:$0xff]
    %v165 = vld [vmem:[#allocation9 + $0x810] sm:$0xff]
    %v166 = vld [vmem:[#allocation9 + $0x818] sm:$0xff]
    %v167 = vld [vmem:[#allocation9 + $0x820] sm:$0xff]
    %v168 = vld [vmem:[#allocation9 + $0x828] sm:$0xff]
    %v169 = vld [vmem:[#allocation9 + $0x830] sm:$0xff]
    %v170 = vld [vmem:[#allocation9 + $0x838] sm:$0xff]
    %v171 = vld [vmem:[#allocation9 + $0x840] sm:$0xff]
    %v172 = vld [vmem:[#allocation9 + $0x848] sm:$0xff]
    %v173 = vld [vmem:[#allocation9 + $0x850] sm:$0xff]
    %v174 = vld [vmem:[#allocation9 + $0x858] sm:$0xff]
    %v175 = vld [vmem:[#allocation9 + $0x860] sm:$0xff]
    %v176 = vld [vmem:[#allocation9 + $0x868] sm:$0xff]
    %v177 = vld [vmem:[#allocation9 + $0x870] sm:$0xff]
    %v178 = vld [vmem:[#allocation9 + $0x878] sm:$0xff]
    %v179 = vld [vmem:[#allocation9 + $0x880] sm:$0xff]
    %v180 = vld [vmem:[#allocation9 + $0x888] sm:$0xff]
    %v181 = vld [vmem:[#allocation9 + $0x890] sm:$0xff]
    %v182 = vld [vmem:[#allocation9 + $0x898] sm:$0xff]
    %v183 = vld [vmem:[#allocation9 + $0x8a0] sm:$0xff]
    %v184 = vld [vmem:[#allocation9 + $0x8a8] sm:$0xff]
    %v185 = vld [vmem:[#allocation9 + $0x8b0] sm:$0xff]
    %v186 = vld [vmem:[#allocation9 + $0x8b8] sm:$0xff]
    %v187 = vld [vmem:[#allocation9 + $0x8c0] sm:$0xff]
    %v188 = vld [vmem:[#allocation9 + $0x8c8] sm:$0xff]
    %v189 = vld [vmem:[#allocation9 + $0x8d0] sm:$0xff]
    %v190 = vld [vmem:[#allocation9 + $0x8d8] sm:$0xff]
    %v191 = vld [vmem:[#allocation9 + $0x8e0] sm:$0xff]
    %v192 = vld [vmem:[#allocation9 + $0x8e8] sm:$0xff]
    %v193 = vld [vmem:[#allocation9 + $0x8f0] sm:$0xff]
    %v194 = vld [vmem:[#allocation9 + $0x8f8] sm:$0xff]
    %v195 = vld [vmem:[#allocation9 + $0x900] sm:$0xff]
    %v196 = vld [vmem:[#allocation9 + $0x908] sm:$0xff]
    %v197 = vld [vmem:[#allocation9] sm:$0xff]
    %v198 = vld [vmem:[#allocation9 + $0x8] sm:$0xff]
    %v199 = vld [vmem:[#allocation9 + $0x10] sm:$0xff]
    %v200 = vld [vmem:[#allocation9 + $0x18] sm:$0xff]
    %v201 = vld [vmem:[#allocation9 + $0x20] sm:$0xff]
    %v202 = vld [vmem:[#allocation9 + $0x28] sm:$0xff]
    %v203 = vld [vmem:[#allocation9 + $0x30] sm:$0xff]
    %v204 = vld [vmem:[#allocation9 + $0x38] sm:$0xff]
    %v205 = vld [vmem:[#allocation9 + $0x40] sm:$0xff]
    %v206 = vld [vmem:[#allocation9 + $0x48] sm:$0xff]
    %v207 = vld [vmem:[#allocation9 + $0x50] sm:$0xff]
    %v208 = vld [vmem:[#allocation9 + $0x58] sm:$0xff]
    %v209 = vld [vmem:[#allocation9 + $0x60] sm:$0xff]
    %v210 = vld [vmem:[#allocation9 + $0x68] sm:$0xff]
    %v211 = vld [vmem:[#allocation9 + $0x70] sm:$0xff]
    %v212 = vld [vmem:[#allocation9 + $0x78] sm:$0xff]
    %v213 = vld [vmem:[#allocation9 + $0x80] sm:$0x1]
    %v214 = vlaneseq
    %v215 = vshrl.u32 %v214, 7
    %v216 = vsub.s32 0, %v215
    %v217 = vrot.slane %v213, %v216
    %218 = vmatprep.subr.mxu0 0.0
    %219 = vmatpush1.msra.mxu0 %v212
    %220 = vmatprep.subr.mxu0 0.0
    %221 = vmatpush1.msra.mxu0 %v211
    %222 = vmatprep.subr.mxu0 0.0
    %223 = vmatpush1.msra.mxu0 %v210
    %224 = vmatprep.subr.mxu0 0.0
    %225 = vmatpush1.msra.mxu0 %v209
    %226 = vmatprep.subr.mxu0 0.0
    %227 = vmatpush1.msra.mxu0 %v208
    %228 = vmatprep.subr.mxu0 0.0
    %229 = vmatpush1.msra.mxu0 %v207
    %230 = vmatprep.subr.mxu0 0.0
    %231 = vmatpush1.msra.mxu0 %v206
    %232 = vmatprep.subr.mxu0 0.0
    %233 = vmatpush1.msra.mxu0 %v205
    %234 = vmatprep.subr.mxu0 0.0
    %235 = vmatpush1.msra.mxu0 %v204
    %236 = vmatprep.subr.mxu0 0.0
    %237 = vmatpush1.msra.mxu0 %v203
    %238 = vmatprep.subr.mxu0 0.0
    %239 = vmatpush1.msra.mxu0 %v202
    %240 = vmatprep.subr.mxu0 0.0
    %241 = vmatpush1.msra.mxu0 %v201
    %242 = vmatprep.subr.mxu0 0.0
    %243 = vmatpush1.msra.mxu0 %v200
    %244 = vmatprep.subr.mxu0 0.0
    %245 = vmatpush1.msra.mxu0 %v199
    %246 = vmatprep.subr.mxu0 0.0
    %247 = vmatpush1.msra.mxu0 %v198
    %248 = vmatprep.subr.mxu0 0.0
    %249 = vmatpush1.msra.mxu0 %v197
    %250 = vmatprep.subr.mxu0 0.0
    %251 = vmatpush2.msra.mxu0 0.0
    %252 = vmatprep.subr.mxu0 0.0
    %253 = vmatpush2.msra.mxu0 0.0
    %254 = vmatprep.subr.mxu0 0.0
    %255 = vmatpush2.msra.mxu0 0.0
    %256 = vmatprep.subr.mxu0 0.0
    %257 = vmatpush2.msra.mxu0 0.0
    %258 = vmatprep.subr.mxu0 0.0
    %259 = vmatpush2.msra.mxu0 0.0
    %260 = vmatprep.subr.mxu0 0.0
    %261 = vmatpush2.msra.mxu0 0.0
    %262 = vmatprep.subr.mxu0 0.0
    %263 = vmatpush2.msra.mxu0 0.0
    %264 = vmatprep.subr.mxu0 0.0
    %265 = vmatpush2.msra.mxu0 0.0
    %266 = vmatprep.subr.mxu0 0.0
    %267 = vmatpush2.msra.mxu0 0.0
    %268 = vmatprep.subr.mxu0 0.0
    %269 = vmatpush2.msra.mxu0 0.0
    %270 = vmatprep.subr.mxu0 0.0
    %271 = vmatpush2.msra.mxu0 0.0
    %272 = vmatprep.subr.mxu0 0.0
    %273 = vmatpush2.msra.mxu0 0.0
    %274 = vmatprep.subr.mxu0 0.0
    %275 = vmatpush2.msra.mxu0 0.0
    %276 = vmatprep.subr.mxu0 0.0
    %277 = vmatpush2.msra.mxu0 0.0
    %278 = vmatprep.subr.mxu0 0.0
    %279 = vmatpush2.msra.mxu0 0.0
    %280 = vmatprep.subr.mxu0 0.0
    %281 = vmatpush2.msra.mxu0 0.0
    %282 = vmatprep.mubr.f32.mxu0 0.0
    %283 = vmatmul.mubr.f32.gmra.mxu0 %v100
    %v284 = vpop.f32.mrf.mxu0
    %v285 = vadd.f32 %v217, %v284
    %v286 = vpop.f32.mrf.mxu0
    %287 = vmatprep.mubr.f32.mxu0 0.0
    %288 = vmatmul.mubr.f32.gmra.mxu0 %v101
    %v289 = vpop.f32.mrf.mxu0
    %v290 = vadd.f32 %v217, %v289
    %v291 = vpop.f32.mrf.mxu0
    %292 = vmatprep.mubr.f32.mxu0 0.0
    %293 = vmatmul.mubr.f32.gmra.mxu0 %v102
    %v294 = vpop.f32.mrf.mxu0
    %v295 = vadd.f32 %v217, %v294
    %v296 = vpop.f32.mrf.mxu0
    %297 = vmatprep.mubr.f32.mxu0 0.0
    %298 = vmatmul.mubr.f32.gmra.mxu0 %v103
    %v299 = vpop.f32.mrf.mxu0
    %v300 = vadd.f32 %v217, %v299
    %v301 = vpop.f32.mrf.mxu0
    %302 = vmatprep.mubr.f32.mxu0 0.0
    %303 = vmatmul.mubr.f32.gmra.mxu0 %v104
    %v304 = vpop.f32.mrf.mxu0
    %v305 = vadd.f32 %v217, %v304
    %v306 = vpop.f32.mrf.mxu0
    %307 = vmatprep.mubr.f32.mxu0 0.0
    %308 = vmatmul.mubr.f32.gmra.mxu0 %v105
    %v309 = vpop.f32.mrf.mxu0
    %v310 = vadd.f32 %v217, %v309
    %v311 = vpop.f32.mrf.mxu0
    %312 = vmatprep.mubr.f32.mxu0 0.0
    %313 = vmatmul.mubr.f32.gmra.mxu0 %v106
    %v314 = vpop.f32.mrf.mxu0
    %v315 = vadd.f32 %v217, %v314
    %v316 = vpop.f32.mrf.mxu0
    %317 = vmatprep.mubr.f32.mxu0 0.0
    %318 = vmatmul.mubr.f32.gmra.mxu0 %v107
    %v319 = vpop.f32.mrf.mxu0
    %v320 = vadd.f32 %v217, %v319
    %v321 = vpop.f32.mrf.mxu0
    %322 = vmatprep.mubr.f32.mxu0 0.0
    %323 = vmatmul.mubr.f32.gmra.mxu0 %v108
    %v324 = vpop.f32.mrf.mxu0
    %v325 = vadd.f32 %v217, %v324
    %v326 = vpop.f32.mrf.mxu0
    %327 = vmatprep.mubr.f32.mxu0 0.0
    %328 = vmatmul.mubr.f32.gmra.mxu0 %v109
    %v329 = vpop.f32.mrf.mxu0
    %v330 = vadd.f32 %v217, %v329
    %v331 = vpop.f32.mrf.mxu0
    %332 = vmatprep.mubr.f32.mxu0 0.0
    %333 = vmatmul.mubr.f32.gmra.mxu0 %v110
    %v334 = vpop.f32.mrf.mxu0
    %v335 = vadd.f32 %v217, %v334
    %v336 = vpop.f32.mrf.mxu0
    %337 = vmatprep.mubr.f32.mxu0 0.0
    %338 = vmatmul.mubr.f32.gmra.mxu0 %v111
    %v339 = vpop.f32.mrf.mxu0
    %v340 = vadd.f32 %v217, %v339
    %v341 = vpop.f32.mrf.mxu0
    %342 = vmatprep.mubr.f32.mxu0 0.0
    %343 = vmatmul.mubr.f32.gmra.mxu0 %v112
    %v344 = vpop.f32.mrf.mxu0
    %v345 = vadd.f32 %v217, %v344
    %v346 = vpop.f32.mrf.mxu0
    %347 = vmatprep.mubr.f32.mxu0 0.0
    %348 = vmatmul.mubr.f32.gmra.mxu0 %v113
    %v349 = vpop.f32.mrf.mxu0
    %v350 = vadd.f32 %v217, %v349
    %v351 = vpop.f32.mrf.mxu0
    %352 = vmatprep.mubr.f32.mxu0 0.0
    %353 = vmatmul.mubr.f32.gmra.mxu0 %v114
    %v354 = vpop.f32.mrf.mxu0
    %v355 = vadd.f32 %v217, %v354
    %v356 = vpop.f32.mrf.mxu0
    %357 = vmatprep.mubr.f32.mxu0 0.0
    %358 = vmatmul.mubr.f32.gmra.mxu0 %v115
    %v359 = vpop.f32.mrf.mxu0
    %v360 = vadd.f32 %v217, %v359
    %v361 = vpop.f32.mrf.mxu0
    %362 = vmatprep.mubr.f32.mxu0 0.0
    %363 = vmatmul.mubr.f32.gmra.mxu0 %v116
    %v364 = vpop.f32.mrf.mxu0
    %v365 = vadd.f32 %v217, %v364
    %v366 = vpop.f32.mrf.mxu0
    %367 = vmatprep.mubr.f32.mxu0 0.0
    %368 = vmatmul.mubr.f32.gmra.mxu0 %v117
    %v369 = vpop.f32.mrf.mxu0
    %v370 = vadd.f32 %v217, %v369
    %v371 = vpop.f32.mrf.mxu0
    %372 = vmatprep.mubr.f32.mxu0 0.0
    %373 = vmatmul.mubr.f32.gmra.mxu0 %v118
    %v374 = vpop.f32.mrf.mxu0
    %v375 = vadd.f32 %v217, %v374
    %v376 = vpop.f32.mrf.mxu0
    %377 = vmatprep.mubr.f32.mxu0 0.0
    %378 = vmatmul.mubr.f32.gmra.mxu0 %v119
    %v379 = vpop.f32.mrf.mxu0
    %v380 = vadd.f32 %v217, %v379
    %v381 = vpop.f32.mrf.mxu0
    %382 = vdwg.mxu0
    %vm383 = vcmp.gt.f32.partialorder %v285, 0.0
    %vm384 = vcmp.gt.f32.partialorder %v290, 0.0
    %vm385 = vcmp.gt.f32.partialorder %v295, 0.0
    %vm386 = vcmp.gt.f32.partialorder %v300, 0.0
    %vm387 = vcmp.gt.f32.partialorder %v305, 0.0
    %vm388 = vcmp.gt.f32.partialorder %v310, 0.0
    %vm389 = vcmp.gt.f32.partialorder %v315, 0.0
    %vm390 = vcmp.gt.f32.partialorder %v320, 0.0
    %vm391 = vcmp.gt.f32.partialorder %v325, 0.0
    %vm392 = vcmp.gt.f32.partialorder %v330, 0.0
    %vm393 = vcmp.gt.f32.partialorder %v335, 0.0
    %vm394 = vcmp.gt.f32.partialorder %v340, 0.0
    %vm395 = vcmp.gt.f32.partialorder %v345, 0.0
    %vm396 = vcmp.gt.f32.partialorder %v350, 0.0
    %vm397 = vcmp.gt.f32.partialorder %v355, 0.0
    %vm398 = vcmp.gt.f32.partialorder %v360, 0.0
    %vm399 = vcmp.gt.f32.partialorder %v365, 0.0
    %vm400 = vcmp.gt.f32.partialorder %v370, 0.0
    %vm401 = vcmp.gt.f32.partialorder %v375, 0.0
    %vm402 = vcmp.gt.f32.partialorder %v380, 0.0
    %v403 = vmul.f32 %v285, 0.01
    %v404 = vmul.f32 %v290, 0.01
    %v405 = vmul.f32 %v295, 0.01
    %v406 = vmul.f32 %v300, 0.01
    %v407 = vmul.f32 %v305, 0.01
    %v408 = vmul.f32 %v310, 0.01
    %v409 = vmul.f32 %v315, 0.01
    %v410 = vmul.f32 %v320, 0.01
    %v411 = vmul.f32 %v325, 0.01
    %v412 = vmul.f32 %v330, 0.01
    %v413 = vmul.f32 %v335, 0.01
    %v414 = vmul.f32 %v340, 0.01
    %v415 = vmul.f32 %v345, 0.01
    %v416 = vmul.f32 %v350, 0.01
    %v417 = vmul.f32 %v355, 0.01
    %v418 = vmul.f32 %v360, 0.01
    %v419 = vmul.f32 %v365, 0.01
    %v420 = vmul.f32 %v370, 0.01
    %v421 = vmul.f32 %v375, 0.01
    %v422 = vmul.f32 %v380, 0.01
    %v423 = vsel %vm383, %v285, %v403
    %v424 = vsel %vm384, %v290, %v404
    %v425 = vsel %vm385, %v295, %v405
    %v426 = vsel %vm386, %v300, %v406
    %v427 = vsel %vm387, %v305, %v407
    %v428 = vsel %vm388, %v310, %v408
    %v429 = vsel %vm389, %v315, %v409
    %v430 = vsel %vm390, %v320, %v410
    %v431 = vsel %vm391, %v325, %v411
    %v432 = vsel %vm392, %v330, %v412
    %v433 = vsel %vm393, %v335, %v413
    %v434 = vsel %vm394, %v340, %v414
    %v435 = vsel %vm395, %v345, %v415
    %v436 = vsel %vm396, %v350, %v416
    %v437 = vsel %vm397, %v355, %v417
    %v438 = vsel %vm398, %v360, %v418
    %v439 = vsel %vm399, %v365, %v419
    %v440 = vsel %vm400, %v370, %v420
    %v441 = vsel %vm401, %v375, %v421
    %v442 = vsel %vm402, %v380, %v422
    %v443 = vld [vmem:[#allocation9 + $0x88] sm:$0xff]
    %v444 = vld [vmem:[#allocation9 + $0x90] sm:$0xff]
    %v445 = vld [vmem:[#allocation9 + $0x98] sm:$0xff]
    %v446 = vld [vmem:[#allocation9 + $0xa0] sm:$0xff]
    %v447 = vld [vmem:[#allocation9 + $0xa8] sm:$0xff]
    %v448 = vld [vmem:[#allocation9 + $0xb0] sm:$0xff]
    %v449 = vld [vmem:[#allocation9 + $0xb8] sm:$0xff]
    %v450 = vld [vmem:[#allocation9 + $0xc0] sm:$0xff]
    %v451 = vld [vmem:[#allocation9 + $0xc8] sm:$0xff]
    %v452 = vld [vmem:[#allocation9 + $0xd0] sm:$0xff]
    %v453 = vld [vmem:[#allocation9 + $0xd8] sm:$0xff]
    %v454 = vld [vmem:[#allocation9 + $0xe0] sm:$0xff]
    %v455 = vld [vmem:[#allocation9 + $0xe8] sm:$0xff]
    %v456 = vld [vmem:[#allocation9 + $0xf0] sm:$0xff]
    %v457 = vld [vmem:[#allocation9 + $0xf8] sm:$0xff]
    %v458 = vld [vmem:[#allocation9 + $0x100] sm:$0xff]
    %v459 = vld [vmem:[#allocation9 + $0x108] sm:$0x1]
    %v460 = vlaneseq
    %v461 = vshrl.u32 %v460, 7
    %v462 = vsub.s32 0, %v461
    %v463 = vrot.slane %v459, %v462
    %464 = vmatprep.subr.mxu0 0.0
    %465 = vmatpush1.msra.mxu0 %v458
    %466 = vmatprep.subr.mxu0 0.0
    %467 = vmatpush1.msra.mxu0 %v457
    %468 = vmatprep.subr.mxu0 0.0
    %469 = vmatpush1.msra.mxu0 %v456
    %470 = vmatprep.subr.mxu0 0.0
    %471 = vmatpush1.msra.mxu0 %v455
    %472 = vmatprep.subr.mxu0 0.0
    %473 = vmatpush1.msra.mxu0 %v454
    %474 = vmatprep.subr.mxu0 0.0
    %475 = vmatpush1.msra.mxu0 %v453
    %476 = vmatprep.subr.mxu0 0.0
    %477 = vmatpush1.msra.mxu0 %v452
    %478 = vmatprep.subr.mxu0 0.0
    %479 = vmatpush1.msra.mxu0 %v451
    %480 = vmatprep.subr.mxu0 0.0
    %481 = vmatpush1.msra.mxu0 %v450
    %482 = vmatprep.subr.mxu0 0.0
    %483 = vmatpush1.msra.mxu0 %v449
    %484 = vmatprep.subr.mxu0 0.0
    %485 = vmatpush1.msra.mxu0 %v448
    %486 = vmatprep.subr.mxu0 0.0
    %487 = vmatpush1.msra.mxu0 %v447
    %488 = vmatprep.subr.mxu0 0.0
    %489 = vmatpush1.msra.mxu0 %v446
    %490 = vmatprep.subr.mxu0 0.0
    %491 = vmatpush1.msra.mxu0 %v445
    %492 = vmatprep.subr.mxu0 0.0
    %493 = vmatpush1.msra.mxu0 %v444
    %494 = vmatprep.subr.mxu0 0.0
    %495 = vmatpush1.msra.mxu0 %v443
    %496 = vmatprep.subr.mxu0 0.0
    %497 = vmatpush2.msra.mxu0 0.0
    %498 = vmatprep.subr.mxu0 0.0
    %499 = vmatpush2.msra.mxu0 0.0
    %500 = vmatprep.subr.mxu0 0.0
    %501 = vmatpush2.msra.mxu0 0.0
    %502 = vmatprep.subr.mxu0 0.0
    %503 = vmatpush2.msra.mxu0 0.0
    %504 = vmatprep.subr.mxu0 0.0
    %505 = vmatpush2.msra.mxu0 0.0
    %506 = vmatprep.subr.mxu0 0.0
    %507 = vmatpush2.msra.mxu0 0.0
    %508 = vmatprep.subr.mxu0 0.0
    %509 = vmatpush2.msra.mxu0 0.0
    %510 = vmatprep.subr.mxu0 0.0
    %511 = vmatpush2.msra.mxu0 0.0
    %512 = vmatprep.subr.mxu0 0.0
    %513 = vmatpush2.msra.mxu0 0.0
    %514 = vmatprep.subr.mxu0 0.0
    %515 = vmatpush2.msra.mxu0 0.0
    %516 = vmatprep.subr.mxu0 0.0
    %517 = vmatpush2.msra.mxu0 0.0
    %518 = vmatprep.subr.mxu0 0.0
    %519 = vmatpush2.msra.mxu0 0.0
    %520 = vmatprep.subr.mxu0 0.0
    %521 = vmatpush2.msra.mxu0 0.0
    %522 = vmatprep.subr.mxu0 0.0
    %523 = vmatpush2.msra.mxu0 0.0
    %524 = vmatprep.subr.mxu0 0.0
    %525 = vmatpush2.msra.mxu0 0.0
    %526 = vmatprep.subr.mxu0 0.0
    %527 = vmatpush2.msra.mxu0 0.0
    %528 = vmatprep.mubr.f32.mxu0 0.0
    %529 = vmatmul.mubr.f32.gmra.mxu0 %v423
    %v530 = vpop.f32.mrf.mxu0
    %v531 = vadd.f32 %v463, %v530
    %v532 = vpop.f32.mrf.mxu0
    %533 = vmatprep.mubr.f32.mxu0 0.0
    %534 = vmatmul.mubr.f32.gmra.mxu0 %v424
    %v535 = vpop.f32.mrf.mxu0
    %v536 = vadd.f32 %v463, %v535
    %v537 = vpop.f32.mrf.mxu0
    %538 = vmatprep.mubr.f32.mxu0 0.0
    %539 = vmatmul.mubr.f32.gmra.mxu0 %v425
    %v540 = vpop.f32.mrf.mxu0
    %v541 = vadd.f32 %v463, %v540
    %v542 = vpop.f32.mrf.mxu0
    %543 = vmatprep.mubr.f32.mxu0 0.0
    %544 = vmatmul.mubr.f32.gmra.mxu0 %v426
    %v545 = vpop.f32.mrf.mxu0
    %v546 = vadd.f32 %v463, %v545
    %v547 = vpop.f32.mrf.mxu0
    %548 = vmatprep.mubr.f32.mxu0 0.0
    %549 = vmatmul.mubr.f32.gmra.mxu0 %v427
    %v550 = vpop.f32.mrf.mxu0
    %v551 = vadd.f32 %v463, %v550
    %v552 = vpop.f32.mrf.mxu0
    %553 = vmatprep.mubr.f32.mxu0 0.0
    %554 = vmatmul.mubr.f32.gmra.mxu0 %v428
    %v555 = vpop.f32.mrf.mxu0
    %v556 = vadd.f32 %v463, %v555
    %v557 = vpop.f32.mrf.mxu0
    %558 = vmatprep.mubr.f32.mxu0 0.0
    %559 = vmatmul.mubr.f32.gmra.mxu0 %v429
    %v560 = vpop.f32.mrf.mxu0
    %v561 = vadd.f32 %v463, %v560
    %v562 = vpop.f32.mrf.mxu0
    %563 = vmatprep.mubr.f32.mxu0 0.0
    %564 = vmatmul.mubr.f32.gmra.mxu0 %v430
    %v565 = vpop.f32.mrf.mxu0
    %v566 = vadd.f32 %v463, %v565
    %v567 = vpop.f32.mrf.mxu0
    %568 = vmatprep.mubr.f32.mxu0 0.0
    %569 = vmatmul.mubr.f32.gmra.mxu0 %v431
    %v570 = vpop.f32.mrf.mxu0
    %v571 = vadd.f32 %v463, %v570
    %v572 = vpop.f32.mrf.mxu0
    %573 = vmatprep.mubr.f32.mxu0 0.0
    %574 = vmatmul.mubr.f32.gmra.mxu0 %v432
    %v575 = vpop.f32.mrf.mxu0
    %v576 = vadd.f32 %v463, %v575
    %v577 = vpop.f32.mrf.mxu0
    %578 = vmatprep.mubr.f32.mxu0 0.0
    %579 = vmatmul.mubr.f32.gmra.mxu0 %v433
    %v580 = vpop.f32.mrf.mxu0
    %v581 = vadd.f32 %v463, %v580
    %v582 = vpop.f32.mrf.mxu0
    %583 = vmatprep.mubr.f32.mxu0 0.0
    %584 = vmatmul.mubr.f32.gmra.mxu0 %v434
    %v585 = vpop.f32.mrf.mxu0
    %v586 = vadd.f32 %v463, %v585
    %v587 = vpop.f32.mrf.mxu0
    %588 = vmatprep.mubr.f32.mxu0 0.0
    %589 = vmatmul.mubr.f32.gmra.mxu0 %v435
    %v590 = vpop.f32.mrf.mxu0
    %v591 = vadd.f32 %v463, %v590
    %v592 = vpop.f32.mrf.mxu0
    %593 = vmatprep.mubr.f32.mxu0 0.0
    %594 = vmatmul.mubr.f32.gmra.mxu0 %v436
    %v595 = vpop.f32.mrf.mxu0
    %v596 = vadd.f32 %v463, %v595
    %v597 = vpop.f32.mrf.mxu0
    %598 = vmatprep.mubr.f32.mxu0 0.0
    %599 = vmatmul.mubr.f32.gmra.mxu0 %v437
    %v600 = vpop.f32.mrf.mxu0
    %v601 = vadd.f32 %v463, %v600
    %v602 = vpop.f32.mrf.mxu0
    %603 = vmatprep.mubr.f32.mxu0 0.0
    %604 = vmatmul.mubr.f32.gmra.mxu0 %v438
    %v605 = vpop.f32.mrf.mxu0
    %v606 = vadd.f32 %v463, %v605
    %v607 = vpop.f32.mrf.mxu0
    %608 = vmatprep.mubr.f32.mxu0 0.0
    %609 = vmatmul.mubr.f32.gmra.mxu0 %v439
    %v610 = vpop.f32.mrf.mxu0
    %v611 = vadd.f32 %v463, %v610
    %v612 = vpop.f32.mrf.mxu0
    %613 = vmatprep.mubr.f32.mxu0 0.0
    %614 = vmatmul.mubr.f32.gmra.mxu0 %v440
    %v615 = vpop.f32.mrf.mxu0
    %v616 = vadd.f32 %v463, %v615
    %v617 = vpop.f32.mrf.mxu0
    %618 = vmatprep.mubr.f32.mxu0 0.0
    %619 = vmatmul.mubr.f32.gmra.mxu0 %v441
    %v620 = vpop.f32.mrf.mxu0
    %v621 = vadd.f32 %v463, %v620
    %v622 = vpop.f32.mrf.mxu0
    %623 = vmatprep.mubr.f32.mxu0 0.0
    %624 = vmatmul.mubr.f32.gmra.mxu0 %v442
    %v625 = vpop.f32.mrf.mxu0
    %v626 = vadd.f32 %v463, %v625
    %v627 = vpop.f32.mrf.mxu0
    %628 = vdwg.mxu0
    %vm629 = vcmp.gt.f32.partialorder %v531, 0.0
    %vm630 = vcmp.gt.f32.partialorder %v536, 0.0
    %vm631 = vcmp.gt.f32.partialorder %v541, 0.0
    %vm632 = vcmp.gt.f32.partialorder %v546, 0.0
    %vm633 = vcmp.gt.f32.partialorder %v551, 0.0
    %vm634 = vcmp.gt.f32.partialorder %v556, 0.0
    %vm635 = vcmp.gt.f32.partialorder %v561, 0.0
    %vm636 = vcmp.gt.f32.partialorder %v566, 0.0
    %vm637 = vcmp.gt.f32.partialorder %v571, 0.0
    %vm638 = vcmp.gt.f32.partialorder %v576, 0.0
    %vm639 = vcmp.gt.f32.partialorder %v581, 0.0
    %vm640 = vcmp.gt.f32.partialorder %v586, 0.0
    %vm641 = vcmp.gt.f32.partialorder %v591, 0.0
    %vm642 = vcmp.gt.f32.partialorder %v596, 0.0
    %vm643 = vcmp.gt.f32.partialorder %v601, 0.0
    %vm644 = vcmp.gt.f32.partialorder %v606, 0.0
    %vm645 = vcmp.gt.f32.partialorder %v611, 0.0
    %vm646 = vcmp.gt.f32.partialorder %v616, 0.0
    %vm647 = vcmp.gt.f32.partialorder %v621, 0.0
    %vm648 = vcmp.gt.f32.partialorder %v626, 0.0
    %v649 = vmin.f32 %v531, 0.0
    %v650 = vmin.f32 %v536, 0.0
    %v651 = vmin.f32 %v541, 0.0
    %v652 = vmin.f32 %v546, 0.0
    %v653 = vmin.f32 %v551, 0.0
    %v654 = vmin.f32 %v556, 0.0
    %v655 = vmin.f32 %v561, 0.0
    %v656 = vmin.f32 %v566, 0.0
    %v657 = vmin.f32 %v571, 0.0
    %v658 = vmin.f32 %v576, 0.0
    %v659 = vmin.f32 %v581, 0.0
    %v660 = vmin.f32 %v586, 0.0
    %v661 = vmin.f32 %v591, 0.0
    %v662 = vmin.f32 %v596, 0.0
    %v663 = vmin.f32 %v601, 0.0
    %v664 = vmin.f32 %v606, 0.0
    %v665 = vmin.f32 %v611, 0.0
    %v666 = vmin.f32 %v616, 0.0
    %v667 = vmin.f32 %v621, 0.0
    %v668 = vmin.f32 %v626, 0.0
    %v669 = vmul.f32 %v649, 1.442695
    %v670 = vpow.pop %v669
    %v671 = vmul.f32 %v650, 1.442695
    %v672 = vpow.pop %v671
    %v673 = vmul.f32 %v651, 1.442695
    %v674 = vpow.pop %v673
    %v675 = vmul.f32 %v652, 1.442695
    %v676 = vpow.pop %v675
    %v677 = vmul.f32 %v653, 1.442695
    %v678 = vpow.pop %v677
    %v679 = vmul.f32 %v654, 1.442695
    %v680 = vpow.pop %v679
    %v681 = vmul.f32 %v655, 1.442695
    %v682 = vpow.pop %v681
    %v683 = vmul.f32 %v656, 1.442695
    %v684 = vpow.pop %v683
    %v685 = vmul.f32 %v657, 1.442695
    %v686 = vpow.pop %v685
    %v687 = vmul.f32 %v658, 1.442695
    %v688 = vpow.pop %v687
    %v689 = vmul.f32 %v659, 1.442695
    %v690 = vpow.pop %v689
    %v691 = vmul.f32 %v660, 1.442695
    %v692 = vpow.pop %v691
    %v693 = vmul.f32 %v661, 1.442695
    %v694 = vpow.pop %v693
    %v695 = vmul.f32 %v662, 1.442695
    %v696 = vpow.pop %v695
    %v697 = vmul.f32 %v663, 1.442695
    %v698 = vpow.pop %v697
    %v699 = vmul.f32 %v664, 1.442695
    %v700 = vpow.pop %v699
    %v701 = vmul.f32 %v665, 1.442695
    %v702 = vpow.pop %v701
    %v703 = vmul.f32 %v666, 1.442695
    %v704 = vpow.pop %v703
    %v705 = vmul.f32 %v667, 1.442695
    %v706 = vpow.pop %v705
    %v707 = vmul.f32 %v668, 1.442695
    %v708 = vpow.pop %v707
    %v709 = vsub.f32 %v670, 1.0
    %v710 = vsub.f32 %v672, 1.0
    %v711 = vsub.f32 %v674, 1.0
    %v712 = vsub.f32 %v676, 1.0
    %v713 = vsub.f32 %v678, 1.0
    %v714 = vsub.f32 %v680, 1.0
    %v715 = vsub.f32 %v682, 1.0
    %v716 = vsub.f32 %v684, 1.0
    %v717 = vsub.f32 %v686, 1.0
    %v718 = vsub.f32 %v688, 1.0
    %v719 = vsub.f32 %v690, 1.0
    %v720 = vsub.f32 %v692, 1.0
    %v721 = vsub.f32 %v694, 1.0
    %v722 = vsub.f32 %v696, 1.0
    %v723 = vsub.f32 %v698, 1.0
    %v724 = vsub.f32 %v700, 1.0
    %v725 = vsub.f32 %v702, 1.0
    %v726 = vsub.f32 %v704, 1.0
    %v727 = vsub.f32 %v706, 1.0
    %v728 = vsub.f32 %v708, 1.0
    %v729 = vsel %vm629, %v531, %v709
    %v730 = vsel %vm630, %v536, %v710
    %v731 = vsel %vm631, %v541, %v711
    %v732 = vsel %vm632, %v546, %v712
    %v733 = vsel %vm633, %v551, %v713
    %v734 = vsel %vm634, %v556, %v714
    %v735 = vsel %vm635, %v561, %v715
    %v736 = vsel %vm636, %v566, %v716
    %v737 = vsel %vm637, %v571, %v717
    %v738 = vsel %vm638, %v576, %v718
    %v739 = vsel %vm639, %v581, %v719
    %v740 = vsel %vm640, %v586, %v720
    %v741 = vsel %vm641, %v591, %v721
    %v742 = vsel %vm642, %v596, %v722
    %v743 = vsel %vm643, %v601, %v723
    %v744 = vsel %vm644, %v606, %v724
    %v745 = vsel %vm645, %v611, %v725
    %v746 = vsel %vm646, %v616, %v726
    %v747 = vsel %vm647, %v621, %v727
    %v748 = vsel %vm648, %v626, %v728
    %749 = vmatprep.subr.mxu0 0.0
    %750 = vmatpush1.msra.mxu0 %v180
    %751 = vmatprep.subr.mxu0 0.0
    %752 = vmatpush1.msra.mxu0 %v179
    %753 = vmatprep.subr.mxu0 0.0
    %754 = vmatpush1.msra.mxu0 %v178
    %755 = vmatprep.subr.mxu0 0.0
    %756 = vmatpush1.msra.mxu0 %v177
    %757 = vmatprep.subr.mxu0 0.0
    %758 = vmatpush1.msra.mxu0 %v176
    %759 = vmatprep.subr.mxu0 0.0
    %760 = vmatpush1.msra.mxu0 %v175
    %761 = vmatprep.subr.mxu0 0.0
    %762 = vmatpush1.msra.mxu0 %v174
    %763 = vmatprep.subr.mxu0 0.0
    %764 = vmatpush1.msra.mxu0 %v173
    %765 = vmatprep.subr.mxu0 0.0
    %766 = vmatpush1.msra.mxu0 %v172
    %767 = vmatprep.subr.mxu0 0.0
    %768 = vmatpush1.msra.mxu0 %v171
    %769 = vmatprep.subr.mxu0 0.0
    %770 = vmatpush1.msra.mxu0 %v170
    %771 = vmatprep.subr.mxu0 0.0
    %772 = vmatpush1.msra.mxu0 %v169
    %773 = vmatprep.subr.mxu0 0.0
    %774 = vmatpush1.msra.mxu0 %v168
    %775 = vmatprep.subr.mxu0 0.0
    %776 = vmatpush1.msra.mxu0 %v167
    %777 = vmatprep.subr.mxu0 0.0
    %778 = vmatpush1.msra.mxu0 %v166
    %779 = vmatprep.subr.mxu0 0.0
    %780 = vmatpush1.msra.mxu0 %v165
    %781 = vmatprep.subr.mxu0 0.0
    %782 = vmatpush2.msra.mxu0 0.0
    %783 = vmatprep.subr.mxu0 0.0
    %784 = vmatpush2.msra.mxu0 0.0
    %785 = vmatprep.subr.mxu0 0.0
    %786 = vmatpush2.msra.mxu0 0.0
    %787 = vmatprep.subr.mxu0 0.0
    %788 = vmatpush2.msra.mxu0 0.0
    %789 = vmatprep.subr.mxu0 0.0
    %790 = vmatpush2.msra.mxu0 0.0
    %791 = vmatprep.subr.mxu0 0.0
    %792 = vmatpush2.msra.mxu0 0.0
    %793 = vmatprep.subr.mxu0 0.0
    %794 = vmatpush2.msra.mxu0 0.0
    %795 = vmatprep.subr.mxu0 0.0
    %796 = vmatpush2.msra.mxu0 0.0
    %797 = vmatprep.subr.mxu0 0.0
    %798 = vmatpush2.msra.mxu0 0.0
    %799 = vmatprep.subr.mxu0 0.0
    %800 = vmatpush2.msra.mxu0 0.0
    %801 = vmatprep.subr.mxu0 0.0
    %802 = vmatpush2.msra.mxu0 0.0
    %803 = vmatprep.subr.mxu0 0.0
    %804 = vmatpush2.msra.mxu0 0.0
    %805 = vmatprep.subr.mxu0 0.0
    %806 = vmatpush2.msra.mxu0 0.0
    %807 = vmatprep.subr.mxu0 0.0
    %808 = vmatpush2.msra.mxu0 0.0
    %809 = vmatprep.subr.mxu0 0.0
    %810 = vmatpush2.msra.mxu0 0.0
    %811 = vmatprep.subr.mxu0 0.0
    %812 = vmatpush2.msra.mxu0 0.0
    %813 = vmatprep.mubr.f32.mxu0 0.0
    %814 = vmatmul.mubr.f32.gmra.mxu0 %v729
    %v815 = vpop.f32.mrf.mxu0
    %v816 = vadd.f32 0.0, %v815
    %v817 = vpop.f32.mrf.mxu0
    %818 = vmatprep.mubr.f32.mxu0 0.0
    %819 = vmatmul.mubr.f32.gmra.mxu0 %v730
    %v820 = vpop.f32.mrf.mxu0
    %v821 = vadd.f32 0.0, %v820
    %v822 = vpop.f32.mrf.mxu0
    %823 = vmatprep.mubr.f32.mxu0 0.0
    %824 = vmatmul.mubr.f32.gmra.mxu0 %v731
    %v825 = vpop.f32.mrf.mxu0
    %v826 = vadd.f32 0.0, %v825
    %v827 = vpop.f32.mrf.mxu0
    %828 = vmatprep.mubr.f32.mxu0 0.0
    %829 = vmatmul.mubr.f32.gmra.mxu0 %v732
    %v830 = vpop.f32.mrf.mxu0
    %v831 = vadd.f32 0.0, %v830
    %v832 = vpop.f32.mrf.mxu0
    %833 = vmatprep.mubr.f32.mxu0 0.0
    %834 = vmatmul.mubr.f32.gmra.mxu0 %v733
    %v835 = vpop.f32.mrf.mxu0
    %v836 = vadd.f32 0.0, %v835
    %v837 = vpop.f32.mrf.mxu0
    %838 = vmatprep.mubr.f32.mxu0 0.0
    %839 = vmatmul.mubr.f32.gmra.mxu0 %v734
    %v840 = vpop.f32.mrf.mxu0
    %v841 = vadd.f32 0.0, %v840
    %v842 = vpop.f32.mrf.mxu0
    %843 = vmatprep.mubr.f32.mxu0 0.0
    %844 = vmatmul.mubr.f32.gmra.mxu0 %v735
    %v845 = vpop.f32.mrf.mxu0
    %v846 = vadd.f32 0.0, %v845
    %v847 = vpop.f32.mrf.mxu0
    %848 = vmatprep.mubr.f32.mxu0 0.0
    %849 = vmatmul.mubr.f32.gmra.mxu0 %v736
    %v850 = vpop.f32.mrf.mxu0
    %v851 = vadd.f32 0.0, %v850
    %v852 = vpop.f32.mrf.mxu0
    %853 = vmatprep.mubr.f32.mxu0 0.0
    %854 = vmatmul.mubr.f32.gmra.mxu0 %v737
    %v855 = vpop.f32.mrf.mxu0
    %v856 = vadd.f32 0.0, %v855
    %v857 = vpop.f32.mrf.mxu0
    %858 = vmatprep.mubr.f32.mxu0 0.0
    %859 = vmatmul.mubr.f32.gmra.mxu0 %v738
    %v860 = vpop.f32.mrf.mxu0
    %v861 = vadd.f32 0.0, %v860
    %v862 = vpop.f32.mrf.mxu0
    %863 = vmatprep.mubr.f32.mxu0 0.0
    %864 = vmatmul.mubr.f32.gmra.mxu0 %v739
    %v865 = vpop.f32.mrf.mxu0
    %v866 = vadd.f32 0.0, %v865
    %v867 = vpop.f32.mrf.mxu0
    %868 = vmatprep.mubr.f32.mxu0 0.0
    %869 = vmatmul.mubr.f32.gmra.mxu0 %v740
    %v870 = vpop.f32.mrf.mxu0
    %v871 = vadd.f32 0.0, %v870
    %v872 = vpop.f32.mrf.mxu0
    %873 = vmatprep.mubr.f32.mxu0 0.0
    %874 = vmatmul.mubr.f32.gmra.mxu0 %v741
    %v875 = vpop.f32.mrf.mxu0
    %v876 = vadd.f32 0.0, %v875
    %v877 = vpop.f32.mrf.mxu0
    %878 = vmatprep.mubr.f32.mxu0 0.0
    %879 = vmatmul.mubr.f32.gmra.mxu0 %v742
    %v880 = vpop.f32.mrf.mxu0
    %v881 = vadd.f32 0.0, %v880
    %v882 = vpop.f32.mrf.mxu0
    %883 = vmatprep.mubr.f32.mxu0 0.0
    %884 = vmatmul.mubr.f32.gmra.mxu0 %v743
    %v885 = vpop.f32.mrf.mxu0
    %v886 = vadd.f32 0.0, %v885
    %v887 = vpop.f32.mrf.mxu0
    %888 = vmatprep.mubr.f32.mxu0 0.0
    %889 = vmatmul.mubr.f32.gmra.mxu0 %v744
    %v890 = vpop.f32.mrf.mxu0
    %v891 = vadd.f32 0.0, %v890
    %v892 = vpop.f32.mrf.mxu0
    %893 = vmatprep.mubr.f32.mxu0 0.0
    %894 = vmatmul.mubr.f32.gmra.mxu0 %v745
    %v895 = vpop.f32.mrf.mxu0
    %v896 = vadd.f32 0.0, %v895
    %v897 = vpop.f32.mrf.mxu0
    %898 = vmatprep.mubr.f32.mxu0 0.0
    %899 = vmatmul.mubr.f32.gmra.mxu0 %v746
    %v900 = vpop.f32.mrf.mxu0
    %v901 = vadd.f32 0.0, %v900
    %v902 = vpop.f32.mrf.mxu0
    %903 = vmatprep.mubr.f32.mxu0 0.0
    %904 = vmatmul.mubr.f32.gmra.mxu0 %v747
    %v905 = vpop.f32.mrf.mxu0
    %v906 = vadd.f32 0.0, %v905
    %v907 = vpop.f32.mrf.mxu0
    %908 = vmatprep.mubr.f32.mxu0 0.0
    %909 = vmatmul.mubr.f32.gmra.mxu0 %v748
    %v910 = vpop.f32.mrf.mxu0
    %v911 = vadd.f32 0.0, %v910
    %v912 = vpop.f32.mrf.mxu0
    %913 = vdwg.mxu0
    %v914 = vld [vmem:[#allocation9 + $0x110] sm:$0xff]
    %v915 = vld [vmem:[#allocation9 + $0x118] sm:$0xff]
    %v916 = vld [vmem:[#allocation9 + $0x120] sm:$0xff]
    %v917 = vld [vmem:[#allocation9 + $0x128] sm:$0xff]
    %v918 = vld [vmem:[#allocation9 + $0x130] sm:$0xff]
    %v919 = vld [vmem:[#allocation9 + $0x138] sm:$0xff]
    %v920 = vld [vmem:[#allocation9 + $0x140] sm:$0xff]
    %v921 = vld [vmem:[#allocation9 + $0x148] sm:$0xff]
    %v922 = vld [vmem:[#allocation9 + $0x150] sm:$0xff]
    %v923 = vld [vmem:[#allocation9 + $0x158] sm:$0xff]
    %v924 = vld [vmem:[#allocation9 + $0x160] sm:$0xff]
    %v925 = vld [vmem:[#allocation9 + $0x168] sm:$0xff]
    %v926 = vld [vmem:[#allocation9 + $0x170] sm:$0xff]
    %v927 = vld [vmem:[#allocation9 + $0x178] sm:$0xff]
    %v928 = vld [vmem:[#allocation9 + $0x180] sm:$0xff]
    %v929 = vld [vmem:[#allocation9 + $0x188] sm:$0xff]
    %930 = vmatprep.subr.mxu0 0.0
    %931 = vmatpush1.msra.mxu0 %v929
    %932 = vmatprep.subr.mxu0 0.0
    %933 = vmatpush1.msra.mxu0 %v928
    %934 = vmatprep.subr.mxu0 0.0
    %935 = vmatpush1.msra.mxu0 %v927
    %936 = vmatprep.subr.mxu0 0.0
    %937 = vmatpush1.msra.mxu0 %v926
    %938 = vmatprep.subr.mxu0 0.0
    %939 = vmatpush1.msra.mxu0 %v925
    %940 = vmatprep.subr.mxu0 0.0
    %941 = vmatpush1.msra.mxu0 %v924
    %942 = vmatprep.subr.mxu0 0.0
    %943 = vmatpush1.msra.mxu0 %v923
    %944 = vmatprep.subr.mxu0 0.0
    %945 = vmatpush1.msra.mxu0 %v922
    %946 = vmatprep.subr.mxu0 0.0
    %947 = vmatpush1.msra.mxu0 %v921
    %948 = vmatprep.subr.mxu0 0.0
    %949 = vmatpush1.msra.mxu0 %v920
    %950 = vmatprep.subr.mxu0 0.0
    %951 = vmatpush1.msra.mxu0 %v919
    %952 = vmatprep.subr.mxu0 0.0
    %953 = vmatpush1.msra.mxu0 %v918
    %954 = vmatprep.subr.mxu0 0.0
    %955 = vmatpush1.msra.mxu0 %v917
    %956 = vmatprep.subr.mxu0 0.0
    %957 = vmatpush1.msra.mxu0 %v916
    %958 = vmatprep.subr.mxu0 0.0
    %959 = vmatpush1.msra.mxu0 %v915
    %960 = vmatprep.subr.mxu0 0.0
    %961 = vmatpush1.msra.mxu0 %v914
    %962 = vmatprep.subr.mxu0 0.0
    %963 = vmatpush2.msra.mxu0 0.0
    %964 = vmatprep.subr.mxu0 0.0
    %965 = vmatpush2.msra.mxu0 0.0
    %966 = vmatprep.subr.mxu0 0.0
    %967 = vmatpush2.msra.mxu0 0.0
    %968 = vmatprep.subr.mxu0 0.0
    %969 = vmatpush2.msra.mxu0 0.0
    %970 = vmatprep.subr.mxu0 0.0
    %971 = vmatpush2.msra.mxu0 0.0
    %972 = vmatprep.subr.mxu0 0.0
    %973 = vmatpush2.msra.mxu0 0.0
    %974 = vmatprep.subr.mxu0 0.0
    %975 = vmatpush2.msra.mxu0 0.0
    %976 = vmatprep.subr.mxu0 0.0
    %977 = vmatpush2.msra.mxu0 0.0
    %978 = vmatprep.subr.mxu0 0.0
    %979 = vmatpush2.msra.mxu0 0.0
    %980 = vmatprep.subr.mxu0 0.0
    %981 = vmatpush2.msra.mxu0 0.0
    %982 = vmatprep.subr.mxu0 0.0
    %983 = vmatpush2.msra.mxu0 0.0
    %984 = vmatprep.subr.mxu0 0.0
    %985 = vmatpush2.msra.mxu0 0.0
    %986 = vmatprep.subr.mxu0 0.0
    %987 = vmatpush2.msra.mxu0 0.0
    %988 = vmatprep.subr.mxu0 0.0
    %989 = vmatpush2.msra.mxu0 0.0
    %990 = vmatprep.subr.mxu0 0.0
    %991 = vmatpush2.msra.mxu0 0.0
    %992 = vmatprep.subr.mxu0 0.0
    %993 = vmatpush2.msra.mxu0 0.0
    %994 = vmatprep.mubr.f32.mxu0 0.0
    %995 = vmatmul.mubr.f32.gmra.mxu0 %v92
    %v996 = vpop.f32.mrf.mxu0
    %v997 = vadd.f32 0.0, %v996
    %v998 = vpop.f32.mrf.mxu0
    %999 = vmatprep.mubr.f32.mxu0 0.0
    %1000 = vmatmul.mubr.f32.gmra.mxu0 %v93
    %v1001 = vpop.f32.mrf.mxu0
    %v1002 = vadd.f32 0.0, %v1001
    %v1003 = vpop.f32.mrf.mxu0
    %1004 = vmatprep.mubr.f32.mxu0 0.0
    %1005 = vmatmul.mubr.f32.gmra.mxu0 %v94
    %v1006 = vpop.f32.mrf.mxu0
    %v1007 = vadd.f32 0.0, %v1006
    %v1008 = vpop.f32.mrf.mxu0
    %1009 = vmatprep.mubr.f32.mxu0 0.0
    %1010 = vmatmul.mubr.f32.gmra.mxu0 %v95
    %v1011 = vpop.f32.mrf.mxu0
    %v1012 = vadd.f32 0.0, %v1011
    %v1013 = vpop.f32.mrf.mxu0
    %1014 = vmatprep.mubr.f32.mxu0 0.0
    %1015 = vmatmul.mubr.f32.gmra.mxu0 %v96
    %v1016 = vpop.f32.mrf.mxu0
    %v1017 = vadd.f32 0.0, %v1016
    %v1018 = vpop.f32.mrf.mxu0
    %1019 = vmatprep.mubr.f32.mxu0 0.0
    %1020 = vmatmul.mubr.f32.gmra.mxu0 %v97
    %v1021 = vpop.f32.mrf.mxu0
    %v1022 = vadd.f32 0.0, %v1021
    %v1023 = vpop.f32.mrf.mxu0
    %1024 = vmatprep.mubr.f32.mxu0 0.0
    %1025 = vmatmul.mubr.f32.gmra.mxu0 %v98
    %v1026 = vpop.f32.mrf.mxu0
    %v1027 = vadd.f32 0.0, %v1026
    %v1028 = vpop.f32.mrf.mxu0
    %1029 = vmatprep.mubr.f32.mxu0 0.0
    %1030 = vmatmul.mubr.f32.gmra.mxu0 %v99
    %v1031 = vpop.f32.mrf.mxu0
    %v1032 = vadd.f32 0.0, %v1031
    %v1033 = vpop.f32.mrf.mxu0
    %1034 = vdwg.mxu0
    %vm1035 = vcmask 523264
    %v1037 = vsel %vm1035, %v120, 0
    %v1040 = vsel %vm1035, %v121, 0
    %v1043 = vsel %vm1035, %v122, 0
    %v1046 = vsel %vm1035, %v123, 0
    %v1049 = vsel %vm1035, %v124, 0
    %v1052 = vsel %vm1035, %v125, 0
    %v1055 = vsel %vm1035, %v126, 0
    %v1058 = vsel %vm1035, %v127, 0
    %v1061 = vsel %vm1035, %v128, 0
    %v1064 = vsel %vm1035, %v129, 0
    %v1067 = vsel %vm1035, %v130, 0
    %v1070 = vsel %vm1035, %v131, 0
    %v1073 = vsel %vm1035, %v132, 0
    %v1076 = vsel %vm1035, %v133, 0
    %v1079 = vsel %vm1035, %v134, 0
    %v1082 = vsel %vm1035, %v135, 0
    %v1085 = vsel %vm1035, %v136, 0
    %v1088 = vsel %vm1035, %v137, 0
    %v1091 = vsel %vm1035, %v138, 0
    %v1094 = vsel %vm1035, %v139, 0
    %1096 = vmatprep.subr.mxu0 0.0
    %1097 = vmatpush1.msra.mxu0 0.0
    %1098 = vmatprep.subr.mxu0 0.0
    %1099 = vmatpush1.msra.mxu0 0.0
    %1100 = vmatprep.subr.mxu0 0.0
    %1101 = vmatpush1.msra.mxu0 0.0
    %1102 = vmatprep.subr.mxu0 0.0
    %1103 = vmatpush1.msra.mxu0 0.0
    %1104 = vmatprep.subr.mxu0 0.0
    %1105 = vmatpush1.msra.mxu0 0.0
    %1106 = vmatprep.subr.mxu0 0.0
    %1107 = vmatpush1.msra.mxu0 0.0
    %1108 = vmatprep.subr.mxu0 0.0
    %1109 = vmatpush1.msra.mxu0 0.0
    %1110 = vmatprep.subr.mxu0 0.0
    %1111 = vmatpush1.msra.mxu0 0.0
    %1112 = vmatprep.subr.mxu0 0.0
    %1113 = vmatpush1.msra.mxu0 %v1032
    %1114 = vmatprep.subr.mxu0 0.0
    %1115 = vmatpush1.msra.mxu0 %v1027
    %1116 = vmatprep.subr.mxu0 0.0
    %1117 = vmatpush1.msra.mxu0 %v1022
    %1118 = vmatprep.subr.mxu0 0.0
    %1119 = vmatpush1.msra.mxu0 %v1017
    %1120 = vmatprep.subr.mxu0 0.0
    %1121 = vmatpush1.msra.mxu0 %v1012
    %1122 = vmatprep.subr.mxu0 0.0
    %1123 = vmatpush1.msra.mxu0 %v1007
    %1124 = vmatprep.subr.mxu0 0.0
    %1125 = vmatpush1.msra.mxu0 %v1002
    %1126 = vmatprep.subr.mxu0 0.0
    %1127 = vmatpush1.msra.mxu0 %v997
    %1128 = vmatprep.subr.mxu0 0.0
    %1129 = vmatpush2.msra.mxu0 0.0
    %1130 = vmatprep.subr.mxu0 0.0
    %1131 = vmatpush2.msra.mxu0 0.0
    %1132 = vmatprep.subr.mxu0 0.0
    %1133 = vmatpush2.msra.mxu0 0.0
    %1134 = vmatprep.subr.mxu0 0.0
    %1135 = vmatpush2.msra.mxu0 0.0
    %1136 = vmatprep.subr.mxu0 0.0
    %1137 = vmatpush2.msra.mxu0 0.0
    %1138 = vmatprep.subr.mxu0 0.0
    %1139 = vmatpush2.msra.mxu0 0.0
    %1140 = vmatprep.subr.mxu0 0.0
    %1141 = vmatpush2.msra.mxu0 0.0
    %1142 = vmatprep.subr.mxu0 0.0
    %1143 = vmatpush2.msra.mxu0 0.0
    %1144 = vmatprep.subr.mxu0 0.0
    %1145 = vmatpush2.msra.mxu0 0.0
    %1146 = vmatprep.subr.mxu0 0.0
    %1147 = vmatpush2.msra.mxu0 0.0
    %1148 = vmatprep.subr.mxu0 0.0
    %1149 = vmatpush2.msra.mxu0 0.0
    %1150 = vmatprep.subr.mxu0 0.0
    %1151 = vmatpush2.msra.mxu0 0.0
    %1152 = vmatprep.subr.mxu0 0.0
    %1153 = vmatpush2.msra.mxu0 0.0
    %1154 = vmatprep.subr.mxu0 0.0
    %1155 = vmatpush2.msra.mxu0 0.0
    %1156 = vmatprep.subr.mxu0 0.0
    %1157 = vmatpush2.msra.mxu0 0.0
    %1158 = vmatprep.subr.mxu0 0.0
    %1159 = vmatpush2.msra.mxu0 0.0
    %1160 = vmatprep.mubr.f32.mxu0 0.0
    %1161 = vmatmul.mubr.f32.gmra.mxu0 %v1037
    %v1162 = vpop.f32.mrf.mxu0
    %v1163 = vadd.f32 0.0, %v1162
    %v1164 = vpop.f32.mrf.mxu0
    %1165 = vmatprep.mubr.f32.mxu0 0.0
    %1166 = vmatmul.mubr.f32.gmra.mxu0 %v1040
    %v1167 = vpop.f32.mrf.mxu0
    %v1168 = vadd.f32 0.0, %v1167
    %v1169 = vpop.f32.mrf.mxu0
    %1170 = vmatprep.mubr.f32.mxu0 0.0
    %1171 = vmatmul.mubr.f32.gmra.mxu0 %v1043
    %v1172 = vpop.f32.mrf.mxu0
    %v1173 = vadd.f32 0.0, %v1172
    %v1174 = vpop.f32.mrf.mxu0
    %1175 = vmatprep.mubr.f32.mxu0 0.0
    %1176 = vmatmul.mubr.f32.gmra.mxu0 %v1046
    %v1177 = vpop.f32.mrf.mxu0
    %v1178 = vadd.f32 0.0, %v1177
    %v1179 = vpop.f32.mrf.mxu0
    %1180 = vmatprep.mubr.f32.mxu0 0.0
    %1181 = vmatmul.mubr.f32.gmra.mxu0 %v1049
    %v1182 = vpop.f32.mrf.mxu0
    %v1183 = vadd.f32 0.0, %v1182
    %v1184 = vpop.f32.mrf.mxu0
    %1185 = vmatprep.mubr.f32.mxu0 0.0
    %1186 = vmatmul.mubr.f32.gmra.mxu0 %v1052
    %v1187 = vpop.f32.mrf.mxu0
    %v1188 = vadd.f32 0.0, %v1187
    %v1189 = vpop.f32.mrf.mxu0
    %1190 = vmatprep.mubr.f32.mxu0 0.0
    %1191 = vmatmul.mubr.f32.gmra.mxu0 %v1055
    %v1192 = vpop.f32.mrf.mxu0
    %v1193 = vadd.f32 0.0, %v1192
    %v1194 = vpop.f32.mrf.mxu0
    %1195 = vmatprep.mubr.f32.mxu0 0.0
    %1196 = vmatmul.mubr.f32.gmra.mxu0 %v1058
    %v1197 = vpop.f32.mrf.mxu0
    %v1198 = vadd.f32 0.0, %v1197
    %v1199 = vpop.f32.mrf.mxu0
    %1200 = vmatprep.mubr.f32.mxu0 0.0
    %1201 = vmatmul.mubr.f32.gmra.mxu0 %v1061
    %v1202 = vpop.f32.mrf.mxu0
    %v1203 = vadd.f32 0.0, %v1202
    %v1204 = vpop.f32.mrf.mxu0
    %1205 = vmatprep.mubr.f32.mxu0 0.0
    %1206 = vmatmul.mubr.f32.gmra.mxu0 %v1064
    %v1207 = vpop.f32.mrf.mxu0
    %v1208 = vadd.f32 0.0, %v1207
    %v1209 = vpop.f32.mrf.mxu0
    %1210 = vmatprep.mubr.f32.mxu0 0.0
    %1211 = vmatmul.mubr.f32.gmra.mxu0 %v1067
    %v1212 = vpop.f32.mrf.mxu0
    %v1213 = vadd.f32 0.0, %v1212
    %v1214 = vpop.f32.mrf.mxu0
    %1215 = vmatprep.mubr.f32.mxu0 0.0
    %1216 = vmatmul.mubr.f32.gmra.mxu0 %v1070
    %v1217 = vpop.f32.mrf.mxu0
    %v1218 = vadd.f32 0.0, %v1217
    %v1219 = vpop.f32.mrf.mxu0
    %1220 = vmatprep.mubr.f32.mxu0 0.0
    %1221 = vmatmul.mubr.f32.gmra.mxu0 %v1073
    %v1222 = vpop.f32.mrf.mxu0
    %v1223 = vadd.f32 0.0, %v1222
    %v1224 = vpop.f32.mrf.mxu0
    %1225 = vmatprep.mubr.f32.mxu0 0.0
    %1226 = vmatmul.mubr.f32.gmra.mxu0 %v1076
    %v1227 = vpop.f32.mrf.mxu0
    %v1228 = vadd.f32 0.0, %v1227
    %v1229 = vpop.f32.mrf.mxu0
    %1230 = vmatprep.mubr.f32.mxu0 0.0
    %1231 = vmatmul.mubr.f32.gmra.mxu0 %v1079
    %v1232 = vpop.f32.mrf.mxu0
    %v1233 = vadd.f32 0.0, %v1232
    %v1234 = vpop.f32.mrf.mxu0
    %1235 = vmatprep.mubr.f32.mxu0 0.0
    %1236 = vmatmul.mubr.f32.gmra.mxu0 %v1082
    %v1237 = vpop.f32.mrf.mxu0
    %v1238 = vadd.f32 0.0, %v1237
    %v1239 = vpop.f32.mrf.mxu0
    %1240 = vmatprep.mubr.f32.mxu0 0.0
    %1241 = vmatmul.mubr.f32.gmra.mxu0 %v1085
    %v1242 = vpop.f32.mrf.mxu0
    %v1243 = vadd.f32 0.0, %v1242
    %v1244 = vpop.f32.mrf.mxu0
    %1245 = vmatprep.mubr.f32.mxu0 0.0
    %1246 = vmatmul.mubr.f32.gmra.mxu0 %v1088
    %v1247 = vpop.f32.mrf.mxu0
    %v1248 = vadd.f32 0.0, %v1247
    %v1249 = vpop.f32.mrf.mxu0
    %1250 = vmatprep.mubr.f32.mxu0 0.0
    %1251 = vmatmul.mubr.f32.gmra.mxu0 %v1091
    %v1252 = vpop.f32.mrf.mxu0
    %v1253 = vadd.f32 0.0, %v1252
    %v1254 = vpop.f32.mrf.mxu0
    %1255 = vmatprep.mubr.f32.mxu0 0.0
    %1256 = vmatmul.mubr.f32.gmra.mxu0 %v1094
    %v1257 = vpop.f32.mrf.mxu0
    %v1258 = vadd.f32 0.0, %v1257
    %v1259 = vpop.f32.mrf.mxu0
    %1260 = vdwg.mxu0
    %v1261 = vmul.f32 %v816, %v1163
    %v1262 = vmul.f32 %v821, %v1168
    %v1263 = vmul.f32 %v826, %v1173
    %v1264 = vmul.f32 %v831, %v1178
    %v1265 = vmul.f32 %v836, %v1183
    %v1266 = vmul.f32 %v841, %v1188
    %v1267 = vmul.f32 %v846, %v1193
    %v1268 = vmul.f32 %v851, %v1198
    %v1269 = vmul.f32 %v856, %v1203
    %v1270 = vmul.f32 %v861, %v1208
    %v1271 = vmul.f32 %v866, %v1213
    %v1272 = vmul.f32 %v871, %v1218
    %v1273 = vmul.f32 %v876, %v1223
    %v1274 = vmul.f32 %v881, %v1228
    %v1275 = vmul.f32 %v886, %v1233
    %v1276 = vmul.f32 %v891, %v1238
    %v1277 = vmul.f32 %v896, %v1243
    %v1278 = vmul.f32 %v901, %v1248
    %v1279 = vmul.f32 %v906, %v1253
    %v1280 = vmul.f32 %v911, %v1258
    %vm1281 = vcmask 261120
    %v1283 = vsel %vm1281, %v141, 0
    %v1286 = vsel %vm1281, %v143, 0
    %v1289 = vsel %vm1281, %v145, 0
    %v1292 = vsel %vm1281, %v147, 0
    %v1295 = vsel %vm1281, %v149, 0
    %v1298 = vsel %vm1281, %v151, 0
    %v1301 = vsel %vm1281, %v153, 0
    %v1304 = vsel %vm1281, %v155, 0
    %1306 = vmatprep.subr.mxu0 0.0
    %1307 = vmatpush1.msra.mxu0 %v1276
    %1308 = vmatprep.subr.mxu0 0.0
    %1309 = vmatpush1.msra.mxu0 %v1275
    %1310 = vmatprep.subr.mxu0 0.0
    %1311 = vmatpush1.msra.mxu0 %v1274
    %1312 = vmatprep.subr.mxu0 0.0
    %1313 = vmatpush1.msra.mxu0 %v1273
    %1314 = vmatprep.subr.mxu0 0.0
    %1315 = vmatpush1.msra.mxu0 %v1272
    %1316 = vmatprep.subr.mxu0 0.0
    %1317 = vmatpush1.msra.mxu0 %v1271
    %1318 = vmatprep.subr.mxu0 0.0
    %1319 = vmatpush1.msra.mxu0 %v1270
    %1320 = vmatprep.subr.mxu0 0.0
    %1321 = vmatpush1.msra.mxu0 %v1269
    %1322 = vmatprep.subr.mxu0 0.0
    %1323 = vmatpush1.msra.mxu0 %v1268
    %1324 = vmatprep.subr.mxu0 0.0
    %1325 = vmatpush1.msra.mxu0 %v1267
    %1326 = vmatprep.subr.mxu0 0.0
    %1327 = vmatpush1.msra.mxu0 %v1266
    %1328 = vmatprep.subr.mxu0 0.0
    %1329 = vmatpush1.msra.mxu0 %v1265
    %1330 = vmatprep.subr.mxu0 0.0
    %1331 = vmatpush1.msra.mxu0 %v1264
    %1332 = vmatprep.subr.mxu0 0.0
    %1333 = vmatpush1.msra.mxu0 %v1263
    %1334 = vmatprep.subr.mxu0 0.0
    %1335 = vmatpush1.msra.mxu0 %v1262
    %1336 = vmatprep.subr.mxu0 0.0
    %1337 = vmatpush1.msra.mxu0 %v1261
    %1338 = vmatprep.subr.mxu0 0.0
    %1339 = vmatpush2.msra.mxu0 0.0
    %1340 = vmatprep.subr.mxu0 0.0
    %1341 = vmatpush2.msra.mxu0 0.0
    %1342 = vmatprep.subr.mxu0 0.0
    %1343 = vmatpush2.msra.mxu0 0.0
    %1344 = vmatprep.subr.mxu0 0.0
    %1345 = vmatpush2.msra.mxu0 0.0
    %1346 = vmatprep.subr.mxu0 0.0
    %1347 = vmatpush2.msra.mxu0 0.0
    %1348 = vmatprep.subr.mxu0 0.0
    %1349 = vmatpush2.msra.mxu0 0.0
    %1350 = vmatprep.subr.mxu0 0.0
    %1351 = vmatpush2.msra.mxu0 0.0
    %1352 = vmatprep.subr.mxu0 0.0
    %1353 = vmatpush2.msra.mxu0 0.0
    %1354 = vmatprep.subr.mxu0 0.0
    %1355 = vmatpush2.msra.mxu0 0.0
    %1356 = vmatprep.subr.mxu0 0.0
    %1357 = vmatpush2.msra.mxu0 0.0
    %1358 = vmatprep.subr.mxu0 0.0
    %1359 = vmatpush2.msra.mxu0 0.0
    %1360 = vmatprep.subr.mxu0 0.0
    %1361 = vmatpush2.msra.mxu0 0.0
    %1362 = vmatprep.subr.mxu0 0.0
    %1363 = vmatpush2.msra.mxu0 %v1280
    %1364 = vmatprep.subr.mxu0 0.0
    %1365 = vmatpush2.msra.mxu0 %v1279
    %1366 = vmatprep.subr.mxu0 0.0
    %1367 = vmatpush2.msra.mxu0 %v1278
    %1368 = vmatprep.subr.mxu0 0.0
    %1369 = vmatpush2.msra.mxu0 %v1277
    %1370 = vmatprep.mubr.f32.mxu0 %v1283
    %1371 = vmatmul.mubr.f32.gmra.mxu0 %v140
    %v1372 = vpop.f32.mrf.mxu0
    %v1373 = vadd.f32 0.0, %v1372
    %v1374 = vpop.f32.mrf.mxu0
    %1375 = vmatprep.mubr.f32.mxu0 %v1286
    %1376 = vmatmul.mubr.f32.gmra.mxu0 %v142
    %v1377 = vpop.f32.mrf.mxu0
    %v1378 = vadd.f32 0.0, %v1377
    %v1379 = vpop.f32.mrf.mxu0
    %1380 = vmatprep.mubr.f32.mxu0 %v1289
    %1381 = vmatmul.mubr.f32.gmra.mxu0 %v144
    %v1382 = vpop.f32.mrf.mxu0
    %v1383 = vadd.f32 0.0, %v1382
    %v1384 = vpop.f32.mrf.mxu0
    %1385 = vmatprep.mubr.f32.mxu0 %v1292
    %1386 = vmatmul.mubr.f32.gmra.mxu0 %v146
    %v1387 = vpop.f32.mrf.mxu0
    %v1388 = vadd.f32 0.0, %v1387
    %v1389 = vpop.f32.mrf.mxu0
    %1390 = vmatprep.mubr.f32.mxu0 %v1295
    %1391 = vmatmul.mubr.f32.gmra.mxu0 %v148
    %v1392 = vpop.f32.mrf.mxu0
    %v1393 = vadd.f32 0.0, %v1392
    %v1394 = vpop.f32.mrf.mxu0
    %1395 = vmatprep.mubr.f32.mxu0 %v1298
    %1396 = vmatmul.mubr.f32.gmra.mxu0 %v150
    %v1397 = vpop.f32.mrf.mxu0
    %v1398 = vadd.f32 0.0, %v1397
    %v1399 = vpop.f32.mrf.mxu0
    %1400 = vmatprep.mubr.f32.mxu0 %v1301
    %1401 = vmatmul.mubr.f32.gmra.mxu0 %v152
    %v1402 = vpop.f32.mrf.mxu0
    %v1403 = vadd.f32 0.0, %v1402
    %v1404 = vpop.f32.mrf.mxu0
    %1405 = vmatprep.mubr.f32.mxu0 %v1304
    %1406 = vmatmul.mubr.f32.gmra.mxu0 %v154
    %v1407 = vpop.f32.mrf.mxu0
    %v1408 = vadd.f32 0.0, %v1407
    %v1409 = vpop.f32.mrf.mxu0
    %1410 = vdwg.mxu0
    %v1411 = vld [vmem:[#allocation9 + $0x190] sm:$0xff]
    %v1412 = vld [vmem:[#allocation9 + $0x198] sm:$0xff]
    %v1413 = vld [vmem:[#allocation9 + $0x1a0] sm:$0xff]
    %v1414 = vld [vmem:[#allocation9 + $0x1a8] sm:$0xff]
    %v1415 = vld [vmem:[#allocation9 + $0x1b0] sm:$0xff]
    %v1416 = vld [vmem:[#allocation9 + $0x1b8] sm:$0xff]
    %v1417 = vld [vmem:[#allocation9 + $0x1c0] sm:$0xff]
    %v1418 = vld [vmem:[#allocation9 + $0x1c8] sm:$0xff]
    %v1419 = vld [vmem:[#allocation9 + $0x1d0] sm:$0xff]
    %v1420 = vld [vmem:[#allocation9 + $0x1d8] sm:$0xff]
    %v1421 = vld [vmem:[#allocation9 + $0x1e0] sm:$0xff]
    %v1422 = vld [vmem:[#allocation9 + $0x1e8] sm:$0xff]
    %v1423 = vld [vmem:[#allocation9 + $0x1f0] sm:$0xff]
    %v1424 = vld [vmem:[#allocation9 + $0x1f8] sm:$0xff]
    %v1425 = vld [vmem:[#allocation9 + $0x200] sm:$0xff]
    %v1426 = vld [vmem:[#allocation9 + $0x208] sm:$0xff]
    %1427 = vmatprep.subr.mxu0 0.0
    %1428 = vmatpush1.msra.mxu0 %v1426
    %1429 = vmatprep.subr.mxu0 0.0
    %1430 = vmatpush1.msra.mxu0 %v1425
    %1431 = vmatprep.subr.mxu0 0.0
    %1432 = vmatpush1.msra.mxu0 %v1424
    %1433 = vmatprep.subr.mxu0 0.0
    %1434 = vmatpush1.msra.mxu0 %v1423
    %1435 = vmatprep.subr.mxu0 0.0
    %1436 = vmatpush1.msra.mxu0 %v1422
    %1437 = vmatprep.subr.mxu0 0.0
    %1438 = vmatpush1.msra.mxu0 %v1421
    %1439 = vmatprep.subr.mxu0 0.0
    %1440 = vmatpush1.msra.mxu0 %v1420
    %1441 = vmatprep.subr.mxu0 0.0
    %1442 = vmatpush1.msra.mxu0 %v1419
    %1443 = vmatprep.subr.mxu0 0.0
    %1444 = vmatpush1.msra.mxu0 %v1418
    %1445 = vmatprep.subr.mxu0 0.0
    %1446 = vmatpush1.msra.mxu0 %v1417
    %1447 = vmatprep.subr.mxu0 0.0
    %1448 = vmatpush1.msra.mxu0 %v1416
    %1449 = vmatprep.subr.mxu0 0.0
    %1450 = vmatpush1.msra.mxu0 %v1415
    %1451 = vmatprep.subr.mxu0 0.0
    %1452 = vmatpush1.msra.mxu0 %v1414
    %1453 = vmatprep.subr.mxu0 0.0
    %1454 = vmatpush1.msra.mxu0 %v1413
    %1455 = vmatprep.subr.mxu0 0.0
    %1456 = vmatpush1.msra.mxu0 %v1412
    %1457 = vmatprep.subr.mxu0 0.0
    %1458 = vmatpush1.msra.mxu0 %v1411
    %1459 = vmatprep.subr.mxu0 0.0
    %1460 = vmatpush2.msra.mxu0 0.0
    %1461 = vmatprep.subr.mxu0 0.0
    %1462 = vmatpush2.msra.mxu0 0.0
    %1463 = vmatprep.subr.mxu0 0.0
    %1464 = vmatpush2.msra.mxu0 0.0
    %1465 = vmatprep.subr.mxu0 0.0
    %1466 = vmatpush2.msra.mxu0 0.0
    %1467 = vmatprep.subr.mxu0 0.0
    %1468 = vmatpush2.msra.mxu0 0.0
    %1469 = vmatprep.subr.mxu0 0.0
    %1470 = vmatpush2.msra.mxu0 0.0
    %1471 = vmatprep.subr.mxu0 0.0
    %1472 = vmatpush2.msra.mxu0 0.0
    %1473 = vmatprep.subr.mxu0 0.0
    %1474 = vmatpush2.msra.mxu0 0.0
    %1475 = vmatprep.subr.mxu0 0.0
    %1476 = vmatpush2.msra.mxu0 0.0
    %1477 = vmatprep.subr.mxu0 0.0
    %1478 = vmatpush2.msra.mxu0 0.0
    %1479 = vmatprep.subr.mxu0 0.0
    %1480 = vmatpush2.msra.mxu0 0.0
    %1481 = vmatprep.subr.mxu0 0.0
    %1482 = vmatpush2.msra.mxu0 0.0
    %1483 = vmatprep.subr.mxu0 0.0
    %1484 = vmatpush2.msra.mxu0 0.0
    %1485 = vmatprep.subr.mxu0 0.0
    %1486 = vmatpush2.msra.mxu0 0.0
    %1487 = vmatprep.subr.mxu0 0.0
    %1488 = vmatpush2.msra.mxu0 0.0
    %1489 = vmatprep.subr.mxu0 0.0
    %1490 = vmatpush2.msra.mxu0 0.0
    %1491 = vmatprep.mubr.f32.mxu0 0.0
    %1492 = vmatmul.mubr.f32.gmra.mxu0 %v92
    %v1493 = vpop.f32.mrf.mxu0
    %v1494 = vadd.f32 0.0, %v1493
    %v1495 = vpop.f32.mrf.mxu0
    %1496 = vmatprep.mubr.f32.mxu0 0.0
    %1497 = vmatmul.mubr.f32.gmra.mxu0 %v93
    %v1498 = vpop.f32.mrf.mxu0
    %v1499 = vadd.f32 0.0, %v1498
    %v1500 = vpop.f32.mrf.mxu0
    %1501 = vmatprep.mubr.f32.mxu0 0.0
    %1502 = vmatmul.mubr.f32.gmra.mxu0 %v94
    %v1503 = vpop.f32.mrf.mxu0
    %v1504 = vadd.f32 0.0, %v1503
    %v1505 = vpop.f32.mrf.mxu0
    %1506 = vmatprep.mubr.f32.mxu0 0.0
    %1507 = vmatmul.mubr.f32.gmra.mxu0 %v95
    %v1508 = vpop.f32.mrf.mxu0
    %v1509 = vadd.f32 0.0, %v1508
    %v1510 = vpop.f32.mrf.mxu0
    %1511 = vmatprep.mubr.f32.mxu0 0.0
    %1512 = vmatmul.mubr.f32.gmra.mxu0 %v96
    %v1513 = vpop.f32.mrf.mxu0
    %v1514 = vadd.f32 0.0, %v1513
    %v1515 = vpop.f32.mrf.mxu0
    %1516 = vmatprep.mubr.f32.mxu0 0.0
    %1517 = vmatmul.mubr.f32.gmra.mxu0 %v97
    %v1518 = vpop.f32.mrf.mxu0
    %v1519 = vadd.f32 0.0, %v1518
    %v1520 = vpop.f32.mrf.mxu0
    %1521 = vmatprep.mubr.f32.mxu0 0.0
    %1522 = vmatmul.mubr.f32.gmra.mxu0 %v98
    %v1523 = vpop.f32.mrf.mxu0
    %v1524 = vadd.f32 0.0, %v1523
    %v1525 = vpop.f32.mrf.mxu0
    %1526 = vmatprep.mubr.f32.mxu0 0.0
    %1527 = vmatmul.mubr.f32.gmra.mxu0 %v99
    %v1528 = vpop.f32.mrf.mxu0
    %v1529 = vadd.f32 0.0, %v1528
    %v1530 = vpop.f32.mrf.mxu0
    %1531 = vdwg.mxu0
    %1532 = vmatprep.subr.mxu0 0.0
    %1533 = vmatpush1.msra.mxu0 %v196
    %1534 = vmatprep.subr.mxu0 0.0
    %1535 = vmatpush1.msra.mxu0 %v195
    %1536 = vmatprep.subr.mxu0 0.0
    %1537 = vmatpush1.msra.mxu0 %v194
    %1538 = vmatprep.subr.mxu0 0.0
    %1539 = vmatpush1.msra.mxu0 %v193
    %1540 = vmatprep.subr.mxu0 0.0
    %1541 = vmatpush1.msra.mxu0 %v192
    %1542 = vmatprep.subr.mxu0 0.0
    %1543 = vmatpush1.msra.mxu0 %v191
    %1544 = vmatprep.subr.mxu0 0.0
    %1545 = vmatpush1.msra.mxu0 %v190
    %1546 = vmatprep.subr.mxu0 0.0
    %1547 = vmatpush1.msra.mxu0 %v189
    %1548 = vmatprep.subr.mxu0 0.0
    %1549 = vmatpush1.msra.mxu0 %v188
    %1550 = vmatprep.subr.mxu0 0.0
    %1551 = vmatpush1.msra.mxu0 %v187
    %1552 = vmatprep.subr.mxu0 0.0
    %1553 = vmatpush1.msra.mxu0 %v186
    %1554 = vmatprep.subr.mxu0 0.0
    %1555 = vmatpush1.msra.mxu0 %v185
    %1556 = vmatprep.subr.mxu0 0.0
    %1557 = vmatpush1.msra.mxu0 %v184
    %1558 = vmatprep.subr.mxu0 0.0
    %1559 = vmatpush1.msra.mxu0 %v183
    %1560 = vmatprep.subr.mxu0 0.0
    %1561 = vmatpush1.msra.mxu0 %v182
    %1562 = vmatprep.subr.mxu0 0.0
    %1563 = vmatpush1.msra.mxu0 %v181
    %1564 = vmatprep.subr.mxu0 0.0
    %1565 = vmatpush2.msra.mxu0 0.0
    %1566 = vmatprep.subr.mxu0 0.0
    %1567 = vmatpush2.msra.mxu0 0.0
    %1568 = vmatprep.subr.mxu0 0.0
    %1569 = vmatpush2.msra.mxu0 0.0
    %1570 = vmatprep.subr.mxu0 0.0
    %1571 = vmatpush2.msra.mxu0 0.0
    %1572 = vmatprep.subr.mxu0 0.0
    %1573 = vmatpush2.msra.mxu0 0.0
    %1574 = vmatprep.subr.mxu0 0.0
    %1575 = vmatpush2.msra.mxu0 0.0
    %1576 = vmatprep.subr.mxu0 0.0
    %1577 = vmatpush2.msra.mxu0 0.0
    %1578 = vmatprep.subr.mxu0 0.0
    %1579 = vmatpush2.msra.mxu0 0.0
    %1580 = vmatprep.subr.mxu0 0.0
    %1581 = vmatpush2.msra.mxu0 0.0
    %1582 = vmatprep.subr.mxu0 0.0
    %1583 = vmatpush2.msra.mxu0 0.0
    %1584 = vmatprep.subr.mxu0 0.0
    %1585 = vmatpush2.msra.mxu0 0.0
    %1586 = vmatprep.subr.mxu0 0.0
    %1587 = vmatpush2.msra.mxu0 0.0
    %1588 = vmatprep.subr.mxu0 0.0
    %1589 = vmatpush2.msra.mxu0 0.0
    %1590 = vmatprep.subr.mxu0 0.0
    %1591 = vmatpush2.msra.mxu0 0.0
    %1592 = vmatprep.subr.mxu0 0.0
    %1593 = vmatpush2.msra.mxu0 0.0
    %1594 = vmatprep.subr.mxu0 0.0
    %1595 = vmatpush2.msra.mxu0 0.0
    %1596 = vmatprep.mubr.f32.mxu0 0.0
    %1597 = vmatmul.mubr.f32.gmra.mxu0 %v1373
    %v1598 = vpop.f32.mrf.mxu0
    %v1599 = vadd.f32 %v1494, %v1598
    %v1600 = vpop.f32.mrf.mxu0
    %1601 = vmatprep.mubr.f32.mxu0 0.0
    %1602 = vmatmul.mubr.f32.gmra.mxu0 %v1378
    %v1603 = vpop.f32.mrf.mxu0
    %v1604 = vadd.f32 %v1499, %v1603
    %v1605 = vpop.f32.mrf.mxu0
    %1606 = vmatprep.mubr.f32.mxu0 0.0
    %1607 = vmatmul.mubr.f32.gmra.mxu0 %v1383
    %v1608 = vpop.f32.mrf.mxu0
    %v1609 = vadd.f32 %v1504, %v1608
    %v1610 = vpop.f32.mrf.mxu0
    %1611 = vmatprep.mubr.f32.mxu0 0.0
    %1612 = vmatmul.mubr.f32.gmra.mxu0 %v1388
    %v1613 = vpop.f32.mrf.mxu0
    %v1614 = vadd.f32 %v1509, %v1613
    %v1615 = vpop.f32.mrf.mxu0
    %1616 = vmatprep.mubr.f32.mxu0 0.0
    %1617 = vmatmul.mubr.f32.gmra.mxu0 %v1393
    %v1618 = vpop.f32.mrf.mxu0
    %v1619 = vadd.f32 %v1514, %v1618
    %v1620 = vpop.f32.mrf.mxu0
    %1621 = vmatprep.mubr.f32.mxu0 0.0
    %1622 = vmatmul.mubr.f32.gmra.mxu0 %v1398
    %v1623 = vpop.f32.mrf.mxu0
    %v1624 = vadd.f32 %v1519, %v1623
    %v1625 = vpop.f32.mrf.mxu0
    %1626 = vmatprep.mubr.f32.mxu0 0.0
    %1627 = vmatmul.mubr.f32.gmra.mxu0 %v1403
    %v1628 = vpop.f32.mrf.mxu0
    %v1629 = vadd.f32 %v1524, %v1628
    %v1630 = vpop.f32.mrf.mxu0
    %1631 = vmatprep.mubr.f32.mxu0 0.0
    %1632 = vmatmul.mubr.f32.gmra.mxu0 %v1408
    %v1633 = vpop.f32.mrf.mxu0
    %v1634 = vadd.f32 %v1529, %v1633
    %v1635 = vpop.f32.mrf.mxu0
    %1636 = vdwg.mxu0
    %v1637 = vld [vmem:[#allocation9 + $0x210] sm:$0x1]
    %v1638 = vlaneseq
    %v1639 = vshrl.u32 %v1638, 7
    %v1640 = vsub.s32 0, %v1639
    %v1641 = vrot.slane %v1637, %v1640
    %v1642 = vadd.f32 %v1599, %v1641
    %v1643 = vadd.f32 %v1604, %v1641
    %v1644 = vadd.f32 %v1609, %v1641
    %v1645 = vadd.f32 %v1614, %v1641
    %v1646 = vadd.f32 %v1619, %v1641
    %v1647 = vadd.f32 %v1624, %v1641
    %v1648 = vadd.f32 %v1629, %v1641
    %v1649 = vadd.f32 %v1634, %v1641
    %vm1650 = vcmp.gt.f32.partialorder %v1642, 0.0
    %vm1651 = vcmp.gt.f32.partialorder %v1643, 0.0
    %vm1652 = vcmp.gt.f32.partialorder %v1644, 0.0
    %vm1653 = vcmp.gt.f32.partialorder %v1645, 0.0
    %vm1654 = vcmp.gt.f32.partialorder %v1646, 0.0
    %vm1655 = vcmp.gt.f32.partialorder %v1647, 0.0
    %vm1656 = vcmp.gt.f32.partialorder %v1648, 0.0
    %vm1657 = vcmp.gt.f32.partialorder %v1649, 0.0
    %v1658 = vmul.f32 %v1642, 0.01
    %v1659 = vmul.f32 %v1643, 0.01
    %v1660 = vmul.f32 %v1644, 0.01
    %v1661 = vmul.f32 %v1645, 0.01
    %v1662 = vmul.f32 %v1646, 0.01
    %v1663 = vmul.f32 %v1647, 0.01
    %v1664 = vmul.f32 %v1648, 0.01
    %v1665 = vmul.f32 %v1649, 0.01
    %v1666 = vsel %vm1650, %v1642, %v1658
    %v1667 = vsel %vm1651, %v1643, %v1659
    %v1668 = vsel %vm1652, %v1644, %v1660
    %v1669 = vsel %vm1653, %v1645, %v1661
    %v1670 = vsel %vm1654, %v1646, %v1662
    %v1671 = vsel %vm1655, %v1647, %v1663
    %v1672 = vsel %vm1656, %v1648, %v1664
    %v1673 = vsel %vm1657, %v1649, %v1665
    %v1674 = vld [vmem:[#allocation9 + $0x218] sm:$0xff]
    %v1675 = vld [vmem:[#allocation9 + $0x220] sm:$0xff]
    %v1676 = vld [vmem:[#allocation9 + $0x228] sm:$0xff]
    %v1677 = vld [vmem:[#allocation9 + $0x230] sm:$0xff]
    %v1678 = vld [vmem:[#allocation9 + $0x238] sm:$0xff]
    %v1679 = vld [vmem:[#allocation9 + $0x240] sm:$0xff]
    %v1680 = vld [vmem:[#allocation9 + $0x248] sm:$0xff]
    %v1681 = vld [vmem:[#allocation9 + $0x250] sm:$0xff]
    %v1682 = vld [vmem:[#allocation9 + $0x258] sm:$0xff]
    %v1683 = vld [vmem:[#allocation9 + $0x260] sm:$0xff]
    %v1684 = vld [vmem:[#allocation9 + $0x268] sm:$0xff]
    %v1685 = vld [vmem:[#allocation9 + $0x270] sm:$0xff]
    %v1686 = vld [vmem:[#allocation9 + $0x278] sm:$0xff]
    %v1687 = vld [vmem:[#allocation9 + $0x280] sm:$0xff]
    %v1688 = vld [vmem:[#allocation9 + $0x288] sm:$0xff]
    %v1689 = vld [vmem:[#allocation9 + $0x290] sm:$0xff]
    %v1690 = vld [vmem:[#allocation9 + $0x298] sm:$0x1]
    %v1691 = vlaneseq
    %v1692 = vshrl.u32 %v1691, 7
    %v1693 = vsub.s32 0, %v1692
    %v1694 = vrot.slane %v1690, %v1693
    %1695 = vmatprep.subr.mxu0 0.0
    %1696 = vmatpush1.msra.mxu0 %v1689
    %1697 = vmatprep.subr.mxu0 0.0
    %1698 = vmatpush1.msra.mxu0 %v1688
    %1699 = vmatprep.subr.mxu0 0.0
    %1700 = vmatpush1.msra.mxu0 %v1687
    %1701 = vmatprep.subr.mxu0 0.0
    %1702 = vmatpush1.msra.mxu0 %v1686
    %1703 = vmatprep.subr.mxu0 0.0
    %1704 = vmatpush1.msra.mxu0 %v1685
    %1705 = vmatprep.subr.mxu0 0.0
    %1706 = vmatpush1.msra.mxu0 %v1684
    %1707 = vmatprep.subr.mxu0 0.0
    %1708 = vmatpush1.msra.mxu0 %v1683
    %1709 = vmatprep.subr.mxu0 0.0
    %1710 = vmatpush1.msra.mxu0 %v1682
    %1711 = vmatprep.subr.mxu0 0.0
    %1712 = vmatpush1.msra.mxu0 %v1681
    %1713 = vmatprep.subr.mxu0 0.0
    %1714 = vmatpush1.msra.mxu0 %v1680
    %1715 = vmatprep.subr.mxu0 0.0
    %1716 = vmatpush1.msra.mxu0 %v1679
    %1717 = vmatprep.subr.mxu0 0.0
    %1718 = vmatpush1.msra.mxu0 %v1678
    %1719 = vmatprep.subr.mxu0 0.0
    %1720 = vmatpush1.msra.mxu0 %v1677
    %1721 = vmatprep.subr.mxu0 0.0
    %1722 = vmatpush1.msra.mxu0 %v1676
    %1723 = vmatprep.subr.mxu0 0.0
    %1724 = vmatpush1.msra.mxu0 %v1675
    %1725 = vmatprep.subr.mxu0 0.0
    %1726 = vmatpush1.msra.mxu0 %v1674
    %1727 = vmatprep.subr.mxu0 0.0
    %1728 = vmatpush2.msra.mxu0 0.0
    %1729 = vmatprep.subr.mxu0 0.0
    %1730 = vmatpush2.msra.mxu0 0.0
    %1731 = vmatprep.subr.mxu0 0.0
    %1732 = vmatpush2.msra.mxu0 0.0
    %1733 = vmatprep.subr.mxu0 0.0
    %1734 = vmatpush2.msra.mxu0 0.0
    %1735 = vmatprep.subr.mxu0 0.0
    %1736 = vmatpush2.msra.mxu0 0.0
    %1737 = vmatprep.subr.mxu0 0.0
    %1738 = vmatpush2.msra.mxu0 0.0
    %1739 = vmatprep.subr.mxu0 0.0
    %1740 = vmatpush2.msra.mxu0 0.0
    %1741 = vmatprep.subr.mxu0 0.0
    %1742 = vmatpush2.msra.mxu0 0.0
    %1743 = vmatprep.subr.mxu0 0.0
    %1744 = vmatpush2.msra.mxu0 0.0
    %1745 = vmatprep.subr.mxu0 0.0
    %1746 = vmatpush2.msra.mxu0 0.0
    %1747 = vmatprep.subr.mxu0 0.0
    %1748 = vmatpush2.msra.mxu0 0.0
    %1749 = vmatprep.subr.mxu0 0.0
    %1750 = vmatpush2.msra.mxu0 0.0
    %1751 = vmatprep.subr.mxu0 0.0
    %1752 = vmatpush2.msra.mxu0 0.0
    %1753 = vmatprep.subr.mxu0 0.0
    %1754 = vmatpush2.msra.mxu0 0.0
    %1755 = vmatprep.subr.mxu0 0.0
    %1756 = vmatpush2.msra.mxu0 0.0
    %1757 = vmatprep.subr.mxu0 0.0
    %1758 = vmatpush2.msra.mxu0 0.0
    %1759 = vmatprep.mubr.f32.mxu0 0.0
    %1760 = vmatmul.mubr.f32.gmra.mxu0 %v1666
    %v1761 = vpop.f32.mrf.mxu0
    %v1762 = vadd.f32 %v1694, %v1761
    %v1763 = vpop.f32.mrf.mxu0
    %1764 = vmatprep.mubr.f32.mxu0 0.0
    %1765 = vmatmul.mubr.f32.gmra.mxu0 %v1667
    %v1766 = vpop.f32.mrf.mxu0
    %v1767 = vadd.f32 %v1694, %v1766
    %v1768 = vpop.f32.mrf.mxu0
    %1769 = vmatprep.mubr.f32.mxu0 0.0
    %1770 = vmatmul.mubr.f32.gmra.mxu0 %v1668
    %v1771 = vpop.f32.mrf.mxu0
    %v1772 = vadd.f32 %v1694, %v1771
    %v1773 = vpop.f32.mrf.mxu0
    %1774 = vmatprep.mubr.f32.mxu0 0.0
    %1775 = vmatmul.mubr.f32.gmra.mxu0 %v1669
    %v1776 = vpop.f32.mrf.mxu0
    %v1777 = vadd.f32 %v1694, %v1776
    %v1778 = vpop.f32.mrf.mxu0
    %1779 = vmatprep.mubr.f32.mxu0 0.0
    %1780 = vmatmul.mubr.f32.gmra.mxu0 %v1670
    %v1781 = vpop.f32.mrf.mxu0
    %v1782 = vadd.f32 %v1694, %v1781
    %v1783 = vpop.f32.mrf.mxu0
    %1784 = vmatprep.mubr.f32.mxu0 0.0
    %1785 = vmatmul.mubr.f32.gmra.mxu0 %v1671
    %v1786 = vpop.f32.mrf.mxu0
    %v1787 = vadd.f32 %v1694, %v1786
    %v1788 = vpop.f32.mrf.mxu0
    %1789 = vmatprep.mubr.f32.mxu0 0.0
    %1790 = vmatmul.mubr.f32.gmra.mxu0 %v1672
    %v1791 = vpop.f32.mrf.mxu0
    %v1792 = vadd.f32 %v1694, %v1791
    %v1793 = vpop.f32.mrf.mxu0
    %1794 = vmatprep.mubr.f32.mxu0 0.0
    %1795 = vmatmul.mubr.f32.gmra.mxu0 %v1673
    %v1796 = vpop.f32.mrf.mxu0
    %v1797 = vadd.f32 %v1694, %v1796
    %v1798 = vpop.f32.mrf.mxu0
    %1799 = vdwg.mxu0
    %vm1800 = vcmp.gt.f32.partialorder %v1762, 0.0
    %vm1801 = vcmp.gt.f32.partialorder %v1767, 0.0
    %vm1802 = vcmp.gt.f32.partialorder %v1772, 0.0
    %vm1803 = vcmp.gt.f32.partialorder %v1777, 0.0
    %vm1804 = vcmp.gt.f32.partialorder %v1782, 0.0
    %vm1805 = vcmp.gt.f32.partialorder %v1787, 0.0
    %vm1806 = vcmp.gt.f32.partialorder %v1792, 0.0
    %vm1807 = vcmp.gt.f32.partialorder %v1797, 0.0
    %v1808 = vmul.f32 %v1762, 0.01
    %v1809 = vmul.f32 %v1767, 0.01
    %v1810 = vmul.f32 %v1772, 0.01
    %v1811 = vmul.f32 %v1777, 0.01
    %v1812 = vmul.f32 %v1782, 0.01
    %v1813 = vmul.f32 %v1787, 0.01
    %v1814 = vmul.f32 %v1792, 0.01
    %v1815 = vmul.f32 %v1797, 0.01
    %v1816 = vsel %vm1800, %v1762, %v1808
    %v1817 = vsel %vm1801, %v1767, %v1809
    %v1818 = vsel %vm1802, %v1772, %v1810
    %v1819 = vsel %vm1803, %v1777, %v1811
    %v1820 = vsel %vm1804, %v1782, %v1812
    %v1821 = vsel %vm1805, %v1787, %v1813
    %v1822 = vsel %vm1806, %v1792, %v1814
    %v1823 = vsel %vm1807, %v1797, %v1815
    %v1824 = vld [vmem:[#allocation9 + $0x2a0] sm:$0x1]
    %v1825 = vlaneseq
    %v1826 = vshrl.u32 %v1825, 7
    %v1827 = vsub.s32 0, %v1826
    %v1828 = vrot.slane %v1824, %v1827
    %v1829 = vmul.f32 %v1816, %v1828
    %v1830 = vmul.f32 %v1817, %v1828
    %v1831 = vmul.f32 %v1818, %v1828
    %v1832 = vmul.f32 %v1819, %v1828
    %v1833 = vmul.f32 %v1820, %v1828
    %v1834 = vmul.f32 %v1821, %v1828
    %v1835 = vmul.f32 %v1822, %v1828
    %v1836 = vmul.f32 %v1823, %v1828
    %v1837 = vld [vmem:[#allocation9 + $0x2a8] sm:$0x1]
    %v1838 = vlaneseq
    %v1839 = vshrl.u32 %v1838, 7
    %v1840 = vsub.s32 0, %v1839
    %v1841 = vrot.slane %v1837, %v1840
    %v1842 = vadd.f32 %v1829, %v1841
    %v1843 = vadd.f32 %v1830, %v1841
    %v1844 = vadd.f32 %v1831, %v1841
    %v1845 = vadd.f32 %v1832, %v1841
    %v1846 = vadd.f32 %v1833, %v1841
    %v1847 = vadd.f32 %v1834, %v1841
    %v1848 = vadd.f32 %v1835, %v1841
    %v1849 = vadd.f32 %v1836, %v1841
    %v1850 = vld [vmem:[#allocation9 + $0x2b0] sm:$0xff]
    %v1851 = vld [vmem:[#allocation9 + $0x2b8] sm:$0xff]
    %v1852 = vld [vmem:[#allocation9 + $0x2c0] sm:$0xff]
    %v1853 = vld [vmem:[#allocation9 + $0x2c8] sm:$0xff]
    %v1854 = vld [vmem:[#allocation9 + $0x2d0] sm:$0xff]
    %v1855 = vld [vmem:[#allocation9 + $0x2d8] sm:$0xff]
    %v1856 = vld [vmem:[#allocation9 + $0x2e0] sm:$0xff]
    %v1857 = vld [vmem:[#allocation9 + $0x2e8] sm:$0xff]
    %v1858 = vld [vmem:[#allocation9 + $0x2f0] sm:$0xff]
    %v1859 = vld [vmem:[#allocation9 + $0x2f8] sm:$0xff]
    %v1860 = vld [vmem:[#allocation9 + $0x300] sm:$0xff]
    %v1861 = vld [vmem:[#allocation9 + $0x308] sm:$0xff]
    %v1862 = vld [vmem:[#allocation9 + $0x310] sm:$0xff]
    %v1863 = vld [vmem:[#allocation9 + $0x318] sm:$0xff]
    %v1864 = vld [vmem:[#allocation9 + $0x320] sm:$0xff]
    %v1865 = vld [vmem:[#allocation9 + $0x328] sm:$0xff]
    %v1866 = vld [vmem:[#allocation9 + $0x330] sm:$0x1]
    %v1867 = vlaneseq
    %v1868 = vshrl.u32 %v1867, 7
    %v1869 = vsub.s32 0, %v1868
    %v1870 = vrot.slane %v1866, %v1869
    %1871 = vmatprep.subr.mxu0 0.0
    %1872 = vmatpush1.msra.mxu0 %v1865
    %1873 = vmatprep.subr.mxu0 0.0
    %1874 = vmatpush1.msra.mxu0 %v1864
    %1875 = vmatprep.subr.mxu0 0.0
    %1876 = vmatpush1.msra.mxu0 %v1863
    %1877 = vmatprep.subr.mxu0 0.0
    %1878 = vmatpush1.msra.mxu0 %v1862
    %1879 = vmatprep.subr.mxu0 0.0
    %1880 = vmatpush1.msra.mxu0 %v1861
    %1881 = vmatprep.subr.mxu0 0.0
    %1882 = vmatpush1.msra.mxu0 %v1860
    %1883 = vmatprep.subr.mxu0 0.0
    %1884 = vmatpush1.msra.mxu0 %v1859
    %1885 = vmatprep.subr.mxu0 0.0
    %1886 = vmatpush1.msra.mxu0 %v1858
    %1887 = vmatprep.subr.mxu0 0.0
    %1888 = vmatpush1.msra.mxu0 %v1857
    %1889 = vmatprep.subr.mxu0 0.0
    %1890 = vmatpush1.msra.mxu0 %v1856
    %1891 = vmatprep.subr.mxu0 0.0
    %1892 = vmatpush1.msra.mxu0 %v1855
    %1893 = vmatprep.subr.mxu0 0.0
    %1894 = vmatpush1.msra.mxu0 %v1854
    %1895 = vmatprep.subr.mxu0 0.0
    %1896 = vmatpush1.msra.mxu0 %v1853
    %1897 = vmatprep.subr.mxu0 0.0
    %1898 = vmatpush1.msra.mxu0 %v1852
    %1899 = vmatprep.subr.mxu0 0.0
    %1900 = vmatpush1.msra.mxu0 %v1851
    %1901 = vmatprep.subr.mxu0 0.0
    %1902 = vmatpush1.msra.mxu0 %v1850
    %1903 = vmatprep.subr.mxu0 0.0
    %1904 = vmatpush2.msra.mxu0 0.0
    %1905 = vmatprep.subr.mxu0 0.0
    %1906 = vmatpush2.msra.mxu0 0.0
    %1907 = vmatprep.subr.mxu0 0.0
    %1908 = vmatpush2.msra.mxu0 0.0
    %1909 = vmatprep.subr.mxu0 0.0
    %1910 = vmatpush2.msra.mxu0 0.0
    %1911 = vmatprep.subr.mxu0 0.0
    %1912 = vmatpush2.msra.mxu0 0.0
    %1913 = vmatprep.subr.mxu0 0.0
    %1914 = vmatpush2.msra.mxu0 0.0
    %1915 = vmatprep.subr.mxu0 0.0
    %1916 = vmatpush2.msra.mxu0 0.0
    %1917 = vmatprep.subr.mxu0 0.0
    %1918 = vmatpush2.msra.mxu0 0.0
    %1919 = vmatprep.subr.mxu0 0.0
    %1920 = vmatpush2.msra.mxu0 0.0
    %1921 = vmatprep.subr.mxu0 0.0
    %1922 = vmatpush2.msra.mxu0 0.0
    %1923 = vmatprep.subr.mxu0 0.0
    %1924 = vmatpush2.msra.mxu0 0.0
    %1925 = vmatprep.subr.mxu0 0.0
    %1926 = vmatpush2.msra.mxu0 0.0
    %1927 = vmatprep.subr.mxu0 0.0
    %1928 = vmatpush2.msra.mxu0 0.0
    %1929 = vmatprep.subr.mxu0 0.0
    %1930 = vmatpush2.msra.mxu0 0.0
    %1931 = vmatprep.subr.mxu0 0.0
    %1932 = vmatpush2.msra.mxu0 0.0
    %1933 = vmatprep.subr.mxu0 0.0
    %1934 = vmatpush2.msra.mxu0 0.0
    %1935 = vmatprep.mubr.f32.mxu0 0.0
    %1936 = vmatmul.mubr.f32.gmra.mxu0 %v100
    %v1937 = vpop.f32.mrf.mxu0
    %v1938 = vadd.f32 %v1870, %v1937
    %v1939 = vpop.f32.mrf.mxu0
    %1940 = vmatprep.mubr.f32.mxu0 0.0
    %1941 = vmatmul.mubr.f32.gmra.mxu0 %v101
    %v1942 = vpop.f32.mrf.mxu0
    %v1943 = vadd.f32 %v1870, %v1942
    %v1944 = vpop.f32.mrf.mxu0
    %1945 = vmatprep.mubr.f32.mxu0 0.0
    %1946 = vmatmul.mubr.f32.gmra.mxu0 %v102
    %v1947 = vpop.f32.mrf.mxu0
    %v1948 = vadd.f32 %v1870, %v1947
    %v1949 = vpop.f32.mrf.mxu0
    %1950 = vmatprep.mubr.f32.mxu0 0.0
    %1951 = vmatmul.mubr.f32.gmra.mxu0 %v103
    %v1952 = vpop.f32.mrf.mxu0
    %v1953 = vadd.f32 %v1870, %v1952
    %v1954 = vpop.f32.mrf.mxu0
    %1955 = vmatprep.mubr.f32.mxu0 0.0
    %1956 = vmatmul.mubr.f32.gmra.mxu0 %v104
    %v1957 = vpop.f32.mrf.mxu0
    %v1958 = vadd.f32 %v1870, %v1957
    %v1959 = vpop.f32.mrf.mxu0
    %1960 = vmatprep.mubr.f32.mxu0 0.0
    %1961 = vmatmul.mubr.f32.gmra.mxu0 %v105
    %v1962 = vpop.f32.mrf.mxu0
    %v1963 = vadd.f32 %v1870, %v1962
    %v1964 = vpop.f32.mrf.mxu0
    %1965 = vmatprep.mubr.f32.mxu0 0.0
    %1966 = vmatmul.mubr.f32.gmra.mxu0 %v106
    %v1967 = vpop.f32.mrf.mxu0
    %v1968 = vadd.f32 %v1870, %v1967
    %v1969 = vpop.f32.mrf.mxu0
    %1970 = vmatprep.mubr.f32.mxu0 0.0
    %1971 = vmatmul.mubr.f32.gmra.mxu0 %v107
    %v1972 = vpop.f32.mrf.mxu0
    %v1973 = vadd.f32 %v1870, %v1972
    %v1974 = vpop.f32.mrf.mxu0
    %1975 = vmatprep.mubr.f32.mxu0 0.0
    %1976 = vmatmul.mubr.f32.gmra.mxu0 %v108
    %v1977 = vpop.f32.mrf.mxu0
    %v1978 = vadd.f32 %v1870, %v1977
    %v1979 = vpop.f32.mrf.mxu0
    %1980 = vmatprep.mubr.f32.mxu0 0.0
    %1981 = vmatmul.mubr.f32.gmra.mxu0 %v109
    %v1982 = vpop.f32.mrf.mxu0
    %v1983 = vadd.f32 %v1870, %v1982
    %v1984 = vpop.f32.mrf.mxu0
    %1985 = vmatprep.mubr.f32.mxu0 0.0
    %1986 = vmatmul.mubr.f32.gmra.mxu0 %v110
    %v1987 = vpop.f32.mrf.mxu0
    %v1988 = vadd.f32 %v1870, %v1987
    %v1989 = vpop.f32.mrf.mxu0
    %1990 = vmatprep.mubr.f32.mxu0 0.0
    %1991 = vmatmul.mubr.f32.gmra.mxu0 %v111
    %v1992 = vpop.f32.mrf.mxu0
    %v1993 = vadd.f32 %v1870, %v1992
    %v1994 = vpop.f32.mrf.mxu0
    %1995 = vmatprep.mubr.f32.mxu0 0.0
    %1996 = vmatmul.mubr.f32.gmra.mxu0 %v112
    %v1997 = vpop.f32.mrf.mxu0
    %v1998 = vadd.f32 %v1870, %v1997
    %v1999 = vpop.f32.mrf.mxu0
    %2000 = vmatprep.mubr.f32.mxu0 0.0
    %2001 = vmatmul.mubr.f32.gmra.mxu0 %v113
    %v2002 = vpop.f32.mrf.mxu0
    %v2003 = vadd.f32 %v1870, %v2002
    %v2004 = vpop.f32.mrf.mxu0
    %2005 = vmatprep.mubr.f32.mxu0 0.0
    %2006 = vmatmul.mubr.f32.gmra.mxu0 %v114
    %v2007 = vpop.f32.mrf.mxu0
    %v2008 = vadd.f32 %v1870, %v2007
    %v2009 = vpop.f32.mrf.mxu0
    %2010 = vmatprep.mubr.f32.mxu0 0.0
    %2011 = vmatmul.mubr.f32.gmra.mxu0 %v115
    %v2012 = vpop.f32.mrf.mxu0
    %v2013 = vadd.f32 %v1870, %v2012
    %v2014 = vpop.f32.mrf.mxu0
    %2015 = vmatprep.mubr.f32.mxu0 0.0
    %2016 = vmatmul.mubr.f32.gmra.mxu0 %v116
    %v2017 = vpop.f32.mrf.mxu0
    %v2018 = vadd.f32 %v1870, %v2017
    %v2019 = vpop.f32.mrf.mxu0
    %2020 = vmatprep.mubr.f32.mxu0 0.0
    %2021 = vmatmul.mubr.f32.gmra.mxu0 %v117
    %v2022 = vpop.f32.mrf.mxu0
    %v2023 = vadd.f32 %v1870, %v2022
    %v2024 = vpop.f32.mrf.mxu0
    %2025 = vmatprep.mubr.f32.mxu0 0.0
    %2026 = vmatmul.mubr.f32.gmra.mxu0 %v118
    %v2027 = vpop.f32.mrf.mxu0
    %v2028 = vadd.f32 %v1870, %v2027
    %v2029 = vpop.f32.mrf.mxu0
    %2030 = vmatprep.mubr.f32.mxu0 0.0
    %2031 = vmatmul.mubr.f32.gmra.mxu0 %v119
    %v2032 = vpop.f32.mrf.mxu0
    %v2033 = vadd.f32 %v1870, %v2032
    %v2034 = vpop.f32.mrf.mxu0
    %2035 = vdwg.mxu0
    %vm2036 = vcmp.gt.f32.partialorder %v1938, 0.0
    %vm2037 = vcmp.gt.f32.partialorder %v1943, 0.0
    %vm2038 = vcmp.gt.f32.partialorder %v1948, 0.0
    %vm2039 = vcmp.gt.f32.partialorder %v1953, 0.0
    %vm2040 = vcmp.gt.f32.partialorder %v1958, 0.0
    %vm2041 = vcmp.gt.f32.partialorder %v1963, 0.0
    %vm2042 = vcmp.gt.f32.partialorder %v1968, 0.0
    %vm2043 = vcmp.gt.f32.partialorder %v1973, 0.0
    %vm2044 = vcmp.gt.f32.partialorder %v1978, 0.0
    %vm2045 = vcmp.gt.f32.partialorder %v1983, 0.0
    %vm2046 = vcmp.gt.f32.partialorder %v1988, 0.0
    %vm2047 = vcmp.gt.f32.partialorder %v1993, 0.0
    %vm2048 = vcmp.gt.f32.partialorder %v1998, 0.0
    %vm2049 = vcmp.gt.f32.partialorder %v2003, 0.0
    %vm2050 = vcmp.gt.f32.partialorder %v2008, 0.0
    %vm2051 = vcmp.gt.f32.partialorder %v2013, 0.0
    %vm2052 = vcmp.gt.f32.partialorder %v2018, 0.0
    %vm2053 = vcmp.gt.f32.partialorder %v2023, 0.0
    %vm2054 = vcmp.gt.f32.partialorder %v2028, 0.0
    %vm2055 = vcmp.gt.f32.partialorder %v2033, 0.0
    %v2056 = vmul.f32 %v1938, 0.01
    %v2057 = vmul.f32 %v1943, 0.01
    %v2058 = vmul.f32 %v1948, 0.01
    %v2059 = vmul.f32 %v1953, 0.01
    %v2060 = vmul.f32 %v1958, 0.01
    %v2061 = vmul.f32 %v1963, 0.01
    %v2062 = vmul.f32 %v1968, 0.01
    %v2063 = vmul.f32 %v1973, 0.01
    %v2064 = vmul.f32 %v1978, 0.01
    %v2065 = vmul.f32 %v1983, 0.01
    %v2066 = vmul.f32 %v1988, 0.01
    %v2067 = vmul.f32 %v1993, 0.01
    %v2068 = vmul.f32 %v1998, 0.01
    %v2069 = vmul.f32 %v2003, 0.01
    %v2070 = vmul.f32 %v2008, 0.01
    %v2071 = vmul.f32 %v2013, 0.01
    %v2072 = vmul.f32 %v2018, 0.01
    %v2073 = vmul.f32 %v2023, 0.01
    %v2074 = vmul.f32 %v2028, 0.01
    %v2075 = vmul.f32 %v2033, 0.01
    %v2076 = vsel %vm2036, %v1938, %v2056
    %v2077 = vsel %vm2037, %v1943, %v2057
    %v2078 = vsel %vm2038, %v1948, %v2058
    %v2079 = vsel %vm2039, %v1953, %v2059
    %v2080 = vsel %vm2040, %v1958, %v2060
    %v2081 = vsel %vm2041, %v1963, %v2061
    %v2082 = vsel %vm2042, %v1968, %v2062
    %v2083 = vsel %vm2043, %v1973, %v2063
    %v2084 = vsel %vm2044, %v1978, %v2064
    %v2085 = vsel %vm2045, %v1983, %v2065
    %v2086 = vsel %vm2046, %v1988, %v2066
    %v2087 = vsel %vm2047, %v1993, %v2067
    %v2088 = vsel %vm2048, %v1998, %v2068
    %v2089 = vsel %vm2049, %v2003, %v2069
    %v2090 = vsel %vm2050, %v2008, %v2070
    %v2091 = vsel %vm2051, %v2013, %v2071
    %v2092 = vsel %vm2052, %v2018, %v2072
    %v2093 = vsel %vm2053, %v2023, %v2073
    %v2094 = vsel %vm2054, %v2028, %v2074
    %v2095 = vsel %vm2055, %v2033, %v2075
    %v2096 = vld [vmem:[#allocation9 + $0x338] sm:$0xff]
    %v2097 = vld [vmem:[#allocation9 + $0x340] sm:$0xff]
    %v2098 = vld [vmem:[#allocation9 + $0x348] sm:$0xff]
    %v2099 = vld [vmem:[#allocation9 + $0x350] sm:$0xff]
    %v2100 = vld [vmem:[#allocation9 + $0x358] sm:$0xff]
    %v2101 = vld [vmem:[#allocation9 + $0x360] sm:$0xff]
    %v2102 = vld [vmem:[#allocation9 + $0x368] sm:$0xff]
    %v2103 = vld [vmem:[#allocation9 + $0x370] sm:$0xff]
    %v2104 = vld [vmem:[#allocation9 + $0x378] sm:$0xff]
    %v2105 = vld [vmem:[#allocation9 + $0x380] sm:$0xff]
    %v2106 = vld [vmem:[#allocation9 + $0x388] sm:$0xff]
    %v2107 = vld [vmem:[#allocation9 + $0x390] sm:$0xff]
    %v2108 = vld [vmem:[#allocation9 + $0x398] sm:$0xff]
    %v2109 = vld [vmem:[#allocation9 + $0x3a0] sm:$0xff]
    %v2110 = vld [vmem:[#allocation9 + $0x3a8] sm:$0xff]
    %v2111 = vld [vmem:[#allocation9 + $0x3b0] sm:$0xff]
    %v2112 = vld [vmem:[#allocation9 + $0x3b8] sm:$0x1]
    %v2113 = vlaneseq
    %v2114 = vshrl.u32 %v2113, 7
    %v2115 = vsub.s32 0, %v2114
    %v2116 = vrot.slane %v2112, %v2115
    %2117 = vmatprep.subr.mxu0 0.0
    %2118 = vmatpush1.msra.mxu0 %v2111
    %2119 = vmatprep.subr.mxu0 0.0
    %2120 = vmatpush1.msra.mxu0 %v2110
    %2121 = vmatprep.subr.mxu0 0.0
    %2122 = vmatpush1.msra.mxu0 %v2109
    %2123 = vmatprep.subr.mxu0 0.0
    %2124 = vmatpush1.msra.mxu0 %v2108
    %2125 = vmatprep.subr.mxu0 0.0
    %2126 = vmatpush1.msra.mxu0 %v2107
    %2127 = vmatprep.subr.mxu0 0.0
    %2128 = vmatpush1.msra.mxu0 %v2106
    %2129 = vmatprep.subr.mxu0 0.0
    %2130 = vmatpush1.msra.mxu0 %v2105
    %2131 = vmatprep.subr.mxu0 0.0
    %2132 = vmatpush1.msra.mxu0 %v2104
    %2133 = vmatprep.subr.mxu0 0.0
    %2134 = vmatpush1.msra.mxu0 %v2103
    %2135 = vmatprep.subr.mxu0 0.0
    %2136 = vmatpush1.msra.mxu0 %v2102
    %2137 = vmatprep.subr.mxu0 0.0
    %2138 = vmatpush1.msra.mxu0 %v2101
    %2139 = vmatprep.subr.mxu0 0.0
    %2140 = vmatpush1.msra.mxu0 %v2100
    %2141 = vmatprep.subr.mxu0 0.0
    %2142 = vmatpush1.msra.mxu0 %v2099
    %2143 = vmatprep.subr.mxu0 0.0
    %2144 = vmatpush1.msra.mxu0 %v2098
    %2145 = vmatprep.subr.mxu0 0.0
    %2146 = vmatpush1.msra.mxu0 %v2097
    %2147 = vmatprep.subr.mxu0 0.0
    %2148 = vmatpush1.msra.mxu0 %v2096
    %2149 = vmatprep.subr.mxu0 0.0
    %2150 = vmatpush2.msra.mxu0 0.0
    %2151 = vmatprep.subr.mxu0 0.0
    %2152 = vmatpush2.msra.mxu0 0.0
    %2153 = vmatprep.subr.mxu0 0.0
    %2154 = vmatpush2.msra.mxu0 0.0
    %2155 = vmatprep.subr.mxu0 0.0
    %2156 = vmatpush2.msra.mxu0 0.0
    %2157 = vmatprep.subr.mxu0 0.0
    %2158 = vmatpush2.msra.mxu0 0.0
    %2159 = vmatprep.subr.mxu0 0.0
    %2160 = vmatpush2.msra.mxu0 0.0
    %2161 = vmatprep.subr.mxu0 0.0
    %2162 = vmatpush2.msra.mxu0 0.0
    %2163 = vmatprep.subr.mxu0 0.0
    %2164 = vmatpush2.msra.mxu0 0.0
    %2165 = vmatprep.subr.mxu0 0.0
    %2166 = vmatpush2.msra.mxu0 0.0
    %2167 = vmatprep.subr.mxu0 0.0
    %2168 = vmatpush2.msra.mxu0 0.0
    %2169 = vmatprep.subr.mxu0 0.0
    %2170 = vmatpush2.msra.mxu0 0.0
    %2171 = vmatprep.subr.mxu0 0.0
    %2172 = vmatpush2.msra.mxu0 0.0
    %2173 = vmatprep.subr.mxu0 0.0
    %2174 = vmatpush2.msra.mxu0 0.0
    %2175 = vmatprep.subr.mxu0 0.0
    %2176 = vmatpush2.msra.mxu0 0.0
    %2177 = vmatprep.subr.mxu0 0.0
    %2178 = vmatpush2.msra.mxu0 0.0
    %2179 = vmatprep.subr.mxu0 0.0
    %2180 = vmatpush2.msra.mxu0 0.0
    %2181 = vmatprep.mubr.f32.mxu0 0.0
    %2182 = vmatmul.mubr.f32.gmra.mxu0 %v2076
    %v2183 = vpop.f32.mrf.mxu0
    %v2184 = vadd.f32 %v2116, %v2183
    %v2185 = vpop.f32.mrf.mxu0
    %2186 = vmatprep.mubr.f32.mxu0 0.0
    %2187 = vmatmul.mubr.f32.gmra.mxu0 %v2077
    %v2188 = vpop.f32.mrf.mxu0
    %v2189 = vadd.f32 %v2116, %v2188
    %v2190 = vpop.f32.mrf.mxu0
    %2191 = vmatprep.mubr.f32.mxu0 0.0
    %2192 = vmatmul.mubr.f32.gmra.mxu0 %v2078
    %v2193 = vpop.f32.mrf.mxu0
    %v2194 = vadd.f32 %v2116, %v2193
    %v2195 = vpop.f32.mrf.mxu0
    %2196 = vmatprep.mubr.f32.mxu0 0.0
    %2197 = vmatmul.mubr.f32.gmra.mxu0 %v2079
    %v2198 = vpop.f32.mrf.mxu0
    %v2199 = vadd.f32 %v2116, %v2198
    %v2200 = vpop.f32.mrf.mxu0
    %2201 = vmatprep.mubr.f32.mxu0 0.0
    %2202 = vmatmul.mubr.f32.gmra.mxu0 %v2080
    %v2203 = vpop.f32.mrf.mxu0
    %v2204 = vadd.f32 %v2116, %v2203
    %v2205 = vpop.f32.mrf.mxu0
    %2206 = vmatprep.mubr.f32.mxu0 0.0
    %2207 = vmatmul.mubr.f32.gmra.mxu0 %v2081
    %v2208 = vpop.f32.mrf.mxu0
    %v2209 = vadd.f32 %v2116, %v2208
    %v2210 = vpop.f32.mrf.mxu0
    %2211 = vmatprep.mubr.f32.mxu0 0.0
    %2212 = vmatmul.mubr.f32.gmra.mxu0 %v2082
    %v2213 = vpop.f32.mrf.mxu0
    %v2214 = vadd.f32 %v2116, %v2213
    %v2215 = vpop.f32.mrf.mxu0
    %2216 = vmatprep.mubr.f32.mxu0 0.0
    %2217 = vmatmul.mubr.f32.gmra.mxu0 %v2083
    %v2218 = vpop.f32.mrf.mxu0
    %v2219 = vadd.f32 %v2116, %v2218
    %v2220 = vpop.f32.mrf.mxu0
    %2221 = vmatprep.mubr.f32.mxu0 0.0
    %2222 = vmatmul.mubr.f32.gmra.mxu0 %v2084
    %v2223 = vpop.f32.mrf.mxu0
    %v2224 = vadd.f32 %v2116, %v2223
    %v2225 = vpop.f32.mrf.mxu0
    %2226 = vmatprep.mubr.f32.mxu0 0.0
    %2227 = vmatmul.mubr.f32.gmra.mxu0 %v2085
    %v2228 = vpop.f32.mrf.mxu0
    %v2229 = vadd.f32 %v2116, %v2228
    %v2230 = vpop.f32.mrf.mxu0
    %2231 = vmatprep.mubr.f32.mxu0 0.0
    %2232 = vmatmul.mubr.f32.gmra.mxu0 %v2086
    %v2233 = vpop.f32.mrf.mxu0
    %v2234 = vadd.f32 %v2116, %v2233
    %v2235 = vpop.f32.mrf.mxu0
    %2236 = vmatprep.mubr.f32.mxu0 0.0
    %2237 = vmatmul.mubr.f32.gmra.mxu0 %v2087
    %v2238 = vpop.f32.mrf.mxu0
    %v2239 = vadd.f32 %v2116, %v2238
    %v2240 = vpop.f32.mrf.mxu0
    %2241 = vmatprep.mubr.f32.mxu0 0.0
    %2242 = vmatmul.mubr.f32.gmra.mxu0 %v2088
    %v2243 = vpop.f32.mrf.mxu0
    %v2244 = vadd.f32 %v2116, %v2243
    %v2245 = vpop.f32.mrf.mxu0
    %2246 = vmatprep.mubr.f32.mxu0 0.0
    %2247 = vmatmul.mubr.f32.gmra.mxu0 %v2089
    %v2248 = vpop.f32.mrf.mxu0
    %v2249 = vadd.f32 %v2116, %v2248
    %v2250 = vpop.f32.mrf.mxu0
    %2251 = vmatprep.mubr.f32.mxu0 0.0
    %2252 = vmatmul.mubr.f32.gmra.mxu0 %v2090
    %v2253 = vpop.f32.mrf.mxu0
    %v2254 = vadd.f32 %v2116, %v2253
    %v2255 = vpop.f32.mrf.mxu0
    %2256 = vmatprep.mubr.f32.mxu0 0.0
    %2257 = vmatmul.mubr.f32.gmra.mxu0 %v2091
    %v2258 = vpop.f32.mrf.mxu0
    %v2259 = vadd.f32 %v2116, %v2258
    %v2260 = vpop.f32.mrf.mxu0
    %2261 = vmatprep.mubr.f32.mxu0 0.0
    %2262 = vmatmul.mubr.f32.gmra.mxu0 %v2092
    %v2263 = vpop.f32.mrf.mxu0
    %v2264 = vadd.f32 %v2116, %v2263
    %v2265 = vpop.f32.mrf.mxu0
    %2266 = vmatprep.mubr.f32.mxu0 0.0
    %2267 = vmatmul.mubr.f32.gmra.mxu0 %v2093
    %v2268 = vpop.f32.mrf.mxu0
    %v2269 = vadd.f32 %v2116, %v2268
    %v2270 = vpop.f32.mrf.mxu0
    %2271 = vmatprep.mubr.f32.mxu0 0.0
    %2272 = vmatmul.mubr.f32.gmra.mxu0 %v2094
    %v2273 = vpop.f32.mrf.mxu0
    %v2274 = vadd.f32 %v2116, %v2273
    %v2275 = vpop.f32.mrf.mxu0
    %2276 = vmatprep.mubr.f32.mxu0 0.0
    %2277 = vmatmul.mubr.f32.gmra.mxu0 %v2095
    %v2278 = vpop.f32.mrf.mxu0
    %v2279 = vadd.f32 %v2116, %v2278
    %v2280 = vpop.f32.mrf.mxu0
    %2281 = vdwg.mxu0
    %vm2282 = vcmp.gt.f32.partialorder %v2184, 0.0
    %vm2283 = vcmp.gt.f32.partialorder %v2189, 0.0
    %vm2284 = vcmp.gt.f32.partialorder %v2194, 0.0
    %vm2285 = vcmp.gt.f32.partialorder %v2199, 0.0
    %vm2286 = vcmp.gt.f32.partialorder %v2204, 0.0
    %vm2287 = vcmp.gt.f32.partialorder %v2209, 0.0
    %vm2288 = vcmp.gt.f32.partialorder %v2214, 0.0
    %vm2289 = vcmp.gt.f32.partialorder %v2219, 0.0
    %vm2290 = vcmp.gt.f32.partialorder %v2224, 0.0
    %vm2291 = vcmp.gt.f32.partialorder %v2229, 0.0
    %vm2292 = vcmp.gt.f32.partialorder %v2234, 0.0
    %vm2293 = vcmp.gt.f32.partialorder %v2239, 0.0
    %vm2294 = vcmp.gt.f32.partialorder %v2244, 0.0
    %vm2295 = vcmp.gt.f32.partialorder %v2249, 0.0
    %vm2296 = vcmp.gt.f32.partialorder %v2254, 0.0
    %vm2297 = vcmp.gt.f32.partialorder %v2259, 0.0
    %vm2298 = vcmp.gt.f32.partialorder %v2264, 0.0
    %vm2299 = vcmp.gt.f32.partialorder %v2269, 0.0
    %vm2300 = vcmp.gt.f32.partialorder %v2274, 0.0
    %vm2301 = vcmp.gt.f32.partialorder %v2279, 0.0
    %v2302 = vmin.f32 %v2184, 0.0
    %v2303 = vmin.f32 %v2189, 0.0
    %v2304 = vmin.f32 %v2194, 0.0
    %v2305 = vmin.f32 %v2199, 0.0
    %v2306 = vmin.f32 %v2204, 0.0
    %v2307 = vmin.f32 %v2209, 0.0
    %v2308 = vmin.f32 %v2214, 0.0
    %v2309 = vmin.f32 %v2219, 0.0
    %v2310 = vmin.f32 %v2224, 0.0
    %v2311 = vmin.f32 %v2229, 0.0
    %v2312 = vmin.f32 %v2234, 0.0
    %v2313 = vmin.f32 %v2239, 0.0
    %v2314 = vmin.f32 %v2244, 0.0
    %v2315 = vmin.f32 %v2249, 0.0
    %v2316 = vmin.f32 %v2254, 0.0
    %v2317 = vmin.f32 %v2259, 0.0
    %v2318 = vmin.f32 %v2264, 0.0
    %v2319 = vmin.f32 %v2269, 0.0
    %v2320 = vmin.f32 %v2274, 0.0
    %v2321 = vmin.f32 %v2279, 0.0
    %v2322 = vmul.f32 %v2302, 1.442695
    %v2323 = vpow.pop %v2322
    %v2324 = vmul.f32 %v2303, 1.442695
    %v2325 = vpow.pop %v2324
    %v2326 = vmul.f32 %v2304, 1.442695
    %v2327 = vpow.pop %v2326
    %v2328 = vmul.f32 %v2305, 1.442695
    %v2329 = vpow.pop %v2328
    %v2330 = vmul.f32 %v2306, 1.442695
    %v2331 = vpow.pop %v2330
    %v2332 = vmul.f32 %v2307, 1.442695
    %v2333 = vpow.pop %v2332
    %v2334 = vmul.f32 %v2308, 1.442695
    %v2335 = vpow.pop %v2334
    %v2336 = vmul.f32 %v2309, 1.442695
    %v2337 = vpow.pop %v2336
    %v2338 = vmul.f32 %v2310, 1.442695
    %v2339 = vpow.pop %v2338
    %v2340 = vmul.f32 %v2311, 1.442695
    %v2341 = vpow.pop %v2340
    %v2342 = vmul.f32 %v2312, 1.442695
    %v2343 = vpow.pop %v2342
    %v2344 = vmul.f32 %v2313, 1.442695
    %v2345 = vpow.pop %v2344
    %v2346 = vmul.f32 %v2314, 1.442695
    %v2347 = vpow.pop %v2346
    %v2348 = vmul.f32 %v2315, 1.442695
    %v2349 = vpow.pop %v2348
    %v2350 = vmul.f32 %v2316, 1.442695
    %v2351 = vpow.pop %v2350
    %v2352 = vmul.f32 %v2317, 1.442695
    %v2353 = vpow.pop %v2352
    %v2354 = vmul.f32 %v2318, 1.442695
    %v2355 = vpow.pop %v2354
    %v2356 = vmul.f32 %v2319, 1.442695
    %v2357 = vpow.pop %v2356
    %v2358 = vmul.f32 %v2320, 1.442695
    %v2359 = vpow.pop %v2358
    %v2360 = vmul.f32 %v2321, 1.442695
    %v2361 = vpow.pop %v2360
    %v2362 = vsub.f32 %v2323, 1.0
    %v2363 = vsub.f32 %v2325, 1.0
    %v2364 = vsub.f32 %v2327, 1.0
    %v2365 = vsub.f32 %v2329, 1.0
    %v2366 = vsub.f32 %v2331, 1.0
    %v2367 = vsub.f32 %v2333, 1.0
    %v2368 = vsub.f32 %v2335, 1.0
    %v2369 = vsub.f32 %v2337, 1.0
    %v2370 = vsub.f32 %v2339, 1.0
    %v2371 = vsub.f32 %v2341, 1.0
    %v2372 = vsub.f32 %v2343, 1.0
    %v2373 = vsub.f32 %v2345, 1.0
    %v2374 = vsub.f32 %v2347, 1.0
    %v2375 = vsub.f32 %v2349, 1.0
    %v2376 = vsub.f32 %v2351, 1.0
    %v2377 = vsub.f32 %v2353, 1.0
    %v2378 = vsub.f32 %v2355, 1.0
    %v2379 = vsub.f32 %v2357, 1.0
    %v2380 = vsub.f32 %v2359, 1.0
    %v2381 = vsub.f32 %v2361, 1.0
    %v2382 = vsel %vm2282, %v2184, %v2362
    %v2383 = vsel %vm2283, %v2189, %v2363
    %v2384 = vsel %vm2284, %v2194, %v2364
    %v2385 = vsel %vm2285, %v2199, %v2365
    %v2386 = vsel %vm2286, %v2204, %v2366
    %v2387 = vsel %vm2287, %v2209, %v2367
    %v2388 = vsel %vm2288, %v2214, %v2368
    %v2389 = vsel %vm2289, %v2219, %v2369
    %v2390 = vsel %vm2290, %v2224, %v2370
    %v2391 = vsel %vm2291, %v2229, %v2371
    %v2392 = vsel %vm2292, %v2234, %v2372
    %v2393 = vsel %vm2293, %v2239, %v2373
    %v2394 = vsel %vm2294, %v2244, %v2374
    %v2395 = vsel %vm2295, %v2249, %v2375
    %v2396 = vsel %vm2296, %v2254, %v2376
    %v2397 = vsel %vm2297, %v2259, %v2377
    %v2398 = vsel %vm2298, %v2264, %v2378
    %v2399 = vsel %vm2299, %v2269, %v2379
    %v2400 = vsel %vm2300, %v2274, %v2380
    %v2401 = vsel %vm2301, %v2279, %v2381
    %2402 = vmatprep.subr.mxu0 0.0
    %2403 = vmatpush1.msra.mxu0 %v180
    %2404 = vmatprep.subr.mxu0 0.0
    %2405 = vmatpush1.msra.mxu0 %v179
    %2406 = vmatprep.subr.mxu0 0.0
    %2407 = vmatpush1.msra.mxu0 %v178
    %2408 = vmatprep.subr.mxu0 0.0
    %2409 = vmatpush1.msra.mxu0 %v177
    %2410 = vmatprep.subr.mxu0 0.0
    %2411 = vmatpush1.msra.mxu0 %v176
    %2412 = vmatprep.subr.mxu0 0.0
    %2413 = vmatpush1.msra.mxu0 %v175
    %2414 = vmatprep.subr.mxu0 0.0
    %2415 = vmatpush1.msra.mxu0 %v174
    %2416 = vmatprep.subr.mxu0 0.0
    %2417 = vmatpush1.msra.mxu0 %v173
    %2418 = vmatprep.subr.mxu0 0.0
    %2419 = vmatpush1.msra.mxu0 %v172
    %2420 = vmatprep.subr.mxu0 0.0
    %2421 = vmatpush1.msra.mxu0 %v171
    %2422 = vmatprep.subr.mxu0 0.0
    %2423 = vmatpush1.msra.mxu0 %v170
    %2424 = vmatprep.subr.mxu0 0.0
    %2425 = vmatpush1.msra.mxu0 %v169
    %2426 = vmatprep.subr.mxu0 0.0
    %2427 = vmatpush1.msra.mxu0 %v168
    %2428 = vmatprep.subr.mxu0 0.0
    %2429 = vmatpush1.msra.mxu0 %v167
    %2430 = vmatprep.subr.mxu0 0.0
    %2431 = vmatpush1.msra.mxu0 %v166
    %2432 = vmatprep.subr.mxu0 0.0
    %2433 = vmatpush1.msra.mxu0 %v165
    %2434 = vmatprep.subr.mxu0 0.0
    %2435 = vmatpush2.msra.mxu0 0.0
    %2436 = vmatprep.subr.mxu0 0.0
    %2437 = vmatpush2.msra.mxu0 0.0
    %2438 = vmatprep.subr.mxu0 0.0
    %2439 = vmatpush2.msra.mxu0 0.0
    %2440 = vmatprep.subr.mxu0 0.0
    %2441 = vmatpush2.msra.mxu0 0.0
    %2442 = vmatprep.subr.mxu0 0.0
    %2443 = vmatpush2.msra.mxu0 0.0
    %2444 = vmatprep.subr.mxu0 0.0
    %2445 = vmatpush2.msra.mxu0 0.0
    %2446 = vmatprep.subr.mxu0 0.0
    %2447 = vmatpush2.msra.mxu0 0.0
    %2448 = vmatprep.subr.mxu0 0.0
    %2449 = vmatpush2.msra.mxu0 0.0
    %2450 = vmatprep.subr.mxu0 0.0
    %2451 = vmatpush2.msra.mxu0 0.0
    %2452 = vmatprep.subr.mxu0 0.0
    %2453 = vmatpush2.msra.mxu0 0.0
    %2454 = vmatprep.subr.mxu0 0.0
    %2455 = vmatpush2.msra.mxu0 0.0
    %2456 = vmatprep.subr.mxu0 0.0
    %2457 = vmatpush2.msra.mxu0 0.0
    %2458 = vmatprep.subr.mxu0 0.0
    %2459 = vmatpush2.msra.mxu0 0.0
    %2460 = vmatprep.subr.mxu0 0.0
    %2461 = vmatpush2.msra.mxu0 0.0
    %2462 = vmatprep.subr.mxu0 0.0
    %2463 = vmatpush2.msra.mxu0 0.0
    %2464 = vmatprep.subr.mxu0 0.0
    %2465 = vmatpush2.msra.mxu0 0.0
    %2466 = vmatprep.mubr.f32.mxu0 0.0
    %2467 = vmatmul.mubr.f32.gmra.mxu0 %v2382
    %v2468 = vpop.f32.mrf.mxu0
    %v2469 = vadd.f32 0.0, %v2468
    %v2470 = vpop.f32.mrf.mxu0
    %2471 = vmatprep.mubr.f32.mxu0 0.0
    %2472 = vmatmul.mubr.f32.gmra.mxu0 %v2383
    %v2473 = vpop.f32.mrf.mxu0
    %v2474 = vadd.f32 0.0, %v2473
    %v2475 = vpop.f32.mrf.mxu0
    %2476 = vmatprep.mubr.f32.mxu0 0.0
    %2477 = vmatmul.mubr.f32.gmra.mxu0 %v2384
    %v2478 = vpop.f32.mrf.mxu0
    %v2479 = vadd.f32 0.0, %v2478
    %v2480 = vpop.f32.mrf.mxu0
    %2481 = vmatprep.mubr.f32.mxu0 0.0
    %2482 = vmatmul.mubr.f32.gmra.mxu0 %v2385
    %v2483 = vpop.f32.mrf.mxu0
    %v2484 = vadd.f32 0.0, %v2483
    %v2485 = vpop.f32.mrf.mxu0
    %2486 = vmatprep.mubr.f32.mxu0 0.0
    %2487 = vmatmul.mubr.f32.gmra.mxu0 %v2386
    %v2488 = vpop.f32.mrf.mxu0
    %v2489 = vadd.f32 0.0, %v2488
    %v2490 = vpop.f32.mrf.mxu0
    %2491 = vmatprep.mubr.f32.mxu0 0.0
    %2492 = vmatmul.mubr.f32.gmra.mxu0 %v2387
    %v2493 = vpop.f32.mrf.mxu0
    %v2494 = vadd.f32 0.0, %v2493
    %v2495 = vpop.f32.mrf.mxu0
    %2496 = vmatprep.mubr.f32.mxu0 0.0
    %2497 = vmatmul.mubr.f32.gmra.mxu0 %v2388
    %v2498 = vpop.f32.mrf.mxu0
    %v2499 = vadd.f32 0.0, %v2498
    %v2500 = vpop.f32.mrf.mxu0
    %2501 = vmatprep.mubr.f32.mxu0 0.0
    %2502 = vmatmul.mubr.f32.gmra.mxu0 %v2389
    %v2503 = vpop.f32.mrf.mxu0
    %v2504 = vadd.f32 0.0, %v2503
    %v2505 = vpop.f32.mrf.mxu0
    %2506 = vmatprep.mubr.f32.mxu0 0.0
    %2507 = vmatmul.mubr.f32.gmra.mxu0 %v2390
    %v2508 = vpop.f32.mrf.mxu0
    %v2509 = vadd.f32 0.0, %v2508
    %v2510 = vpop.f32.mrf.mxu0
    %2511 = vmatprep.mubr.f32.mxu0 0.0
    %2512 = vmatmul.mubr.f32.gmra.mxu0 %v2391
    %v2513 = vpop.f32.mrf.mxu0
    %v2514 = vadd.f32 0.0, %v2513
    %v2515 = vpop.f32.mrf.mxu0
    %2516 = vmatprep.mubr.f32.mxu0 0.0
    %2517 = vmatmul.mubr.f32.gmra.mxu0 %v2392
    %v2518 = vpop.f32.mrf.mxu0
    %v2519 = vadd.f32 0.0, %v2518
    %v2520 = vpop.f32.mrf.mxu0
    %2521 = vmatprep.mubr.f32.mxu0 0.0
    %2522 = vmatmul.mubr.f32.gmra.mxu0 %v2393
    %v2523 = vpop.f32.mrf.mxu0
    %v2524 = vadd.f32 0.0, %v2523
    %v2525 = vpop.f32.mrf.mxu0
    %2526 = vmatprep.mubr.f32.mxu0 0.0
    %2527 = vmatmul.mubr.f32.gmra.mxu0 %v2394
    %v2528 = vpop.f32.mrf.mxu0
    %v2529 = vadd.f32 0.0, %v2528
    %v2530 = vpop.f32.mrf.mxu0
    %2531 = vmatprep.mubr.f32.mxu0 0.0
    %2532 = vmatmul.mubr.f32.gmra.mxu0 %v2395
    %v2533 = vpop.f32.mrf.mxu0
    %v2534 = vadd.f32 0.0, %v2533
    %v2535 = vpop.f32.mrf.mxu0
    %2536 = vmatprep.mubr.f32.mxu0 0.0
    %2537 = vmatmul.mubr.f32.gmra.mxu0 %v2396
    %v2538 = vpop.f32.mrf.mxu0
    %v2539 = vadd.f32 0.0, %v2538
    %v2540 = vpop.f32.mrf.mxu0
    %2541 = vmatprep.mubr.f32.mxu0 0.0
    %2542 = vmatmul.mubr.f32.gmra.mxu0 %v2397
    %v2543 = vpop.f32.mrf.mxu0
    %v2544 = vadd.f32 0.0, %v2543
    %v2545 = vpop.f32.mrf.mxu0
    %2546 = vmatprep.mubr.f32.mxu0 0.0
    %2547 = vmatmul.mubr.f32.gmra.mxu0 %v2398
    %v2548 = vpop.f32.mrf.mxu0
    %v2549 = vadd.f32 0.0, %v2548
    %v2550 = vpop.f32.mrf.mxu0
    %2551 = vmatprep.mubr.f32.mxu0 0.0
    %2552 = vmatmul.mubr.f32.gmra.mxu0 %v2399
    %v2553 = vpop.f32.mrf.mxu0
    %v2554 = vadd.f32 0.0, %v2553
    %v2555 = vpop.f32.mrf.mxu0
    %2556 = vmatprep.mubr.f32.mxu0 0.0
    %2557 = vmatmul.mubr.f32.gmra.mxu0 %v2400
    %v2558 = vpop.f32.mrf.mxu0
    %v2559 = vadd.f32 0.0, %v2558
    %v2560 = vpop.f32.mrf.mxu0
    %2561 = vmatprep.mubr.f32.mxu0 0.0
    %2562 = vmatmul.mubr.f32.gmra.mxu0 %v2401
    %v2563 = vpop.f32.mrf.mxu0
    %v2564 = vadd.f32 0.0, %v2563
    %v2565 = vpop.f32.mrf.mxu0
    %2566 = vdwg.mxu0
    %v2567 = vld [vmem:[#allocation9 + $0x3c0] sm:$0xff]
    %v2568 = vld [vmem:[#allocation9 + $0x3c8] sm:$0xff]
    %v2569 = vld [vmem:[#allocation9 + $0x3d0] sm:$0xff]
    %v2570 = vld [vmem:[#allocation9 + $0x3d8] sm:$0xff]
    %v2571 = vld [vmem:[#allocation9 + $0x3e0] sm:$0xff]
    %v2572 = vld [vmem:[#allocation9 + $0x3e8] sm:$0xff]
    %v2573 = vld [vmem:[#allocation9 + $0x3f0] sm:$0xff]
    %v2574 = vld [vmem:[#allocation9 + $0x3f8] sm:$0xff]
    %v2575 = vld [vmem:[#allocation9 + $0x400] sm:$0xff]
    %v2576 = vld [vmem:[#allocation9 + $0x408] sm:$0xff]
    %v2577 = vld [vmem:[#allocation9 + $0x410] sm:$0xff]
    %v2578 = vld [vmem:[#allocation9 + $0x418] sm:$0xff]
    %v2579 = vld [vmem:[#allocation9 + $0x420] sm:$0xff]
    %v2580 = vld [vmem:[#allocation9 + $0x428] sm:$0xff]
    %v2581 = vld [vmem:[#allocation9 + $0x430] sm:$0xff]
    %v2582 = vld [vmem:[#allocation9 + $0x438] sm:$0xff]
    %2583 = vmatprep.subr.mxu0 0.0
    %2584 = vmatpush1.msra.mxu0 %v2582
    %2585 = vmatprep.subr.mxu0 0.0
    %2586 = vmatpush1.msra.mxu0 %v2581
    %2587 = vmatprep.subr.mxu0 0.0
    %2588 = vmatpush1.msra.mxu0 %v2580
    %2589 = vmatprep.subr.mxu0 0.0
    %2590 = vmatpush1.msra.mxu0 %v2579
    %2591 = vmatprep.subr.mxu0 0.0
    %2592 = vmatpush1.msra.mxu0 %v2578
    %2593 = vmatprep.subr.mxu0 0.0
    %2594 = vmatpush1.msra.mxu0 %v2577
    %2595 = vmatprep.subr.mxu0 0.0
    %2596 = vmatpush1.msra.mxu0 %v2576
    %2597 = vmatprep.subr.mxu0 0.0
    %2598 = vmatpush1.msra.mxu0 %v2575
    %2599 = vmatprep.subr.mxu0 0.0
    %2600 = vmatpush1.msra.mxu0 %v2574
    %2601 = vmatprep.subr.mxu0 0.0
    %2602 = vmatpush1.msra.mxu0 %v2573
    %2603 = vmatprep.subr.mxu0 0.0
    %2604 = vmatpush1.msra.mxu0 %v2572
    %2605 = vmatprep.subr.mxu0 0.0
    %2606 = vmatpush1.msra.mxu0 %v2571
    %2607 = vmatprep.subr.mxu0 0.0
    %2608 = vmatpush1.msra.mxu0 %v2570
    %2609 = vmatprep.subr.mxu0 0.0
    %2610 = vmatpush1.msra.mxu0 %v2569
    %2611 = vmatprep.subr.mxu0 0.0
    %2612 = vmatpush1.msra.mxu0 %v2568
    %2613 = vmatprep.subr.mxu0 0.0
    %2614 = vmatpush1.msra.mxu0 %v2567
    %2615 = vmatprep.subr.mxu0 0.0
    %2616 = vmatpush2.msra.mxu0 0.0
    %2617 = vmatprep.subr.mxu0 0.0
    %2618 = vmatpush2.msra.mxu0 0.0
    %2619 = vmatprep.subr.mxu0 0.0
    %2620 = vmatpush2.msra.mxu0 0.0
    %2621 = vmatprep.subr.mxu0 0.0
    %2622 = vmatpush2.msra.mxu0 0.0
    %2623 = vmatprep.subr.mxu0 0.0
    %2624 = vmatpush2.msra.mxu0 0.0
    %2625 = vmatprep.subr.mxu0 0.0
    %2626 = vmatpush2.msra.mxu0 0.0
    %2627 = vmatprep.subr.mxu0 0.0
    %2628 = vmatpush2.msra.mxu0 0.0
    %2629 = vmatprep.subr.mxu0 0.0
    %2630 = vmatpush2.msra.mxu0 0.0
    %2631 = vmatprep.subr.mxu0 0.0
    %2632 = vmatpush2.msra.mxu0 0.0
    %2633 = vmatprep.subr.mxu0 0.0
    %2634 = vmatpush2.msra.mxu0 0.0
    %2635 = vmatprep.subr.mxu0 0.0
    %2636 = vmatpush2.msra.mxu0 0.0
    %2637 = vmatprep.subr.mxu0 0.0
    %2638 = vmatpush2.msra.mxu0 0.0
    %2639 = vmatprep.subr.mxu0 0.0
    %2640 = vmatpush2.msra.mxu0 0.0
    %2641 = vmatprep.subr.mxu0 0.0
    %2642 = vmatpush2.msra.mxu0 0.0
    %2643 = vmatprep.subr.mxu0 0.0
    %2644 = vmatpush2.msra.mxu0 0.0
    %2645 = vmatprep.subr.mxu0 0.0
    %2646 = vmatpush2.msra.mxu0 0.0
    %2647 = vmatprep.mubr.f32.mxu0 0.0
    %2648 = vmatmul.mubr.f32.gmra.mxu0 %v1842
    %v2649 = vpop.f32.mrf.mxu0
    %v2650 = vadd.f32 0.0, %v2649
    %v2651 = vpop.f32.mrf.mxu0
    %2652 = vmatprep.mubr.f32.mxu0 0.0
    %2653 = vmatmul.mubr.f32.gmra.mxu0 %v1843
    %v2654 = vpop.f32.mrf.mxu0
    %v2655 = vadd.f32 0.0, %v2654
    %v2656 = vpop.f32.mrf.mxu0
    %2657 = vmatprep.mubr.f32.mxu0 0.0
    %2658 = vmatmul.mubr.f32.gmra.mxu0 %v1844
    %v2659 = vpop.f32.mrf.mxu0
    %v2660 = vadd.f32 0.0, %v2659
    %v2661 = vpop.f32.mrf.mxu0
    %2662 = vmatprep.mubr.f32.mxu0 0.0
    %2663 = vmatmul.mubr.f32.gmra.mxu0 %v1845
    %v2664 = vpop.f32.mrf.mxu0
    %v2665 = vadd.f32 0.0, %v2664
    %v2666 = vpop.f32.mrf.mxu0
    %2667 = vmatprep.mubr.f32.mxu0 0.0
    %2668 = vmatmul.mubr.f32.gmra.mxu0 %v1846
    %v2669 = vpop.f32.mrf.mxu0
    %v2670 = vadd.f32 0.0, %v2669
    %v2671 = vpop.f32.mrf.mxu0
    %2672 = vmatprep.mubr.f32.mxu0 0.0
    %2673 = vmatmul.mubr.f32.gmra.mxu0 %v1847
    %v2674 = vpop.f32.mrf.mxu0
    %v2675 = vadd.f32 0.0, %v2674
    %v2676 = vpop.f32.mrf.mxu0
    %2677 = vmatprep.mubr.f32.mxu0 0.0
    %2678 = vmatmul.mubr.f32.gmra.mxu0 %v1848
    %v2679 = vpop.f32.mrf.mxu0
    %v2680 = vadd.f32 0.0, %v2679
    %v2681 = vpop.f32.mrf.mxu0
    %2682 = vmatprep.mubr.f32.mxu0 0.0
    %2683 = vmatmul.mubr.f32.gmra.mxu0 %v1849
    %v2684 = vpop.f32.mrf.mxu0
    %v2685 = vadd.f32 0.0, %v2684
    %v2686 = vpop.f32.mrf.mxu0
    %2687 = vdwg.mxu0
    %2688 = vmatprep.subr.mxu0 0.0
    %2689 = vmatpush1.msra.mxu0 0.0
    %2690 = vmatprep.subr.mxu0 0.0
    %2691 = vmatpush1.msra.mxu0 0.0
    %2692 = vmatprep.subr.mxu0 0.0
    %2693 = vmatpush1.msra.mxu0 0.0
    %2694 = vmatprep.subr.mxu0 0.0
    %2695 = vmatpush1.msra.mxu0 0.0
    %2696 = vmatprep.subr.mxu0 0.0
    %2697 = vmatpush1.msra.mxu0 0.0
    %2698 = vmatprep.subr.mxu0 0.0
    %2699 = vmatpush1.msra.mxu0 0.0
    %2700 = vmatprep.subr.mxu0 0.0
    %2701 = vmatpush1.msra.mxu0 0.0
    %2702 = vmatprep.subr.mxu0 0.0
    %2703 = vmatpush1.msra.mxu0 0.0
    %2704 = vmatprep.subr.mxu0 0.0
    %2705 = vmatpush1.msra.mxu0 %v2685
    %2706 = vmatprep.subr.mxu0 0.0
    %2707 = vmatpush1.msra.mxu0 %v2680
    %2708 = vmatprep.subr.mxu0 0.0
    %2709 = vmatpush1.msra.mxu0 %v2675
    %2710 = vmatprep.subr.mxu0 0.0
    %2711 = vmatpush1.msra.mxu0 %v2670
    %2712 = vmatprep.subr.mxu0 0.0
    %2713 = vmatpush1.msra.mxu0 %v2665
    %2714 = vmatprep.subr.mxu0 0.0
    %2715 = vmatpush1.msra.mxu0 %v2660
    %2716 = vmatprep.subr.mxu0 0.0
    %2717 = vmatpush1.msra.mxu0 %v2655
    %2718 = vmatprep.subr.mxu0 0.0
    %2719 = vmatpush1.msra.mxu0 %v2650
    %2720 = vmatprep.subr.mxu0 0.0
    %2721 = vmatpush2.msra.mxu0 0.0
    %2722 = vmatprep.subr.mxu0 0.0
    %2723 = vmatpush2.msra.mxu0 0.0
    %2724 = vmatprep.subr.mxu0 0.0
    %2725 = vmatpush2.msra.mxu0 0.0
    %2726 = vmatprep.subr.mxu0 0.0
    %2727 = vmatpush2.msra.mxu0 0.0
    %2728 = vmatprep.subr.mxu0 0.0
    %2729 = vmatpush2.msra.mxu0 0.0
    %2730 = vmatprep.subr.mxu0 0.0
    %2731 = vmatpush2.msra.mxu0 0.0
    %2732 = vmatprep.subr.mxu0 0.0
    %2733 = vmatpush2.msra.mxu0 0.0
    %2734 = vmatprep.subr.mxu0 0.0
    %2735 = vmatpush2.msra.mxu0 0.0
    %2736 = vmatprep.subr.mxu0 0.0
    %2737 = vmatpush2.msra.mxu0 0.0
    %2738 = vmatprep.subr.mxu0 0.0
    %2739 = vmatpush2.msra.mxu0 0.0
    %2740 = vmatprep.subr.mxu0 0.0
    %2741 = vmatpush2.msra.mxu0 0.0
    %2742 = vmatprep.subr.mxu0 0.0
    %2743 = vmatpush2.msra.mxu0 0.0
    %2744 = vmatprep.subr.mxu0 0.0
    %2745 = vmatpush2.msra.mxu0 0.0
    %2746 = vmatprep.subr.mxu0 0.0
    %2747 = vmatpush2.msra.mxu0 0.0
    %2748 = vmatprep.subr.mxu0 0.0
    %2749 = vmatpush2.msra.mxu0 0.0
    %2750 = vmatprep.subr.mxu0 0.0
    %2751 = vmatpush2.msra.mxu0 0.0
    %2752 = vmatprep.mubr.f32.mxu0 0.0
    %2753 = vmatmul.mubr.f32.gmra.mxu0 %v1037
    %v2754 = vpop.f32.mrf.mxu0
    %v2755 = vadd.f32 0.0, %v2754
    %v2756 = vpop.f32.mrf.mxu0
    %2757 = vmatprep.mubr.f32.mxu0 0.0
    %2758 = vmatmul.mubr.f32.gmra.mxu0 %v1040
    %v2759 = vpop.f32.mrf.mxu0
    %v2760 = vadd.f32 0.0, %v2759
    %v2761 = vpop.f32.mrf.mxu0
    %2762 = vmatprep.mubr.f32.mxu0 0.0
    %2763 = vmatmul.mubr.f32.gmra.mxu0 %v1043
    %v2764 = vpop.f32.mrf.mxu0
    %v2765 = vadd.f32 0.0, %v2764
    %v2766 = vpop.f32.mrf.mxu0
    %2767 = vmatprep.mubr.f32.mxu0 0.0
    %2768 = vmatmul.mubr.f32.gmra.mxu0 %v1046
    %v2769 = vpop.f32.mrf.mxu0
    %v2770 = vadd.f32 0.0, %v2769
    %v2771 = vpop.f32.mrf.mxu0
    %2772 = vmatprep.mubr.f32.mxu0 0.0
    %2773 = vmatmul.mubr.f32.gmra.mxu0 %v1049
    %v2774 = vpop.f32.mrf.mxu0
    %v2775 = vadd.f32 0.0, %v2774
    %v2776 = vpop.f32.mrf.mxu0
    %2777 = vmatprep.mubr.f32.mxu0 0.0
    %2778 = vmatmul.mubr.f32.gmra.mxu0 %v1052
    %v2779 = vpop.f32.mrf.mxu0
    %v2780 = vadd.f32 0.0, %v2779
    %v2781 = vpop.f32.mrf.mxu0
    %2782 = vmatprep.mubr.f32.mxu0 0.0
    %2783 = vmatmul.mubr.f32.gmra.mxu0 %v1055
    %v2784 = vpop.f32.mrf.mxu0
    %v2785 = vadd.f32 0.0, %v2784
    %v2786 = vpop.f32.mrf.mxu0
    %2787 = vmatprep.mubr.f32.mxu0 0.0
    %2788 = vmatmul.mubr.f32.gmra.mxu0 %v1058
    %v2789 = vpop.f32.mrf.mxu0
    %v2790 = vadd.f32 0.0, %v2789
    %v2791 = vpop.f32.mrf.mxu0
    %2792 = vmatprep.mubr.f32.mxu0 0.0
    %2793 = vmatmul.mubr.f32.gmra.mxu0 %v1061
    %v2794 = vpop.f32.mrf.mxu0
    %v2795 = vadd.f32 0.0, %v2794
    %v2796 = vpop.f32.mrf.mxu0
    %2797 = vmatprep.mubr.f32.mxu0 0.0
    %2798 = vmatmul.mubr.f32.gmra.mxu0 %v1064
    %v2799 = vpop.f32.mrf.mxu0
    %v2800 = vadd.f32 0.0, %v2799
    %v2801 = vpop.f32.mrf.mxu0
    %2802 = vmatprep.mubr.f32.mxu0 0.0
    %2803 = vmatmul.mubr.f32.gmra.mxu0 %v1067
    %v2804 = vpop.f32.mrf.mxu0
    %v2805 = vadd.f32 0.0, %v2804
    %v2806 = vpop.f32.mrf.mxu0
    %2807 = vmatprep.mubr.f32.mxu0 0.0
    %2808 = vmatmul.mubr.f32.gmra.mxu0 %v1070
    %v2809 = vpop.f32.mrf.mxu0
    %v2810 = vadd.f32 0.0, %v2809
    %v2811 = vpop.f32.mrf.mxu0
    %2812 = vmatprep.mubr.f32.mxu0 0.0
    %2813 = vmatmul.mubr.f32.gmra.mxu0 %v1073
    %v2814 = vpop.f32.mrf.mxu0
    %v2815 = vadd.f32 0.0, %v2814
    %v2816 = vpop.f32.mrf.mxu0
    %2817 = vmatprep.mubr.f32.mxu0 0.0
    %2818 = vmatmul.mubr.f32.gmra.mxu0 %v1076
    %v2819 = vpop.f32.mrf.mxu0
    %v2820 = vadd.f32 0.0, %v2819
    %v2821 = vpop.f32.mrf.mxu0
    %2822 = vmatprep.mubr.f32.mxu0 0.0
    %2823 = vmatmul.mubr.f32.gmra.mxu0 %v1079
    %v2824 = vpop.f32.mrf.mxu0
    %v2825 = vadd.f32 0.0, %v2824
    %v2826 = vpop.f32.mrf.mxu0
    %2827 = vmatprep.mubr.f32.mxu0 0.0
    %2828 = vmatmul.mubr.f32.gmra.mxu0 %v1082
    %v2829 = vpop.f32.mrf.mxu0
    %v2830 = vadd.f32 0.0, %v2829
    %v2831 = vpop.f32.mrf.mxu0
    %2832 = vmatprep.mubr.f32.mxu0 0.0
    %2833 = vmatmul.mubr.f32.gmra.mxu0 %v1085
    %v2834 = vpop.f32.mrf.mxu0
    %v2835 = vadd.f32 0.0, %v2834
    %v2836 = vpop.f32.mrf.mxu0
    %2837 = vmatprep.mubr.f32.mxu0 0.0
    %2838 = vmatmul.mubr.f32.gmra.mxu0 %v1088
    %v2839 = vpop.f32.mrf.mxu0
    %v2840 = vadd.f32 0.0, %v2839
    %v2841 = vpop.f32.mrf.mxu0
    %2842 = vmatprep.mubr.f32.mxu0 0.0
    %2843 = vmatmul.mubr.f32.gmra.mxu0 %v1091
    %v2844 = vpop.f32.mrf.mxu0
    %v2845 = vadd.f32 0.0, %v2844
    %v2846 = vpop.f32.mrf.mxu0
    %2847 = vmatprep.mubr.f32.mxu0 0.0
    %2848 = vmatmul.mubr.f32.gmra.mxu0 %v1094
    %v2849 = vpop.f32.mrf.mxu0
    %v2850 = vadd.f32 0.0, %v2849
    %v2851 = vpop.f32.mrf.mxu0
    %2852 = vdwg.mxu0
    %v2853 = vmul.f32 %v2469, %v2755
    %v2854 = vmul.f32 %v2474, %v2760
    %v2855 = vmul.f32 %v2479, %v2765
    %v2856 = vmul.f32 %v2484, %v2770
    %v2857 = vmul.f32 %v2489, %v2775
    %v2858 = vmul.f32 %v2494, %v2780
    %v2859 = vmul.f32 %v2499, %v2785
    %v2860 = vmul.f32 %v2504, %v2790
    %v2861 = vmul.f32 %v2509, %v2795
    %v2862 = vmul.f32 %v2514, %v2800
    %v2863 = vmul.f32 %v2519, %v2805
    %v2864 = vmul.f32 %v2524, %v2810
    %v2865 = vmul.f32 %v2529, %v2815
    %v2866 = vmul.f32 %v2534, %v2820
    %v2867 = vmul.f32 %v2539, %v2825
    %v2868 = vmul.f32 %v2544, %v2830
    %v2869 = vmul.f32 %v2549, %v2835
    %v2870 = vmul.f32 %v2554, %v2840
    %v2871 = vmul.f32 %v2559, %v2845
    %v2872 = vmul.f32 %v2564, %v2850
    %2873 = vmatprep.subr.mxu0 0.0
    %2874 = vmatpush1.msra.mxu0 %v2868
    %2875 = vmatprep.subr.mxu0 0.0
    %2876 = vmatpush1.msra.mxu0 %v2867
    %2877 = vmatprep.subr.mxu0 0.0
    %2878 = vmatpush1.msra.mxu0 %v2866
    %2879 = vmatprep.subr.mxu0 0.0
    %2880 = vmatpush1.msra.mxu0 %v2865
    %2881 = vmatprep.subr.mxu0 0.0
    %2882 = vmatpush1.msra.mxu0 %v2864
    %2883 = vmatprep.subr.mxu0 0.0
    %2884 = vmatpush1.msra.mxu0 %v2863
    %2885 = vmatprep.subr.mxu0 0.0
    %2886 = vmatpush1.msra.mxu0 %v2862
    %2887 = vmatprep.subr.mxu0 0.0
    %2888 = vmatpush1.msra.mxu0 %v2861
    %2889 = vmatprep.subr.mxu0 0.0
    %2890 = vmatpush1.msra.mxu0 %v2860
    %2891 = vmatprep.subr.mxu0 0.0
    %2892 = vmatpush1.msra.mxu0 %v2859
    %2893 = vmatprep.subr.mxu0 0.0
    %2894 = vmatpush1.msra.mxu0 %v2858
    %2895 = vmatprep.subr.mxu0 0.0
    %2896 = vmatpush1.msra.mxu0 %v2857
    %2897 = vmatprep.subr.mxu0 0.0
    %2898 = vmatpush1.msra.mxu0 %v2856
    %2899 = vmatprep.subr.mxu0 0.0
    %2900 = vmatpush1.msra.mxu0 %v2855
    %2901 = vmatprep.subr.mxu0 0.0
    %2902 = vmatpush1.msra.mxu0 %v2854
    %2903 = vmatprep.subr.mxu0 0.0
    %2904 = vmatpush1.msra.mxu0 %v2853
    %2905 = vmatprep.subr.mxu0 0.0
    %2906 = vmatpush2.msra.mxu0 0.0
    %2907 = vmatprep.subr.mxu0 0.0
    %2908 = vmatpush2.msra.mxu0 0.0
    %2909 = vmatprep.subr.mxu0 0.0
    %2910 = vmatpush2.msra.mxu0 0.0
    %2911 = vmatprep.subr.mxu0 0.0
    %2912 = vmatpush2.msra.mxu0 0.0
    %2913 = vmatprep.subr.mxu0 0.0
    %2914 = vmatpush2.msra.mxu0 0.0
    %2915 = vmatprep.subr.mxu0 0.0
    %2916 = vmatpush2.msra.mxu0 0.0
    %2917 = vmatprep.subr.mxu0 0.0
    %2918 = vmatpush2.msra.mxu0 0.0
    %2919 = vmatprep.subr.mxu0 0.0
    %2920 = vmatpush2.msra.mxu0 0.0
    %2921 = vmatprep.subr.mxu0 0.0
    %2922 = vmatpush2.msra.mxu0 0.0
    %2923 = vmatprep.subr.mxu0 0.0
    %2924 = vmatpush2.msra.mxu0 0.0
    %2925 = vmatprep.subr.mxu0 0.0
    %2926 = vmatpush2.msra.mxu0 0.0
    %2927 = vmatprep.subr.mxu0 0.0
    %2928 = vmatpush2.msra.mxu0 0.0
    %2929 = vmatprep.subr.mxu0 0.0
    %2930 = vmatpush2.msra.mxu0 %v2872
    %2931 = vmatprep.subr.mxu0 0.0
    %2932 = vmatpush2.msra.mxu0 %v2871
    %2933 = vmatprep.subr.mxu0 0.0
    %2934 = vmatpush2.msra.mxu0 %v2870
    %2935 = vmatprep.subr.mxu0 0.0
    %2936 = vmatpush2.msra.mxu0 %v2869
    %2937 = vmatprep.mubr.f32.mxu0 %v1283
    %2938 = vmatmul.mubr.f32.gmra.mxu0 %v140
    %v2939 = vpop.f32.mrf.mxu0
    %v2940 = vadd.f32 0.0, %v2939
    %v2941 = vpop.f32.mrf.mxu0
    %2942 = vmatprep.mubr.f32.mxu0 %v1286
    %2943 = vmatmul.mubr.f32.gmra.mxu0 %v142
    %v2944 = vpop.f32.mrf.mxu0
    %v2945 = vadd.f32 0.0, %v2944
    %v2946 = vpop.f32.mrf.mxu0
    %2947 = vmatprep.mubr.f32.mxu0 %v1289
    %2948 = vmatmul.mubr.f32.gmra.mxu0 %v144
    %v2949 = vpop.f32.mrf.mxu0
    %v2950 = vadd.f32 0.0, %v2949
    %v2951 = vpop.f32.mrf.mxu0
    %2952 = vmatprep.mubr.f32.mxu0 %v1292
    %2953 = vmatmul.mubr.f32.gmra.mxu0 %v146
    %v2954 = vpop.f32.mrf.mxu0
    %v2955 = vadd.f32 0.0, %v2954
    %v2956 = vpop.f32.mrf.mxu0
    %2957 = vmatprep.mubr.f32.mxu0 %v1295
    %2958 = vmatmul.mubr.f32.gmra.mxu0 %v148
    %v2959 = vpop.f32.mrf.mxu0
    %v2960 = vadd.f32 0.0, %v2959
    %v2961 = vpop.f32.mrf.mxu0
    %2962 = vmatprep.mubr.f32.mxu0 %v1298
    %2963 = vmatmul.mubr.f32.gmra.mxu0 %v150
    %v2964 = vpop.f32.mrf.mxu0
    %v2965 = vadd.f32 0.0, %v2964
    %v2966 = vpop.f32.mrf.mxu0
    %2967 = vmatprep.mubr.f32.mxu0 %v1301
    %2968 = vmatmul.mubr.f32.gmra.mxu0 %v152
    %v2969 = vpop.f32.mrf.mxu0
    %v2970 = vadd.f32 0.0, %v2969
    %v2971 = vpop.f32.mrf.mxu0
    %2972 = vmatprep.mubr.f32.mxu0 %v1304
    %2973 = vmatmul.mubr.f32.gmra.mxu0 %v154
    %v2974 = vpop.f32.mrf.mxu0
    %v2975 = vadd.f32 0.0, %v2974
    %v2976 = vpop.f32.mrf.mxu0
    %2977 = vdwg.mxu0
    %v2978 = vld [vmem:[#allocation9 + $0x440] sm:$0xff]
    %v2979 = vld [vmem:[#allocation9 + $0x448] sm:$0xff]
    %v2980 = vld [vmem:[#allocation9 + $0x450] sm:$0xff]
    %v2981 = vld [vmem:[#allocation9 + $0x458] sm:$0xff]
    %v2982 = vld [vmem:[#allocation9 + $0x460] sm:$0xff]
    %v2983 = vld [vmem:[#allocation9 + $0x468] sm:$0xff]
    %v2984 = vld [vmem:[#allocation9 + $0x470] sm:$0xff]
    %v2985 = vld [vmem:[#allocation9 + $0x478] sm:$0xff]
    %v2986 = vld [vmem:[#allocation9 + $0x480] sm:$0xff]
    %v2987 = vld [vmem:[#allocation9 + $0x488] sm:$0xff]
    %v2988 = vld [vmem:[#allocation9 + $0x490] sm:$0xff]
    %v2989 = vld [vmem:[#allocation9 + $0x498] sm:$0xff]
    %v2990 = vld [vmem:[#allocation9 + $0x4a0] sm:$0xff]
    %v2991 = vld [vmem:[#allocation9 + $0x4a8] sm:$0xff]
    %v2992 = vld [vmem:[#allocation9 + $0x4b0] sm:$0xff]
    %v2993 = vld [vmem:[#allocation9 + $0x4b8] sm:$0xff]
    %2994 = vmatprep.subr.mxu0 0.0
    %2995 = vmatpush1.msra.mxu0 %v2993
    %2996 = vmatprep.subr.mxu0 0.0
    %2997 = vmatpush1.msra.mxu0 %v2992
    %2998 = vmatprep.subr.mxu0 0.0
    %2999 = vmatpush1.msra.mxu0 %v2991
    %3000 = vmatprep.subr.mxu0 0.0
    %3001 = vmatpush1.msra.mxu0 %v2990
    %3002 = vmatprep.subr.mxu0 0.0
    %3003 = vmatpush1.msra.mxu0 %v2989
    %3004 = vmatprep.subr.mxu0 0.0
    %3005 = vmatpush1.msra.mxu0 %v2988
    %3006 = vmatprep.subr.mxu0 0.0
    %3007 = vmatpush1.msra.mxu0 %v2987
    %3008 = vmatprep.subr.mxu0 0.0
    %3009 = vmatpush1.msra.mxu0 %v2986
    %3010 = vmatprep.subr.mxu0 0.0
    %3011 = vmatpush1.msra.mxu0 %v2985
    %3012 = vmatprep.subr.mxu0 0.0
    %3013 = vmatpush1.msra.mxu0 %v2984
    %3014 = vmatprep.subr.mxu0 0.0
    %3015 = vmatpush1.msra.mxu0 %v2983
    %3016 = vmatprep.subr.mxu0 0.0
    %3017 = vmatpush1.msra.mxu0 %v2982
    %3018 = vmatprep.subr.mxu0 0.0
    %3019 = vmatpush1.msra.mxu0 %v2981
    %3020 = vmatprep.subr.mxu0 0.0
    %3021 = vmatpush1.msra.mxu0 %v2980
    %3022 = vmatprep.subr.mxu0 0.0
    %3023 = vmatpush1.msra.mxu0 %v2979
    %3024 = vmatprep.subr.mxu0 0.0
    %3025 = vmatpush1.msra.mxu0 %v2978
    %3026 = vmatprep.subr.mxu0 0.0
    %3027 = vmatpush2.msra.mxu0 0.0
    %3028 = vmatprep.subr.mxu0 0.0
    %3029 = vmatpush2.msra.mxu0 0.0
    %3030 = vmatprep.subr.mxu0 0.0
    %3031 = vmatpush2.msra.mxu0 0.0
    %3032 = vmatprep.subr.mxu0 0.0
    %3033 = vmatpush2.msra.mxu0 0.0
    %3034 = vmatprep.subr.mxu0 0.0
    %3035 = vmatpush2.msra.mxu0 0.0
    %3036 = vmatprep.subr.mxu0 0.0
    %3037 = vmatpush2.msra.mxu0 0.0
    %3038 = vmatprep.subr.mxu0 0.0
    %3039 = vmatpush2.msra.mxu0 0.0
    %3040 = vmatprep.subr.mxu0 0.0
    %3041 = vmatpush2.msra.mxu0 0.0
    %3042 = vmatprep.subr.mxu0 0.0
    %3043 = vmatpush2.msra.mxu0 0.0
    %3044 = vmatprep.subr.mxu0 0.0
    %3045 = vmatpush2.msra.mxu0 0.0
    %3046 = vmatprep.subr.mxu0 0.0
    %3047 = vmatpush2.msra.mxu0 0.0
    %3048 = vmatprep.subr.mxu0 0.0
    %3049 = vmatpush2.msra.mxu0 0.0
    %3050 = vmatprep.subr.mxu0 0.0
    %3051 = vmatpush2.msra.mxu0 0.0
    %3052 = vmatprep.subr.mxu0 0.0
    %3053 = vmatpush2.msra.mxu0 0.0
    %3054 = vmatprep.subr.mxu0 0.0
    %3055 = vmatpush2.msra.mxu0 0.0
    %3056 = vmatprep.subr.mxu0 0.0
    %3057 = vmatpush2.msra.mxu0 0.0
    %3058 = vmatprep.mubr.f32.mxu0 0.0
    %3059 = vmatmul.mubr.f32.gmra.mxu0 %v1842
    %v3060 = vpop.f32.mrf.mxu0
    %v3061 = vadd.f32 0.0, %v3060
    %v3062 = vpop.f32.mrf.mxu0
    %3063 = vmatprep.mubr.f32.mxu0 0.0
    %3064 = vmatmul.mubr.f32.gmra.mxu0 %v1843
    %v3065 = vpop.f32.mrf.mxu0
    %v3066 = vadd.f32 0.0, %v3065
    %v3067 = vpop.f32.mrf.mxu0
    %3068 = vmatprep.mubr.f32.mxu0 0.0
    %3069 = vmatmul.mubr.f32.gmra.mxu0 %v1844
    %v3070 = vpop.f32.mrf.mxu0
    %v3071 = vadd.f32 0.0, %v3070
    %v3072 = vpop.f32.mrf.mxu0
    %3073 = vmatprep.mubr.f32.mxu0 0.0
    %3074 = vmatmul.mubr.f32.gmra.mxu0 %v1845
    %v3075 = vpop.f32.mrf.mxu0
    %v3076 = vadd.f32 0.0, %v3075
    %v3077 = vpop.f32.mrf.mxu0
    %3078 = vmatprep.mubr.f32.mxu0 0.0
    %3079 = vmatmul.mubr.f32.gmra.mxu0 %v1846
    %v3080 = vpop.f32.mrf.mxu0
    %v3081 = vadd.f32 0.0, %v3080
    %v3082 = vpop.f32.mrf.mxu0
    %3083 = vmatprep.mubr.f32.mxu0 0.0
    %3084 = vmatmul.mubr.f32.gmra.mxu0 %v1847
    %v3085 = vpop.f32.mrf.mxu0
    %v3086 = vadd.f32 0.0, %v3085
    %v3087 = vpop.f32.mrf.mxu0
    %3088 = vmatprep.mubr.f32.mxu0 0.0
    %3089 = vmatmul.mubr.f32.gmra.mxu0 %v1848
    %v3090 = vpop.f32.mrf.mxu0
    %v3091 = vadd.f32 0.0, %v3090
    %v3092 = vpop.f32.mrf.mxu0
    %3093 = vmatprep.mubr.f32.mxu0 0.0
    %3094 = vmatmul.mubr.f32.gmra.mxu0 %v1849
    %v3095 = vpop.f32.mrf.mxu0
    %v3096 = vadd.f32 0.0, %v3095
    %v3097 = vpop.f32.mrf.mxu0
    %3098 = vdwg.mxu0
    %3099 = vmatprep.subr.mxu0 0.0
    %3100 = vmatpush1.msra.mxu0 %v196
    %3101 = vmatprep.subr.mxu0 0.0
    %3102 = vmatpush1.msra.mxu0 %v195
    %3103 = vmatprep.subr.mxu0 0.0
    %3104 = vmatpush1.msra.mxu0 %v194
    %3105 = vmatprep.subr.mxu0 0.0
    %3106 = vmatpush1.msra.mxu0 %v193
    %3107 = vmatprep.subr.mxu0 0.0
    %3108 = vmatpush1.msra.mxu0 %v192
    %3109 = vmatprep.subr.mxu0 0.0
    %3110 = vmatpush1.msra.mxu0 %v191
    %3111 = vmatprep.subr.mxu0 0.0
    %3112 = vmatpush1.msra.mxu0 %v190
    %3113 = vmatprep.subr.mxu0 0.0
    %3114 = vmatpush1.msra.mxu0 %v189
    %3115 = vmatprep.subr.mxu0 0.0
    %3116 = vmatpush1.msra.mxu0 %v188
    %3117 = vmatprep.subr.mxu0 0.0
    %3118 = vmatpush1.msra.mxu0 %v187
    %3119 = vmatprep.subr.mxu0 0.0
    %3120 = vmatpush1.msra.mxu0 %v186
    %3121 = vmatprep.subr.mxu0 0.0
    %3122 = vmatpush1.msra.mxu0 %v185
    %3123 = vmatprep.subr.mxu0 0.0
    %3124 = vmatpush1.msra.mxu0 %v184
    %3125 = vmatprep.subr.mxu0 0.0
    %3126 = vmatpush1.msra.mxu0 %v183
    %3127 = vmatprep.subr.mxu0 0.0
    %3128 = vmatpush1.msra.mxu0 %v182
    %3129 = vmatprep.subr.mxu0 0.0
    %3130 = vmatpush1.msra.mxu0 %v181
    %3131 = vmatprep.subr.mxu0 0.0
    %3132 = vmatpush2.msra.mxu0 0.0
    %3133 = vmatprep.subr.mxu0 0.0
    %3134 = vmatpush2.msra.mxu0 0.0
    %3135 = vmatprep.subr.mxu0 0.0
    %3136 = vmatpush2.msra.mxu0 0.0
    %3137 = vmatprep.subr.mxu0 0.0
    %3138 = vmatpush2.msra.mxu0 0.0
    %3139 = vmatprep.subr.mxu0 0.0
    %3140 = vmatpush2.msra.mxu0 0.0
    %3141 = vmatprep.subr.mxu0 0.0
    %3142 = vmatpush2.msra.mxu0 0.0
    %3143 = vmatprep.subr.mxu0 0.0
    %3144 = vmatpush2.msra.mxu0 0.0
    %3145 = vmatprep.subr.mxu0 0.0
    %3146 = vmatpush2.msra.mxu0 0.0
    %3147 = vmatprep.subr.mxu0 0.0
    %3148 = vmatpush2.msra.mxu0 0.0
    %3149 = vmatprep.subr.mxu0 0.0
    %3150 = vmatpush2.msra.mxu0 0.0
    %3151 = vmatprep.subr.mxu0 0.0
    %3152 = vmatpush2.msra.mxu0 0.0
    %3153 = vmatprep.subr.mxu0 0.0
    %3154 = vmatpush2.msra.mxu0 0.0
    %3155 = vmatprep.subr.mxu0 0.0
    %3156 = vmatpush2.msra.mxu0 0.0
    %3157 = vmatprep.subr.mxu0 0.0
    %3158 = vmatpush2.msra.mxu0 0.0
    %3159 = vmatprep.subr.mxu0 0.0
    %3160 = vmatpush2.msra.mxu0 0.0
    %3161 = vmatprep.subr.mxu0 0.0
    %3162 = vmatpush2.msra.mxu0 0.0
    %3163 = vmatprep.mubr.f32.mxu0 0.0
    %3164 = vmatmul.mubr.f32.gmra.mxu0 %v2940
    %v3165 = vpop.f32.mrf.mxu0
    %v3166 = vadd.f32 %v3061, %v3165
    %v3167 = vpop.f32.mrf.mxu0
    %3168 = vmatprep.mubr.f32.mxu0 0.0
    %3169 = vmatmul.mubr.f32.gmra.mxu0 %v2945
    %v3170 = vpop.f32.mrf.mxu0
    %v3171 = vadd.f32 %v3066, %v3170
    %v3172 = vpop.f32.mrf.mxu0
    %3173 = vmatprep.mubr.f32.mxu0 0.0
    %3174 = vmatmul.mubr.f32.gmra.mxu0 %v2950
    %v3175 = vpop.f32.mrf.mxu0
    %v3176 = vadd.f32 %v3071, %v3175
    %v3177 = vpop.f32.mrf.mxu0
    %3178 = vmatprep.mubr.f32.mxu0 0.0
    %3179 = vmatmul.mubr.f32.gmra.mxu0 %v2955
    %v3180 = vpop.f32.mrf.mxu0
    %v3181 = vadd.f32 %v3076, %v3180
    %v3182 = vpop.f32.mrf.mxu0
    %3183 = vmatprep.mubr.f32.mxu0 0.0
    %3184 = vmatmul.mubr.f32.gmra.mxu0 %v2960
    %v3185 = vpop.f32.mrf.mxu0
    %v3186 = vadd.f32 %v3081, %v3185
    %v3187 = vpop.f32.mrf.mxu0
    %3188 = vmatprep.mubr.f32.mxu0 0.0
    %3189 = vmatmul.mubr.f32.gmra.mxu0 %v2965
    %v3190 = vpop.f32.mrf.mxu0
    %v3191 = vadd.f32 %v3086, %v3190
    %v3192 = vpop.f32.mrf.mxu0
    %3193 = vmatprep.mubr.f32.mxu0 0.0
    %3194 = vmatmul.mubr.f32.gmra.mxu0 %v2970
    %v3195 = vpop.f32.mrf.mxu0
    %v3196 = vadd.f32 %v3091, %v3195
    %v3197 = vpop.f32.mrf.mxu0
    %3198 = vmatprep.mubr.f32.mxu0 0.0
    %3199 = vmatmul.mubr.f32.gmra.mxu0 %v2975
    %v3200 = vpop.f32.mrf.mxu0
    %v3201 = vadd.f32 %v3096, %v3200
    %v3202 = vpop.f32.mrf.mxu0
    %3203 = vdwg.mxu0
    %v3204 = vld [vmem:[#allocation9 + $0x4c0] sm:$0x1]
    %v3205 = vlaneseq
    %v3206 = vshrl.u32 %v3205, 7
    %v3207 = vsub.s32 0, %v3206
    %v3208 = vrot.slane %v3204, %v3207
    %v3209 = vadd.f32 %v3166, %v3208
    %v3210 = vadd.f32 %v3171, %v3208
    %v3211 = vadd.f32 %v3176, %v3208
    %v3212 = vadd.f32 %v3181, %v3208
    %v3213 = vadd.f32 %v3186, %v3208
    %v3214 = vadd.f32 %v3191, %v3208
    %v3215 = vadd.f32 %v3196, %v3208
    %v3216 = vadd.f32 %v3201, %v3208
    %vm3217 = vcmp.gt.f32.partialorder %v3209, 0.0
    %vm3218 = vcmp.gt.f32.partialorder %v3210, 0.0
    %vm3219 = vcmp.gt.f32.partialorder %v3211, 0.0
    %vm3220 = vcmp.gt.f32.partialorder %v3212, 0.0
    %vm3221 = vcmp.gt.f32.partialorder %v3213, 0.0
    %vm3222 = vcmp.gt.f32.partialorder %v3214, 0.0
    %vm3223 = vcmp.gt.f32.partialorder %v3215, 0.0
    %vm3224 = vcmp.gt.f32.partialorder %v3216, 0.0
    %v3225 = vmul.f32 %v3209, 0.01
    %v3226 = vmul.f32 %v3210, 0.01
    %v3227 = vmul.f32 %v3211, 0.01
    %v3228 = vmul.f32 %v3212, 0.01
    %v3229 = vmul.f32 %v3213, 0.01
    %v3230 = vmul.f32 %v3214, 0.01
    %v3231 = vmul.f32 %v3215, 0.01
    %v3232 = vmul.f32 %v3216, 0.01
    %v3233 = vsel %vm3217, %v3209, %v3225
    %v3234 = vsel %vm3218, %v3210, %v3226
    %v3235 = vsel %vm3219, %v3211, %v3227
    %v3236 = vsel %vm3220, %v3212, %v3228
    %v3237 = vsel %vm3221, %v3213, %v3229
    %v3238 = vsel %vm3222, %v3214, %v3230
    %v3239 = vsel %vm3223, %v3215, %v3231
    %v3240 = vsel %vm3224, %v3216, %v3232
    %v3241 = vld [vmem:[#allocation9 + $0x4c8] sm:$0xff]
    %v3242 = vld [vmem:[#allocation9 + $0x4d0] sm:$0xff]
    %v3243 = vld [vmem:[#allocation9 + $0x4d8] sm:$0xff]
    %v3244 = vld [vmem:[#allocation9 + $0x4e0] sm:$0xff]
    %v3245 = vld [vmem:[#allocation9 + $0x4e8] sm:$0xff]
    %v3246 = vld [vmem:[#allocation9 + $0x4f0] sm:$0xff]
    %v3247 = vld [vmem:[#allocation9 + $0x4f8] sm:$0xff]
    %v3248 = vld [vmem:[#allocation9 + $0x500] sm:$0xff]
    %v3249 = vld [vmem:[#allocation9 + $0x508] sm:$0xff]
    %v3250 = vld [vmem:[#allocation9 + $0x510] sm:$0xff]
    %v3251 = vld [vmem:[#allocation9 + $0x518] sm:$0xff]
    %v3252 = vld [vmem:[#allocation9 + $0x520] sm:$0xff]
    %v3253 = vld [vmem:[#allocation9 + $0x528] sm:$0xff]
    %v3254 = vld [vmem:[#allocation9 + $0x530] sm:$0xff]
    %v3255 = vld [vmem:[#allocation9 + $0x538] sm:$0xff]
    %v3256 = vld [vmem:[#allocation9 + $0x540] sm:$0xff]
    %v3257 = vld [vmem:[#allocation9 + $0x548] sm:$0x1]
    %v3258 = vlaneseq
    %v3259 = vshrl.u32 %v3258, 7
    %v3260 = vsub.s32 0, %v3259
    %v3261 = vrot.slane %v3257, %v3260
    %3262 = vmatprep.subr.mxu0 0.0
    %3263 = vmatpush1.msra.mxu0 %v3256
    %3264 = vmatprep.subr.mxu0 0.0
    %3265 = vmatpush1.msra.mxu0 %v3255
    %3266 = vmatprep.subr.mxu0 0.0
    %3267 = vmatpush1.msra.mxu0 %v3254
    %3268 = vmatprep.subr.mxu0 0.0
    %3269 = vmatpush1.msra.mxu0 %v3253
    %3270 = vmatprep.subr.mxu0 0.0
    %3271 = vmatpush1.msra.mxu0 %v3252
    %3272 = vmatprep.subr.mxu0 0.0
    %3273 = vmatpush1.msra.mxu0 %v3251
    %3274 = vmatprep.subr.mxu0 0.0
    %3275 = vmatpush1.msra.mxu0 %v3250
    %3276 = vmatprep.subr.mxu0 0.0
    %3277 = vmatpush1.msra.mxu0 %v3249
    %3278 = vmatprep.subr.mxu0 0.0
    %3279 = vmatpush1.msra.mxu0 %v3248
    %3280 = vmatprep.subr.mxu0 0.0
    %3281 = vmatpush1.msra.mxu0 %v3247
    %3282 = vmatprep.subr.mxu0 0.0
    %3283 = vmatpush1.msra.mxu0 %v3246
    %3284 = vmatprep.subr.mxu0 0.0
    %3285 = vmatpush1.msra.mxu0 %v3245
    %3286 = vmatprep.subr.mxu0 0.0
    %3287 = vmatpush1.msra.mxu0 %v3244
    %3288 = vmatprep.subr.mxu0 0.0
    %3289 = vmatpush1.msra.mxu0 %v3243
    %3290 = vmatprep.subr.mxu0 0.0
    %3291 = vmatpush1.msra.mxu0 %v3242
    %3292 = vmatprep.subr.mxu0 0.0
    %3293 = vmatpush1.msra.mxu0 %v3241
    %3294 = vmatprep.subr.mxu0 0.0
    %3295 = vmatpush2.msra.mxu0 0.0
    %3296 = vmatprep.subr.mxu0 0.0
    %3297 = vmatpush2.msra.mxu0 0.0
    %3298 = vmatprep.subr.mxu0 0.0
    %3299 = vmatpush2.msra.mxu0 0.0
    %3300 = vmatprep.subr.mxu0 0.0
    %3301 = vmatpush2.msra.mxu0 0.0
    %3302 = vmatprep.subr.mxu0 0.0
    %3303 = vmatpush2.msra.mxu0 0.0
    %3304 = vmatprep.subr.mxu0 0.0
    %3305 = vmatpush2.msra.mxu0 0.0
    %3306 = vmatprep.subr.mxu0 0.0
    %3307 = vmatpush2.msra.mxu0 0.0
    %3308 = vmatprep.subr.mxu0 0.0
    %3309 = vmatpush2.msra.mxu0 0.0
    %3310 = vmatprep.subr.mxu0 0.0
    %3311 = vmatpush2.msra.mxu0 0.0
    %3312 = vmatprep.subr.mxu0 0.0
    %3313 = vmatpush2.msra.mxu0 0.0
    %3314 = vmatprep.subr.mxu0 0.0
    %3315 = vmatpush2.msra.mxu0 0.0
    %3316 = vmatprep.subr.mxu0 0.0
    %3317 = vmatpush2.msra.mxu0 0.0
    %3318 = vmatprep.subr.mxu0 0.0
    %3319 = vmatpush2.msra.mxu0 0.0
    %3320 = vmatprep.subr.mxu0 0.0
    %3321 = vmatpush2.msra.mxu0 0.0
    %3322 = vmatprep.subr.mxu0 0.0
    %3323 = vmatpush2.msra.mxu0 0.0
    %3324 = vmatprep.subr.mxu0 0.0
    %3325 = vmatpush2.msra.mxu0 0.0
    %3326 = vmatprep.mubr.f32.mxu0 0.0
    %3327 = vmatmul.mubr.f32.gmra.mxu0 %v3233
    %v3328 = vpop.f32.mrf.mxu0
    %v3329 = vadd.f32 %v3261, %v3328
    %v3330 = vpop.f32.mrf.mxu0
    %3331 = vmatprep.mubr.f32.mxu0 0.0
    %3332 = vmatmul.mubr.f32.gmra.mxu0 %v3234
    %v3333 = vpop.f32.mrf.mxu0
    %v3334 = vadd.f32 %v3261, %v3333
    %v3335 = vpop.f32.mrf.mxu0
    %3336 = vmatprep.mubr.f32.mxu0 0.0
    %3337 = vmatmul.mubr.f32.gmra.mxu0 %v3235
    %v3338 = vpop.f32.mrf.mxu0
    %v3339 = vadd.f32 %v3261, %v3338
    %v3340 = vpop.f32.mrf.mxu0
    %3341 = vmatprep.mubr.f32.mxu0 0.0
    %3342 = vmatmul.mubr.f32.gmra.mxu0 %v3236
    %v3343 = vpop.f32.mrf.mxu0
    %v3344 = vadd.f32 %v3261, %v3343
    %v3345 = vpop.f32.mrf.mxu0
    %3346 = vmatprep.mubr.f32.mxu0 0.0
    %3347 = vmatmul.mubr.f32.gmra.mxu0 %v3237
    %v3348 = vpop.f32.mrf.mxu0
    %v3349 = vadd.f32 %v3261, %v3348
    %v3350 = vpop.f32.mrf.mxu0
    %3351 = vmatprep.mubr.f32.mxu0 0.0
    %3352 = vmatmul.mubr.f32.gmra.mxu0 %v3238
    %v3353 = vpop.f32.mrf.mxu0
    %v3354 = vadd.f32 %v3261, %v3353
    %v3355 = vpop.f32.mrf.mxu0
    %3356 = vmatprep.mubr.f32.mxu0 0.0
    %3357 = vmatmul.mubr.f32.gmra.mxu0 %v3239
    %v3358 = vpop.f32.mrf.mxu0
    %v3359 = vadd.f32 %v3261, %v3358
    %v3360 = vpop.f32.mrf.mxu0
    %3361 = vmatprep.mubr.f32.mxu0 0.0
    %3362 = vmatmul.mubr.f32.gmra.mxu0 %v3240
    %v3363 = vpop.f32.mrf.mxu0
    %v3364 = vadd.f32 %v3261, %v3363
    %v3365 = vpop.f32.mrf.mxu0
    %3366 = vdwg.mxu0
    %vm3367 = vcmp.gt.f32.partialorder %v3329, 0.0
    %vm3368 = vcmp.gt.f32.partialorder %v3334, 0.0
    %vm3369 = vcmp.gt.f32.partialorder %v3339, 0.0
    %vm3370 = vcmp.gt.f32.partialorder %v3344, 0.0
    %vm3371 = vcmp.gt.f32.partialorder %v3349, 0.0
    %vm3372 = vcmp.gt.f32.partialorder %v3354, 0.0
    %vm3373 = vcmp.gt.f32.partialorder %v3359, 0.0
    %vm3374 = vcmp.gt.f32.partialorder %v3364, 0.0
    %v3375 = vmul.f32 %v3329, 0.01
    %v3376 = vmul.f32 %v3334, 0.01
    %v3377 = vmul.f32 %v3339, 0.01
    %v3378 = vmul.f32 %v3344, 0.01
    %v3379 = vmul.f32 %v3349, 0.01
    %v3380 = vmul.f32 %v3354, 0.01
    %v3381 = vmul.f32 %v3359, 0.01
    %v3382 = vmul.f32 %v3364, 0.01
    %v3383 = vsel %vm3367, %v3329, %v3375
    %v3384 = vsel %vm3368, %v3334, %v3376
    %v3385 = vsel %vm3369, %v3339, %v3377
    %v3386 = vsel %vm3370, %v3344, %v3378
    %v3387 = vsel %vm3371, %v3349, %v3379
    %v3388 = vsel %vm3372, %v3354, %v3380
    %v3389 = vsel %vm3373, %v3359, %v3381
    %v3390 = vsel %vm3374, %v3364, %v3382
    %v3391 = vld [vmem:[#allocation9 + $0x550] sm:$0x1]
    %v3392 = vlaneseq
    %v3393 = vshrl.u32 %v3392, 7
    %v3394 = vsub.s32 0, %v3393
    %v3395 = vrot.slane %v3391, %v3394
    %v3396 = vmul.f32 %v3383, %v3395
    %v3397 = vmul.f32 %v3384, %v3395
    %v3398 = vmul.f32 %v3385, %v3395
    %v3399 = vmul.f32 %v3386, %v3395
    %v3400 = vmul.f32 %v3387, %v3395
    %v3401 = vmul.f32 %v3388, %v3395
    %v3402 = vmul.f32 %v3389, %v3395
    %v3403 = vmul.f32 %v3390, %v3395
    %v3404 = vld [vmem:[#allocation9 + $0x558] sm:$0x1]
    %v3405 = vlaneseq
    %v3406 = vshrl.u32 %v3405, 7
    %v3407 = vsub.s32 0, %v3406
    %v3408 = vrot.slane %v3404, %v3407
    %v3409 = vadd.f32 %v3396, %v3408
    %v3410 = vadd.f32 %v3397, %v3408
    %v3411 = vadd.f32 %v3398, %v3408
    %v3412 = vadd.f32 %v3399, %v3408
    %v3413 = vadd.f32 %v3400, %v3408
    %v3414 = vadd.f32 %v3401, %v3408
    %v3415 = vadd.f32 %v3402, %v3408
    %v3416 = vadd.f32 %v3403, %v3408
    %v3417 = vmax.f32 %v1842, %v3409
    %v3418 = vmax.f32 %v1843, %v3410
    %v3419 = vmax.f32 %v1844, %v3411
    %v3420 = vmax.f32 %v1845, %v3412
    %v3421 = vmax.f32 %v1846, %v3413
    %v3422 = vmax.f32 %v1847, %v3414
    %v3423 = vmax.f32 %v1848, %v3415
    %v3424 = vmax.f32 %v1849, %v3416
    %v3425 = vld [vmem:[#allocation9 + $0x560] sm:$0xff]
    %v3426 = vld [vmem:[#allocation9 + $0x568] sm:$0xff]
    %v3427 = vld [vmem:[#allocation9 + $0x570] sm:$0xff]
    %v3428 = vld [vmem:[#allocation9 + $0x578] sm:$0xff]
    %v3429 = vld [vmem:[#allocation9 + $0x580] sm:$0xff]
    %v3430 = vld [vmem:[#allocation9 + $0x588] sm:$0xff]
    %v3431 = vld [vmem:[#allocation9 + $0x590] sm:$0xff]
    %v3432 = vld [vmem:[#allocation9 + $0x598] sm:$0xff]
    %v3433 = vld [vmem:[#allocation9 + $0x5a0] sm:$0xff]
    %v3434 = vld [vmem:[#allocation9 + $0x5a8] sm:$0xff]
    %v3435 = vld [vmem:[#allocation9 + $0x5b0] sm:$0xff]
    %v3436 = vld [vmem:[#allocation9 + $0x5b8] sm:$0xff]
    %v3437 = vld [vmem:[#allocation9 + $0x5c0] sm:$0xff]
    %v3438 = vld [vmem:[#allocation9 + $0x5c8] sm:$0xff]
    %v3439 = vld [vmem:[#allocation9 + $0x5d0] sm:$0xff]
    %v3440 = vld [vmem:[#allocation9 + $0x5d8] sm:$0xff]
    %v3441 = vld [vmem:[#allocation9 + $0x5e0] sm:$0x1]
    %v3442 = vlaneseq
    %v3443 = vshrl.u32 %v3442, 7
    %v3444 = vsub.s32 0, %v3443
    %v3445 = vrot.slane %v3441, %v3444
    %3446 = vmatprep.subr.mxu0 0.0
    %3447 = vmatpush1.msra.mxu0 %v3440
    %3448 = vmatprep.subr.mxu0 0.0
    %3449 = vmatpush1.msra.mxu0 %v3439
    %3450 = vmatprep.subr.mxu0 0.0
    %3451 = vmatpush1.msra.mxu0 %v3438
    %3452 = vmatprep.subr.mxu0 0.0
    %3453 = vmatpush1.msra.mxu0 %v3437
    %3454 = vmatprep.subr.mxu0 0.0
    %3455 = vmatpush1.msra.mxu0 %v3436
    %3456 = vmatprep.subr.mxu0 0.0
    %3457 = vmatpush1.msra.mxu0 %v3435
    %3458 = vmatprep.subr.mxu0 0.0
    %3459 = vmatpush1.msra.mxu0 %v3434
    %3460 = vmatprep.subr.mxu0 0.0
    %3461 = vmatpush1.msra.mxu0 %v3433
    %3462 = vmatprep.subr.mxu0 0.0
    %3463 = vmatpush1.msra.mxu0 %v3432
    %3464 = vmatprep.subr.mxu0 0.0
    %3465 = vmatpush1.msra.mxu0 %v3431
    %3466 = vmatprep.subr.mxu0 0.0
    %3467 = vmatpush1.msra.mxu0 %v3430
    %3468 = vmatprep.subr.mxu0 0.0
    %3469 = vmatpush1.msra.mxu0 %v3429
    %3470 = vmatprep.subr.mxu0 0.0
    %3471 = vmatpush1.msra.mxu0 %v3428
    %3472 = vmatprep.subr.mxu0 0.0
    %3473 = vmatpush1.msra.mxu0 %v3427
    %3474 = vmatprep.subr.mxu0 0.0
    %3475 = vmatpush1.msra.mxu0 %v3426
    %3476 = vmatprep.subr.mxu0 0.0
    %3477 = vmatpush1.msra.mxu0 %v3425
    %3478 = vmatprep.subr.mxu0 0.0
    %3479 = vmatpush2.msra.mxu0 0.0
    %3480 = vmatprep.subr.mxu0 0.0
    %3481 = vmatpush2.msra.mxu0 0.0
    %3482 = vmatprep.subr.mxu0 0.0
    %3483 = vmatpush2.msra.mxu0 0.0
    %3484 = vmatprep.subr.mxu0 0.0
    %3485 = vmatpush2.msra.mxu0 0.0
    %3486 = vmatprep.subr.mxu0 0.0
    %3487 = vmatpush2.msra.mxu0 0.0
    %3488 = vmatprep.subr.mxu0 0.0
    %3489 = vmatpush2.msra.mxu0 0.0
    %3490 = vmatprep.subr.mxu0 0.0
    %3491 = vmatpush2.msra.mxu0 0.0
    %3492 = vmatprep.subr.mxu0 0.0
    %3493 = vmatpush2.msra.mxu0 0.0
    %3494 = vmatprep.subr.mxu0 0.0
    %3495 = vmatpush2.msra.mxu0 0.0
    %3496 = vmatprep.subr.mxu0 0.0
    %3497 = vmatpush2.msra.mxu0 0.0
    %3498 = vmatprep.subr.mxu0 0.0
    %3499 = vmatpush2.msra.mxu0 0.0
    %3500 = vmatprep.subr.mxu0 0.0
    %3501 = vmatpush2.msra.mxu0 0.0
    %3502 = vmatprep.subr.mxu0 0.0
    %3503 = vmatpush2.msra.mxu0 0.0
    %3504 = vmatprep.subr.mxu0 0.0
    %3505 = vmatpush2.msra.mxu0 0.0
    %3506 = vmatprep.subr.mxu0 0.0
    %3507 = vmatpush2.msra.mxu0 0.0
    %3508 = vmatprep.subr.mxu0 0.0
    %3509 = vmatpush2.msra.mxu0 0.0
    %3510 = vmatprep.mubr.f32.mxu0 0.0
    %3511 = vmatmul.mubr.f32.gmra.mxu0 %v100
    %v3512 = vpop.f32.mrf.mxu0
    %v3513 = vadd.f32 %v3445, %v3512
    %v3514 = vpop.f32.mrf.mxu0
    %3515 = vmatprep.mubr.f32.mxu0 0.0
    %3516 = vmatmul.mubr.f32.gmra.mxu0 %v101
    %v3517 = vpop.f32.mrf.mxu0
    %v3518 = vadd.f32 %v3445, %v3517
    %v3519 = vpop.f32.mrf.mxu0
    %3520 = vmatprep.mubr.f32.mxu0 0.0
    %3521 = vmatmul.mubr.f32.gmra.mxu0 %v102
    %v3522 = vpop.f32.mrf.mxu0
    %v3523 = vadd.f32 %v3445, %v3522
    %v3524 = vpop.f32.mrf.mxu0
    %3525 = vmatprep.mubr.f32.mxu0 0.0
    %3526 = vmatmul.mubr.f32.gmra.mxu0 %v103
    %v3527 = vpop.f32.mrf.mxu0
    %v3528 = vadd.f32 %v3445, %v3527
    %v3529 = vpop.f32.mrf.mxu0
    %3530 = vmatprep.mubr.f32.mxu0 0.0
    %3531 = vmatmul.mubr.f32.gmra.mxu0 %v104
    %v3532 = vpop.f32.mrf.mxu0
    %v3533 = vadd.f32 %v3445, %v3532
    %v3534 = vpop.f32.mrf.mxu0
    %3535 = vmatprep.mubr.f32.mxu0 0.0
    %3536 = vmatmul.mubr.f32.gmra.mxu0 %v105
    %v3537 = vpop.f32.mrf.mxu0
    %v3538 = vadd.f32 %v3445, %v3537
    %v3539 = vpop.f32.mrf.mxu0
    %3540 = vmatprep.mubr.f32.mxu0 0.0
    %3541 = vmatmul.mubr.f32.gmra.mxu0 %v106
    %v3542 = vpop.f32.mrf.mxu0
    %v3543 = vadd.f32 %v3445, %v3542
    %v3544 = vpop.f32.mrf.mxu0
    %3545 = vmatprep.mubr.f32.mxu0 0.0
    %3546 = vmatmul.mubr.f32.gmra.mxu0 %v107
    %v3547 = vpop.f32.mrf.mxu0
    %v3548 = vadd.f32 %v3445, %v3547
    %v3549 = vpop.f32.mrf.mxu0
    %3550 = vmatprep.mubr.f32.mxu0 0.0
    %3551 = vmatmul.mubr.f32.gmra.mxu0 %v108
    %v3552 = vpop.f32.mrf.mxu0
    %v3553 = vadd.f32 %v3445, %v3552
    %v3554 = vpop.f32.mrf.mxu0
    %3555 = vmatprep.mubr.f32.mxu0 0.0
    %3556 = vmatmul.mubr.f32.gmra.mxu0 %v109
    %v3557 = vpop.f32.mrf.mxu0
    %v3558 = vadd.f32 %v3445, %v3557
    %v3559 = vpop.f32.mrf.mxu0
    %3560 = vmatprep.mubr.f32.mxu0 0.0
    %3561 = vmatmul.mubr.f32.gmra.mxu0 %v110
    %v3562 = vpop.f32.mrf.mxu0
    %v3563 = vadd.f32 %v3445, %v3562
    %v3564 = vpop.f32.mrf.mxu0
    %3565 = vmatprep.mubr.f32.mxu0 0.0
    %3566 = vmatmul.mubr.f32.gmra.mxu0 %v111
    %v3567 = vpop.f32.mrf.mxu0
    %v3568 = vadd.f32 %v3445, %v3567
    %v3569 = vpop.f32.mrf.mxu0
    %3570 = vmatprep.mubr.f32.mxu0 0.0
    %3571 = vmatmul.mubr.f32.gmra.mxu0 %v112
    %v3572 = vpop.f32.mrf.mxu0
    %v3573 = vadd.f32 %v3445, %v3572
    %v3574 = vpop.f32.mrf.mxu0
    %3575 = vmatprep.mubr.f32.mxu0 0.0
    %3576 = vmatmul.mubr.f32.gmra.mxu0 %v113
    %v3577 = vpop.f32.mrf.mxu0
    %v3578 = vadd.f32 %v3445, %v3577
    %v3579 = vpop.f32.mrf.mxu0
    %3580 = vmatprep.mubr.f32.mxu0 0.0
    %3581 = vmatmul.mubr.f32.gmra.mxu0 %v114
    %v3582 = vpop.f32.mrf.mxu0
    %v3583 = vadd.f32 %v3445, %v3582
    %v3584 = vpop.f32.mrf.mxu0
    %3585 = vmatprep.mubr.f32.mxu0 0.0
    %3586 = vmatmul.mubr.f32.gmra.mxu0 %v115
    %v3587 = vpop.f32.mrf.mxu0
    %v3588 = vadd.f32 %v3445, %v3587
    %v3589 = vpop.f32.mrf.mxu0
    %3590 = vmatprep.mubr.f32.mxu0 0.0
    %3591 = vmatmul.mubr.f32.gmra.mxu0 %v116
    %v3592 = vpop.f32.mrf.mxu0
    %v3593 = vadd.f32 %v3445, %v3592
    %v3594 = vpop.f32.mrf.mxu0
    %3595 = vmatprep.mubr.f32.mxu0 0.0
    %3596 = vmatmul.mubr.f32.gmra.mxu0 %v117
    %v3597 = vpop.f32.mrf.mxu0
    %v3598 = vadd.f32 %v3445, %v3597
    %v3599 = vpop.f32.mrf.mxu0
    %3600 = vmatprep.mubr.f32.mxu0 0.0
    %3601 = vmatmul.mubr.f32.gmra.mxu0 %v118
    %v3602 = vpop.f32.mrf.mxu0
    %v3603 = vadd.f32 %v3445, %v3602
    %v3604 = vpop.f32.mrf.mxu0
    %3605 = vmatprep.mubr.f32.mxu0 0.0
    %3606 = vmatmul.mubr.f32.gmra.mxu0 %v119
    %v3607 = vpop.f32.mrf.mxu0
    %v3608 = vadd.f32 %v3445, %v3607
    %v3609 = vpop.f32.mrf.mxu0
    %3610 = vdwg.mxu0
    %vm3611 = vcmp.gt.f32.partialorder %v3513, 0.0
    %vm3612 = vcmp.gt.f32.partialorder %v3518, 0.0
    %vm3613 = vcmp.gt.f32.partialorder %v3523, 0.0
    %vm3614 = vcmp.gt.f32.partialorder %v3528, 0.0
    %vm3615 = vcmp.gt.f32.partialorder %v3533, 0.0
    %vm3616 = vcmp.gt.f32.partialorder %v3538, 0.0
    %vm3617 = vcmp.gt.f32.partialorder %v3543, 0.0
    %vm3618 = vcmp.gt.f32.partialorder %v3548, 0.0
    %vm3619 = vcmp.gt.f32.partialorder %v3553, 0.0
    %vm3620 = vcmp.gt.f32.partialorder %v3558, 0.0
    %vm3621 = vcmp.gt.f32.partialorder %v3563, 0.0
    %vm3622 = vcmp.gt.f32.partialorder %v3568, 0.0
    %vm3623 = vcmp.gt.f32.partialorder %v3573, 0.0
    %vm3624 = vcmp.gt.f32.partialorder %v3578, 0.0
    %vm3625 = vcmp.gt.f32.partialorder %v3583, 0.0
    %vm3626 = vcmp.gt.f32.partialorder %v3588, 0.0
    %vm3627 = vcmp.gt.f32.partialorder %v3593, 0.0
    %vm3628 = vcmp.gt.f32.partialorder %v3598, 0.0
    %vm3629 = vcmp.gt.f32.partialorder %v3603, 0.0
    %vm3630 = vcmp.gt.f32.partialorder %v3608, 0.0
    %v3631 = vmul.f32 %v3513, 0.01
    %v3632 = vmul.f32 %v3518, 0.01
    %v3633 = vmul.f32 %v3523, 0.01
    %v3634 = vmul.f32 %v3528, 0.01
    %v3635 = vmul.f32 %v3533, 0.01
    %v3636 = vmul.f32 %v3538, 0.01
    %v3637 = vmul.f32 %v3543, 0.01
    %v3638 = vmul.f32 %v3548, 0.01
    %v3639 = vmul.f32 %v3553, 0.01
    %v3640 = vmul.f32 %v3558, 0.01
    %v3641 = vmul.f32 %v3563, 0.01
    %v3642 = vmul.f32 %v3568, 0.01
    %v3643 = vmul.f32 %v3573, 0.01
    %v3644 = vmul.f32 %v3578, 0.01
    %v3645 = vmul.f32 %v3583, 0.01
    %v3646 = vmul.f32 %v3588, 0.01
    %v3647 = vmul.f32 %v3593, 0.01
    %v3648 = vmul.f32 %v3598, 0.01
    %v3649 = vmul.f32 %v3603, 0.01
    %v3650 = vmul.f32 %v3608, 0.01
    %v3651 = vsel %vm3611, %v3513, %v3631
    %v3652 = vsel %vm3612, %v3518, %v3632
    %v3653 = vsel %vm3613, %v3523, %v3633
    %v3654 = vsel %vm3614, %v3528, %v3634
    %v3655 = vsel %vm3615, %v3533, %v3635
    %v3656 = vsel %vm3616, %v3538, %v3636
    %v3657 = vsel %vm3617, %v3543, %v3637
    %v3658 = vsel %vm3618, %v3548, %v3638
    %v3659 = vsel %vm3619, %v3553, %v3639
    %v3660 = vsel %vm3620, %v3558, %v3640
    %v3661 = vsel %vm3621, %v3563, %v3641
    %v3662 = vsel %vm3622, %v3568, %v3642
    %v3663 = vsel %vm3623, %v3573, %v3643
    %v3664 = vsel %vm3624, %v3578, %v3644
    %v3665 = vsel %vm3625, %v3583, %v3645
    %v3666 = vsel %vm3626, %v3588, %v3646
    %v3667 = vsel %vm3627, %v3593, %v3647
    %v3668 = vsel %vm3628, %v3598, %v3648
    %v3669 = vsel %vm3629, %v3603, %v3649
    %v3670 = vsel %vm3630, %v3608, %v3650
    %v3671 = vld [vmem:[#allocation9 + $0x5e8] sm:$0xff]
    %v3672 = vld [vmem:[#allocation9 + $0x5f0] sm:$0xff]
    %v3673 = vld [vmem:[#allocation9 + $0x5f8] sm:$0xff]
    %v3674 = vld [vmem:[#allocation9 + $0x600] sm:$0xff]
    %v3675 = vld [vmem:[#allocation9 + $0x608] sm:$0xff]
    %v3676 = vld [vmem:[#allocation9 + $0x610] sm:$0xff]
    %v3677 = vld [vmem:[#allocation9 + $0x618] sm:$0xff]
    %v3678 = vld [vmem:[#allocation9 + $0x620] sm:$0xff]
    %v3679 = vld [vmem:[#allocation9 + $0x628] sm:$0xff]
    %v3680 = vld [vmem:[#allocation9 + $0x630] sm:$0xff]
    %v3681 = vld [vmem:[#allocation9 + $0x638] sm:$0xff]
    %v3682 = vld [vmem:[#allocation9 + $0x640] sm:$0xff]
    %v3683 = vld [vmem:[#allocation9 + $0x648] sm:$0xff]
    %v3684 = vld [vmem:[#allocation9 + $0x650] sm:$0xff]
    %v3685 = vld [vmem:[#allocation9 + $0x658] sm:$0xff]
    %v3686 = vld [vmem:[#allocation9 + $0x660] sm:$0xff]
    %v3687 = vld [vmem:[#allocation9 + $0x668] sm:$0x1]
    %v3688 = vlaneseq
    %v3689 = vshrl.u32 %v3688, 7
    %v3690 = vsub.s32 0, %v3689
    %v3691 = vrot.slane %v3687, %v3690
    %3692 = vmatprep.subr.mxu0 0.0
    %3693 = vmatpush1.msra.mxu0 %v3686
    %3694 = vmatprep.subr.mxu0 0.0
    %3695 = vmatpush1.msra.mxu0 %v3685
    %3696 = vmatprep.subr.mxu0 0.0
    %3697 = vmatpush1.msra.mxu0 %v3684
    %3698 = vmatprep.subr.mxu0 0.0
    %3699 = vmatpush1.msra.mxu0 %v3683
    %3700 = vmatprep.subr.mxu0 0.0
    %3701 = vmatpush1.msra.mxu0 %v3682
    %3702 = vmatprep.subr.mxu0 0.0
    %3703 = vmatpush1.msra.mxu0 %v3681
    %3704 = vmatprep.subr.mxu0 0.0
    %3705 = vmatpush1.msra.mxu0 %v3680
    %3706 = vmatprep.subr.mxu0 0.0
    %3707 = vmatpush1.msra.mxu0 %v3679
    %3708 = vmatprep.subr.mxu0 0.0
    %3709 = vmatpush1.msra.mxu0 %v3678
    %3710 = vmatprep.subr.mxu0 0.0
    %3711 = vmatpush1.msra.mxu0 %v3677
    %3712 = vmatprep.subr.mxu0 0.0
    %3713 = vmatpush1.msra.mxu0 %v3676
    %3714 = vmatprep.subr.mxu0 0.0
    %3715 = vmatpush1.msra.mxu0 %v3675
    %3716 = vmatprep.subr.mxu0 0.0
    %3717 = vmatpush1.msra.mxu0 %v3674
    %3718 = vmatprep.subr.mxu0 0.0
    %3719 = vmatpush1.msra.mxu0 %v3673
    %3720 = vmatprep.subr.mxu0 0.0
    %3721 = vmatpush1.msra.mxu0 %v3672
    %3722 = vmatprep.subr.mxu0 0.0
    %3723 = vmatpush1.msra.mxu0 %v3671
    %3724 = vmatprep.subr.mxu0 0.0
    %3725 = vmatpush2.msra.mxu0 0.0
    %3726 = vmatprep.subr.mxu0 0.0
    %3727 = vmatpush2.msra.mxu0 0.0
    %3728 = vmatprep.subr.mxu0 0.0
    %3729 = vmatpush2.msra.mxu0 0.0
    %3730 = vmatprep.subr.mxu0 0.0
    %3731 = vmatpush2.msra.mxu0 0.0
    %3732 = vmatprep.subr.mxu0 0.0
    %3733 = vmatpush2.msra.mxu0 0.0
    %3734 = vmatprep.subr.mxu0 0.0
    %3735 = vmatpush2.msra.mxu0 0.0
    %3736 = vmatprep.subr.mxu0 0.0
    %3737 = vmatpush2.msra.mxu0 0.0
    %3738 = vmatprep.subr.mxu0 0.0
    %3739 = vmatpush2.msra.mxu0 0.0
    %3740 = vmatprep.subr.mxu0 0.0
    %3741 = vmatpush2.msra.mxu0 0.0
    %3742 = vmatprep.subr.mxu0 0.0
    %3743 = vmatpush2.msra.mxu0 0.0
    %3744 = vmatprep.subr.mxu0 0.0
    %3745 = vmatpush2.msra.mxu0 0.0
    %3746 = vmatprep.subr.mxu0 0.0
    %3747 = vmatpush2.msra.mxu0 0.0
    %3748 = vmatprep.subr.mxu0 0.0
    %3749 = vmatpush2.msra.mxu0 0.0
    %3750 = vmatprep.subr.mxu0 0.0
    %3751 = vmatpush2.msra.mxu0 0.0
    %3752 = vmatprep.subr.mxu0 0.0
    %3753 = vmatpush2.msra.mxu0 0.0
    %3754 = vmatprep.subr.mxu0 0.0
    %3755 = vmatpush2.msra.mxu0 0.0
    %3756 = vmatprep.mubr.f32.mxu0 0.0
    %3757 = vmatmul.mubr.f32.gmra.mxu0 %v3651
    %v3758 = vpop.f32.mrf.mxu0
    %v3759 = vadd.f32 %v3691, %v3758
    %v3760 = vpop.f32.mrf.mxu0
    %3761 = vmatprep.mubr.f32.mxu0 0.0
    %3762 = vmatmul.mubr.f32.gmra.mxu0 %v3652
    %v3763 = vpop.f32.mrf.mxu0
    %v3764 = vadd.f32 %v3691, %v3763
    %v3765 = vpop.f32.mrf.mxu0
    %3766 = vmatprep.mubr.f32.mxu0 0.0
    %3767 = vmatmul.mubr.f32.gmra.mxu0 %v3653
    %v3768 = vpop.f32.mrf.mxu0
    %v3769 = vadd.f32 %v3691, %v3768
    %v3770 = vpop.f32.mrf.mxu0
    %3771 = vmatprep.mubr.f32.mxu0 0.0
    %3772 = vmatmul.mubr.f32.gmra.mxu0 %v3654
    %v3773 = vpop.f32.mrf.mxu0
    %v3774 = vadd.f32 %v3691, %v3773
    %v3775 = vpop.f32.mrf.mxu0
    %3776 = vmatprep.mubr.f32.mxu0 0.0
    %3777 = vmatmul.mubr.f32.gmra.mxu0 %v3655
    %v3778 = vpop.f32.mrf.mxu0
    %v3779 = vadd.f32 %v3691, %v3778
    %v3780 = vpop.f32.mrf.mxu0
    %3781 = vmatprep.mubr.f32.mxu0 0.0
    %3782 = vmatmul.mubr.f32.gmra.mxu0 %v3656
    %v3783 = vpop.f32.mrf.mxu0
    %v3784 = vadd.f32 %v3691, %v3783
    %v3785 = vpop.f32.mrf.mxu0
    %3786 = vmatprep.mubr.f32.mxu0 0.0
    %3787 = vmatmul.mubr.f32.gmra.mxu0 %v3657
    %v3788 = vpop.f32.mrf.mxu0
    %v3789 = vadd.f32 %v3691, %v3788
    %v3790 = vpop.f32.mrf.mxu0
    %3791 = vmatprep.mubr.f32.mxu0 0.0
    %3792 = vmatmul.mubr.f32.gmra.mxu0 %v3658
    %v3793 = vpop.f32.mrf.mxu0
    %v3794 = vadd.f32 %v3691, %v3793
    %v3795 = vpop.f32.mrf.mxu0
    %3796 = vmatprep.mubr.f32.mxu0 0.0
    %3797 = vmatmul.mubr.f32.gmra.mxu0 %v3659
    %v3798 = vpop.f32.mrf.mxu0
    %v3799 = vadd.f32 %v3691, %v3798
    %v3800 = vpop.f32.mrf.mxu0
    %3801 = vmatprep.mubr.f32.mxu0 0.0
    %3802 = vmatmul.mubr.f32.gmra.mxu0 %v3660
    %v3803 = vpop.f32.mrf.mxu0
    %v3804 = vadd.f32 %v3691, %v3803
    %v3805 = vpop.f32.mrf.mxu0
    %3806 = vmatprep.mubr.f32.mxu0 0.0
    %3807 = vmatmul.mubr.f32.gmra.mxu0 %v3661
    %v3808 = vpop.f32.mrf.mxu0
    %v3809 = vadd.f32 %v3691, %v3808
    %v3810 = vpop.f32.mrf.mxu0
    %3811 = vmatprep.mubr.f32.mxu0 0.0
    %3812 = vmatmul.mubr.f32.gmra.mxu0 %v3662
    %v3813 = vpop.f32.mrf.mxu0
    %v3814 = vadd.f32 %v3691, %v3813
    %v3815 = vpop.f32.mrf.mxu0
    %3816 = vmatprep.mubr.f32.mxu0 0.0
    %3817 = vmatmul.mubr.f32.gmra.mxu0 %v3663
    %v3818 = vpop.f32.mrf.mxu0
    %v3819 = vadd.f32 %v3691, %v3818
    %v3820 = vpop.f32.mrf.mxu0
    %3821 = vmatprep.mubr.f32.mxu0 0.0
    %3822 = vmatmul.mubr.f32.gmra.mxu0 %v3664
    %v3823 = vpop.f32.mrf.mxu0
    %v3824 = vadd.f32 %v3691, %v3823
    %v3825 = vpop.f32.mrf.mxu0
    %3826 = vmatprep.mubr.f32.mxu0 0.0
    %3827 = vmatmul.mubr.f32.gmra.mxu0 %v3665
    %v3828 = vpop.f32.mrf.mxu0
    %v3829 = vadd.f32 %v3691, %v3828
    %v3830 = vpop.f32.mrf.mxu0
    %3831 = vmatprep.mubr.f32.mxu0 0.0
    %3832 = vmatmul.mubr.f32.gmra.mxu0 %v3666
    %v3833 = vpop.f32.mrf.mxu0
    %v3834 = vadd.f32 %v3691, %v3833
    %v3835 = vpop.f32.mrf.mxu0
    %3836 = vmatprep.mubr.f32.mxu0 0.0
    %3837 = vmatmul.mubr.f32.gmra.mxu0 %v3667
    %v3838 = vpop.f32.mrf.mxu0
    %v3839 = vadd.f32 %v3691, %v3838
    %v3840 = vpop.f32.mrf.mxu0
    %3841 = vmatprep.mubr.f32.mxu0 0.0
    %3842 = vmatmul.mubr.f32.gmra.mxu0 %v3668
    %v3843 = vpop.f32.mrf.mxu0
    %v3844 = vadd.f32 %v3691, %v3843
    %v3845 = vpop.f32.mrf.mxu0
    %3846 = vmatprep.mubr.f32.mxu0 0.0
    %3847 = vmatmul.mubr.f32.gmra.mxu0 %v3669
    %v3848 = vpop.f32.mrf.mxu0
    %v3849 = vadd.f32 %v3691, %v3848
    %v3850 = vpop.f32.mrf.mxu0
    %3851 = vmatprep.mubr.f32.mxu0 0.0
    %3852 = vmatmul.mubr.f32.gmra.mxu0 %v3670
    %v3853 = vpop.f32.mrf.mxu0
    %v3854 = vadd.f32 %v3691, %v3853
    %v3855 = vpop.f32.mrf.mxu0
    %3856 = vdwg.mxu0
    %vm3857 = vcmp.gt.f32.partialorder %v3759, 0.0
    %vm3858 = vcmp.gt.f32.partialorder %v3764, 0.0
    %vm3859 = vcmp.gt.f32.partialorder %v3769, 0.0
    %vm3860 = vcmp.gt.f32.partialorder %v3774, 0.0
    %vm3861 = vcmp.gt.f32.partialorder %v3779, 0.0
    %vm3862 = vcmp.gt.f32.partialorder %v3784, 0.0
    %vm3863 = vcmp.gt.f32.partialorder %v3789, 0.0
    %vm3864 = vcmp.gt.f32.partialorder %v3794, 0.0
    %vm3865 = vcmp.gt.f32.partialorder %v3799, 0.0
    %vm3866 = vcmp.gt.f32.partialorder %v3804, 0.0
    %vm3867 = vcmp.gt.f32.partialorder %v3809, 0.0
    %vm3868 = vcmp.gt.f32.partialorder %v3814, 0.0
    %vm3869 = vcmp.gt.f32.partialorder %v3819, 0.0
    %vm3870 = vcmp.gt.f32.partialorder %v3824, 0.0
    %vm3871 = vcmp.gt.f32.partialorder %v3829, 0.0
    %vm3872 = vcmp.gt.f32.partialorder %v3834, 0.0
    %vm3873 = vcmp.gt.f32.partialorder %v3839, 0.0
    %vm3874 = vcmp.gt.f32.partialorder %v3844, 0.0
    %vm3875 = vcmp.gt.f32.partialorder %v3849, 0.0
    %vm3876 = vcmp.gt.f32.partialorder %v3854, 0.0
    %v3877 = vmin.f32 %v3759, 0.0
    %v3878 = vmin.f32 %v3764, 0.0
    %v3879 = vmin.f32 %v3769, 0.0
    %v3880 = vmin.f32 %v3774, 0.0
    %v3881 = vmin.f32 %v3779, 0.0
    %v3882 = vmin.f32 %v3784, 0.0
    %v3883 = vmin.f32 %v3789, 0.0
    %v3884 = vmin.f32 %v3794, 0.0
    %v3885 = vmin.f32 %v3799, 0.0
    %v3886 = vmin.f32 %v3804, 0.0
    %v3887 = vmin.f32 %v3809, 0.0
    %v3888 = vmin.f32 %v3814, 0.0
    %v3889 = vmin.f32 %v3819, 0.0
    %v3890 = vmin.f32 %v3824, 0.0
    %v3891 = vmin.f32 %v3829, 0.0
    %v3892 = vmin.f32 %v3834, 0.0
    %v3893 = vmin.f32 %v3839, 0.0
    %v3894 = vmin.f32 %v3844, 0.0
    %v3895 = vmin.f32 %v3849, 0.0
    %v3896 = vmin.f32 %v3854, 0.0
    %v3897 = vmul.f32 %v3877, 1.442695
    %v3898 = vpow.pop %v3897
    %v3899 = vmul.f32 %v3878, 1.442695
    %v3900 = vpow.pop %v3899
    %v3901 = vmul.f32 %v3879, 1.442695
    %v3902 = vpow.pop %v3901
    %v3903 = vmul.f32 %v3880, 1.442695
    %v3904 = vpow.pop %v3903
    %v3905 = vmul.f32 %v3881, 1.442695
    %v3906 = vpow.pop %v3905
    %v3907 = vmul.f32 %v3882, 1.442695
    %v3908 = vpow.pop %v3907
    %v3909 = vmul.f32 %v3883, 1.442695
    %v3910 = vpow.pop %v3909
    %v3911 = vmul.f32 %v3884, 1.442695
    %v3912 = vpow.pop %v3911
    %v3913 = vmul.f32 %v3885, 1.442695
    %v3914 = vpow.pop %v3913
    %v3915 = vmul.f32 %v3886, 1.442695
    %v3916 = vpow.pop %v3915
    %v3917 = vmul.f32 %v3887, 1.442695
    %v3918 = vpow.pop %v3917
    %v3919 = vmul.f32 %v3888, 1.442695
    %v3920 = vpow.pop %v3919
    %v3921 = vmul.f32 %v3889, 1.442695
    %v3922 = vpow.pop %v3921
    %v3923 = vmul.f32 %v3890, 1.442695
    %v3924 = vpow.pop %v3923
    %v3925 = vmul.f32 %v3891, 1.442695
    %v3926 = vpow.pop %v3925
    %v3927 = vmul.f32 %v3892, 1.442695
    %v3928 = vpow.pop %v3927
    %v3929 = vmul.f32 %v3893, 1.442695
    %v3930 = vpow.pop %v3929
    %v3931 = vmul.f32 %v3894, 1.442695
    %v3932 = vpow.pop %v3931
    %v3933 = vmul.f32 %v3895, 1.442695
    %v3934 = vpow.pop %v3933
    %v3935 = vmul.f32 %v3896, 1.442695
    %v3936 = vpow.pop %v3935
    %v3937 = vsub.f32 %v3898, 1.0
    %v3938 = vsub.f32 %v3900, 1.0
    %v3939 = vsub.f32 %v3902, 1.0
    %v3940 = vsub.f32 %v3904, 1.0
    %v3941 = vsub.f32 %v3906, 1.0
    %v3942 = vsub.f32 %v3908, 1.0
    %v3943 = vsub.f32 %v3910, 1.0
    %v3944 = vsub.f32 %v3912, 1.0
    %v3945 = vsub.f32 %v3914, 1.0
    %v3946 = vsub.f32 %v3916, 1.0
    %v3947 = vsub.f32 %v3918, 1.0
    %v3948 = vsub.f32 %v3920, 1.0
    %v3949 = vsub.f32 %v3922, 1.0
    %v3950 = vsub.f32 %v3924, 1.0
    %v3951 = vsub.f32 %v3926, 1.0
    %v3952 = vsub.f32 %v3928, 1.0
    %v3953 = vsub.f32 %v3930, 1.0
    %v3954 = vsub.f32 %v3932, 1.0
    %v3955 = vsub.f32 %v3934, 1.0
    %v3956 = vsub.f32 %v3936, 1.0
    %v3957 = vsel %vm3857, %v3759, %v3937
    %v3958 = vsel %vm3858, %v3764, %v3938
    %v3959 = vsel %vm3859, %v3769, %v3939
    %v3960 = vsel %vm3860, %v3774, %v3940
    %v3961 = vsel %vm3861, %v3779, %v3941
    %v3962 = vsel %vm3862, %v3784, %v3942
    %v3963 = vsel %vm3863, %v3789, %v3943
    %v3964 = vsel %vm3864, %v3794, %v3944
    %v3965 = vsel %vm3865, %v3799, %v3945
    %v3966 = vsel %vm3866, %v3804, %v3946
    %v3967 = vsel %vm3867, %v3809, %v3947
    %v3968 = vsel %vm3868, %v3814, %v3948
    %v3969 = vsel %vm3869, %v3819, %v3949
    %v3970 = vsel %vm3870, %v3824, %v3950
    %v3971 = vsel %vm3871, %v3829, %v3951
    %v3972 = vsel %vm3872, %v3834, %v3952
    %v3973 = vsel %vm3873, %v3839, %v3953
    %v3974 = vsel %vm3874, %v3844, %v3954
    %v3975 = vsel %vm3875, %v3849, %v3955
    %v3976 = vsel %vm3876, %v3854, %v3956
    %3977 = vmatprep.subr.mxu0 0.0
    %3978 = vmatpush1.msra.mxu0 %v180
    %3979 = vmatprep.subr.mxu0 0.0
    %3980 = vmatpush1.msra.mxu0 %v179
    %3981 = vmatprep.subr.mxu0 0.0
    %3982 = vmatpush1.msra.mxu0 %v178
    %3983 = vmatprep.subr.mxu0 0.0
    %3984 = vmatpush1.msra.mxu0 %v177
    %3985 = vmatprep.subr.mxu0 0.0
    %3986 = vmatpush1.msra.mxu0 %v176
    %3987 = vmatprep.subr.mxu0 0.0
    %3988 = vmatpush1.msra.mxu0 %v175
    %3989 = vmatprep.subr.mxu0 0.0
    %3990 = vmatpush1.msra.mxu0 %v174
    %3991 = vmatprep.subr.mxu0 0.0
    %3992 = vmatpush1.msra.mxu0 %v173
    %3993 = vmatprep.subr.mxu0 0.0
    %3994 = vmatpush1.msra.mxu0 %v172
    %3995 = vmatprep.subr.mxu0 0.0
    %3996 = vmatpush1.msra.mxu0 %v171
    %3997 = vmatprep.subr.mxu0 0.0
    %3998 = vmatpush1.msra.mxu0 %v170
    %3999 = vmatprep.subr.mxu0 0.0
    %4000 = vmatpush1.msra.mxu0 %v169
    %4001 = vmatprep.subr.mxu0 0.0
    %4002 = vmatpush1.msra.mxu0 %v168
    %4003 = vmatprep.subr.mxu0 0.0
    %4004 = vmatpush1.msra.mxu0 %v167
    %4005 = vmatprep.subr.mxu0 0.0
    %4006 = vmatpush1.msra.mxu0 %v166
    %4007 = vmatprep.subr.mxu0 0.0
    %4008 = vmatpush1.msra.mxu0 %v165
    %4009 = vmatprep.subr.mxu0 0.0
    %4010 = vmatpush2.msra.mxu0 0.0
    %4011 = vmatprep.subr.mxu0 0.0
    %4012 = vmatpush2.msra.mxu0 0.0
    %4013 = vmatprep.subr.mxu0 0.0
    %4014 = vmatpush2.msra.mxu0 0.0
    %4015 = vmatprep.subr.mxu0 0.0
    %4016 = vmatpush2.msra.mxu0 0.0
    %4017 = vmatprep.subr.mxu0 0.0
    %4018 = vmatpush2.msra.mxu0 0.0
    %4019 = vmatprep.subr.mxu0 0.0
    %4020 = vmatpush2.msra.mxu0 0.0
    %4021 = vmatprep.subr.mxu0 0.0
    %4022 = vmatpush2.msra.mxu0 0.0
    %4023 = vmatprep.subr.mxu0 0.0
    %4024 = vmatpush2.msra.mxu0 0.0
    %4025 = vmatprep.subr.mxu0 0.0
    %4026 = vmatpush2.msra.mxu0 0.0
    %4027 = vmatprep.subr.mxu0 0.0
    %4028 = vmatpush2.msra.mxu0 0.0
    %4029 = vmatprep.subr.mxu0 0.0
    %4030 = vmatpush2.msra.mxu0 0.0
    %4031 = vmatprep.subr.mxu0 0.0
    %4032 = vmatpush2.msra.mxu0 0.0
    %4033 = vmatprep.subr.mxu0 0.0
    %4034 = vmatpush2.msra.mxu0 0.0
    %4035 = vmatprep.subr.mxu0 0.0
    %4036 = vmatpush2.msra.mxu0 0.0
    %4037 = vmatprep.subr.mxu0 0.0
    %4038 = vmatpush2.msra.mxu0 0.0
    %4039 = vmatprep.subr.mxu0 0.0
    %4040 = vmatpush2.msra.mxu0 0.0
    %4041 = vmatprep.mubr.f32.mxu0 0.0
    %4042 = vmatmul.mubr.f32.gmra.mxu0 %v3957
    %v4043 = vpop.f32.mrf.mxu0
    %v4044 = vadd.f32 0.0, %v4043
    %v4045 = vpop.f32.mrf.mxu0
    %4046 = vmatprep.mubr.f32.mxu0 0.0
    %4047 = vmatmul.mubr.f32.gmra.mxu0 %v3958
    %v4048 = vpop.f32.mrf.mxu0
    %v4049 = vadd.f32 0.0, %v4048
    %v4050 = vpop.f32.mrf.mxu0
    %4051 = vmatprep.mubr.f32.mxu0 0.0
    %4052 = vmatmul.mubr.f32.gmra.mxu0 %v3959
    %v4053 = vpop.f32.mrf.mxu0
    %v4054 = vadd.f32 0.0, %v4053
    %v4055 = vpop.f32.mrf.mxu0
    %4056 = vmatprep.mubr.f32.mxu0 0.0
    %4057 = vmatmul.mubr.f32.gmra.mxu0 %v3960
    %v4058 = vpop.f32.mrf.mxu0
    %v4059 = vadd.f32 0.0, %v4058
    %v4060 = vpop.f32.mrf.mxu0
    %4061 = vmatprep.mubr.f32.mxu0 0.0
    %4062 = vmatmul.mubr.f32.gmra.mxu0 %v3961
    %v4063 = vpop.f32.mrf.mxu0
    %v4064 = vadd.f32 0.0, %v4063
    %v4065 = vpop.f32.mrf.mxu0
    %4066 = vmatprep.mubr.f32.mxu0 0.0
    %4067 = vmatmul.mubr.f32.gmra.mxu0 %v3962
    %v4068 = vpop.f32.mrf.mxu0
    %v4069 = vadd.f32 0.0, %v4068
    %v4070 = vpop.f32.mrf.mxu0
    %4071 = vmatprep.mubr.f32.mxu0 0.0
    %4072 = vmatmul.mubr.f32.gmra.mxu0 %v3963
    %v4073 = vpop.f32.mrf.mxu0
    %v4074 = vadd.f32 0.0, %v4073
    %v4075 = vpop.f32.mrf.mxu0
    %4076 = vmatprep.mubr.f32.mxu0 0.0
    %4077 = vmatmul.mubr.f32.gmra.mxu0 %v3964
    %v4078 = vpop.f32.mrf.mxu0
    %v4079 = vadd.f32 0.0, %v4078
    %v4080 = vpop.f32.mrf.mxu0
    %4081 = vmatprep.mubr.f32.mxu0 0.0
    %4082 = vmatmul.mubr.f32.gmra.mxu0 %v3965
    %v4083 = vpop.f32.mrf.mxu0
    %v4084 = vadd.f32 0.0, %v4083
    %v4085 = vpop.f32.mrf.mxu0
    %4086 = vmatprep.mubr.f32.mxu0 0.0
    %4087 = vmatmul.mubr.f32.gmra.mxu0 %v3966
    %v4088 = vpop.f32.mrf.mxu0
    %v4089 = vadd.f32 0.0, %v4088
    %v4090 = vpop.f32.mrf.mxu0
    %4091 = vmatprep.mubr.f32.mxu0 0.0
    %4092 = vmatmul.mubr.f32.gmra.mxu0 %v3967
    %v4093 = vpop.f32.mrf.mxu0
    %v4094 = vadd.f32 0.0, %v4093
    %v4095 = vpop.f32.mrf.mxu0
    %4096 = vmatprep.mubr.f32.mxu0 0.0
    %4097 = vmatmul.mubr.f32.gmra.mxu0 %v3968
    %v4098 = vpop.f32.mrf.mxu0
    %v4099 = vadd.f32 0.0, %v4098
    %v4100 = vpop.f32.mrf.mxu0
    %4101 = vmatprep.mubr.f32.mxu0 0.0
    %4102 = vmatmul.mubr.f32.gmra.mxu0 %v3969
    %v4103 = vpop.f32.mrf.mxu0
    %v4104 = vadd.f32 0.0, %v4103
    %v4105 = vpop.f32.mrf.mxu0
    %4106 = vmatprep.mubr.f32.mxu0 0.0
    %4107 = vmatmul.mubr.f32.gmra.mxu0 %v3970
    %v4108 = vpop.f32.mrf.mxu0
    %v4109 = vadd.f32 0.0, %v4108
    %v4110 = vpop.f32.mrf.mxu0
    %4111 = vmatprep.mubr.f32.mxu0 0.0
    %4112 = vmatmul.mubr.f32.gmra.mxu0 %v3971
    %v4113 = vpop.f32.mrf.mxu0
    %v4114 = vadd.f32 0.0, %v4113
    %v4115 = vpop.f32.mrf.mxu0
    %4116 = vmatprep.mubr.f32.mxu0 0.0
    %4117 = vmatmul.mubr.f32.gmra.mxu0 %v3972
    %v4118 = vpop.f32.mrf.mxu0
    %v4119 = vadd.f32 0.0, %v4118
    %v4120 = vpop.f32.mrf.mxu0
    %4121 = vmatprep.mubr.f32.mxu0 0.0
    %4122 = vmatmul.mubr.f32.gmra.mxu0 %v3973
    %v4123 = vpop.f32.mrf.mxu0
    %v4124 = vadd.f32 0.0, %v4123
    %v4125 = vpop.f32.mrf.mxu0
    %4126 = vmatprep.mubr.f32.mxu0 0.0
    %4127 = vmatmul.mubr.f32.gmra.mxu0 %v3974
    %v4128 = vpop.f32.mrf.mxu0
    %v4129 = vadd.f32 0.0, %v4128
    %v4130 = vpop.f32.mrf.mxu0
    %4131 = vmatprep.mubr.f32.mxu0 0.0
    %4132 = vmatmul.mubr.f32.gmra.mxu0 %v3975
    %v4133 = vpop.f32.mrf.mxu0
    %v4134 = vadd.f32 0.0, %v4133
    %v4135 = vpop.f32.mrf.mxu0
    %4136 = vmatprep.mubr.f32.mxu0 0.0
    %4137 = vmatmul.mubr.f32.gmra.mxu0 %v3976
    %v4138 = vpop.f32.mrf.mxu0
    %v4139 = vadd.f32 0.0, %v4138
    %v4140 = vpop.f32.mrf.mxu0
    %4141 = vdwg.mxu0
    %v4142 = vld [vmem:[#allocation9 + $0x670] sm:$0xff]
    %v4143 = vld [vmem:[#allocation9 + $0x678] sm:$0xff]
    %v4144 = vld [vmem:[#allocation9 + $0x680] sm:$0xff]
    %v4145 = vld [vmem:[#allocation9 + $0x688] sm:$0xff]
    %v4146 = vld [vmem:[#allocation9 + $0x690] sm:$0xff]
    %v4147 = vld [vmem:[#allocation9 + $0x698] sm:$0xff]
    %v4148 = vld [vmem:[#allocation9 + $0x6a0] sm:$0xff]
    %v4149 = vld [vmem:[#allocation9 + $0x6a8] sm:$0xff]
    %v4150 = vld [vmem:[#allocation9 + $0x6b0] sm:$0xff]
    %v4151 = vld [vmem:[#allocation9 + $0x6b8] sm:$0xff]
    %v4152 = vld [vmem:[#allocation9 + $0x6c0] sm:$0xff]
    %v4153 = vld [vmem:[#allocation9 + $0x6c8] sm:$0xff]
    %v4154 = vld [vmem:[#allocation9 + $0x6d0] sm:$0xff]
    %v4155 = vld [vmem:[#allocation9 + $0x6d8] sm:$0xff]
    %v4156 = vld [vmem:[#allocation9 + $0x6e0] sm:$0xff]
    %v4157 = vld [vmem:[#allocation9 + $0x6e8] sm:$0xff]
    %4158 = vmatprep.subr.mxu0 0.0
    %4159 = vmatpush1.msra.mxu0 %v4157
    %4160 = vmatprep.subr.mxu0 0.0
    %4161 = vmatpush1.msra.mxu0 %v4156
    %4162 = vmatprep.subr.mxu0 0.0
    %4163 = vmatpush1.msra.mxu0 %v4155
    %4164 = vmatprep.subr.mxu0 0.0
    %4165 = vmatpush1.msra.mxu0 %v4154
    %4166 = vmatprep.subr.mxu0 0.0
    %4167 = vmatpush1.msra.mxu0 %v4153
    %4168 = vmatprep.subr.mxu0 0.0
    %4169 = vmatpush1.msra.mxu0 %v4152
    %4170 = vmatprep.subr.mxu0 0.0
    %4171 = vmatpush1.msra.mxu0 %v4151
    %4172 = vmatprep.subr.mxu0 0.0
    %4173 = vmatpush1.msra.mxu0 %v4150
    %4174 = vmatprep.subr.mxu0 0.0
    %4175 = vmatpush1.msra.mxu0 %v4149
    %4176 = vmatprep.subr.mxu0 0.0
    %4177 = vmatpush1.msra.mxu0 %v4148
    %4178 = vmatprep.subr.mxu0 0.0
    %4179 = vmatpush1.msra.mxu0 %v4147
    %4180 = vmatprep.subr.mxu0 0.0
    %4181 = vmatpush1.msra.mxu0 %v4146
    %4182 = vmatprep.subr.mxu0 0.0
    %4183 = vmatpush1.msra.mxu0 %v4145
    %4184 = vmatprep.subr.mxu0 0.0
    %4185 = vmatpush1.msra.mxu0 %v4144
    %4186 = vmatprep.subr.mxu0 0.0
    %4187 = vmatpush1.msra.mxu0 %v4143
    %4188 = vmatprep.subr.mxu0 0.0
    %4189 = vmatpush1.msra.mxu0 %v4142
    %4190 = vmatprep.subr.mxu0 0.0
    %4191 = vmatpush2.msra.mxu0 0.0
    %4192 = vmatprep.subr.mxu0 0.0
    %4193 = vmatpush2.msra.mxu0 0.0
    %4194 = vmatprep.subr.mxu0 0.0
    %4195 = vmatpush2.msra.mxu0 0.0
    %4196 = vmatprep.subr.mxu0 0.0
    %4197 = vmatpush2.msra.mxu0 0.0
    %4198 = vmatprep.subr.mxu0 0.0
    %4199 = vmatpush2.msra.mxu0 0.0
    %4200 = vmatprep.subr.mxu0 0.0
    %4201 = vmatpush2.msra.mxu0 0.0
    %4202 = vmatprep.subr.mxu0 0.0
    %4203 = vmatpush2.msra.mxu0 0.0
    %4204 = vmatprep.subr.mxu0 0.0
    %4205 = vmatpush2.msra.mxu0 0.0
    %4206 = vmatprep.subr.mxu0 0.0
    %4207 = vmatpush2.msra.mxu0 0.0
    %4208 = vmatprep.subr.mxu0 0.0
    %4209 = vmatpush2.msra.mxu0 0.0
    %4210 = vmatprep.subr.mxu0 0.0
    %4211 = vmatpush2.msra.mxu0 0.0
    %4212 = vmatprep.subr.mxu0 0.0
    %4213 = vmatpush2.msra.mxu0 0.0
    %4214 = vmatprep.subr.mxu0 0.0
    %4215 = vmatpush2.msra.mxu0 0.0
    %4216 = vmatprep.subr.mxu0 0.0
    %4217 = vmatpush2.msra.mxu0 0.0
    %4218 = vmatprep.subr.mxu0 0.0
    %4219 = vmatpush2.msra.mxu0 0.0
    %4220 = vmatprep.subr.mxu0 0.0
    %4221 = vmatpush2.msra.mxu0 0.0
    %4222 = vmatprep.mubr.f32.mxu0 0.0
    %4223 = vmatmul.mubr.f32.gmra.mxu0 %v3409
    %v4224 = vpop.f32.mrf.mxu0
    %v4225 = vadd.f32 0.0, %v4224
    %v4226 = vpop.f32.mrf.mxu0
    %4227 = vmatprep.mubr.f32.mxu0 0.0
    %4228 = vmatmul.mubr.f32.gmra.mxu0 %v3410
    %v4229 = vpop.f32.mrf.mxu0
    %v4230 = vadd.f32 0.0, %v4229
    %v4231 = vpop.f32.mrf.mxu0
    %4232 = vmatprep.mubr.f32.mxu0 0.0
    %4233 = vmatmul.mubr.f32.gmra.mxu0 %v3411
    %v4234 = vpop.f32.mrf.mxu0
    %v4235 = vadd.f32 0.0, %v4234
    %v4236 = vpop.f32.mrf.mxu0
    %4237 = vmatprep.mubr.f32.mxu0 0.0
    %4238 = vmatmul.mubr.f32.gmra.mxu0 %v3412
    %v4239 = vpop.f32.mrf.mxu0
    %v4240 = vadd.f32 0.0, %v4239
    %v4241 = vpop.f32.mrf.mxu0
    %4242 = vmatprep.mubr.f32.mxu0 0.0
    %4243 = vmatmul.mubr.f32.gmra.mxu0 %v3413
    %v4244 = vpop.f32.mrf.mxu0
    %v4245 = vadd.f32 0.0, %v4244
    %v4246 = vpop.f32.mrf.mxu0
    %4247 = vmatprep.mubr.f32.mxu0 0.0
    %4248 = vmatmul.mubr.f32.gmra.mxu0 %v3414
    %v4249 = vpop.f32.mrf.mxu0
    %v4250 = vadd.f32 0.0, %v4249
    %v4251 = vpop.f32.mrf.mxu0
    %4252 = vmatprep.mubr.f32.mxu0 0.0
    %4253 = vmatmul.mubr.f32.gmra.mxu0 %v3415
    %v4254 = vpop.f32.mrf.mxu0
    %v4255 = vadd.f32 0.0, %v4254
    %v4256 = vpop.f32.mrf.mxu0
    %4257 = vmatprep.mubr.f32.mxu0 0.0
    %4258 = vmatmul.mubr.f32.gmra.mxu0 %v3416
    %v4259 = vpop.f32.mrf.mxu0
    %v4260 = vadd.f32 0.0, %v4259
    %v4261 = vpop.f32.mrf.mxu0
    %4262 = vdwg.mxu0
    %4263 = vmatprep.subr.mxu0 0.0
    %4264 = vmatpush1.msra.mxu0 0.0
    %4265 = vmatprep.subr.mxu0 0.0
    %4266 = vmatpush1.msra.mxu0 0.0
    %4267 = vmatprep.subr.mxu0 0.0
    %4268 = vmatpush1.msra.mxu0 0.0
    %4269 = vmatprep.subr.mxu0 0.0
    %4270 = vmatpush1.msra.mxu0 0.0
    %4271 = vmatprep.subr.mxu0 0.0
    %4272 = vmatpush1.msra.mxu0 0.0
    %4273 = vmatprep.subr.mxu0 0.0
    %4274 = vmatpush1.msra.mxu0 0.0
    %4275 = vmatprep.subr.mxu0 0.0
    %4276 = vmatpush1.msra.mxu0 0.0
    %4277 = vmatprep.subr.mxu0 0.0
    %4278 = vmatpush1.msra.mxu0 0.0
    %4279 = vmatprep.subr.mxu0 0.0
    %4280 = vmatpush1.msra.mxu0 %v4260
    %4281 = vmatprep.subr.mxu0 0.0
    %4282 = vmatpush1.msra.mxu0 %v4255
    %4283 = vmatprep.subr.mxu0 0.0
    %4284 = vmatpush1.msra.mxu0 %v4250
    %4285 = vmatprep.subr.mxu0 0.0
    %4286 = vmatpush1.msra.mxu0 %v4245
    %4287 = vmatprep.subr.mxu0 0.0
    %4288 = vmatpush1.msra.mxu0 %v4240
    %4289 = vmatprep.subr.mxu0 0.0
    %4290 = vmatpush1.msra.mxu0 %v4235
    %4291 = vmatprep.subr.mxu0 0.0
    %4292 = vmatpush1.msra.mxu0 %v4230
    %4293 = vmatprep.subr.mxu0 0.0
    %4294 = vmatpush1.msra.mxu0 %v4225
    %4295 = vmatprep.subr.mxu0 0.0
    %4296 = vmatpush2.msra.mxu0 0.0
    %4297 = vmatprep.subr.mxu0 0.0
    %4298 = vmatpush2.msra.mxu0 0.0
    %4299 = vmatprep.subr.mxu0 0.0
    %4300 = vmatpush2.msra.mxu0 0.0
    %4301 = vmatprep.subr.mxu0 0.0
    %4302 = vmatpush2.msra.mxu0 0.0
    %4303 = vmatprep.subr.mxu0 0.0
    %4304 = vmatpush2.msra.mxu0 0.0
    %4305 = vmatprep.subr.mxu0 0.0
    %4306 = vmatpush2.msra.mxu0 0.0
    %4307 = vmatprep.subr.mxu0 0.0
    %4308 = vmatpush2.msra.mxu0 0.0
    %4309 = vmatprep.subr.mxu0 0.0
    %4310 = vmatpush2.msra.mxu0 0.0
    %4311 = vmatprep.subr.mxu0 0.0
    %4312 = vmatpush2.msra.mxu0 0.0
    %4313 = vmatprep.subr.mxu0 0.0
    %4314 = vmatpush2.msra.mxu0 0.0
    %4315 = vmatprep.subr.mxu0 0.0
    %4316 = vmatpush2.msra.mxu0 0.0
    %4317 = vmatprep.subr.mxu0 0.0
    %4318 = vmatpush2.msra.mxu0 0.0
    %4319 = vmatprep.subr.mxu0 0.0
    %4320 = vmatpush2.msra.mxu0 0.0
    %4321 = vmatprep.subr.mxu0 0.0
    %4322 = vmatpush2.msra.mxu0 0.0
    %4323 = vmatprep.subr.mxu0 0.0
    %4324 = vmatpush2.msra.mxu0 0.0
    %4325 = vmatprep.subr.mxu0 0.0
    %4326 = vmatpush2.msra.mxu0 0.0
    %4327 = vmatprep.mubr.f32.mxu0 0.0
    %4328 = vmatmul.mubr.f32.gmra.mxu0 %v1037
    %v4329 = vpop.f32.mrf.mxu0
    %v4330 = vadd.f32 0.0, %v4329
    %v4331 = vpop.f32.mrf.mxu0
    %4332 = vmatprep.mubr.f32.mxu0 0.0
    %4333 = vmatmul.mubr.f32.gmra.mxu0 %v1040
    %v4334 = vpop.f32.mrf.mxu0
    %v4335 = vadd.f32 0.0, %v4334
    %v4336 = vpop.f32.mrf.mxu0
    %4337 = vmatprep.mubr.f32.mxu0 0.0
    %4338 = vmatmul.mubr.f32.gmra.mxu0 %v1043
    %v4339 = vpop.f32.mrf.mxu0
    %v4340 = vadd.f32 0.0, %v4339
    %v4341 = vpop.f32.mrf.mxu0
    %4342 = vmatprep.mubr.f32.mxu0 0.0
    %4343 = vmatmul.mubr.f32.gmra.mxu0 %v1046
    %v4344 = vpop.f32.mrf.mxu0
    %v4345 = vadd.f32 0.0, %v4344
    %v4346 = vpop.f32.mrf.mxu0
    %4347 = vmatprep.mubr.f32.mxu0 0.0
    %4348 = vmatmul.mubr.f32.gmra.mxu0 %v1049
    %v4349 = vpop.f32.mrf.mxu0
    %v4350 = vadd.f32 0.0, %v4349
    %v4351 = vpop.f32.mrf.mxu0
    %4352 = vmatprep.mubr.f32.mxu0 0.0
    %4353 = vmatmul.mubr.f32.gmra.mxu0 %v1052
    %v4354 = vpop.f32.mrf.mxu0
    %v4355 = vadd.f32 0.0, %v4354
    %v4356 = vpop.f32.mrf.mxu0
    %4357 = vmatprep.mubr.f32.mxu0 0.0
    %4358 = vmatmul.mubr.f32.gmra.mxu0 %v1055
    %v4359 = vpop.f32.mrf.mxu0
    %v4360 = vadd.f32 0.0, %v4359
    %v4361 = vpop.f32.mrf.mxu0
    %4362 = vmatprep.mubr.f32.mxu0 0.0
    %4363 = vmatmul.mubr.f32.gmra.mxu0 %v1058
    %v4364 = vpop.f32.mrf.mxu0
    %v4365 = vadd.f32 0.0, %v4364
    %v4366 = vpop.f32.mrf.mxu0
    %4367 = vmatprep.mubr.f32.mxu0 0.0
    %4368 = vmatmul.mubr.f32.gmra.mxu0 %v1061
    %v4369 = vpop.f32.mrf.mxu0
    %v4370 = vadd.f32 0.0, %v4369
    %v4371 = vpop.f32.mrf.mxu0
    %4372 = vmatprep.mubr.f32.mxu0 0.0
    %4373 = vmatmul.mubr.f32.gmra.mxu0 %v1064
    %v4374 = vpop.f32.mrf.mxu0
    %v4375 = vadd.f32 0.0, %v4374
    %v4376 = vpop.f32.mrf.mxu0
    %4377 = vmatprep.mubr.f32.mxu0 0.0
    %4378 = vmatmul.mubr.f32.gmra.mxu0 %v1067
    %v4379 = vpop.f32.mrf.mxu0
    %v4380 = vadd.f32 0.0, %v4379
    %v4381 = vpop.f32.mrf.mxu0
    %4382 = vmatprep.mubr.f32.mxu0 0.0
    %4383 = vmatmul.mubr.f32.gmra.mxu0 %v1070
    %v4384 = vpop.f32.mrf.mxu0
    %v4385 = vadd.f32 0.0, %v4384
    %v4386 = vpop.f32.mrf.mxu0
    %4387 = vmatprep.mubr.f32.mxu0 0.0
    %4388 = vmatmul.mubr.f32.gmra.mxu0 %v1073
    %v4389 = vpop.f32.mrf.mxu0
    %v4390 = vadd.f32 0.0, %v4389
    %v4391 = vpop.f32.mrf.mxu0
    %4392 = vmatprep.mubr.f32.mxu0 0.0
    %4393 = vmatmul.mubr.f32.gmra.mxu0 %v1076
    %v4394 = vpop.f32.mrf.mxu0
    %v4395 = vadd.f32 0.0, %v4394
    %v4396 = vpop.f32.mrf.mxu0
    %4397 = vmatprep.mubr.f32.mxu0 0.0
    %4398 = vmatmul.mubr.f32.gmra.mxu0 %v1079
    %v4399 = vpop.f32.mrf.mxu0
    %v4400 = vadd.f32 0.0, %v4399
    %v4401 = vpop.f32.mrf.mxu0
    %4402 = vmatprep.mubr.f32.mxu0 0.0
    %4403 = vmatmul.mubr.f32.gmra.mxu0 %v1082
    %v4404 = vpop.f32.mrf.mxu0
    %v4405 = vadd.f32 0.0, %v4404
    %v4406 = vpop.f32.mrf.mxu0
    %4407 = vmatprep.mubr.f32.mxu0 0.0
    %4408 = vmatmul.mubr.f32.gmra.mxu0 %v1085
    %v4409 = vpop.f32.mrf.mxu0
    %v4410 = vadd.f32 0.0, %v4409
    %v4411 = vpop.f32.mrf.mxu0
    %4412 = vmatprep.mubr.f32.mxu0 0.0
    %4413 = vmatmul.mubr.f32.gmra.mxu0 %v1088
    %v4414 = vpop.f32.mrf.mxu0
    %v4415 = vadd.f32 0.0, %v4414
    %v4416 = vpop.f32.mrf.mxu0
    %4417 = vmatprep.mubr.f32.mxu0 0.0
    %4418 = vmatmul.mubr.f32.gmra.mxu0 %v1091
    %v4419 = vpop.f32.mrf.mxu0
    %v4420 = vadd.f32 0.0, %v4419
    %v4421 = vpop.f32.mrf.mxu0
    %4422 = vmatprep.mubr.f32.mxu0 0.0
    %4423 = vmatmul.mubr.f32.gmra.mxu0 %v1094
    %v4424 = vpop.f32.mrf.mxu0
    %v4425 = vadd.f32 0.0, %v4424
    %v4426 = vpop.f32.mrf.mxu0
    %4427 = vdwg.mxu0
    %v4428 = vmul.f32 %v4044, %v4330
    %v4429 = vmul.f32 %v4049, %v4335
    %v4430 = vmul.f32 %v4054, %v4340
    %v4431 = vmul.f32 %v4059, %v4345
    %v4432 = vmul.f32 %v4064, %v4350
    %v4433 = vmul.f32 %v4069, %v4355
    %v4434 = vmul.f32 %v4074, %v4360
    %v4435 = vmul.f32 %v4079, %v4365
    %v4436 = vmul.f32 %v4084, %v4370
    %v4437 = vmul.f32 %v4089, %v4375
    %v4438 = vmul.f32 %v4094, %v4380
    %v4439 = vmul.f32 %v4099, %v4385
    %v4440 = vmul.f32 %v4104, %v4390
    %v4441 = vmul.f32 %v4109, %v4395
    %v4442 = vmul.f32 %v4114, %v4400
    %v4443 = vmul.f32 %v4119, %v4405
    %v4444 = vmul.f32 %v4124, %v4410
    %v4445 = vmul.f32 %v4129, %v4415
    %v4446 = vmul.f32 %v4134, %v4420
    %v4447 = vmul.f32 %v4139, %v4425
    %4448 = vmatprep.subr.mxu0 0.0
    %4449 = vmatpush1.msra.mxu0 %v4443
    %4450 = vmatprep.subr.mxu0 0.0
    %4451 = vmatpush1.msra.mxu0 %v4442
    %4452 = vmatprep.subr.mxu0 0.0
    %4453 = vmatpush1.msra.mxu0 %v4441
    %4454 = vmatprep.subr.mxu0 0.0
    %4455 = vmatpush1.msra.mxu0 %v4440
    %4456 = vmatprep.subr.mxu0 0.0
    %4457 = vmatpush1.msra.mxu0 %v4439
    %4458 = vmatprep.subr.mxu0 0.0
    %4459 = vmatpush1.msra.mxu0 %v4438
    %4460 = vmatprep.subr.mxu0 0.0
    %4461 = vmatpush1.msra.mxu0 %v4437
    %4462 = vmatprep.subr.mxu0 0.0
    %4463 = vmatpush1.msra.mxu0 %v4436
    %4464 = vmatprep.subr.mxu0 0.0
    %4465 = vmatpush1.msra.mxu0 %v4435
    %4466 = vmatprep.subr.mxu0 0.0
    %4467 = vmatpush1.msra.mxu0 %v4434
    %4468 = vmatprep.subr.mxu0 0.0
    %4469 = vmatpush1.msra.mxu0 %v4433
    %4470 = vmatprep.subr.mxu0 0.0
    %4471 = vmatpush1.msra.mxu0 %v4432
    %4472 = vmatprep.subr.mxu0 0.0
    %4473 = vmatpush1.msra.mxu0 %v4431
    %4474 = vmatprep.subr.mxu0 0.0
    %4475 = vmatpush1.msra.mxu0 %v4430
    %4476 = vmatprep.subr.mxu0 0.0
    %4477 = vmatpush1.msra.mxu0 %v4429
    %4478 = vmatprep.subr.mxu0 0.0
    %4479 = vmatpush1.msra.mxu0 %v4428
    %4480 = vmatprep.subr.mxu0 0.0
    %4481 = vmatpush2.msra.mxu0 0.0
    %4482 = vmatprep.subr.mxu0 0.0
    %4483 = vmatpush2.msra.mxu0 0.0
    %4484 = vmatprep.subr.mxu0 0.0
    %4485 = vmatpush2.msra.mxu0 0.0
    %4486 = vmatprep.subr.mxu0 0.0
    %4487 = vmatpush2.msra.mxu0 0.0
    %4488 = vmatprep.subr.mxu0 0.0
    %4489 = vmatpush2.msra.mxu0 0.0
    %4490 = vmatprep.subr.mxu0 0.0
    %4491 = vmatpush2.msra.mxu0 0.0
    %4492 = vmatprep.subr.mxu0 0.0
    %4493 = vmatpush2.msra.mxu0 0.0
    %4494 = vmatprep.subr.mxu0 0.0
    %4495 = vmatpush2.msra.mxu0 0.0
    %4496 = vmatprep.subr.mxu0 0.0
    %4497 = vmatpush2.msra.mxu0 0.0
    %4498 = vmatprep.subr.mxu0 0.0
    %4499 = vmatpush2.msra.mxu0 0.0
    %4500 = vmatprep.subr.mxu0 0.0
    %4501 = vmatpush2.msra.mxu0 0.0
    %4502 = vmatprep.subr.mxu0 0.0
    %4503 = vmatpush2.msra.mxu0 0.0
    %4504 = vmatprep.subr.mxu0 0.0
    %4505 = vmatpush2.msra.mxu0 %v4447
    %4506 = vmatprep.subr.mxu0 0.0
    %4507 = vmatpush2.msra.mxu0 %v4446
    %4508 = vmatprep.subr.mxu0 0.0
    %4509 = vmatpush2.msra.mxu0 %v4445
    %4510 = vmatprep.subr.mxu0 0.0
    %4511 = vmatpush2.msra.mxu0 %v4444
    %4512 = vmatprep.mubr.f32.mxu0 %v1283
    %4513 = vmatmul.mubr.f32.gmra.mxu0 %v140
    %v4514 = vpop.f32.mrf.mxu0
    %v4515 = vadd.f32 0.0, %v4514
    %v4516 = vpop.f32.mrf.mxu0
    %4517 = vmatprep.mubr.f32.mxu0 %v1286
    %4518 = vmatmul.mubr.f32.gmra.mxu0 %v142
    %v4519 = vpop.f32.mrf.mxu0
    %v4520 = vadd.f32 0.0, %v4519
    %v4521 = vpop.f32.mrf.mxu0
    %4522 = vmatprep.mubr.f32.mxu0 %v1289
    %4523 = vmatmul.mubr.f32.gmra.mxu0 %v144
    %v4524 = vpop.f32.mrf.mxu0
    %v4525 = vadd.f32 0.0, %v4524
    %v4526 = vpop.f32.mrf.mxu0
    %4527 = vmatprep.mubr.f32.mxu0 %v1292
    %4528 = vmatmul.mubr.f32.gmra.mxu0 %v146
    %v4529 = vpop.f32.mrf.mxu0
    %v4530 = vadd.f32 0.0, %v4529
    %v4531 = vpop.f32.mrf.mxu0
    %4532 = vmatprep.mubr.f32.mxu0 %v1295
    %4533 = vmatmul.mubr.f32.gmra.mxu0 %v148
    %v4534 = vpop.f32.mrf.mxu0
    %v4535 = vadd.f32 0.0, %v4534
    %v4536 = vpop.f32.mrf.mxu0
    %4537 = vmatprep.mubr.f32.mxu0 %v1298
    %4538 = vmatmul.mubr.f32.gmra.mxu0 %v150
    %v4539 = vpop.f32.mrf.mxu0
    %v4540 = vadd.f32 0.0, %v4539
    %v4541 = vpop.f32.mrf.mxu0
    %4542 = vmatprep.mubr.f32.mxu0 %v1301
    %4543 = vmatmul.mubr.f32.gmra.mxu0 %v152
    %v4544 = vpop.f32.mrf.mxu0
    %v4545 = vadd.f32 0.0, %v4544
    %v4546 = vpop.f32.mrf.mxu0
    %4547 = vmatprep.mubr.f32.mxu0 %v1304
    %4548 = vmatmul.mubr.f32.gmra.mxu0 %v154
    %v4549 = vpop.f32.mrf.mxu0
    %v4550 = vadd.f32 0.0, %v4549
    %v4551 = vpop.f32.mrf.mxu0
    %4552 = vdwg.mxu0
    %v4553 = vld [vmem:[#allocation9 + $0x6f0] sm:$0xff]
    %v4554 = vld [vmem:[#allocation9 + $0x6f8] sm:$0xff]
    %v4555 = vld [vmem:[#allocation9 + $0x700] sm:$0xff]
    %v4556 = vld [vmem:[#allocation9 + $0x708] sm:$0xff]
    %v4557 = vld [vmem:[#allocation9 + $0x710] sm:$0xff]
    %v4558 = vld [vmem:[#allocation9 + $0x718] sm:$0xff]
    %v4559 = vld [vmem:[#allocation9 + $0x720] sm:$0xff]
    %v4560 = vld [vmem:[#allocation9 + $0x728] sm:$0xff]
    %v4561 = vld [vmem:[#allocation9 + $0x730] sm:$0xff]
    %v4562 = vld [vmem:[#allocation9 + $0x738] sm:$0xff]
    %v4563 = vld [vmem:[#allocation9 + $0x740] sm:$0xff]
    %v4564 = vld [vmem:[#allocation9 + $0x748] sm:$0xff]
    %v4565 = vld [vmem:[#allocation9 + $0x750] sm:$0xff]
    %v4566 = vld [vmem:[#allocation9 + $0x758] sm:$0xff]
    %v4567 = vld [vmem:[#allocation9 + $0x760] sm:$0xff]
    %v4568 = vld [vmem:[#allocation9 + $0x768] sm:$0xff]
    %4569 = vmatprep.subr.mxu0 0.0
    %4570 = vmatpush1.msra.mxu0 %v4568
    %4571 = vmatprep.subr.mxu0 0.0
    %4572 = vmatpush1.msra.mxu0 %v4567
    %4573 = vmatprep.subr.mxu0 0.0
    %4574 = vmatpush1.msra.mxu0 %v4566
    %4575 = vmatprep.subr.mxu0 0.0
    %4576 = vmatpush1.msra.mxu0 %v4565
    %4577 = vmatprep.subr.mxu0 0.0
    %4578 = vmatpush1.msra.mxu0 %v4564
    %4579 = vmatprep.subr.mxu0 0.0
    %4580 = vmatpush1.msra.mxu0 %v4563
    %4581 = vmatprep.subr.mxu0 0.0
    %4582 = vmatpush1.msra.mxu0 %v4562
    %4583 = vmatprep.subr.mxu0 0.0
    %4584 = vmatpush1.msra.mxu0 %v4561
    %4585 = vmatprep.subr.mxu0 0.0
    %4586 = vmatpush1.msra.mxu0 %v4560
    %4587 = vmatprep.subr.mxu0 0.0
    %4588 = vmatpush1.msra.mxu0 %v4559
    %4589 = vmatprep.subr.mxu0 0.0
    %4590 = vmatpush1.msra.mxu0 %v4558
    %4591 = vmatprep.subr.mxu0 0.0
    %4592 = vmatpush1.msra.mxu0 %v4557
    %4593 = vmatprep.subr.mxu0 0.0
    %4594 = vmatpush1.msra.mxu0 %v4556
    %4595 = vmatprep.subr.mxu0 0.0
    %4596 = vmatpush1.msra.mxu0 %v4555
    %4597 = vmatprep.subr.mxu0 0.0
    %4598 = vmatpush1.msra.mxu0 %v4554
    %4599 = vmatprep.subr.mxu0 0.0
    %4600 = vmatpush1.msra.mxu0 %v4553
    %4601 = vmatprep.subr.mxu0 0.0
    %4602 = vmatpush2.msra.mxu0 0.0
    %4603 = vmatprep.subr.mxu0 0.0
    %4604 = vmatpush2.msra.mxu0 0.0
    %4605 = vmatprep.subr.mxu0 0.0
    %4606 = vmatpush2.msra.mxu0 0.0
    %4607 = vmatprep.subr.mxu0 0.0
    %4608 = vmatpush2.msra.mxu0 0.0
    %4609 = vmatprep.subr.mxu0 0.0
    %4610 = vmatpush2.msra.mxu0 0.0
    %4611 = vmatprep.subr.mxu0 0.0
    %4612 = vmatpush2.msra.mxu0 0.0
    %4613 = vmatprep.subr.mxu0 0.0
    %4614 = vmatpush2.msra.mxu0 0.0
    %4615 = vmatprep.subr.mxu0 0.0
    %4616 = vmatpush2.msra.mxu0 0.0
    %4617 = vmatprep.subr.mxu0 0.0
    %4618 = vmatpush2.msra.mxu0 0.0
    %4619 = vmatprep.subr.mxu0 0.0
    %4620 = vmatpush2.msra.mxu0 0.0
    %4621 = vmatprep.subr.mxu0 0.0
    %4622 = vmatpush2.msra.mxu0 0.0
    %4623 = vmatprep.subr.mxu0 0.0
    %4624 = vmatpush2.msra.mxu0 0.0
    %4625 = vmatprep.subr.mxu0 0.0
    %4626 = vmatpush2.msra.mxu0 0.0
    %4627 = vmatprep.subr.mxu0 0.0
    %4628 = vmatpush2.msra.mxu0 0.0
    %4629 = vmatprep.subr.mxu0 0.0
    %4630 = vmatpush2.msra.mxu0 0.0
    %4631 = vmatprep.subr.mxu0 0.0
    %4632 = vmatpush2.msra.mxu0 0.0
    %4633 = vmatprep.mubr.f32.mxu0 0.0
    %4634 = vmatmul.mubr.f32.gmra.mxu0 %v3409
    %v4635 = vpop.f32.mrf.mxu0
    %v4636 = vadd.f32 0.0, %v4635
    %v4637 = vpop.f32.mrf.mxu0
    %4638 = vmatprep.mubr.f32.mxu0 0.0
    %4639 = vmatmul.mubr.f32.gmra.mxu0 %v3410
    %v4640 = vpop.f32.mrf.mxu0
    %v4641 = vadd.f32 0.0, %v4640
    %v4642 = vpop.f32.mrf.mxu0
    %4643 = vmatprep.mubr.f32.mxu0 0.0
    %4644 = vmatmul.mubr.f32.gmra.mxu0 %v3411
    %v4645 = vpop.f32.mrf.mxu0
    %v4646 = vadd.f32 0.0, %v4645
    %v4647 = vpop.f32.mrf.mxu0
    %4648 = vmatprep.mubr.f32.mxu0 0.0
    %4649 = vmatmul.mubr.f32.gmra.mxu0 %v3412
    %v4650 = vpop.f32.mrf.mxu0
    %v4651 = vadd.f32 0.0, %v4650
    %v4652 = vpop.f32.mrf.mxu0
    %4653 = vmatprep.mubr.f32.mxu0 0.0
    %4654 = vmatmul.mubr.f32.gmra.mxu0 %v3413
    %v4655 = vpop.f32.mrf.mxu0
    %v4656 = vadd.f32 0.0, %v4655
    %v4657 = vpop.f32.mrf.mxu0
    %4658 = vmatprep.mubr.f32.mxu0 0.0
    %4659 = vmatmul.mubr.f32.gmra.mxu0 %v3414
    %v4660 = vpop.f32.mrf.mxu0
    %v4661 = vadd.f32 0.0, %v4660
    %v4662 = vpop.f32.mrf.mxu0
    %4663 = vmatprep.mubr.f32.mxu0 0.0
    %4664 = vmatmul.mubr.f32.gmra.mxu0 %v3415
    %v4665 = vpop.f32.mrf.mxu0
    %v4666 = vadd.f32 0.0, %v4665
    %v4667 = vpop.f32.mrf.mxu0
    %4668 = vmatprep.mubr.f32.mxu0 0.0
    %4669 = vmatmul.mubr.f32.gmra.mxu0 %v3416
    %v4670 = vpop.f32.mrf.mxu0
    %v4671 = vadd.f32 0.0, %v4670
    %v4672 = vpop.f32.mrf.mxu0
    %4673 = vdwg.mxu0
    %4674 = vmatprep.subr.mxu0 0.0
    %4675 = vmatpush1.msra.mxu0 %v196
    %4676 = vmatprep.subr.mxu0 0.0
    %4677 = vmatpush1.msra.mxu0 %v195
    %4678 = vmatprep.subr.mxu0 0.0
    %4679 = vmatpush1.msra.mxu0 %v194
    %4680 = vmatprep.subr.mxu0 0.0
    %4681 = vmatpush1.msra.mxu0 %v193
    %4682 = vmatprep.subr.mxu0 0.0
    %4683 = vmatpush1.msra.mxu0 %v192
    %4684 = vmatprep.subr.mxu0 0.0
    %4685 = vmatpush1.msra.mxu0 %v191
    %4686 = vmatprep.subr.mxu0 0.0
    %4687 = vmatpush1.msra.mxu0 %v190
    %4688 = vmatprep.subr.mxu0 0.0
    %4689 = vmatpush1.msra.mxu0 %v189
    %4690 = vmatprep.subr.mxu0 0.0
    %4691 = vmatpush1.msra.mxu0 %v188
    %4692 = vmatprep.subr.mxu0 0.0
    %4693 = vmatpush1.msra.mxu0 %v187
    %4694 = vmatprep.subr.mxu0 0.0
    %4695 = vmatpush1.msra.mxu0 %v186
    %4696 = vmatprep.subr.mxu0 0.0
    %4697 = vmatpush1.msra.mxu0 %v185
    %4698 = vmatprep.subr.mxu0 0.0
    %4699 = vmatpush1.msra.mxu0 %v184
    %4700 = vmatprep.subr.mxu0 0.0
    %4701 = vmatpush1.msra.mxu0 %v183
    %4702 = vmatprep.subr.mxu0 0.0
    %4703 = vmatpush1.msra.mxu0 %v182
    %4704 = vmatprep.subr.mxu0 0.0
    %4705 = vmatpush1.msra.mxu0 %v181
    %4706 = vmatprep.subr.mxu0 0.0
    %4707 = vmatpush2.msra.mxu0 0.0
    %4708 = vmatprep.subr.mxu0 0.0
    %4709 = vmatpush2.msra.mxu0 0.0
    %4710 = vmatprep.subr.mxu0 0.0
    %4711 = vmatpush2.msra.mxu0 0.0
    %4712 = vmatprep.subr.mxu0 0.0
    %4713 = vmatpush2.msra.mxu0 0.0
    %4714 = vmatprep.subr.mxu0 0.0
    %4715 = vmatpush2.msra.mxu0 0.0
    %4716 = vmatprep.subr.mxu0 0.0
    %4717 = vmatpush2.msra.mxu0 0.0
    %4718 = vmatprep.subr.mxu0 0.0
    %4719 = vmatpush2.msra.mxu0 0.0
    %4720 = vmatprep.subr.mxu0 0.0
    %4721 = vmatpush2.msra.mxu0 0.0
    %4722 = vmatprep.subr.mxu0 0.0
    %4723 = vmatpush2.msra.mxu0 0.0
    %4724 = vmatprep.subr.mxu0 0.0
    %4725 = vmatpush2.msra.mxu0 0.0
    %4726 = vmatprep.subr.mxu0 0.0
    %4727 = vmatpush2.msra.mxu0 0.0
    %4728 = vmatprep.subr.mxu0 0.0
    %4729 = vmatpush2.msra.mxu0 0.0
    %4730 = vmatprep.subr.mxu0 0.0
    %4731 = vmatpush2.msra.mxu0 0.0
    %4732 = vmatprep.subr.mxu0 0.0
    %4733 = vmatpush2.msra.mxu0 0.0
    %4734 = vmatprep.subr.mxu0 0.0
    %4735 = vmatpush2.msra.mxu0 0.0
    %4736 = vmatprep.subr.mxu0 0.0
    %4737 = vmatpush2.msra.mxu0 0.0
    %4738 = vmatprep.mubr.f32.mxu0 0.0
    %4739 = vmatmul.mubr.f32.gmra.mxu0 %v4515
    %v4740 = vpop.f32.mrf.mxu0
    %v4741 = vadd.f32 %v4636, %v4740
    %v4742 = vpop.f32.mrf.mxu0
    %4743 = vmatprep.mubr.f32.mxu0 0.0
    %4744 = vmatmul.mubr.f32.gmra.mxu0 %v4520
    %v4745 = vpop.f32.mrf.mxu0
    %v4746 = vadd.f32 %v4641, %v4745
    %v4747 = vpop.f32.mrf.mxu0
    %4748 = vmatprep.mubr.f32.mxu0 0.0
    %4749 = vmatmul.mubr.f32.gmra.mxu0 %v4525
    %v4750 = vpop.f32.mrf.mxu0
    %v4751 = vadd.f32 %v4646, %v4750
    %v4752 = vpop.f32.mrf.mxu0
    %4753 = vmatprep.mubr.f32.mxu0 0.0
    %4754 = vmatmul.mubr.f32.gmra.mxu0 %v4530
    %v4755 = vpop.f32.mrf.mxu0
    %v4756 = vadd.f32 %v4651, %v4755
    %v4757 = vpop.f32.mrf.mxu0
    %4758 = vmatprep.mubr.f32.mxu0 0.0
    %4759 = vmatmul.mubr.f32.gmra.mxu0 %v4535
    %v4760 = vpop.f32.mrf.mxu0
    %v4761 = vadd.f32 %v4656, %v4760
    %v4762 = vpop.f32.mrf.mxu0
    %4763 = vmatprep.mubr.f32.mxu0 0.0
    %4764 = vmatmul.mubr.f32.gmra.mxu0 %v4540
    %v4765 = vpop.f32.mrf.mxu0
    %v4766 = vadd.f32 %v4661, %v4765
    %v4767 = vpop.f32.mrf.mxu0
    %4768 = vmatprep.mubr.f32.mxu0 0.0
    %4769 = vmatmul.mubr.f32.gmra.mxu0 %v4545
    %v4770 = vpop.f32.mrf.mxu0
    %v4771 = vadd.f32 %v4666, %v4770
    %v4772 = vpop.f32.mrf.mxu0
    %4773 = vmatprep.mubr.f32.mxu0 0.0
    %4774 = vmatmul.mubr.f32.gmra.mxu0 %v4550
    %v4775 = vpop.f32.mrf.mxu0
    %v4776 = vadd.f32 %v4671, %v4775
    %v4777 = vpop.f32.mrf.mxu0
    %4778 = vdwg.mxu0
    %v4779 = vld [vmem:[#allocation9 + $0x770] sm:$0x1]
    %v4780 = vlaneseq
    %v4781 = vshrl.u32 %v4780, 7
    %v4782 = vsub.s32 0, %v4781
    %v4783 = vrot.slane %v4779, %v4782
    %v4784 = vadd.f32 %v4741, %v4783
    %v4785 = vadd.f32 %v4746, %v4783
    %v4786 = vadd.f32 %v4751, %v4783
    %v4787 = vadd.f32 %v4756, %v4783
    %v4788 = vadd.f32 %v4761, %v4783
    %v4789 = vadd.f32 %v4766, %v4783
    %v4790 = vadd.f32 %v4771, %v4783
    %v4791 = vadd.f32 %v4776, %v4783
    %vm4792 = vcmp.gt.f32.partialorder %v4784, 0.0
    %vm4793 = vcmp.gt.f32.partialorder %v4785, 0.0
    %vm4794 = vcmp.gt.f32.partialorder %v4786, 0.0
    %vm4795 = vcmp.gt.f32.partialorder %v4787, 0.0
    %vm4796 = vcmp.gt.f32.partialorder %v4788, 0.0
    %vm4797 = vcmp.gt.f32.partialorder %v4789, 0.0
    %vm4798 = vcmp.gt.f32.partialorder %v4790, 0.0
    %vm4799 = vcmp.gt.f32.partialorder %v4791, 0.0
    %v4800 = vmul.f32 %v4784, 0.01
    %v4801 = vmul.f32 %v4785, 0.01
    %v4802 = vmul.f32 %v4786, 0.01
    %v4803 = vmul.f32 %v4787, 0.01
    %v4804 = vmul.f32 %v4788, 0.01
    %v4805 = vmul.f32 %v4789, 0.01
    %v4806 = vmul.f32 %v4790, 0.01
    %v4807 = vmul.f32 %v4791, 0.01
    %v4808 = vsel %vm4792, %v4784, %v4800
    %v4809 = vsel %vm4793, %v4785, %v4801
    %v4810 = vsel %vm4794, %v4786, %v4802
    %v4811 = vsel %vm4795, %v4787, %v4803
    %v4812 = vsel %vm4796, %v4788, %v4804
    %v4813 = vsel %vm4797, %v4789, %v4805
    %v4814 = vsel %vm4798, %v4790, %v4806
    %v4815 = vsel %vm4799, %v4791, %v4807
    %v4816 = vld [vmem:[#allocation9 + $0x778] sm:$0xff]
    %v4817 = vld [vmem:[#allocation9 + $0x780] sm:$0xff]
    %v4818 = vld [vmem:[#allocation9 + $0x788] sm:$0xff]
    %v4819 = vld [vmem:[#allocation9 + $0x790] sm:$0xff]
    %v4820 = vld [vmem:[#allocation9 + $0x798] sm:$0xff]
    %v4821 = vld [vmem:[#allocation9 + $0x7a0] sm:$0xff]
    %v4822 = vld [vmem:[#allocation9 + $0x7a8] sm:$0xff]
    %v4823 = vld [vmem:[#allocation9 + $0x7b0] sm:$0xff]
    %v4824 = vld [vmem:[#allocation9 + $0x7b8] sm:$0xff]
    %v4825 = vld [vmem:[#allocation9 + $0x7c0] sm:$0xff]
    %v4826 = vld [vmem:[#allocation9 + $0x7c8] sm:$0xff]
    %v4827 = vld [vmem:[#allocation9 + $0x7d0] sm:$0xff]
    %v4828 = vld [vmem:[#allocation9 + $0x7d8] sm:$0xff]
    %v4829 = vld [vmem:[#allocation9 + $0x7e0] sm:$0xff]
    %v4830 = vld [vmem:[#allocation9 + $0x7e8] sm:$0xff]
    %v4831 = vld [vmem:[#allocation9 + $0x7f0] sm:$0xff]
    %v4832 = vld [vmem:[#allocation9 + $0x7f8] sm:$0x1]
    %v4833 = vlaneseq
    %v4834 = vshrl.u32 %v4833, 7
    %v4835 = vsub.s32 0, %v4834
    %v4836 = vrot.slane %v4832, %v4835
    %4837 = vmatprep.subr.mxu0 0.0
    %4838 = vmatpush1.msra.mxu0 %v4831
    %4839 = vmatprep.subr.mxu0 0.0
    %4840 = vmatpush1.msra.mxu0 %v4830
    %4841 = vmatprep.subr.mxu0 0.0
    %4842 = vmatpush1.msra.mxu0 %v4829
    %4843 = vmatprep.subr.mxu0 0.0
    %4844 = vmatpush1.msra.mxu0 %v4828
    %4845 = vmatprep.subr.mxu0 0.0
    %4846 = vmatpush1.msra.mxu0 %v4827
    %4847 = vmatprep.subr.mxu0 0.0
    %4848 = vmatpush1.msra.mxu0 %v4826
    %4849 = vmatprep.subr.mxu0 0.0
    %4850 = vmatpush1.msra.mxu0 %v4825
    %4851 = vmatprep.subr.mxu0 0.0
    %4852 = vmatpush1.msra.mxu0 %v4824
    %4853 = vmatprep.subr.mxu0 0.0
    %4854 = vmatpush1.msra.mxu0 %v4823
    %4855 = vmatprep.subr.mxu0 0.0
    %4856 = vmatpush1.msra.mxu0 %v4822
    %4857 = vmatprep.subr.mxu0 0.0
    %4858 = vmatpush1.msra.mxu0 %v4821
    %4859 = vmatprep.subr.mxu0 0.0
    %4860 = vmatpush1.msra.mxu0 %v4820
    %4861 = vmatprep.subr.mxu0 0.0
    %4862 = vmatpush1.msra.mxu0 %v4819
    %4863 = vmatprep.subr.mxu0 0.0
    %4864 = vmatpush1.msra.mxu0 %v4818
    %4865 = vmatprep.subr.mxu0 0.0
    %4866 = vmatpush1.msra.mxu0 %v4817
    %4867 = vmatprep.subr.mxu0 0.0
    %4868 = vmatpush1.msra.mxu0 %v4816
    %4869 = vmatprep.subr.mxu0 0.0
    %4870 = vmatpush2.msra.mxu0 0.0
    %4871 = vmatprep.subr.mxu0 0.0
    %4872 = vmatpush2.msra.mxu0 0.0
    %4873 = vmatprep.subr.mxu0 0.0
    %4874 = vmatpush2.msra.mxu0 0.0
    %4875 = vmatprep.subr.mxu0 0.0
    %4876 = vmatpush2.msra.mxu0 0.0
    %4877 = vmatprep.subr.mxu0 0.0
    %4878 = vmatpush2.msra.mxu0 0.0
    %4879 = vmatprep.subr.mxu0 0.0
    %4880 = vmatpush2.msra.mxu0 0.0
    %4881 = vmatprep.subr.mxu0 0.0
    %4882 = vmatpush2.msra.mxu0 0.0
    %4883 = vmatprep.subr.mxu0 0.0
    %4884 = vmatpush2.msra.mxu0 0.0
    %4885 = vmatprep.subr.mxu0 0.0
    %4886 = vmatpush2.msra.mxu0 0.0
    %4887 = vmatprep.subr.mxu0 0.0
    %4888 = vmatpush2.msra.mxu0 0.0
    %4889 = vmatprep.subr.mxu0 0.0
    %4890 = vmatpush2.msra.mxu0 0.0
    %4891 = vmatprep.subr.mxu0 0.0
    %4892 = vmatpush2.msra.mxu0 0.0
    %4893 = vmatprep.subr.mxu0 0.0
    %4894 = vmatpush2.msra.mxu0 0.0
    %4895 = vmatprep.subr.mxu0 0.0
    %4896 = vmatpush2.msra.mxu0 0.0
    %4897 = vmatprep.subr.mxu0 0.0
    %4898 = vmatpush2.msra.mxu0 0.0
    %4899 = vmatprep.subr.mxu0 0.0
    %4900 = vmatpush2.msra.mxu0 0.0
    %4901 = vmatprep.mubr.f32.mxu0 0.0
    %4902 = vmatmul.mubr.f32.gmra.mxu0 %v4808
    %v4903 = vpop.f32.mrf.mxu0
    %v4904 = vadd.f32 %v4836, %v4903
    %v4905 = vpop.f32.mrf.mxu0
    %4906 = vmatprep.mubr.f32.mxu0 0.0
    %4907 = vmatmul.mubr.f32.gmra.mxu0 %v4809
    %v4908 = vpop.f32.mrf.mxu0
    %v4909 = vadd.f32 %v4836, %v4908
    %v4910 = vpop.f32.mrf.mxu0
    %4911 = vmatprep.mubr.f32.mxu0 0.0
    %4912 = vmatmul.mubr.f32.gmra.mxu0 %v4810
    %v4913 = vpop.f32.mrf.mxu0
    %v4914 = vadd.f32 %v4836, %v4913
    %v4915 = vpop.f32.mrf.mxu0
    %4916 = vmatprep.mubr.f32.mxu0 0.0
    %4917 = vmatmul.mubr.f32.gmra.mxu0 %v4811
    %v4918 = vpop.f32.mrf.mxu0
    %v4919 = vadd.f32 %v4836, %v4918
    %v4920 = vpop.f32.mrf.mxu0
    %4921 = vmatprep.mubr.f32.mxu0 0.0
    %4922 = vmatmul.mubr.f32.gmra.mxu0 %v4812
    %v4923 = vpop.f32.mrf.mxu0
    %v4924 = vadd.f32 %v4836, %v4923
    %v4925 = vpop.f32.mrf.mxu0
    %4926 = vmatprep.mubr.f32.mxu0 0.0
    %4927 = vmatmul.mubr.f32.gmra.mxu0 %v4813
    %v4928 = vpop.f32.mrf.mxu0
    %v4929 = vadd.f32 %v4836, %v4928
    %v4930 = vpop.f32.mrf.mxu0
    %4931 = vmatprep.mubr.f32.mxu0 0.0
    %4932 = vmatmul.mubr.f32.gmra.mxu0 %v4814
    %v4933 = vpop.f32.mrf.mxu0
    %v4934 = vadd.f32 %v4836, %v4933
    %v4935 = vpop.f32.mrf.mxu0
    %4936 = vmatprep.mubr.f32.mxu0 0.0
    %4937 = vmatmul.mubr.f32.gmra.mxu0 %v4815
    %v4938 = vpop.f32.mrf.mxu0
    %v4939 = vadd.f32 %v4836, %v4938
    %v4940 = vpop.f32.mrf.mxu0
    %4941 = vdwg.mxu0
    %vm4942 = vcmp.gt.f32.partialorder %v4904, 0.0
    %vm4943 = vcmp.gt.f32.partialorder %v4909, 0.0
    %vm4944 = vcmp.gt.f32.partialorder %v4914, 0.0
    %vm4945 = vcmp.gt.f32.partialorder %v4919, 0.0
    %vm4946 = vcmp.gt.f32.partialorder %v4924, 0.0
    %vm4947 = vcmp.gt.f32.partialorder %v4929, 0.0
    %vm4948 = vcmp.gt.f32.partialorder %v4934, 0.0
    %vm4949 = vcmp.gt.f32.partialorder %v4939, 0.0
    %v4950 = vmul.f32 %v4904, 0.01
    %v4951 = vmul.f32 %v4909, 0.01
    %v4952 = vmul.f32 %v4914, 0.01
    %v4953 = vmul.f32 %v4919, 0.01
    %v4954 = vmul.f32 %v4924, 0.01
    %v4955 = vmul.f32 %v4929, 0.01
    %v4956 = vmul.f32 %v4934, 0.01
    %v4957 = vmul.f32 %v4939, 0.01
    %v4958 = vsel %vm4942, %v4904, %v4950
    %v4959 = vsel %vm4943, %v4909, %v4951
    %v4960 = vsel %vm4944, %v4914, %v4952
    %v4961 = vsel %vm4945, %v4919, %v4953
    %v4962 = vsel %vm4946, %v4924, %v4954
    %v4963 = vsel %vm4947, %v4929, %v4955
    %v4964 = vsel %vm4948, %v4934, %v4956
    %v4965 = vsel %vm4949, %v4939, %v4957
    %v4966 = vld [vmem:[#allocation9 + $0x800] sm:$0x1]
    %v4967 = vlaneseq
    %v4968 = vshrl.u32 %v4967, 7
    %v4969 = vsub.s32 0, %v4968
    %v4970 = vrot.slane %v4966, %v4969
    %v4971 = vmul.f32 %v4958, %v4970
    %v4972 = vmul.f32 %v4959, %v4970
    %v4973 = vmul.f32 %v4960, %v4970
    %v4974 = vmul.f32 %v4961, %v4970
    %v4975 = vmul.f32 %v4962, %v4970
    %v4976 = vmul.f32 %v4963, %v4970
    %v4977 = vmul.f32 %v4964, %v4970
    %v4978 = vmul.f32 %v4965, %v4970
    %v4979 = vld [vmem:[#allocation9 + $0x808] sm:$0x1]
    %v4980 = vlaneseq
    %v4981 = vshrl.u32 %v4980, 7
    %v4982 = vsub.s32 0, %v4981
    %v4983 = vrot.slane %v4979, %v4982
    %v4984 = vadd.f32 %v4971, %v4983
    %v4985 = vadd.f32 %v4972, %v4983
    %v4986 = vadd.f32 %v4973, %v4983
    %v4987 = vadd.f32 %v4974, %v4983
    %v4988 = vadd.f32 %v4975, %v4983
    %v4989 = vadd.f32 %v4976, %v4983
    %v4990 = vadd.f32 %v4977, %v4983
    %v4991 = vadd.f32 %v4978, %v4983
    %v4992 = vmax.f32 %v3417, %v4984
    %v4993 = vmax.f32 %v3418, %v4985
    %v4994 = vmax.f32 %v3419, %v4986
    %v4995 = vmax.f32 %v3420, %v4987
    %v4996 = vmax.f32 %v3421, %v4988
    %v4997 = vmax.f32 %v3422, %v4989
    %v4998 = vmax.f32 %v3423, %v4990
    %v4999 = vmax.f32 %v3424, %v4991
    %v5000 = vld [vmem:[#allocation9 + $0x910] sm:$0xff]
    %v5001 = vld [vmem:[#allocation9 + $0x918] sm:$0xff]
    %v5002 = vld [vmem:[#allocation9 + $0x920] sm:$0xff]
    %v5003 = vld [vmem:[#allocation9 + $0x928] sm:$0xff]
    %v5004 = vld [vmem:[#allocation9 + $0x930] sm:$0xff]
    %v5005 = vld [vmem:[#allocation9 + $0x938] sm:$0xff]
    %v5006 = vld [vmem:[#allocation9 + $0x940] sm:$0xff]
    %v5007 = vld [vmem:[#allocation9 + $0x948] sm:$0xff]
    %v5008 = vld [vmem:[#allocation9 + $0x950] sm:$0xff]
    %v5009 = vld [vmem:[#allocation9 + $0x958] sm:$0xff]
    %v5010 = vld [vmem:[#allocation9 + $0x960] sm:$0xff]
    %v5011 = vld [vmem:[#allocation9 + $0x968] sm:$0xff]
    %v5012 = vld [vmem:[#allocation9 + $0x970] sm:$0xff]
    %v5013 = vld [vmem:[#allocation9 + $0x978] sm:$0xff]
    %v5014 = vld [vmem:[#allocation9 + $0x980] sm:$0xff]
    %v5015 = vld [vmem:[#allocation9 + $0x988] sm:$0xff]
    %v5016 = vld [vmem:[#allocation9 + $0x990] sm:$0xff]
    %v5017 = vld [vmem:[#allocation9 + $0x998] sm:$0xff]
    %v5018 = vld [vmem:[#allocation9 + $0x9a0] sm:$0xff]
    %v5019 = vld [vmem:[#allocation9 + $0x9a8] sm:$0xff]
    %v5020 = vld [vmem:[#allocation9 + $0x9b0] sm:$0xff]
    %v5021 = vld [vmem:[#allocation9 + $0x9b8] sm:$0xff]
    %v5022 = vld [vmem:[#allocation9 + $0x9c0] sm:$0xff]
    %v5023 = vld [vmem:[#allocation9 + $0x9c8] sm:$0xff]
    %v5024 = vld [vmem:[#allocation9 + $0x9d0] sm:$0x1]
    %v5025 = vld [vmem:[#allocation9 + $0x9d8] sm:$0xff]
    %v5026 = vld [vmem:[#allocation9 + $0x9e0] sm:$0xff]
    %v5027 = vld [vmem:[#allocation9 + $0x9e8] sm:$0xff]
    %v5028 = vld [vmem:[#allocation9 + $0x9f0] sm:$0xff]
    %v5029 = vld [vmem:[#allocation9 + $0x9f8] sm:$0xff]
    %v5030 = vld [vmem:[#allocation9 + $0xa00] sm:$0xff]
    %v5031 = vld [vmem:[#allocation9 + $0xa08] sm:$0xff]
    %v5032 = vld [vmem:[#allocation9 + $0xa10] sm:$0xff]
    %v5033 = vld [vmem:[#allocation9 + $0xa18] sm:$0x1]
    %v5034 = vld [vmem:[#allocation9 + $0xa20] sm:$0xff]
    %v5035 = vld [vmem:[#allocation9 + $0xa28] sm:$0xff]
    %v5036 = vld [vmem:[#allocation9 + $0xa30] sm:$0xff]
    %v5037 = vld [vmem:[#allocation9 + $0xa38] sm:$0xff]
    %v5038 = vld [vmem:[#allocation9 + $0xa40] sm:$0xff]
    %v5039 = vld [vmem:[#allocation9 + $0xa48] sm:$0xff]
    %v5040 = vld [vmem:[#allocation9 + $0xa50] sm:$0xff]
    %v5041 = vld [vmem:[#allocation9 + $0xa58] sm:$0xff]
    %v5042 = vld [vmem:[#allocation9 + $0xa60] sm:$0xff]
    %v5043 = vld [vmem:[#allocation9 + $0xa68] sm:$0xff]
    %v5044 = vld [vmem:[#allocation9 + $0xa70] sm:$0xff]
    %v5045 = vld [vmem:[#allocation9 + $0xa78] sm:$0xff]
    %v5046 = vld [vmem:[#allocation9 + $0xa80] sm:$0xff]
    %v5047 = vld [vmem:[#allocation9 + $0xa88] sm:$0xff]
    %v5048 = vld [vmem:[#allocation9 + $0xa90] sm:$0xff]
    %v5049 = vld [vmem:[#allocation9 + $0xa98] sm:$0xff]
    %v5050 = vld [vmem:[#allocation9 + $0xaa0] sm:$0xff]
    %v5051 = vld [vmem:[#allocation9 + $0xaa8] sm:$0xff]
    %v5052 = vld [vmem:[#allocation9 + $0xab0] sm:$0xff]
    %v5053 = vld [vmem:[#allocation9 + $0xab8] sm:$0xff]
    %v5054 = vld [vmem:[#allocation9 + $0xac0] sm:$0x1]
    %v5055 = vld [vmem:[#allocation9 + $0xac8] sm:$0xff]
    %v5056 = vld [vmem:[#allocation9 + $0xad0] sm:$0xff]
    %v5057 = vld [vmem:[#allocation9 + $0xad8] sm:$0xff]
    %v5058 = vld [vmem:[#allocation9 + $0xae0] sm:$0xff]
    %v5059 = vld [vmem:[#allocation9 + $0xae8] sm:$0xff]
    %v5060 = vld [vmem:[#allocation9 + $0xaf0] sm:$0xff]
    %v5061 = vld [vmem:[#allocation9 + $0xaf8] sm:$0xff]
    %v5062 = vld [vmem:[#allocation9 + $0xb00] sm:$0xff]
    %v5063 = vld [vmem:[#allocation9 + $0xb08] sm:$0xff]
    %v5064 = vld [vmem:[#allocation9 + $0xb10] sm:$0xff]
    %v5065 = vld [vmem:[#allocation9 + $0xb18] sm:$0xff]
    %v5066 = vld [vmem:[#allocation9 + $0xb20] sm:$0xff]
    %v5067 = vld [vmem:[#allocation9 + $0xb28] sm:$0xff]
    %v5068 = vld [vmem:[#allocation9 + $0xb30] sm:$0xff]
    %v5069 = vld [vmem:[#allocation9 + $0xb38] sm:$0xff]
    %v5070 = vld [vmem:[#allocation9 + $0xb40] sm:$0xff]
    %v5071 = vld [vmem:[#allocation9 + $0xb48] sm:$0x1]
    %vm5072 = vcmp.gt.f32.partialorder %v157, 0.5
    %vm5073 = vcmp.gt.f32.partialorder %v158, 0.5
    %vm5074 = vcmp.gt.f32.partialorder %v159, 0.5
    %vm5075 = vcmp.gt.f32.partialorder %v160, 0.5
    %vm5076 = vcmp.gt.f32.partialorder %v161, 0.5
    %vm5077 = vcmp.gt.f32.partialorder %v162, 0.5
    %vm5078 = vcmp.gt.f32.partialorder %v163, 0.5
    %vm5079 = vcmp.gt.f32.partialorder %v164, 0.5
    %5080 = vmatprep.subr.mxu0 0.0
    %5081 = vmatpush1.msra.mxu0 %v5019
    %5082 = vmatprep.subr.mxu0 0.0
    %5083 = vmatpush1.msra.mxu0 %v5018
    %5084 = vmatprep.subr.mxu0 0.0
    %5085 = vmatpush1.msra.mxu0 %v5017
    %5086 = vmatprep.subr.mxu0 0.0
    %5087 = vmatpush1.msra.mxu0 %v5016
    %5088 = vmatprep.subr.mxu0 0.0
    %5089 = vmatpush1.msra.mxu0 %v5015
    %5090 = vmatprep.subr.mxu0 0.0
    %5091 = vmatpush1.msra.mxu0 %v5014
    %5092 = vmatprep.subr.mxu0 0.0
    %5093 = vmatpush1.msra.mxu0 %v5013
    %5094 = vmatprep.subr.mxu0 0.0
    %5095 = vmatpush1.msra.mxu0 %v5012
    %5096 = vmatprep.subr.mxu0 0.0
    %5097 = vmatpush1.msra.mxu0 %v5011
    %5098 = vmatprep.subr.mxu0 0.0
    %5099 = vmatpush1.msra.mxu0 %v5010
    %5100 = vmatprep.subr.mxu0 0.0
    %5101 = vmatpush1.msra.mxu0 %v5009
    %5102 = vmatprep.subr.mxu0 0.0
    %5103 = vmatpush1.msra.mxu0 %v5008
    %5104 = vmatprep.subr.mxu0 0.0
    %5105 = vmatpush1.msra.mxu0 %v5007
    %5106 = vmatprep.subr.mxu0 0.0
    %5107 = vmatpush1.msra.mxu0 %v5006
    %5108 = vmatprep.subr.mxu0 0.0
    %5109 = vmatpush1.msra.mxu0 %v5005
    %5110 = vmatprep.subr.mxu0 0.0
    %5111 = vmatpush1.msra.mxu0 %v5004
    %5112 = vmatprep.subr.mxu0 0.0
    %5113 = vmatpush2.msra.mxu0 0.0
    %5114 = vmatprep.subr.mxu0 0.0
    %5115 = vmatpush2.msra.mxu0 0.0
    %5116 = vmatprep.subr.mxu0 0.0
    %5117 = vmatpush2.msra.mxu0 0.0
    %5118 = vmatprep.subr.mxu0 0.0
    %5119 = vmatpush2.msra.mxu0 0.0
    %5120 = vmatprep.subr.mxu0 0.0
    %5121 = vmatpush2.msra.mxu0 0.0
    %5122 = vmatprep.subr.mxu0 0.0
    %5123 = vmatpush2.msra.mxu0 0.0
    %5124 = vmatprep.subr.mxu0 0.0
    %5125 = vmatpush2.msra.mxu0 0.0
    %5126 = vmatprep.subr.mxu0 0.0
    %5127 = vmatpush2.msra.mxu0 0.0
    %5128 = vmatprep.subr.mxu0 0.0
    %5129 = vmatpush2.msra.mxu0 0.0
    %5130 = vmatprep.subr.mxu0 0.0
    %5131 = vmatpush2.msra.mxu0 0.0
    %5132 = vmatprep.subr.mxu0 0.0
    %5133 = vmatpush2.msra.mxu0 0.0
    %5134 = vmatprep.subr.mxu0 0.0
    %5135 = vmatpush2.msra.mxu0 0.0
    %5136 = vmatprep.subr.mxu0 0.0
    %5137 = vmatpush2.msra.mxu0 0.0
    %5138 = vmatprep.subr.mxu0 0.0
    %5139 = vmatpush2.msra.mxu0 0.0
    %5140 = vmatprep.subr.mxu0 0.0
    %5141 = vmatpush2.msra.mxu0 0.0
    %5142 = vmatprep.subr.mxu0 0.0
    %5143 = vmatpush2.msra.mxu0 0.0
    %5144 = vmatprep.mubr.f32.mxu0 0.0
    %5145 = vmatmul.mubr.f32.gmra.mxu0 0.0
    %v5146 = vpop.f32.mrf.mxu0
    %v5147 = vadd.f32 0.0, %v5146
    %v5148 = vpop.f32.mrf.mxu0
    %5149 = vdwg.mxu0
    %v5151 = vsel %vm1281, 0.0, 0
    %5153 = vmatprep.subr.mxu0 0.0
    %5154 = vmatpush1.msra.mxu0 0.0
    %5155 = vmatprep.subr.mxu0 0.0
    %5156 = vmatpush1.msra.mxu0 0.0
    %5157 = vmatprep.subr.mxu0 0.0
    %5158 = vmatpush1.msra.mxu0 0.0
    %5159 = vmatprep.subr.mxu0 0.0
    %5160 = vmatpush1.msra.mxu0 0.0
    %5161 = vmatprep.subr.mxu0 0.0
    %5162 = vmatpush1.msra.mxu0 0.0
    %5163 = vmatprep.subr.mxu0 0.0
    %5164 = vmatpush1.msra.mxu0 0.0
    %5165 = vmatprep.subr.mxu0 0.0
    %5166 = vmatpush1.msra.mxu0 0.0
    %5167 = vmatprep.subr.mxu0 0.0
    %5168 = vmatpush1.msra.mxu0 0.0
    %5169 = vmatprep.subr.mxu0 0.0
    %5170 = vmatpush1.msra.mxu0 0.0
    %5171 = vmatprep.subr.mxu0 0.0
    %5172 = vmatpush1.msra.mxu0 0.0
    %5173 = vmatprep.subr.mxu0 0.0
    %5174 = vmatpush1.msra.mxu0 0.0
    %5175 = vmatprep.subr.mxu0 0.0
    %5176 = vmatpush1.msra.mxu0 0.0
    %5177 = vmatprep.subr.mxu0 0.0
    %5178 = vmatpush1.msra.mxu0 %v5003
    %5179 = vmatprep.subr.mxu0 0.0
    %5180 = vmatpush1.msra.mxu0 %v5002
    %5181 = vmatprep.subr.mxu0 0.0
    %5182 = vmatpush1.msra.mxu0 %v5001
    %5183 = vmatprep.subr.mxu0 0.0
    %5184 = vmatpush1.msra.mxu0 %v5000
    %5185 = vmatprep.subr.mxu0 0.0
    %5186 = vmatpush2.msra.mxu0 0.0
    %5187 = vmatprep.subr.mxu0 0.0
    %5188 = vmatpush2.msra.mxu0 0.0
    %5189 = vmatprep.subr.mxu0 0.0
    %5190 = vmatpush2.msra.mxu0 0.0
    %5191 = vmatprep.subr.mxu0 0.0
    %5192 = vmatpush2.msra.mxu0 0.0
    %5193 = vmatprep.subr.mxu0 0.0
    %5194 = vmatpush2.msra.mxu0 0.0
    %5195 = vmatprep.subr.mxu0 0.0
    %5196 = vmatpush2.msra.mxu0 0.0
    %5197 = vmatprep.subr.mxu0 0.0
    %5198 = vmatpush2.msra.mxu0 0.0
    %5199 = vmatprep.subr.mxu0 0.0
    %5200 = vmatpush2.msra.mxu0 0.0
    %5201 = vmatprep.subr.mxu0 0.0
    %5202 = vmatpush2.msra.mxu0 0.0
    %5203 = vmatprep.subr.mxu0 0.0
    %5204 = vmatpush2.msra.mxu0 0.0
    %5205 = vmatprep.subr.mxu0 0.0
    %5206 = vmatpush2.msra.mxu0 0.0
    %5207 = vmatprep.subr.mxu0 0.0
    %5208 = vmatpush2.msra.mxu0 0.0
    %5209 = vmatprep.subr.mxu0 0.0
    %5210 = vmatpush2.msra.mxu0 0.0
    %5211 = vmatprep.subr.mxu0 0.0
    %5212 = vmatpush2.msra.mxu0 0.0
    %5213 = vmatprep.subr.mxu0 0.0
    %5214 = vmatpush2.msra.mxu0 0.0
    %5215 = vmatprep.subr.mxu0 0.0
    %5216 = vmatpush2.msra.mxu0 0.0
    %5217 = vmatprep.mubr.f32.mxu0 0.0
    %5218 = vmatmul.mubr.f32.gmra.mxu0 %v5151
    %v5219 = vpop.f32.mrf.mxu0
    %v5220 = vadd.f32 %v5147, %v5219
    %v5221 = vpop.f32.mrf.mxu0
    %5222 = vdwg.mxu0
    %5223 = vmatprep.subr.mxu0 0.0
    %5224 = vmatpush1.msra.mxu0 0.0
    %5225 = vmatprep.subr.mxu0 0.0
    %5226 = vmatpush1.msra.mxu0 0.0
    %5227 = vmatprep.subr.mxu0 0.0
    %5228 = vmatpush1.msra.mxu0 0.0
    %5229 = vmatprep.subr.mxu0 0.0
    %5230 = vmatpush1.msra.mxu0 0.0
    %5231 = vmatprep.subr.mxu0 0.0
    %5232 = vmatpush1.msra.mxu0 0.0
    %5233 = vmatprep.subr.mxu0 0.0
    %5234 = vmatpush1.msra.mxu0 0.0
    %5235 = vmatprep.subr.mxu0 0.0
    %5236 = vmatpush1.msra.mxu0 0.0
    %5237 = vmatprep.subr.mxu0 0.0
    %5238 = vmatpush1.msra.mxu0 0.0
    %5239 = vmatprep.subr.mxu0 0.0
    %5240 = vmatpush1.msra.mxu0 0.0
    %5241 = vmatprep.subr.mxu0 0.0
    %5242 = vmatpush1.msra.mxu0 0.0
    %5243 = vmatprep.subr.mxu0 0.0
    %5244 = vmatpush1.msra.mxu0 0.0
    %5245 = vmatprep.subr.mxu0 0.0
    %5246 = vmatpush1.msra.mxu0 0.0
    %5247 = vmatprep.subr.mxu0 0.0
    %5248 = vmatpush1.msra.mxu0 %v5023
    %5249 = vmatprep.subr.mxu0 0.0
    %5250 = vmatpush1.msra.mxu0 %v5022
    %5251 = vmatprep.subr.mxu0 0.0
    %5252 = vmatpush1.msra.mxu0 %v5021
    %5253 = vmatprep.subr.mxu0 0.0
    %5254 = vmatpush1.msra.mxu0 %v5020
    %5255 = vmatprep.subr.mxu0 0.0
    %5256 = vmatpush2.msra.mxu0 0.0
    %5257 = vmatprep.subr.mxu0 0.0
    %5258 = vmatpush2.msra.mxu0 0.0
    %5259 = vmatprep.subr.mxu0 0.0
    %5260 = vmatpush2.msra.mxu0 0.0
    %5261 = vmatprep.subr.mxu0 0.0
    %5262 = vmatpush2.msra.mxu0 0.0
    %5263 = vmatprep.subr.mxu0 0.0
    %5264 = vmatpush2.msra.mxu0 0.0
    %5265 = vmatprep.subr.mxu0 0.0
    %5266 = vmatpush2.msra.mxu0 0.0
    %5267 = vmatprep.subr.mxu0 0.0
    %5268 = vmatpush2.msra.mxu0 0.0
    %5269 = vmatprep.subr.mxu0 0.0
    %5270 = vmatpush2.msra.mxu0 0.0
    %5271 = vmatprep.subr.mxu0 0.0
    %5272 = vmatpush2.msra.mxu0 0.0
    %5273 = vmatprep.subr.mxu0 0.0
    %5274 = vmatpush2.msra.mxu0 0.0
    %5275 = vmatprep.subr.mxu0 0.0
    %5276 = vmatpush2.msra.mxu0 0.0
    %5277 = vmatprep.subr.mxu0 0.0
    %5278 = vmatpush2.msra.mxu0 0.0
    %5279 = vmatprep.subr.mxu0 0.0
    %5280 = vmatpush2.msra.mxu0 0.0
    %5281 = vmatprep.subr.mxu0 0.0
    %5282 = vmatpush2.msra.mxu0 0.0
    %5283 = vmatprep.subr.mxu0 0.0
    %5284 = vmatpush2.msra.mxu0 0.0
    %5285 = vmatprep.subr.mxu0 0.0
    %5286 = vmatpush2.msra.mxu0 0.0
    %5287 = vmatprep.mubr.f32.mxu0 0.0
    %5288 = vmatmul.mubr.f32.gmra.mxu0 %v5151
    %v5289 = vpop.f32.mrf.mxu0
    %v5290 = vadd.f32 0.0, %v5289
    %v5291 = vpop.f32.mrf.mxu0
    %5292 = vdwg.mxu0
    %v5293 = vadd.f32 %v5220, %v5290
    %v5294 = vlaneseq
    %v5295 = vshrl.u32 %v5294, 7
    %v5296 = vsub.s32 0, %v5295
    %v5297 = vrot.slane %v5024, %v5296
    %v5298 = vadd.f32 %v5293, %v5297
    %v5299 = vxor.u32 %v5298, 2147483648
    %v5300 = vmul.f32 %v5299, 1.442695
    %v5301 = vpow.pop %v5300
    %v5302 = vadd.f32 %v5301, 1.0
    %v5303 = vrcp.pop %v5302
    %v5304 = vmul.f32 1.0, %v5303
    %v5305 = vtanh.pop %v5298
    %v5306 = vmul.f32 %v5304, 0.0
    %5308 = vrot.lane.b32.xlu0 %v5305, 64
    %v5309 = vpop.permute.xlu0 %5308
    %v5311 = vmul.f32 %v5304, %v5309
    %5313 = vrot.lane.b32.xlu0 %v5311, 32
    %v5314 = vpop.permute.xlu0 %5313
    %v5316 = vadd.f32 %v5306, %v5314
    %v5317 = vtanh.pop %v5316
    %5319 = vrot.lane.b32.xlu0 %v5317, 64
    %v5320 = vpop.permute.xlu0 %5319
    %v5322 = vmul.f32 %v5304, %v5320
    %5323 = vmatprep.subr.mxu0 0.0
    %5324 = vmatpush1.msra.mxu0 0.0
    %5325 = vmatprep.subr.mxu0 0.0
    %5326 = vmatpush1.msra.mxu0 0.0
    %5327 = vmatprep.subr.mxu0 0.0
    %5328 = vmatpush1.msra.mxu0 0.0
    %5329 = vmatprep.subr.mxu0 0.0
    %5330 = vmatpush1.msra.mxu0 0.0
    %5331 = vmatprep.subr.mxu0 0.0
    %5332 = vmatpush1.msra.mxu0 0.0
    %5333 = vmatprep.subr.mxu0 0.0
    %5334 = vmatpush1.msra.mxu0 0.0
    %5335 = vmatprep.subr.mxu0 0.0
    %5336 = vmatpush1.msra.mxu0 0.0
    %5337 = vmatprep.subr.mxu0 0.0
    %5338 = vmatpush1.msra.mxu0 0.0
    %5339 = vmatprep.subr.mxu0 0.0
    %5340 = vmatpush1.msra.mxu0 0.0
    %5341 = vmatprep.subr.mxu0 0.0
    %5342 = vmatpush1.msra.mxu0 0.0
    %5343 = vmatprep.subr.mxu0 0.0
    %5344 = vmatpush1.msra.mxu0 0.0
    %5345 = vmatprep.subr.mxu0 0.0
    %5346 = vmatpush1.msra.mxu0 0.0
    %5347 = vmatprep.subr.mxu0 0.0
    %5348 = vmatpush1.msra.mxu0 %v5032
    %5349 = vmatprep.subr.mxu0 0.0
    %5350 = vmatpush1.msra.mxu0 %v5031
    %5351 = vmatprep.subr.mxu0 0.0
    %5352 = vmatpush1.msra.mxu0 %v5030
    %5353 = vmatprep.subr.mxu0 0.0
    %5354 = vmatpush1.msra.mxu0 %v5029
    %5355 = vmatprep.subr.mxu0 0.0
    %5356 = vmatpush2.msra.mxu0 0.0
    %5357 = vmatprep.subr.mxu0 0.0
    %5358 = vmatpush2.msra.mxu0 0.0
    %5359 = vmatprep.subr.mxu0 0.0
    %5360 = vmatpush2.msra.mxu0 0.0
    %5361 = vmatprep.subr.mxu0 0.0
    %5362 = vmatpush2.msra.mxu0 0.0
    %5363 = vmatprep.subr.mxu0 0.0
    %5364 = vmatpush2.msra.mxu0 0.0
    %5365 = vmatprep.subr.mxu0 0.0
    %5366 = vmatpush2.msra.mxu0 0.0
    %5367 = vmatprep.subr.mxu0 0.0
    %5368 = vmatpush2.msra.mxu0 0.0
    %5369 = vmatprep.subr.mxu0 0.0
    %5370 = vmatpush2.msra.mxu0 0.0
    %5371 = vmatprep.subr.mxu0 0.0
    %5372 = vmatpush2.msra.mxu0 0.0
    %5373 = vmatprep.subr.mxu0 0.0
    %5374 = vmatpush2.msra.mxu0 0.0
    %5375 = vmatprep.subr.mxu0 0.0
    %5376 = vmatpush2.msra.mxu0 0.0
    %5377 = vmatprep.subr.mxu0 0.0
    %5378 = vmatpush2.msra.mxu0 0.0
    %5379 = vmatprep.subr.mxu0 0.0
    %5380 = vmatpush2.msra.mxu0 0.0
    %5381 = vmatprep.subr.mxu0 0.0
    %5382 = vmatpush2.msra.mxu0 0.0
    %5383 = vmatprep.subr.mxu0 0.0
    %5384 = vmatpush2.msra.mxu0 0.0
    %5385 = vmatprep.subr.mxu0 0.0
    %5386 = vmatpush2.msra.mxu0 0.0
    %5387 = vmatprep.mubr.f32.mxu0 0.0
    %5388 = vmatmul.mubr.f32.gmra.mxu0 %v5151
    %v5389 = vpop.f32.mrf.mxu0
    %v5390 = vadd.f32 0.0, %v5389
    %v5391 = vpop.f32.mrf.mxu0
    %5392 = vdwg.mxu0
    %5394 = vrot.lane.b32.xlu0 %v5322, 32
    %v5395 = vpop.permute.xlu0 %5394
    %v5396 = vsel %vm1281, %v5395, 0
    %5398 = vmatprep.subr.mxu0 0.0
    %5399 = vmatpush1.msra.mxu0 0.0
    %5400 = vmatprep.subr.mxu0 0.0
    %5401 = vmatpush1.msra.mxu0 0.0
    %5402 = vmatprep.subr.mxu0 0.0
    %5403 = vmatpush1.msra.mxu0 0.0
    %5404 = vmatprep.subr.mxu0 0.0
    %5405 = vmatpush1.msra.mxu0 0.0
    %5406 = vmatprep.subr.mxu0 0.0
    %5407 = vmatpush1.msra.mxu0 0.0
    %5408 = vmatprep.subr.mxu0 0.0
    %5409 = vmatpush1.msra.mxu0 0.0
    %5410 = vmatprep.subr.mxu0 0.0
    %5411 = vmatpush1.msra.mxu0 0.0
    %5412 = vmatprep.subr.mxu0 0.0
    %5413 = vmatpush1.msra.mxu0 0.0
    %5414 = vmatprep.subr.mxu0 0.0
    %5415 = vmatpush1.msra.mxu0 0.0
    %5416 = vmatprep.subr.mxu0 0.0
    %5417 = vmatpush1.msra.mxu0 0.0
    %5418 = vmatprep.subr.mxu0 0.0
    %5419 = vmatpush1.msra.mxu0 0.0
    %5420 = vmatprep.subr.mxu0 0.0
    %5421 = vmatpush1.msra.mxu0 0.0
    %5422 = vmatprep.subr.mxu0 0.0
    %5423 = vmatpush1.msra.mxu0 %v5028
    %5424 = vmatprep.subr.mxu0 0.0
    %5425 = vmatpush1.msra.mxu0 %v5027
    %5426 = vmatprep.subr.mxu0 0.0
    %5427 = vmatpush1.msra.mxu0 %v5026
    %5428 = vmatprep.subr.mxu0 0.0
    %5429 = vmatpush1.msra.mxu0 %v5025
    %5430 = vmatprep.subr.mxu0 0.0
    %5431 = vmatpush2.msra.mxu0 0.0
    %5432 = vmatprep.subr.mxu0 0.0
    %5433 = vmatpush2.msra.mxu0 0.0
    %5434 = vmatprep.subr.mxu0 0.0
    %5435 = vmatpush2.msra.mxu0 0.0
    %5436 = vmatprep.subr.mxu0 0.0
    %5437 = vmatpush2.msra.mxu0 0.0
    %5438 = vmatprep.subr.mxu0 0.0
    %5439 = vmatpush2.msra.mxu0 0.0
    %5440 = vmatprep.subr.mxu0 0.0
    %5441 = vmatpush2.msra.mxu0 0.0
    %5442 = vmatprep.subr.mxu0 0.0
    %5443 = vmatpush2.msra.mxu0 0.0
    %5444 = vmatprep.subr.mxu0 0.0
    %5445 = vmatpush2.msra.mxu0 0.0
    %5446 = vmatprep.subr.mxu0 0.0
    %5447 = vmatpush2.msra.mxu0 0.0
    %5448 = vmatprep.subr.mxu0 0.0
    %5449 = vmatpush2.msra.mxu0 0.0
    %5450 = vmatprep.subr.mxu0 0.0
    %5451 = vmatpush2.msra.mxu0 0.0
    %5452 = vmatprep.subr.mxu0 0.0
    %5453 = vmatpush2.msra.mxu0 0.0
    %5454 = vmatprep.subr.mxu0 0.0
    %5455 = vmatpush2.msra.mxu0 0.0
    %5456 = vmatprep.subr.mxu0 0.0
    %5457 = vmatpush2.msra.mxu0 0.0
    %5458 = vmatprep.subr.mxu0 0.0
    %5459 = vmatpush2.msra.mxu0 0.0
    %5460 = vmatprep.subr.mxu0 0.0
    %5461 = vmatpush2.msra.mxu0 0.0
    %5462 = vmatprep.mubr.f32.mxu0 0.0
    %5463 = vmatmul.mubr.f32.gmra.mxu0 %v5396
    %v5464 = vpop.f32.mrf.mxu0
    %v5465 = vadd.f32 %v5390, %v5464
    %v5466 = vpop.f32.mrf.mxu0
    %5467 = vdwg.mxu0
    %v5468 = vlaneseq
    %v5469 = vshrl.u32 %v5468, 7
    %v5470 = vsub.s32 0, %v5469
    %v5471 = vrot.slane %v5033, %v5470
    %v5472 = vadd.f32 %v5465, %v5471
    %v5473 = vxor.u32 %v5472, 2147483648
    %v5474 = vmul.f32 %v5473, 1.442695
    %v5475 = vpow.pop %v5474
    %v5476 = vadd.f32 %v5475, 1.0
    %v5477 = vrcp.pop %v5476
    %v5478 = vmul.f32 1.0, %v5477
    %v5479 = vtanh.pop %v5472
    %v5480 = vmul.f32 %v5478, 0.0
    %5482 = vrot.lane.b32.xlu0 %v5479, 64
    %v5483 = vpop.permute.xlu0 %5482
    %v5485 = vmul.f32 %v5478, %v5483
    %5487 = vrot.lane.b32.xlu0 %v5485, 32
    %v5488 = vpop.permute.xlu0 %5487
    %v5490 = vadd.f32 %v5480, %v5488
    %v5491 = vtanh.pop %v5490
    %5493 = vrot.lane.b32.xlu0 %v5491, 64
    %v5494 = vpop.permute.xlu0 %5493
    %v5496 = vmul.f32 %v5478, %v5494
    %5498 = vrot.lane.b32.xlu0 %v5496, 32
    %v5499 = vpop.permute.xlu0 %5498
    %vm5501 = vcmask 64512
    %v5503 = vsel %vm5501, %v157, 0
    %v5506 = vsel %vm5501, %v158, 0
    %v5509 = vsel %vm5501, %v159, 0
    %v5512 = vsel %vm5501, %v160, 0
    %v5515 = vsel %vm5501, %v161, 0
    %v5518 = vsel %vm5501, %v162, 0
    %v5521 = vsel %vm5501, %v163, 0
    %v5524 = vsel %vm5501, %v164, 0
    %5526 = vmatprep.subr.mxu0 0.0
    %5527 = vmatpush1.msra.mxu0 0.0
    %5528 = vmatprep.subr.mxu0 0.0
    %5529 = vmatpush1.msra.mxu0 0.0
    %5530 = vmatprep.subr.mxu0 0.0
    %5531 = vmatpush1.msra.mxu0 0.0
    %5532 = vmatprep.subr.mxu0 0.0
    %5533 = vmatpush1.msra.mxu0 0.0
    %5534 = vmatprep.subr.mxu0 0.0
    %5535 = vmatpush1.msra.mxu0 0.0
    %5536 = vmatprep.subr.mxu0 0.0
    %5537 = vmatpush1.msra.mxu0 0.0
    %5538 = vmatprep.subr.mxu0 0.0
    %5539 = vmatpush1.msra.mxu0 0.0
    %5540 = vmatprep.subr.mxu0 0.0
    %5541 = vmatpush1.msra.mxu0 0.0
    %5542 = vmatprep.subr.mxu0 0.0
    %5543 = vmatpush1.msra.mxu0 0.0
    %5544 = vmatprep.subr.mxu0 0.0
    %5545 = vmatpush1.msra.mxu0 0.0
    %5546 = vmatprep.subr.mxu0 0.0
    %5547 = vmatpush1.msra.mxu0 0.0
    %5548 = vmatprep.subr.mxu0 0.0
    %5549 = vmatpush1.msra.mxu0 0.0
    %5550 = vmatprep.subr.mxu0 0.0
    %5551 = vmatpush1.msra.mxu0 0.0
    %5552 = vmatprep.subr.mxu0 0.0
    %5553 = vmatpush1.msra.mxu0 0.0
    %5554 = vmatprep.subr.mxu0 0.0
    %5555 = vmatpush1.msra.mxu0 0.0
    %5556 = vmatprep.subr.mxu0 0.0
    %5557 = vmatpush1.msra.mxu0 %v5499
    %5558 = vmatprep.subr.mxu0 0.0
    %5559 = vmatpush2.msra.mxu0 0.0
    %5560 = vmatprep.subr.mxu0 0.0
    %5561 = vmatpush2.msra.mxu0 0.0
    %5562 = vmatprep.subr.mxu0 0.0
    %5563 = vmatpush2.msra.mxu0 0.0
    %5564 = vmatprep.subr.mxu0 0.0
    %5565 = vmatpush2.msra.mxu0 0.0
    %5566 = vmatprep.subr.mxu0 0.0
    %5567 = vmatpush2.msra.mxu0 0.0
    %5568 = vmatprep.subr.mxu0 0.0
    %5569 = vmatpush2.msra.mxu0 0.0
    %5570 = vmatprep.subr.mxu0 0.0
    %5571 = vmatpush2.msra.mxu0 0.0
    %5572 = vmatprep.subr.mxu0 0.0
    %5573 = vmatpush2.msra.mxu0 0.0
    %5574 = vmatprep.subr.mxu0 0.0
    %5575 = vmatpush2.msra.mxu0 0.0
    %5576 = vmatprep.subr.mxu0 0.0
    %5577 = vmatpush2.msra.mxu0 0.0
    %5578 = vmatprep.subr.mxu0 0.0
    %5579 = vmatpush2.msra.mxu0 0.0
    %5580 = vmatprep.subr.mxu0 0.0
    %5581 = vmatpush2.msra.mxu0 0.0
    %5582 = vmatprep.subr.mxu0 0.0
    %5583 = vmatpush2.msra.mxu0 0.0
    %5584 = vmatprep.subr.mxu0 0.0
    %5585 = vmatpush2.msra.mxu0 0.0
    %5586 = vmatprep.subr.mxu0 0.0
    %5587 = vmatpush2.msra.mxu0 0.0
    %5588 = vmatprep.subr.mxu0 0.0
    %5589 = vmatpush2.msra.mxu0 0.0
    %5590 = vmatprep.mubr.f32.mxu0 0.0
    %5591 = vmatmul.mubr.f32.gmra.mxu0 %v5503
    %v5592 = vpop.f32.mrf.mxu0
    %v5593 = vadd.f32 0.0, %v5592
    %v5594 = vpop.f32.mrf.mxu0
    %5595 = vmatprep.mubr.f32.mxu0 0.0
    %5596 = vmatmul.mubr.f32.gmra.mxu0 %v5506
    %v5597 = vpop.f32.mrf.mxu0
    %v5598 = vadd.f32 0.0, %v5597
    %v5599 = vpop.f32.mrf.mxu0
    %5600 = vmatprep.mubr.f32.mxu0 0.0
    %5601 = vmatmul.mubr.f32.gmra.mxu0 %v5509
    %v5602 = vpop.f32.mrf.mxu0
    %v5603 = vadd.f32 0.0, %v5602
    %v5604 = vpop.f32.mrf.mxu0
    %5605 = vmatprep.mubr.f32.mxu0 0.0
    %5606 = vmatmul.mubr.f32.gmra.mxu0 %v5512
    %v5607 = vpop.f32.mrf.mxu0
    %v5608 = vadd.f32 0.0, %v5607
    %v5609 = vpop.f32.mrf.mxu0
    %5610 = vmatprep.mubr.f32.mxu0 0.0
    %5611 = vmatmul.mubr.f32.gmra.mxu0 %v5515
    %v5612 = vpop.f32.mrf.mxu0
    %v5613 = vadd.f32 0.0, %v5612
    %v5614 = vpop.f32.mrf.mxu0
    %5615 = vmatprep.mubr.f32.mxu0 0.0
    %5616 = vmatmul.mubr.f32.gmra.mxu0 %v5518
    %v5617 = vpop.f32.mrf.mxu0
    %v5618 = vadd.f32 0.0, %v5617
    %v5619 = vpop.f32.mrf.mxu0
    %5620 = vmatprep.mubr.f32.mxu0 0.0
    %5621 = vmatmul.mubr.f32.gmra.mxu0 %v5521
    %v5622 = vpop.f32.mrf.mxu0
    %v5623 = vadd.f32 0.0, %v5622
    %v5624 = vpop.f32.mrf.mxu0
    %5625 = vmatprep.mubr.f32.mxu0 0.0
    %5626 = vmatmul.mubr.f32.gmra.mxu0 %v5524
    %v5627 = vpop.f32.mrf.mxu0
    %v5628 = vadd.f32 0.0, %v5627
    %v5629 = vpop.f32.mrf.mxu0
    %5630 = vdwg.mxu0
    %v5631 = vmul.f32 %v4992, %v5593
    %v5632 = vmul.f32 %v4993, %v5598
    %v5633 = vmul.f32 %v4994, %v5603
    %v5634 = vmul.f32 %v4995, %v5608
    %v5635 = vmul.f32 %v4996, %v5613
    %v5636 = vmul.f32 %v4997, %v5618
    %v5637 = vmul.f32 %v4998, %v5623
    %v5638 = vmul.f32 %v4999, %v5628
    %v5639 = vsel %vm1281, %v5631, 0.0
    %5640 = vadd.xlane.f32.xlu0 %v5639
    %v5641 = vpop.xlane.xlu0 %5640
    %v5642 = vsel %vm1281, %v5632, 0.0
    %5643 = vadd.xlane.f32.xlu0 %v5642
    %v5644 = vpop.xlane.xlu0 %5643
    %v5645 = vsel %vm1281, %v5633, 0.0
    %5646 = vadd.xlane.f32.xlu0 %v5645
    %v5647 = vpop.xlane.xlu0 %5646
    %v5648 = vsel %vm1281, %v5634, 0.0
    %5649 = vadd.xlane.f32.xlu0 %v5648
    %v5650 = vpop.xlane.xlu0 %5649
    %v5651 = vsel %vm1281, %v5635, 0.0
    %5652 = vadd.xlane.f32.xlu0 %v5651
    %v5653 = vpop.xlane.xlu0 %5652
    %v5654 = vsel %vm1281, %v5636, 0.0
    %5655 = vadd.xlane.f32.xlu0 %v5654
    %v5656 = vpop.xlane.xlu0 %5655
    %v5657 = vsel %vm1281, %v5637, 0.0
    %5658 = vadd.xlane.f32.xlu0 %v5657
    %v5659 = vpop.xlane.xlu0 %5658
    %v5660 = vsel %vm1281, %v5638, 0.0
    %5661 = vadd.xlane.f32.xlu0 %v5660
    %v5662 = vpop.xlane.xlu0 %5661
    %v5663 = vsel %vm5072, %v5641, -1e+30
    %v5664 = vsel %vm5073, %v5644, -1e+30
    %v5665 = vsel %vm5074, %v5647, -1e+30
    %v5666 = vsel %vm5075, %v5650, -1e+30
    %v5667 = vsel %vm5076, %v5653, -1e+30
    %v5668 = vsel %vm5077, %v5656, -1e+30
    %v5669 = vsel %vm5078, %v5659, -1e+30
    %v5670 = vsel %vm5079, %v5662, -1e+30
    %v5671 = vsel %vm5501, %v5663, -inf
    %v5672 = vsel %vm5501, %v5664, -inf
    %v5673 = vsel %vm5501, %v5665, -inf
    %v5674 = vsel %vm5501, %v5666, -inf
    %v5675 = vsel %vm5501, %v5667, -inf
    %v5676 = vmax.f32 %v5671, %v5675
    %v5677 = vsel %vm5501, %v5668, -inf
    %v5678 = vmax.f32 %v5672, %v5677
    %v5679 = vsel %vm5501, %v5669, -inf
    %v5680 = vmax.f32 %v5673, %v5679
    %v5681 = vsel %vm5501, %v5670, -inf
    %v5682 = vmax.f32 %v5674, %v5681
    %v5683 = vmax.f32 %v5676, %v5678
    %v5684 = vmax.f32 %v5680, %v5682
    %v5685 = vmax.f32 %v5683, %v5684
    %v5686 = vrot.slane %v5685, 4
    %v5687 = vmax.f32 %v5685, %v5686
    %v5688 = vrot.slane %v5687, 2
    %v5689 = vmax.f32 %v5687, %v5688
    %v5690 = vrot.slane %v5689, 1
    %v5691 = vmax.f32 %v5689, %v5690
    %v5692 = vmul.f32 %v157, %v5691
    %v5693 = vmul.f32 %v158, %v5691
    %v5694 = vmul.f32 %v159, %v5691
    %v5695 = vmul.f32 %v160, %v5691
    %v5696 = vmul.f32 %v161, %v5691
    %v5697 = vmul.f32 %v162, %v5691
    %v5698 = vmul.f32 %v163, %v5691
    %v5699 = vmul.f32 %v164, %v5691
    %v5700 = vsel %vm5501, %v5692, 0.0
    %5701 = vadd.xlane.f32.xlu0 %v5700
    %v5702 = vpop.xlane.xlu0 %5701
    %v5703 = vsel %vm5501, %v5693, 0.0
    %5704 = vadd.xlane.f32.xlu0 %v5703
    %v5705 = vpop.xlane.xlu0 %5704
    %v5706 = vsel %vm5501, %v5694, 0.0
    %5707 = vadd.xlane.f32.xlu0 %v5706
    %v5708 = vpop.xlane.xlu0 %5707
    %v5709 = vsel %vm5501, %v5695, 0.0
    %5710 = vadd.xlane.f32.xlu0 %v5709
    %v5711 = vpop.xlane.xlu0 %5710
    %v5712 = vsel %vm5501, %v5696, 0.0
    %5713 = vadd.xlane.f32.xlu0 %v5712
    %v5714 = vpop.xlane.xlu0 %5713
    %v5715 = vsel %vm5501, %v5697, 0.0
    %5716 = vadd.xlane.f32.xlu0 %v5715
    %v5717 = vpop.xlane.xlu0 %5716
    %v5718 = vsel %vm5501, %v5698, 0.0
    %5719 = vadd.xlane.f32.xlu0 %v5718
    %v5720 = vpop.xlane.xlu0 %5719
    %v5721 = vsel %vm5501, %v5699, 0.0
    %5722 = vadd.xlane.f32.xlu0 %v5721
    %v5723 = vpop.xlane.xlu0 %5722
    %v5724 = vsub.f32 %v5641, %v5702
    %v5725 = vsub.f32 %v5644, %v5705
    %v5726 = vsub.f32 %v5647, %v5708
    %v5727 = vsub.f32 %v5650, %v5711
    %v5728 = vsub.f32 %v5653, %v5714
    %v5729 = vsub.f32 %v5656, %v5717
    %v5730 = vsub.f32 %v5659, %v5720
    %v5731 = vsub.f32 %v5662, %v5723
    %v5732 = vmul.f32 %v5724, 1.442695
    %v5733 = vpow.pop %v5732
    %v5734 = vmul.f32 %v5725, 1.442695
    %v5735 = vpow.pop %v5734
    %v5736 = vmul.f32 %v5726, 1.442695
    %v5737 = vpow.pop %v5736
    %v5738 = vmul.f32 %v5727, 1.442695
    %v5739 = vpow.pop %v5738
    %v5740 = vmul.f32 %v5728, 1.442695
    %v5741 = vpow.pop %v5740
    %v5742 = vmul.f32 %v5729, 1.442695
    %v5743 = vpow.pop %v5742
    %v5744 = vmul.f32 %v5730, 1.442695
    %v5745 = vpow.pop %v5744
    %v5746 = vmul.f32 %v5731, 1.442695
    %v5747 = vpow.pop %v5746
    %v5749 = vsel %vm1035, %v156, 0
    %5751 = vmatprep.subr.mxu0 0.0
    %5752 = vmatpush1.msra.mxu0 0.0
    %5753 = vmatprep.subr.mxu0 0.0
    %5754 = vmatpush1.msra.mxu0 0.0
    %5755 = vmatprep.subr.mxu0 0.0
    %5756 = vmatpush1.msra.mxu0 0.0
    %5757 = vmatprep.subr.mxu0 0.0
    %5758 = vmatpush1.msra.mxu0 0.0
    %5759 = vmatprep.subr.mxu0 0.0
    %5760 = vmatpush1.msra.mxu0 0.0
    %5761 = vmatprep.subr.mxu0 0.0
    %5762 = vmatpush1.msra.mxu0 0.0
    %5763 = vmatprep.subr.mxu0 0.0
    %5764 = vmatpush1.msra.mxu0 0.0
    %5765 = vmatprep.subr.mxu0 0.0
    %5766 = vmatpush1.msra.mxu0 0.0
    %5767 = vmatprep.subr.mxu0 0.0
    %5768 = vmatpush1.msra.mxu0 %v5747
    %5769 = vmatprep.subr.mxu0 0.0
    %5770 = vmatpush1.msra.mxu0 %v5745
    %5771 = vmatprep.subr.mxu0 0.0
    %5772 = vmatpush1.msra.mxu0 %v5743
    %5773 = vmatprep.subr.mxu0 0.0
    %5774 = vmatpush1.msra.mxu0 %v5741
    %5775 = vmatprep.subr.mxu0 0.0
    %5776 = vmatpush1.msra.mxu0 %v5739
    %5777 = vmatprep.subr.mxu0 0.0
    %5778 = vmatpush1.msra.mxu0 %v5737
    %5779 = vmatprep.subr.mxu0 0.0
    %5780 = vmatpush1.msra.mxu0 %v5735
    %5781 = vmatprep.subr.mxu0 0.0
    %5782 = vmatpush1.msra.mxu0 %v5733
    %5783 = vmatprep.subr.mxu0 0.0
    %5784 = vmatpush2.msra.mxu0 0.0
    %5785 = vmatprep.subr.mxu0 0.0
    %5786 = vmatpush2.msra.mxu0 0.0
    %5787 = vmatprep.subr.mxu0 0.0
    %5788 = vmatpush2.msra.mxu0 0.0
    %5789 = vmatprep.subr.mxu0 0.0
    %5790 = vmatpush2.msra.mxu0 0.0
    %5791 = vmatprep.subr.mxu0 0.0
    %5792 = vmatpush2.msra.mxu0 0.0
    %5793 = vmatprep.subr.mxu0 0.0
    %5794 = vmatpush2.msra.mxu0 0.0
    %5795 = vmatprep.subr.mxu0 0.0
    %5796 = vmatpush2.msra.mxu0 0.0
    %5797 = vmatprep.subr.mxu0 0.0
    %5798 = vmatpush2.msra.mxu0 0.0
    %5799 = vmatprep.subr.mxu0 0.0
    %5800 = vmatpush2.msra.mxu0 0.0
    %5801 = vmatprep.subr.mxu0 0.0
    %5802 = vmatpush2.msra.mxu0 0.0
    %5803 = vmatprep.subr.mxu0 0.0
    %5804 = vmatpush2.msra.mxu0 0.0
    %5805 = vmatprep.subr.mxu0 0.0
    %5806 = vmatpush2.msra.mxu0 0.0
    %5807 = vmatprep.subr.mxu0 0.0
    %5808 = vmatpush2.msra.mxu0 0.0
    %5809 = vmatprep.subr.mxu0 0.0
    %5810 = vmatpush2.msra.mxu0 0.0
    %5811 = vmatprep.subr.mxu0 0.0
    %5812 = vmatpush2.msra.mxu0 0.0
    %5813 = vmatprep.subr.mxu0 0.0
    %5814 = vmatpush2.msra.mxu0 0.0
    %5815 = vmatprep.mubr.f32.mxu0 0.0
    %5816 = vmatmul.mubr.f32.gmra.mxu0 %v5749
    %v5817 = vpop.f32.mrf.mxu0
    %v5818 = vadd.f32 0.0, %v5817
    %v5819 = vpop.f32.mrf.mxu0
    %5820 = vdwg.mxu0
    %5821 = vmatprep.subr.mxu0 0.0
    %5822 = vmatpush1.msra.mxu0 0.0
    %5823 = vmatprep.subr.mxu0 0.0
    %5824 = vmatpush1.msra.mxu0 0.0
    %5825 = vmatprep.subr.mxu0 0.0
    %5826 = vmatpush1.msra.mxu0 0.0
    %5827 = vmatprep.subr.mxu0 0.0
    %5828 = vmatpush1.msra.mxu0 0.0
    %5829 = vmatprep.subr.mxu0 0.0
    %5830 = vmatpush1.msra.mxu0 0.0
    %5831 = vmatprep.subr.mxu0 0.0
    %5832 = vmatpush1.msra.mxu0 0.0
    %5833 = vmatprep.subr.mxu0 0.0
    %5834 = vmatpush1.msra.mxu0 0.0
    %5835 = vmatprep.subr.mxu0 0.0
    %5836 = vmatpush1.msra.mxu0 0.0
    %5837 = vmatprep.subr.mxu0 0.0
    %5838 = vmatpush1.msra.mxu0 0.0
    %5839 = vmatprep.subr.mxu0 0.0
    %5840 = vmatpush1.msra.mxu0 0.0
    %5841 = vmatprep.subr.mxu0 0.0
    %5842 = vmatpush1.msra.mxu0 0.0
    %5843 = vmatprep.subr.mxu0 0.0
    %5844 = vmatpush1.msra.mxu0 0.0
    %5845 = vmatprep.subr.mxu0 0.0
    %5846 = vmatpush1.msra.mxu0 0.0
    %5847 = vmatprep.subr.mxu0 0.0
    %5848 = vmatpush1.msra.mxu0 0.0
    %5849 = vmatprep.subr.mxu0 0.0
    %5850 = vmatpush1.msra.mxu0 0.0
    %5851 = vmatprep.subr.mxu0 0.0
    %5852 = vmatpush1.msra.mxu0 %v5818
    %5853 = vmatprep.subr.mxu0 0.0
    %5854 = vmatpush2.msra.mxu0 0.0
    %5855 = vmatprep.subr.mxu0 0.0
    %5856 = vmatpush2.msra.mxu0 0.0
    %5857 = vmatprep.subr.mxu0 0.0
    %5858 = vmatpush2.msra.mxu0 0.0
    %5859 = vmatprep.subr.mxu0 0.0
    %5860 = vmatpush2.msra.mxu0 0.0
    %5861 = vmatprep.subr.mxu0 0.0
    %5862 = vmatpush2.msra.mxu0 0.0
    %5863 = vmatprep.subr.mxu0 0.0
    %5864 = vmatpush2.msra.mxu0 0.0
    %5865 = vmatprep.subr.mxu0 0.0
    %5866 = vmatpush2.msra.mxu0 0.0
    %5867 = vmatprep.subr.mxu0 0.0
    %5868 = vmatpush2.msra.mxu0 0.0
    %5869 = vmatprep.subr.mxu0 0.0
    %5870 = vmatpush2.msra.mxu0 0.0
    %5871 = vmatprep.subr.mxu0 0.0
    %5872 = vmatpush2.msra.mxu0 0.0
    %5873 = vmatprep.subr.mxu0 0.0
    %5874 = vmatpush2.msra.mxu0 0.0
    %5875 = vmatprep.subr.mxu0 0.0
    %5876 = vmatpush2.msra.mxu0 0.0
    %5877 = vmatprep.subr.mxu0 0.0
    %5878 = vmatpush2.msra.mxu0 0.0
    %5879 = vmatprep.subr.mxu0 0.0
    %5880 = vmatpush2.msra.mxu0 0.0
    %5881 = vmatprep.subr.mxu0 0.0
    %5882 = vmatpush2.msra.mxu0 0.0
    %5883 = vmatprep.subr.mxu0 0.0
    %5884 = vmatpush2.msra.mxu0 0.0
    %5885 = vmatprep.mubr.f32.mxu0 0.0
    %5886 = vmatmul.mubr.f32.gmra.mxu0 %v5503
    %v5887 = vpop.f32.mrf.mxu0
    %v5888 = vadd.f32 1e-16, %v5887
    %v5889 = vpop.f32.mrf.mxu0
    %5890 = vmatprep.mubr.f32.mxu0 0.0
    %5891 = vmatmul.mubr.f32.gmra.mxu0 %v5506
    %v5892 = vpop.f32.mrf.mxu0
    %v5893 = vadd.f32 1e-16, %v5892
    %v5894 = vpop.f32.mrf.mxu0
    %5895 = vmatprep.mubr.f32.mxu0 0.0
    %5896 = vmatmul.mubr.f32.gmra.mxu0 %v5509
    %v5897 = vpop.f32.mrf.mxu0
    %v5898 = vadd.f32 1e-16, %v5897
    %v5899 = vpop.f32.mrf.mxu0
    %5900 = vmatprep.mubr.f32.mxu0 0.0
    %5901 = vmatmul.mubr.f32.gmra.mxu0 %v5512
    %v5902 = vpop.f32.mrf.mxu0
    %v5903 = vadd.f32 1e-16, %v5902
    %v5904 = vpop.f32.mrf.mxu0
    %5905 = vmatprep.mubr.f32.mxu0 0.0
    %5906 = vmatmul.mubr.f32.gmra.mxu0 %v5515
    %v5907 = vpop.f32.mrf.mxu0
    %v5908 = vadd.f32 1e-16, %v5907
    %v5909 = vpop.f32.mrf.mxu0
    %5910 = vmatprep.mubr.f32.mxu0 0.0
    %5911 = vmatmul.mubr.f32.gmra.mxu0 %v5518
    %v5912 = vpop.f32.mrf.mxu0
    %v5913 = vadd.f32 1e-16, %v5912
    %v5914 = vpop.f32.mrf.mxu0
    %5915 = vmatprep.mubr.f32.mxu0 0.0
    %5916 = vmatmul.mubr.f32.gmra.mxu0 %v5521
    %v5917 = vpop.f32.mrf.mxu0
    %v5918 = vadd.f32 1e-16, %v5917
    %v5919 = vpop.f32.mrf.mxu0
    %5920 = vmatprep.mubr.f32.mxu0 0.0
    %5921 = vmatmul.mubr.f32.gmra.mxu0 %v5524
    %v5922 = vpop.f32.mrf.mxu0
    %v5923 = vadd.f32 1e-16, %v5922
    %v5924 = vpop.f32.mrf.mxu0
    %5925 = vdwg.mxu0
    %v5926 = vrcp.pop %v5888
    %v5927 = vrcp.pop %v5893
    %v5928 = vrcp.pop %v5898
    %v5929 = vrcp.pop %v5903
    %v5930 = vrcp.pop %v5908
    %v5931 = vrcp.pop %v5913
    %v5932 = vrcp.pop %v5918
    %v5933 = vrcp.pop %v5923
    %v5934 = vmul.f32 %v5733, %v5926
    %v5935 = vmul.f32 %v5735, %v5927
    %v5936 = vmul.f32 %v5737, %v5928
    %v5937 = vmul.f32 %v5739, %v5929
    %v5938 = vmul.f32 %v5741, %v5930
    %v5939 = vmul.f32 %v5743, %v5931
    %v5940 = vmul.f32 %v5745, %v5932
    %v5941 = vmul.f32 %v5747, %v5933
    %5943 = vset.pattern.permute.xlu0 0
    %5944 = vperm.xlu0 %5943, %v5934
    %v5945 = vpop.permute.xlu0 %5944
    %5948 = vset.pattern.permute.xlu0 0
    %5949 = vperm.xlu0 %5948, %v5935
    %v5950 = vpop.permute.xlu0 %5949
    %5953 = vset.pattern.permute.xlu0 0
    %5954 = vperm.xlu0 %5953, %v5936
    %v5955 = vpop.permute.xlu0 %5954
    %5958 = vset.pattern.permute.xlu0 0
    %5959 = vperm.xlu0 %5958, %v5937
    %v5960 = vpop.permute.xlu0 %5959
    %5963 = vset.pattern.permute.xlu0 0
    %5964 = vperm.xlu0 %5963, %v5938
    %v5965 = vpop.permute.xlu0 %5964
    %5968 = vset.pattern.permute.xlu0 0
    %5969 = vperm.xlu0 %5968, %v5939
    %v5970 = vpop.permute.xlu0 %5969
    %5973 = vset.pattern.permute.xlu0 0
    %5974 = vperm.xlu0 %5973, %v5940
    %v5975 = vpop.permute.xlu0 %5974
    %5978 = vset.pattern.permute.xlu0 0
    %5979 = vperm.xlu0 %5978, %v5941
    %v5980 = vpop.permute.xlu0 %5979
    %v5982 = vmul.f32 %v5945, %v4992
    %v5983 = vmul.f32 %v5950, %v4993
    %v5984 = vmul.f32 %v5955, %v4994
    %v5985 = vmul.f32 %v5960, %v4995
    %v5986 = vmul.f32 %v5965, %v4996
    %v5987 = vmul.f32 %v5970, %v4997
    %v5988 = vmul.f32 %v5975, %v4998
    %v5989 = vmul.f32 %v5980, %v4999
    %5990 = vmatprep.subr.mxu0 0.0
    %5991 = vmatpush1.msra.mxu0 0.0
    %5992 = vmatprep.subr.mxu0 0.0
    %5993 = vmatpush1.msra.mxu0 0.0
    %5994 = vmatprep.subr.mxu0 0.0
    %5995 = vmatpush1.msra.mxu0 0.0
    %5996 = vmatprep.subr.mxu0 0.0
    %5997 = vmatpush1.msra.mxu0 0.0
    %5998 = vmatprep.subr.mxu0 0.0
    %5999 = vmatpush1.msra.mxu0 0.0
    %6000 = vmatprep.subr.mxu0 0.0
    %6001 = vmatpush1.msra.mxu0 0.0
    %6002 = vmatprep.subr.mxu0 0.0
    %6003 = vmatpush1.msra.mxu0 0.0
    %6004 = vmatprep.subr.mxu0 0.0
    %6005 = vmatpush1.msra.mxu0 0.0
    %6006 = vmatprep.subr.mxu0 0.0
    %6007 = vmatpush1.msra.mxu0 %v5989
    %6008 = vmatprep.subr.mxu0 0.0
    %6009 = vmatpush1.msra.mxu0 %v5988
    %6010 = vmatprep.subr.mxu0 0.0
    %6011 = vmatpush1.msra.mxu0 %v5987
    %6012 = vmatprep.subr.mxu0 0.0
    %6013 = vmatpush1.msra.mxu0 %v5986
    %6014 = vmatprep.subr.mxu0 0.0
    %6015 = vmatpush1.msra.mxu0 %v5985
    %6016 = vmatprep.subr.mxu0 0.0
    %6017 = vmatpush1.msra.mxu0 %v5984
    %6018 = vmatprep.subr.mxu0 0.0
    %6019 = vmatpush1.msra.mxu0 %v5983
    %6020 = vmatprep.subr.mxu0 0.0
    %6021 = vmatpush1.msra.mxu0 %v5982
    %6022 = vmatprep.subr.mxu0 0.0
    %6023 = vmatpush2.msra.mxu0 0.0
    %6024 = vmatprep.subr.mxu0 0.0
    %6025 = vmatpush2.msra.mxu0 0.0
    %6026 = vmatprep.subr.mxu0 0.0
    %6027 = vmatpush2.msra.mxu0 0.0
    %6028 = vmatprep.subr.mxu0 0.0
    %6029 = vmatpush2.msra.mxu0 0.0
    %6030 = vmatprep.subr.mxu0 0.0
    %6031 = vmatpush2.msra.mxu0 0.0
    %6032 = vmatprep.subr.mxu0 0.0
    %6033 = vmatpush2.msra.mxu0 0.0
    %6034 = vmatprep.subr.mxu0 0.0
    %6035 = vmatpush2.msra.mxu0 0.0
    %6036 = vmatprep.subr.mxu0 0.0
    %6037 = vmatpush2.msra.mxu0 0.0
    %6038 = vmatprep.subr.mxu0 0.0
    %6039 = vmatpush2.msra.mxu0 0.0
    %6040 = vmatprep.subr.mxu0 0.0
    %6041 = vmatpush2.msra.mxu0 0.0
    %6042 = vmatprep.subr.mxu0 0.0
    %6043 = vmatpush2.msra.mxu0 0.0
    %6044 = vmatprep.subr.mxu0 0.0
    %6045 = vmatpush2.msra.mxu0 0.0
    %6046 = vmatprep.subr.mxu0 0.0
    %6047 = vmatpush2.msra.mxu0 0.0
    %6048 = vmatprep.subr.mxu0 0.0
    %6049 = vmatpush2.msra.mxu0 0.0
    %6050 = vmatprep.subr.mxu0 0.0
    %6051 = vmatpush2.msra.mxu0 0.0
    %6052 = vmatprep.subr.mxu0 0.0
    %6053 = vmatpush2.msra.mxu0 0.0
    %6054 = vmatprep.mubr.f32.mxu0 0.0
    %6055 = vmatmul.mubr.f32.gmra.mxu0 %v5749
    %v6056 = vpop.f32.mrf.mxu0
    %v6057 = vadd.f32 0.0, %v6056
    %v6058 = vpop.f32.mrf.mxu0
    %6059 = vdwg.mxu0
    %6060 = vmatprep.subr.mxu0 0.0
    %6061 = vmatpush1.msra.mxu0 %v5019
    %6062 = vmatprep.subr.mxu0 0.0
    %6063 = vmatpush1.msra.mxu0 %v5018
    %6064 = vmatprep.subr.mxu0 0.0
    %6065 = vmatpush1.msra.mxu0 %v5017
    %6066 = vmatprep.subr.mxu0 0.0
    %6067 = vmatpush1.msra.mxu0 %v5016
    %6068 = vmatprep.subr.mxu0 0.0
    %6069 = vmatpush1.msra.mxu0 %v5015
    %6070 = vmatprep.subr.mxu0 0.0
    %6071 = vmatpush1.msra.mxu0 %v5014
    %6072 = vmatprep.subr.mxu0 0.0
    %6073 = vmatpush1.msra.mxu0 %v5013
    %6074 = vmatprep.subr.mxu0 0.0
    %6075 = vmatpush1.msra.mxu0 %v5012
    %6076 = vmatprep.subr.mxu0 0.0
    %6077 = vmatpush1.msra.mxu0 %v5011
    %6078 = vmatprep.subr.mxu0 0.0
    %6079 = vmatpush1.msra.mxu0 %v5010
    %6080 = vmatprep.subr.mxu0 0.0
    %6081 = vmatpush1.msra.mxu0 %v5009
    %6082 = vmatprep.subr.mxu0 0.0
    %6083 = vmatpush1.msra.mxu0 %v5008
    %6084 = vmatprep.subr.mxu0 0.0
    %6085 = vmatpush1.msra.mxu0 %v5007
    %6086 = vmatprep.subr.mxu0 0.0
    %6087 = vmatpush1.msra.mxu0 %v5006
    %6088 = vmatprep.subr.mxu0 0.0
    %6089 = vmatpush1.msra.mxu0 %v5005
    %6090 = vmatprep.subr.mxu0 0.0
    %6091 = vmatpush1.msra.mxu0 %v5004
    %6092 = vmatprep.subr.mxu0 0.0
    %6093 = vmatpush2.msra.mxu0 0.0
    %6094 = vmatprep.subr.mxu0 0.0
    %6095 = vmatpush2.msra.mxu0 0.0
    %6096 = vmatprep.subr.mxu0 0.0
    %6097 = vmatpush2.msra.mxu0 0.0
    %6098 = vmatprep.subr.mxu0 0.0
    %6099 = vmatpush2.msra.mxu0 0.0
    %6100 = vmatprep.subr.mxu0 0.0
    %6101 = vmatpush2.msra.mxu0 0.0
    %6102 = vmatprep.subr.mxu0 0.0
    %6103 = vmatpush2.msra.mxu0 0.0
    %6104 = vmatprep.subr.mxu0 0.0
    %6105 = vmatpush2.msra.mxu0 0.0
    %6106 = vmatprep.subr.mxu0 0.0
    %6107 = vmatpush2.msra.mxu0 0.0
    %6108 = vmatprep.subr.mxu0 0.0
    %6109 = vmatpush2.msra.mxu0 0.0
    %6110 = vmatprep.subr.mxu0 0.0
    %6111 = vmatpush2.msra.mxu0 0.0
    %6112 = vmatprep.subr.mxu0 0.0
    %6113 = vmatpush2.msra.mxu0 0.0
    %6114 = vmatprep.subr.mxu0 0.0
    %6115 = vmatpush2.msra.mxu0 0.0
    %6116 = vmatprep.subr.mxu0 0.0
    %6117 = vmatpush2.msra.mxu0 0.0
    %6118 = vmatprep.subr.mxu0 0.0
    %6119 = vmatpush2.msra.mxu0 0.0
    %6120 = vmatprep.subr.mxu0 0.0
    %6121 = vmatpush2.msra.mxu0 0.0
    %6122 = vmatprep.subr.mxu0 0.0
    %6123 = vmatpush2.msra.mxu0 0.0
    %6124 = vmatprep.mubr.f32.mxu0 0.0
    %6125 = vmatmul.mubr.f32.gmra.mxu0 %v6057
    %v6126 = vpop.f32.mrf.mxu0
    %v6127 = vadd.f32 0.0, %v6126
    %v6128 = vpop.f32.mrf.mxu0
    %6129 = vdwg.mxu0
    %v6130 = vsel %vm1281, %v5499, 0
    %6132 = vmatprep.subr.mxu0 0.0
    %6133 = vmatpush1.msra.mxu0 0.0
    %6134 = vmatprep.subr.mxu0 0.0
    %6135 = vmatpush1.msra.mxu0 0.0
    %6136 = vmatprep.subr.mxu0 0.0
    %6137 = vmatpush1.msra.mxu0 0.0
    %6138 = vmatprep.subr.mxu0 0.0
    %6139 = vmatpush1.msra.mxu0 0.0
    %6140 = vmatprep.subr.mxu0 0.0
    %6141 = vmatpush1.msra.mxu0 0.0
    %6142 = vmatprep.subr.mxu0 0.0
    %6143 = vmatpush1.msra.mxu0 0.0
    %6144 = vmatprep.subr.mxu0 0.0
    %6145 = vmatpush1.msra.mxu0 0.0
    %6146 = vmatprep.subr.mxu0 0.0
    %6147 = vmatpush1.msra.mxu0 0.0
    %6148 = vmatprep.subr.mxu0 0.0
    %6149 = vmatpush1.msra.mxu0 0.0
    %6150 = vmatprep.subr.mxu0 0.0
    %6151 = vmatpush1.msra.mxu0 0.0
    %6152 = vmatprep.subr.mxu0 0.0
    %6153 = vmatpush1.msra.mxu0 0.0
    %6154 = vmatprep.subr.mxu0 0.0
    %6155 = vmatpush1.msra.mxu0 0.0
    %6156 = vmatprep.subr.mxu0 0.0
    %6157 = vmatpush1.msra.mxu0 %v5003
    %6158 = vmatprep.subr.mxu0 0.0
    %6159 = vmatpush1.msra.mxu0 %v5002
    %6160 = vmatprep.subr.mxu0 0.0
    %6161 = vmatpush1.msra.mxu0 %v5001
    %6162 = vmatprep.subr.mxu0 0.0
    %6163 = vmatpush1.msra.mxu0 %v5000
    %6164 = vmatprep.subr.mxu0 0.0
    %6165 = vmatpush2.msra.mxu0 0.0
    %6166 = vmatprep.subr.mxu0 0.0
    %6167 = vmatpush2.msra.mxu0 0.0
    %6168 = vmatprep.subr.mxu0 0.0
    %6169 = vmatpush2.msra.mxu0 0.0
    %6170 = vmatprep.subr.mxu0 0.0
    %6171 = vmatpush2.msra.mxu0 0.0
    %6172 = vmatprep.subr.mxu0 0.0
    %6173 = vmatpush2.msra.mxu0 0.0
    %6174 = vmatprep.subr.mxu0 0.0
    %6175 = vmatpush2.msra.mxu0 0.0
    %6176 = vmatprep.subr.mxu0 0.0
    %6177 = vmatpush2.msra.mxu0 0.0
    %6178 = vmatprep.subr.mxu0 0.0
    %6179 = vmatpush2.msra.mxu0 0.0
    %6180 = vmatprep.subr.mxu0 0.0
    %6181 = vmatpush2.msra.mxu0 0.0
    %6182 = vmatprep.subr.mxu0 0.0
    %6183 = vmatpush2.msra.mxu0 0.0
    %6184 = vmatprep.subr.mxu0 0.0
    %6185 = vmatpush2.msra.mxu0 0.0
    %6186 = vmatprep.subr.mxu0 0.0
    %6187 = vmatpush2.msra.mxu0 0.0
    %6188 = vmatprep.subr.mxu0 0.0
    %6189 = vmatpush2.msra.mxu0 0.0
    %6190 = vmatprep.subr.mxu0 0.0
    %6191 = vmatpush2.msra.mxu0 0.0
    %6192 = vmatprep.subr.mxu0 0.0
    %6193 = vmatpush2.msra.mxu0 0.0
    %6194 = vmatprep.subr.mxu0 0.0
    %6195 = vmatpush2.msra.mxu0 0.0
    %6196 = vmatprep.mubr.f32.mxu0 0.0
    %6197 = vmatmul.mubr.f32.gmra.mxu0 %v6130
    %v6198 = vpop.f32.mrf.mxu0
    %v6199 = vadd.f32 %v6127, %v6198
    %v6200 = vpop.f32.mrf.mxu0
    %6201 = vdwg.mxu0
    %6202 = vmatprep.subr.mxu0 0.0
    %6203 = vmatpush1.msra.mxu0 0.0
    %6204 = vmatprep.subr.mxu0 0.0
    %6205 = vmatpush1.msra.mxu0 0.0
    %6206 = vmatprep.subr.mxu0 0.0
    %6207 = vmatpush1.msra.mxu0 0.0
    %6208 = vmatprep.subr.mxu0 0.0
    %6209 = vmatpush1.msra.mxu0 0.0
    %6210 = vmatprep.subr.mxu0 0.0
    %6211 = vmatpush1.msra.mxu0 0.0
    %6212 = vmatprep.subr.mxu0 0.0
    %6213 = vmatpush1.msra.mxu0 0.0
    %6214 = vmatprep.subr.mxu0 0.0
    %6215 = vmatpush1.msra.mxu0 0.0
    %6216 = vmatprep.subr.mxu0 0.0
    %6217 = vmatpush1.msra.mxu0 0.0
    %6218 = vmatprep.subr.mxu0 0.0
    %6219 = vmatpush1.msra.mxu0 0.0
    %6220 = vmatprep.subr.mxu0 0.0
    %6221 = vmatpush1.msra.mxu0 0.0
    %6222 = vmatprep.subr.mxu0 0.0
    %6223 = vmatpush1.msra.mxu0 0.0
    %6224 = vmatprep.subr.mxu0 0.0
    %6225 = vmatpush1.msra.mxu0 0.0
    %6226 = vmatprep.subr.mxu0 0.0
    %6227 = vmatpush1.msra.mxu0 %v5023
    %6228 = vmatprep.subr.mxu0 0.0
    %6229 = vmatpush1.msra.mxu0 %v5022
    %6230 = vmatprep.subr.mxu0 0.0
    %6231 = vmatpush1.msra.mxu0 %v5021
    %6232 = vmatprep.subr.mxu0 0.0
    %6233 = vmatpush1.msra.mxu0 %v5020
    %6234 = vmatprep.subr.mxu0 0.0
    %6235 = vmatpush2.msra.mxu0 0.0
    %6236 = vmatprep.subr.mxu0 0.0
    %6237 = vmatpush2.msra.mxu0 0.0
    %6238 = vmatprep.subr.mxu0 0.0
    %6239 = vmatpush2.msra.mxu0 0.0
    %6240 = vmatprep.subr.mxu0 0.0
    %6241 = vmatpush2.msra.mxu0 0.0
    %6242 = vmatprep.subr.mxu0 0.0
    %6243 = vmatpush2.msra.mxu0 0.0
    %6244 = vmatprep.subr.mxu0 0.0
    %6245 = vmatpush2.msra.mxu0 0.0
    %6246 = vmatprep.subr.mxu0 0.0
    %6247 = vmatpush2.msra.mxu0 0.0
    %6248 = vmatprep.subr.mxu0 0.0
    %6249 = vmatpush2.msra.mxu0 0.0
    %6250 = vmatprep.subr.mxu0 0.0
    %6251 = vmatpush2.msra.mxu0 0.0
    %6252 = vmatprep.subr.mxu0 0.0
    %6253 = vmatpush2.msra.mxu0 0.0
    %6254 = vmatprep.subr.mxu0 0.0
    %6255 = vmatpush2.msra.mxu0 0.0
    %6256 = vmatprep.subr.mxu0 0.0
    %6257 = vmatpush2.msra.mxu0 0.0
    %6258 = vmatprep.subr.mxu0 0.0
    %6259 = vmatpush2.msra.mxu0 0.0
    %6260 = vmatprep.subr.mxu0 0.0
    %6261 = vmatpush2.msra.mxu0 0.0
    %6262 = vmatprep.subr.mxu0 0.0
    %6263 = vmatpush2.msra.mxu0 0.0
    %6264 = vmatprep.subr.mxu0 0.0
    %6265 = vmatpush2.msra.mxu0 0.0
    %6266 = vmatprep.mubr.f32.mxu0 0.0
    %6267 = vmatmul.mubr.f32.gmra.mxu0 %v5396
    %v6268 = vpop.f32.mrf.mxu0
    %v6269 = vadd.f32 0.0, %v6268
    %v6270 = vpop.f32.mrf.mxu0
    %6271 = vdwg.mxu0
    %v6272 = vadd.f32 %v6199, %v6269
    %v6273 = vadd.f32 %v6272, %v5297
    %v6274 = vxor.u32 %v6273, 2147483648
    %v6275 = vmul.f32 %v6274, 1.442695
    %v6276 = vpow.pop %v6275
    %v6277 = vadd.f32 %v6276, 1.0
    %v6278 = vrcp.pop %v6277
    %v6279 = vmul.f32 1.0, %v6278
    %v6280 = vtanh.pop %v6273
    %v6281 = vmul.f32 %v6279, %v5316
    %6283 = vrot.lane.b32.xlu0 %v6280, 64
    %v6284 = vpop.permute.xlu0 %6283
    %v6286 = vmul.f32 %v6279, %v6284
    %6288 = vrot.lane.b32.xlu0 %v6286, 32
    %v6289 = vpop.permute.xlu0 %6288
    %v6291 = vadd.f32 %v6281, %v6289
    %v6292 = vtanh.pop %v6291
    %6294 = vrot.lane.b32.xlu0 %v6292, 64
    %v6295 = vpop.permute.xlu0 %6294
    %v6297 = vmul.f32 %v6279, %v6295
    %6298 = vmatprep.subr.mxu0 0.0
    %6299 = vmatpush1.msra.mxu0 0.0
    %6300 = vmatprep.subr.mxu0 0.0
    %6301 = vmatpush1.msra.mxu0 0.0
    %6302 = vmatprep.subr.mxu0 0.0
    %6303 = vmatpush1.msra.mxu0 0.0
    %6304 = vmatprep.subr.mxu0 0.0
    %6305 = vmatpush1.msra.mxu0 0.0
    %6306 = vmatprep.subr.mxu0 0.0
    %6307 = vmatpush1.msra.mxu0 0.0
    %6308 = vmatprep.subr.mxu0 0.0
    %6309 = vmatpush1.msra.mxu0 0.0
    %6310 = vmatprep.subr.mxu0 0.0
    %6311 = vmatpush1.msra.mxu0 0.0
    %6312 = vmatprep.subr.mxu0 0.0
    %6313 = vmatpush1.msra.mxu0 0.0
    %6314 = vmatprep.subr.mxu0 0.0
    %6315 = vmatpush1.msra.mxu0 0.0
    %6316 = vmatprep.subr.mxu0 0.0
    %6317 = vmatpush1.msra.mxu0 0.0
    %6318 = vmatprep.subr.mxu0 0.0
    %6319 = vmatpush1.msra.mxu0 0.0
    %6320 = vmatprep.subr.mxu0 0.0
    %6321 = vmatpush1.msra.mxu0 0.0
    %6322 = vmatprep.subr.mxu0 0.0
    %6323 = vmatpush1.msra.mxu0 %v5032
    %6324 = vmatprep.subr.mxu0 0.0
    %6325 = vmatpush1.msra.mxu0 %v5031
    %6326 = vmatprep.subr.mxu0 0.0
    %6327 = vmatpush1.msra.mxu0 %v5030
    %6328 = vmatprep.subr.mxu0 0.0
    %6329 = vmatpush1.msra.mxu0 %v5029
    %6330 = vmatprep.subr.mxu0 0.0
    %6331 = vmatpush2.msra.mxu0 0.0
    %6332 = vmatprep.subr.mxu0 0.0
    %6333 = vmatpush2.msra.mxu0 0.0
    %6334 = vmatprep.subr.mxu0 0.0
    %6335 = vmatpush2.msra.mxu0 0.0
    %6336 = vmatprep.subr.mxu0 0.0
    %6337 = vmatpush2.msra.mxu0 0.0
    %6338 = vmatprep.subr.mxu0 0.0
    %6339 = vmatpush2.msra.mxu0 0.0
    %6340 = vmatprep.subr.mxu0 0.0
    %6341 = vmatpush2.msra.mxu0 0.0
    %6342 = vmatprep.subr.mxu0 0.0
    %6343 = vmatpush2.msra.mxu0 0.0
    %6344 = vmatprep.subr.mxu0 0.0
    %6345 = vmatpush2.msra.mxu0 0.0
    %6346 = vmatprep.subr.mxu0 0.0
    %6347 = vmatpush2.msra.mxu0 0.0
    %6348 = vmatprep.subr.mxu0 0.0
    %6349 = vmatpush2.msra.mxu0 0.0
    %6350 = vmatprep.subr.mxu0 0.0
    %6351 = vmatpush2.msra.mxu0 0.0
    %6352 = vmatprep.subr.mxu0 0.0
    %6353 = vmatpush2.msra.mxu0 0.0
    %6354 = vmatprep.subr.mxu0 0.0
    %6355 = vmatpush2.msra.mxu0 0.0
    %6356 = vmatprep.subr.mxu0 0.0
    %6357 = vmatpush2.msra.mxu0 0.0
    %6358 = vmatprep.subr.mxu0 0.0
    %6359 = vmatpush2.msra.mxu0 0.0
    %6360 = vmatprep.subr.mxu0 0.0
    %6361 = vmatpush2.msra.mxu0 0.0
    %6362 = vmatprep.mubr.f32.mxu0 0.0
    %6363 = vmatmul.mubr.f32.gmra.mxu0 %v6130
    %v6364 = vpop.f32.mrf.mxu0
    %v6365 = vadd.f32 0.0, %v6364
    %v6366 = vpop.f32.mrf.mxu0
    %6367 = vdwg.mxu0
    %6369 = vrot.lane.b32.xlu0 %v6297, 32
    %v6370 = vpop.permute.xlu0 %6369
    %v6371 = vsel %vm1281, %v6370, 0
    %6373 = vmatprep.subr.mxu0 0.0
    %6374 = vmatpush1.msra.mxu0 0.0
    %6375 = vmatprep.subr.mxu0 0.0
    %6376 = vmatpush1.msra.mxu0 0.0
    %6377 = vmatprep.subr.mxu0 0.0
    %6378 = vmatpush1.msra.mxu0 0.0
    %6379 = vmatprep.subr.mxu0 0.0
    %6380 = vmatpush1.msra.mxu0 0.0
    %6381 = vmatprep.subr.mxu0 0.0
    %6382 = vmatpush1.msra.mxu0 0.0
    %6383 = vmatprep.subr.mxu0 0.0
    %6384 = vmatpush1.msra.mxu0 0.0
    %6385 = vmatprep.subr.mxu0 0.0
    %6386 = vmatpush1.msra.mxu0 0.0
    %6387 = vmatprep.subr.mxu0 0.0
    %6388 = vmatpush1.msra.mxu0 0.0
    %6389 = vmatprep.subr.mxu0 0.0
    %6390 = vmatpush1.msra.mxu0 0.0
    %6391 = vmatprep.subr.mxu0 0.0
    %6392 = vmatpush1.msra.mxu0 0.0
    %6393 = vmatprep.subr.mxu0 0.0
    %6394 = vmatpush1.msra.mxu0 0.0
    %6395 = vmatprep.subr.mxu0 0.0
    %6396 = vmatpush1.msra.mxu0 0.0
    %6397 = vmatprep.subr.mxu0 0.0
    %6398 = vmatpush1.msra.mxu0 %v5028
    %6399 = vmatprep.subr.mxu0 0.0
    %6400 = vmatpush1.msra.mxu0 %v5027
    %6401 = vmatprep.subr.mxu0 0.0
    %6402 = vmatpush1.msra.mxu0 %v5026
    %6403 = vmatprep.subr.mxu0 0.0
    %6404 = vmatpush1.msra.mxu0 %v5025
    %6405 = vmatprep.subr.mxu0 0.0
    %6406 = vmatpush2.msra.mxu0 0.0
    %6407 = vmatprep.subr.mxu0 0.0
    %6408 = vmatpush2.msra.mxu0 0.0
    %6409 = vmatprep.subr.mxu0 0.0
    %6410 = vmatpush2.msra.mxu0 0.0
    %6411 = vmatprep.subr.mxu0 0.0
    %6412 = vmatpush2.msra.mxu0 0.0
    %6413 = vmatprep.subr.mxu0 0.0
    %6414 = vmatpush2.msra.mxu0 0.0
    %6415 = vmatprep.subr.mxu0 0.0
    %6416 = vmatpush2.msra.mxu0 0.0
    %6417 = vmatprep.subr.mxu0 0.0
    %6418 = vmatpush2.msra.mxu0 0.0
    %6419 = vmatprep.subr.mxu0 0.0
    %6420 = vmatpush2.msra.mxu0 0.0
    %6421 = vmatprep.subr.mxu0 0.0
    %6422 = vmatpush2.msra.mxu0 0.0
    %6423 = vmatprep.subr.mxu0 0.0
    %6424 = vmatpush2.msra.mxu0 0.0
    %6425 = vmatprep.subr.mxu0 0.0
    %6426 = vmatpush2.msra.mxu0 0.0
    %6427 = vmatprep.subr.mxu0 0.0
    %6428 = vmatpush2.msra.mxu0 0.0
    %6429 = vmatprep.subr.mxu0 0.0
    %6430 = vmatpush2.msra.mxu0 0.0
    %6431 = vmatprep.subr.mxu0 0.0
    %6432 = vmatpush2.msra.mxu0 0.0
    %6433 = vmatprep.subr.mxu0 0.0
    %6434 = vmatpush2.msra.mxu0 0.0
    %6435 = vmatprep.subr.mxu0 0.0
    %6436 = vmatpush2.msra.mxu0 0.0
    %6437 = vmatprep.mubr.f32.mxu0 0.0
    %6438 = vmatmul.mubr.f32.gmra.mxu0 %v6371
    %v6439 = vpop.f32.mrf.mxu0
    %v6440 = vadd.f32 %v6365, %v6439
    %v6441 = vpop.f32.mrf.mxu0
    %6442 = vdwg.mxu0
    %v6443 = vadd.f32 %v6440, %v5471
    %v6444 = vxor.u32 %v6443, 2147483648
    %v6445 = vmul.f32 %v6444, 1.442695
    %v6446 = vpow.pop %v6445
    %v6447 = vadd.f32 %v6446, 1.0
    %v6448 = vrcp.pop %v6447
    %v6449 = vmul.f32 1.0, %v6448
    %v6450 = vtanh.pop %v6443
    %v6451 = vmul.f32 %v6449, %v5490
    %6453 = vrot.lane.b32.xlu0 %v6450, 64
    %v6454 = vpop.permute.xlu0 %6453
    %v6456 = vmul.f32 %v6449, %v6454
    %6458 = vrot.lane.b32.xlu0 %v6456, 32
    %v6459 = vpop.permute.xlu0 %6458
    %v6461 = vadd.f32 %v6451, %v6459
    %v6462 = vtanh.pop %v6461
    %6464 = vrot.lane.b32.xlu0 %v6462, 64
    %v6465 = vpop.permute.xlu0 %6464
    %v6467 = vmul.f32 %v6449, %v6465
    %6469 = vrot.lane.b32.xlu0 %v6467, 32
    %v6470 = vpop.permute.xlu0 %6469
    %6472 = vmatprep.subr.mxu0 0.0
    %6473 = vmatpush1.msra.mxu0 0.0
    %6474 = vmatprep.subr.mxu0 0.0
    %6475 = vmatpush1.msra.mxu0 0.0
    %6476 = vmatprep.subr.mxu0 0.0
    %6477 = vmatpush1.msra.mxu0 0.0
    %6478 = vmatprep.subr.mxu0 0.0
    %6479 = vmatpush1.msra.mxu0 0.0
    %6480 = vmatprep.subr.mxu0 0.0
    %6481 = vmatpush1.msra.mxu0 0.0
    %6482 = vmatprep.subr.mxu0 0.0
    %6483 = vmatpush1.msra.mxu0 0.0
    %6484 = vmatprep.subr.mxu0 0.0
    %6485 = vmatpush1.msra.mxu0 0.0
    %6486 = vmatprep.subr.mxu0 0.0
    %6487 = vmatpush1.msra.mxu0 0.0
    %6488 = vmatprep.subr.mxu0 0.0
    %6489 = vmatpush1.msra.mxu0 0.0
    %6490 = vmatprep.subr.mxu0 0.0
    %6491 = vmatpush1.msra.mxu0 0.0
    %6492 = vmatprep.subr.mxu0 0.0
    %6493 = vmatpush1.msra.mxu0 0.0
    %6494 = vmatprep.subr.mxu0 0.0
    %6495 = vmatpush1.msra.mxu0 0.0
    %6496 = vmatprep.subr.mxu0 0.0
    %6497 = vmatpush1.msra.mxu0 0.0
    %6498 = vmatprep.subr.mxu0 0.0
    %6499 = vmatpush1.msra.mxu0 0.0
    %6500 = vmatprep.subr.mxu0 0.0
    %6501 = vmatpush1.msra.mxu0 0.0
    %6502 = vmatprep.subr.mxu0 0.0
    %6503 = vmatpush1.msra.mxu0 %v6470
    %6504 = vmatprep.subr.mxu0 0.0
    %6505 = vmatpush2.msra.mxu0 0.0
    %6506 = vmatprep.subr.mxu0 0.0
    %6507 = vmatpush2.msra.mxu0 0.0
    %6508 = vmatprep.subr.mxu0 0.0
    %6509 = vmatpush2.msra.mxu0 0.0
    %6510 = vmatprep.subr.mxu0 0.0
    %6511 = vmatpush2.msra.mxu0 0.0
    %6512 = vmatprep.subr.mxu0 0.0
    %6513 = vmatpush2.msra.mxu0 0.0
    %6514 = vmatprep.subr.mxu0 0.0
    %6515 = vmatpush2.msra.mxu0 0.0
    %6516 = vmatprep.subr.mxu0 0.0
    %6517 = vmatpush2.msra.mxu0 0.0
    %6518 = vmatprep.subr.mxu0 0.0
    %6519 = vmatpush2.msra.mxu0 0.0
    %6520 = vmatprep.subr.mxu0 0.0
    %6521 = vmatpush2.msra.mxu0 0.0
    %6522 = vmatprep.subr.mxu0 0.0
    %6523 = vmatpush2.msra.mxu0 0.0
    %6524 = vmatprep.subr.mxu0 0.0
    %6525 = vmatpush2.msra.mxu0 0.0
    %6526 = vmatprep.subr.mxu0 0.0
    %6527 = vmatpush2.msra.mxu0 0.0
    %6528 = vmatprep.subr.mxu0 0.0
    %6529 = vmatpush2.msra.mxu0 0.0
    %6530 = vmatprep.subr.mxu0 0.0
    %6531 = vmatpush2.msra.mxu0 0.0
    %6532 = vmatprep.subr.mxu0 0.0
    %6533 = vmatpush2.msra.mxu0 0.0
    %6534 = vmatprep.subr.mxu0 0.0
    %6535 = vmatpush2.msra.mxu0 0.0
    %6536 = vmatprep.mubr.f32.mxu0 0.0
    %6537 = vmatmul.mubr.f32.gmra.mxu0 %v5503
    %v6538 = vpop.f32.mrf.mxu0
    %v6539 = vadd.f32 0.0, %v6538
    %v6540 = vpop.f32.mrf.mxu0
    %6541 = vmatprep.mubr.f32.mxu0 0.0
    %6542 = vmatmul.mubr.f32.gmra.mxu0 %v5506
    %v6543 = vpop.f32.mrf.mxu0
    %v6544 = vadd.f32 0.0, %v6543
    %v6545 = vpop.f32.mrf.mxu0
    %6546 = vmatprep.mubr.f32.mxu0 0.0
    %6547 = vmatmul.mubr.f32.gmra.mxu0 %v5509
    %v6548 = vpop.f32.mrf.mxu0
    %v6549 = vadd.f32 0.0, %v6548
    %v6550 = vpop.f32.mrf.mxu0
    %6551 = vmatprep.mubr.f32.mxu0 0.0
    %6552 = vmatmul.mubr.f32.gmra.mxu0 %v5512
    %v6553 = vpop.f32.mrf.mxu0
    %v6554 = vadd.f32 0.0, %v6553
    %v6555 = vpop.f32.mrf.mxu0
    %6556 = vmatprep.mubr.f32.mxu0 0.0
    %6557 = vmatmul.mubr.f32.gmra.mxu0 %v5515
    %v6558 = vpop.f32.mrf.mxu0
    %v6559 = vadd.f32 0.0, %v6558
    %v6560 = vpop.f32.mrf.mxu0
    %6561 = vmatprep.mubr.f32.mxu0 0.0
    %6562 = vmatmul.mubr.f32.gmra.mxu0 %v5518
    %v6563 = vpop.f32.mrf.mxu0
    %v6564 = vadd.f32 0.0, %v6563
    %v6565 = vpop.f32.mrf.mxu0
    %6566 = vmatprep.mubr.f32.mxu0 0.0
    %6567 = vmatmul.mubr.f32.gmra.mxu0 %v5521
    %v6568 = vpop.f32.mrf.mxu0
    %v6569 = vadd.f32 0.0, %v6568
    %v6570 = vpop.f32.mrf.mxu0
    %6571 = vmatprep.mubr.f32.mxu0 0.0
    %6572 = vmatmul.mubr.f32.gmra.mxu0 %v5524
    %v6573 = vpop.f32.mrf.mxu0
    %v6574 = vadd.f32 0.0, %v6573
    %v6575 = vpop.f32.mrf.mxu0
    %6576 = vdwg.mxu0
    %v6577 = vmul.f32 %v4992, %v6539
    %v6578 = vmul.f32 %v4993, %v6544
    %v6579 = vmul.f32 %v4994, %v6549
    %v6580 = vmul.f32 %v4995, %v6554
    %v6581 = vmul.f32 %v4996, %v6559
    %v6582 = vmul.f32 %v4997, %v6564
    %v6583 = vmul.f32 %v4998, %v6569
    %v6584 = vmul.f32 %v4999, %v6574
    %v6585 = vsel %vm1281, %v6577, 0.0
    %6586 = vadd.xlane.f32.xlu0 %v6585
    %v6587 = vpop.xlane.xlu0 %6586
    %v6588 = vsel %vm1281, %v6578, 0.0
    %6589 = vadd.xlane.f32.xlu0 %v6588
    %v6590 = vpop.xlane.xlu0 %6589
    %v6591 = vsel %vm1281, %v6579, 0.0
    %6592 = vadd.xlane.f32.xlu0 %v6591
    %v6593 = vpop.xlane.xlu0 %6592
    %v6594 = vsel %vm1281, %v6580, 0.0
    %6595 = vadd.xlane.f32.xlu0 %v6594
    %v6596 = vpop.xlane.xlu0 %6595
    %v6597 = vsel %vm1281, %v6581, 0.0
    %6598 = vadd.xlane.f32.xlu0 %v6597
    %v6599 = vpop.xlane.xlu0 %6598
    %v6600 = vsel %vm1281, %v6582, 0.0
    %6601 = vadd.xlane.f32.xlu0 %v6600
    %v6602 = vpop.xlane.xlu0 %6601
    %v6603 = vsel %vm1281, %v6583, 0.0
    %6604 = vadd.xlane.f32.xlu0 %v6603
    %v6605 = vpop.xlane.xlu0 %6604
    %v6606 = vsel %vm1281, %v6584, 0.0
    %6607 = vadd.xlane.f32.xlu0 %v6606
    %v6608 = vpop.xlane.xlu0 %6607
    %v6609 = vsel %vm5072, %v6587, -1e+30
    %v6610 = vsel %vm5073, %v6590, -1e+30
    %v6611 = vsel %vm5074, %v6593, -1e+30
    %v6612 = vsel %vm5075, %v6596, -1e+30
    %v6613 = vsel %vm5076, %v6599, -1e+30
    %v6614 = vsel %vm5077, %v6602, -1e+30
    %v6615 = vsel %vm5078, %v6605, -1e+30
    %v6616 = vsel %vm5079, %v6608, -1e+30
    %v6617 = vsel %vm5501, %v6609, -inf
    %v6618 = vsel %vm5501, %v6610, -inf
    %v6619 = vsel %vm5501, %v6611, -inf
    %v6620 = vsel %vm5501, %v6612, -inf
    %v6621 = vsel %vm5501, %v6613, -inf
    %v6622 = vmax.f32 %v6617, %v6621
    %v6623 = vsel %vm5501, %v6614, -inf
    %v6624 = vmax.f32 %v6618, %v6623
    %v6625 = vsel %vm5501, %v6615, -inf
    %v6626 = vmax.f32 %v6619, %v6625
    %v6627 = vsel %vm5501, %v6616, -inf
    %v6628 = vmax.f32 %v6620, %v6627
    %v6629 = vmax.f32 %v6622, %v6624
    %v6630 = vmax.f32 %v6626, %v6628
    %v6631 = vmax.f32 %v6629, %v6630
    %v6632 = vrot.slane %v6631, 4
    %v6633 = vmax.f32 %v6631, %v6632
    %v6634 = vrot.slane %v6633, 2
    %v6635 = vmax.f32 %v6633, %v6634
    %v6636 = vrot.slane %v6635, 1
    %v6637 = vmax.f32 %v6635, %v6636
    %v6638 = vmul.f32 %v157, %v6637
    %v6639 = vmul.f32 %v158, %v6637
    %v6640 = vmul.f32 %v159, %v6637
    %v6641 = vmul.f32 %v160, %v6637
    %v6642 = vmul.f32 %v161, %v6637
    %v6643 = vmul.f32 %v162, %v6637
    %v6644 = vmul.f32 %v163, %v6637
    %v6645 = vmul.f32 %v164, %v6637
    %v6646 = vsel %vm5501, %v6638, 0.0
    %6647 = vadd.xlane.f32.xlu0 %v6646
    %v6648 = vpop.xlane.xlu0 %6647
    %v6649 = vsel %vm5501, %v6639, 0.0
    %6650 = vadd.xlane.f32.xlu0 %v6649
    %v6651 = vpop.xlane.xlu0 %6650
    %v6652 = vsel %vm5501, %v6640, 0.0
    %6653 = vadd.xlane.f32.xlu0 %v6652
    %v6654 = vpop.xlane.xlu0 %6653
    %v6655 = vsel %vm5501, %v6641, 0.0
    %6656 = vadd.xlane.f32.xlu0 %v6655
    %v6657 = vpop.xlane.xlu0 %6656
    %v6658 = vsel %vm5501, %v6642, 0.0
    %6659 = vadd.xlane.f32.xlu0 %v6658
    %v6660 = vpop.xlane.xlu0 %6659
    %v6661 = vsel %vm5501, %v6643, 0.0
    %6662 = vadd.xlane.f32.xlu0 %v6661
    %v6663 = vpop.xlane.xlu0 %6662
    %v6664 = vsel %vm5501, %v6644, 0.0
    %6665 = vadd.xlane.f32.xlu0 %v6664
    %v6666 = vpop.xlane.xlu0 %6665
    %v6667 = vsel %vm5501, %v6645, 0.0
    %6668 = vadd.xlane.f32.xlu0 %v6667
    %v6669 = vpop.xlane.xlu0 %6668
    %v6670 = vsub.f32 %v6587, %v6648
    %v6671 = vsub.f32 %v6590, %v6651
    %v6672 = vsub.f32 %v6593, %v6654
    %v6673 = vsub.f32 %v6596, %v6657
    %v6674 = vsub.f32 %v6599, %v6660
    %v6675 = vsub.f32 %v6602, %v6663
    %v6676 = vsub.f32 %v6605, %v6666
    %v6677 = vsub.f32 %v6608, %v6669
    %v6678 = vmul.f32 %v6670, 1.442695
    %v6679 = vpow.pop %v6678
    %v6680 = vmul.f32 %v6671, 1.442695
    %v6681 = vpow.pop %v6680
    %v6682 = vmul.f32 %v6672, 1.442695
    %v6683 = vpow.pop %v6682
    %v6684 = vmul.f32 %v6673, 1.442695
    %v6685 = vpow.pop %v6684
    %v6686 = vmul.f32 %v6674, 1.442695
    %v6687 = vpow.pop %v6686
    %v6688 = vmul.f32 %v6675, 1.442695
    %v6689 = vpow.pop %v6688
    %v6690 = vmul.f32 %v6676, 1.442695
    %v6691 = vpow.pop %v6690
    %v6692 = vmul.f32 %v6677, 1.442695
    %v6693 = vpow.pop %v6692
    %6694 = vmatprep.subr.mxu0 0.0
    %6695 = vmatpush1.msra.mxu0 0.0
    %6696 = vmatprep.subr.mxu0 0.0
    %6697 = vmatpush1.msra.mxu0 0.0
    %6698 = vmatprep.subr.mxu0 0.0
    %6699 = vmatpush1.msra.mxu0 0.0
    %6700 = vmatprep.subr.mxu0 0.0
    %6701 = vmatpush1.msra.mxu0 0.0
    %6702 = vmatprep.subr.mxu0 0.0
    %6703 = vmatpush1.msra.mxu0 0.0
    %6704 = vmatprep.subr.mxu0 0.0
    %6705 = vmatpush1.msra.mxu0 0.0
    %6706 = vmatprep.subr.mxu0 0.0
    %6707 = vmatpush1.msra.mxu0 0.0
    %6708 = vmatprep.subr.mxu0 0.0
    %6709 = vmatpush1.msra.mxu0 0.0
    %6710 = vmatprep.subr.mxu0 0.0
    %6711 = vmatpush1.msra.mxu0 %v6693
    %6712 = vmatprep.subr.mxu0 0.0
    %6713 = vmatpush1.msra.mxu0 %v6691
    %6714 = vmatprep.subr.mxu0 0.0
    %6715 = vmatpush1.msra.mxu0 %v6689
    %6716 = vmatprep.subr.mxu0 0.0
    %6717 = vmatpush1.msra.mxu0 %v6687
    %6718 = vmatprep.subr.mxu0 0.0
    %6719 = vmatpush1.msra.mxu0 %v6685
    %6720 = vmatprep.subr.mxu0 0.0
    %6721 = vmatpush1.msra.mxu0 %v6683
    %6722 = vmatprep.subr.mxu0 0.0
    %6723 = vmatpush1.msra.mxu0 %v6681
    %6724 = vmatprep.subr.mxu0 0.0
    %6725 = vmatpush1.msra.mxu0 %v6679
    %6726 = vmatprep.subr.mxu0 0.0
    %6727 = vmatpush2.msra.mxu0 0.0
    %6728 = vmatprep.subr.mxu0 0.0
    %6729 = vmatpush2.msra.mxu0 0.0
    %6730 = vmatprep.subr.mxu0 0.0
    %6731 = vmatpush2.msra.mxu0 0.0
    %6732 = vmatprep.subr.mxu0 0.0
    %6733 = vmatpush2.msra.mxu0 0.0
    %6734 = vmatprep.subr.mxu0 0.0
    %6735 = vmatpush2.msra.mxu0 0.0
    %6736 = vmatprep.subr.mxu0 0.0
    %6737 = vmatpush2.msra.mxu0 0.0
    %6738 = vmatprep.subr.mxu0 0.0
    %6739 = vmatpush2.msra.mxu0 0.0
    %6740 = vmatprep.subr.mxu0 0.0
    %6741 = vmatpush2.msra.mxu0 0.0
    %6742 = vmatprep.subr.mxu0 0.0
    %6743 = vmatpush2.msra.mxu0 0.0
    %6744 = vmatprep.subr.mxu0 0.0
    %6745 = vmatpush2.msra.mxu0 0.0
    %6746 = vmatprep.subr.mxu0 0.0
    %6747 = vmatpush2.msra.mxu0 0.0
    %6748 = vmatprep.subr.mxu0 0.0
    %6749 = vmatpush2.msra.mxu0 0.0
    %6750 = vmatprep.subr.mxu0 0.0
    %6751 = vmatpush2.msra.mxu0 0.0
    %6752 = vmatprep.subr.mxu0 0.0
    %6753 = vmatpush2.msra.mxu0 0.0
    %6754 = vmatprep.subr.mxu0 0.0
    %6755 = vmatpush2.msra.mxu0 0.0
    %6756 = vmatprep.subr.mxu0 0.0
    %6757 = vmatpush2.msra.mxu0 0.0
    %6758 = vmatprep.mubr.f32.mxu0 0.0
    %6759 = vmatmul.mubr.f32.gmra.mxu0 %v5749
    %v6760 = vpop.f32.mrf.mxu0
    %v6761 = vadd.f32 0.0, %v6760
    %v6762 = vpop.f32.mrf.mxu0
    %6763 = vdwg.mxu0
    %6764 = vmatprep.subr.mxu0 0.0
    %6765 = vmatpush1.msra.mxu0 0.0
    %6766 = vmatprep.subr.mxu0 0.0
    %6767 = vmatpush1.msra.mxu0 0.0
    %6768 = vmatprep.subr.mxu0 0.0
    %6769 = vmatpush1.msra.mxu0 0.0
    %6770 = vmatprep.subr.mxu0 0.0
    %6771 = vmatpush1.msra.mxu0 0.0
    %6772 = vmatprep.subr.mxu0 0.0
    %6773 = vmatpush1.msra.mxu0 0.0
    %6774 = vmatprep.subr.mxu0 0.0
    %6775 = vmatpush1.msra.mxu0 0.0
    %6776 = vmatprep.subr.mxu0 0.0
    %6777 = vmatpush1.msra.mxu0 0.0
    %6778 = vmatprep.subr.mxu0 0.0
    %6779 = vmatpush1.msra.mxu0 0.0
    %6780 = vmatprep.subr.mxu0 0.0
    %6781 = vmatpush1.msra.mxu0 0.0
    %6782 = vmatprep.subr.mxu0 0.0
    %6783 = vmatpush1.msra.mxu0 0.0
    %6784 = vmatprep.subr.mxu0 0.0
    %6785 = vmatpush1.msra.mxu0 0.0
    %6786 = vmatprep.subr.mxu0 0.0
    %6787 = vmatpush1.msra.mxu0 0.0
    %6788 = vmatprep.subr.mxu0 0.0
    %6789 = vmatpush1.msra.mxu0 0.0
    %6790 = vmatprep.subr.mxu0 0.0
    %6791 = vmatpush1.msra.mxu0 0.0
    %6792 = vmatprep.subr.mxu0 0.0
    %6793 = vmatpush1.msra.mxu0 0.0
    %6794 = vmatprep.subr.mxu0 0.0
    %6795 = vmatpush1.msra.mxu0 %v6761
    %6796 = vmatprep.subr.mxu0 0.0
    %6797 = vmatpush2.msra.mxu0 0.0
    %6798 = vmatprep.subr.mxu0 0.0
    %6799 = vmatpush2.msra.mxu0 0.0
    %6800 = vmatprep.subr.mxu0 0.0
    %6801 = vmatpush2.msra.mxu0 0.0
    %6802 = vmatprep.subr.mxu0 0.0
    %6803 = vmatpush2.msra.mxu0 0.0
    %6804 = vmatprep.subr.mxu0 0.0
    %6805 = vmatpush2.msra.mxu0 0.0
    %6806 = vmatprep.subr.mxu0 0.0
    %6807 = vmatpush2.msra.mxu0 0.0
    %6808 = vmatprep.subr.mxu0 0.0
    %6809 = vmatpush2.msra.mxu0 0.0
    %6810 = vmatprep.subr.mxu0 0.0
    %6811 = vmatpush2.msra.mxu0 0.0
    %6812 = vmatprep.subr.mxu0 0.0
    %6813 = vmatpush2.msra.mxu0 0.0
    %6814 = vmatprep.subr.mxu0 0.0
    %6815 = vmatpush2.msra.mxu0 0.0
    %6816 = vmatprep.subr.mxu0 0.0
    %6817 = vmatpush2.msra.mxu0 0.0
    %6818 = vmatprep.subr.mxu0 0.0
    %6819 = vmatpush2.msra.mxu0 0.0
    %6820 = vmatprep.subr.mxu0 0.0
    %6821 = vmatpush2.msra.mxu0 0.0
    %6822 = vmatprep.subr.mxu0 0.0
    %6823 = vmatpush2.msra.mxu0 0.0
    %6824 = vmatprep.subr.mxu0 0.0
    %6825 = vmatpush2.msra.mxu0 0.0
    %6826 = vmatprep.subr.mxu0 0.0
    %6827 = vmatpush2.msra.mxu0 0.0
    %6828 = vmatprep.mubr.f32.mxu0 0.0
    %6829 = vmatmul.mubr.f32.gmra.mxu0 %v5503
    %v6830 = vpop.f32.mrf.mxu0
    %v6831 = vadd.f32 1e-16, %v6830
    %v6832 = vpop.f32.mrf.mxu0
    %6833 = vmatprep.mubr.f32.mxu0 0.0
    %6834 = vmatmul.mubr.f32.gmra.mxu0 %v5506
    %v6835 = vpop.f32.mrf.mxu0
    %v6836 = vadd.f32 1e-16, %v6835
    %v6837 = vpop.f32.mrf.mxu0
    %6838 = vmatprep.mubr.f32.mxu0 0.0
    %6839 = vmatmul.mubr.f32.gmra.mxu0 %v5509
    %v6840 = vpop.f32.mrf.mxu0
    %v6841 = vadd.f32 1e-16, %v6840
    %v6842 = vpop.f32.mrf.mxu0
    %6843 = vmatprep.mubr.f32.mxu0 0.0
    %6844 = vmatmul.mubr.f32.gmra.mxu0 %v5512
    %v6845 = vpop.f32.mrf.mxu0
    %v6846 = vadd.f32 1e-16, %v6845
    %v6847 = vpop.f32.mrf.mxu0
    %6848 = vmatprep.mubr.f32.mxu0 0.0
    %6849 = vmatmul.mubr.f32.gmra.mxu0 %v5515
    %v6850 = vpop.f32.mrf.mxu0
    %v6851 = vadd.f32 1e-16, %v6850
    %v6852 = vpop.f32.mrf.mxu0
    %6853 = vmatprep.mubr.f32.mxu0 0.0
    %6854 = vmatmul.mubr.f32.gmra.mxu0 %v5518
    %v6855 = vpop.f32.mrf.mxu0
    %v6856 = vadd.f32 1e-16, %v6855
    %v6857 = vpop.f32.mrf.mxu0
    %6858 = vmatprep.mubr.f32.mxu0 0.0
    %6859 = vmatmul.mubr.f32.gmra.mxu0 %v5521
    %v6860 = vpop.f32.mrf.mxu0
    %v6861 = vadd.f32 1e-16, %v6860
    %v6862 = vpop.f32.mrf.mxu0
    %6863 = vmatprep.mubr.f32.mxu0 0.0
    %6864 = vmatmul.mubr.f32.gmra.mxu0 %v5524
    %v6865 = vpop.f32.mrf.mxu0
    %v6866 = vadd.f32 1e-16, %v6865
    %v6867 = vpop.f32.mrf.mxu0
    %6868 = vdwg.mxu0
    %v6869 = vrcp.pop %v6831
    %v6870 = vrcp.pop %v6836
    %v6871 = vrcp.pop %v6841
    %v6872 = vrcp.pop %v6846
    %v6873 = vrcp.pop %v6851
    %v6874 = vrcp.pop %v6856
    %v6875 = vrcp.pop %v6861
    %v6876 = vrcp.pop %v6866
    %v6877 = vmul.f32 %v6679, %v6869
    %v6878 = vmul.f32 %v6681, %v6870
    %v6879 = vmul.f32 %v6683, %v6871
    %v6880 = vmul.f32 %v6685, %v6872
    %v6881 = vmul.f32 %v6687, %v6873
    %v6882 = vmul.f32 %v6689, %v6874
    %v6883 = vmul.f32 %v6691, %v6875
    %v6884 = vmul.f32 %v6693, %v6876
    %6886 = vset.pattern.permute.xlu0 0
    %6887 = vperm.xlu0 %6886, %v6877
    %v6888 = vpop.permute.xlu0 %6887
    %6891 = vset.pattern.permute.xlu0 0
    %6892 = vperm.xlu0 %6891, %v6878
    %v6893 = vpop.permute.xlu0 %6892
    %6896 = vset.pattern.permute.xlu0 0
    %6897 = vperm.xlu0 %6896, %v6879
    %v6898 = vpop.permute.xlu0 %6897
    %6901 = vset.pattern.permute.xlu0 0
    %6902 = vperm.xlu0 %6901, %v6880
    %v6903 = vpop.permute.xlu0 %6902
    %6906 = vset.pattern.permute.xlu0 0
    %6907 = vperm.xlu0 %6906, %v6881
    %v6908 = vpop.permute.xlu0 %6907
    %6911 = vset.pattern.permute.xlu0 0
    %6912 = vperm.xlu0 %6911, %v6882
    %v6913 = vpop.permute.xlu0 %6912
    %6916 = vset.pattern.permute.xlu0 0
    %6917 = vperm.xlu0 %6916, %v6883
    %v6918 = vpop.permute.xlu0 %6917
    %6921 = vset.pattern.permute.xlu0 0
    %6922 = vperm.xlu0 %6921, %v6884
    %v6923 = vpop.permute.xlu0 %6922
    %v6925 = vmul.f32 %v6888, %v4992
    %v6926 = vmul.f32 %v6893, %v4993
    %v6927 = vmul.f32 %v6898, %v4994
    %v6928 = vmul.f32 %v6903, %v4995
    %v6929 = vmul.f32 %v6908, %v4996
    %v6930 = vmul.f32 %v6913, %v4997
    %v6931 = vmul.f32 %v6918, %v4998
    %v6932 = vmul.f32 %v6923, %v4999
    %6933 = vmatprep.subr.mxu0 0.0
    %6934 = vmatpush1.msra.mxu0 0.0
    %6935 = vmatprep.subr.mxu0 0.0
    %6936 = vmatpush1.msra.mxu0 0.0
    %6937 = vmatprep.subr.mxu0 0.0
    %6938 = vmatpush1.msra.mxu0 0.0
    %6939 = vmatprep.subr.mxu0 0.0
    %6940 = vmatpush1.msra.mxu0 0.0
    %6941 = vmatprep.subr.mxu0 0.0
    %6942 = vmatpush1.msra.mxu0 0.0
    %6943 = vmatprep.subr.mxu0 0.0
    %6944 = vmatpush1.msra.mxu0 0.0
    %6945 = vmatprep.subr.mxu0 0.0
    %6946 = vmatpush1.msra.mxu0 0.0
    %6947 = vmatprep.subr.mxu0 0.0
    %6948 = vmatpush1.msra.mxu0 0.0
    %6949 = vmatprep.subr.mxu0 0.0
    %6950 = vmatpush1.msra.mxu0 %v6932
    %6951 = vmatprep.subr.mxu0 0.0
    %6952 = vmatpush1.msra.mxu0 %v6931
    %6953 = vmatprep.subr.mxu0 0.0
    %6954 = vmatpush1.msra.mxu0 %v6930
    %6955 = vmatprep.subr.mxu0 0.0
    %6956 = vmatpush1.msra.mxu0 %v6929
    %6957 = vmatprep.subr.mxu0 0.0
    %6958 = vmatpush1.msra.mxu0 %v6928
    %6959 = vmatprep.subr.mxu0 0.0
    %6960 = vmatpush1.msra.mxu0 %v6927
    %6961 = vmatprep.subr.mxu0 0.0
    %6962 = vmatpush1.msra.mxu0 %v6926
    %6963 = vmatprep.subr.mxu0 0.0
    %6964 = vmatpush1.msra.mxu0 %v6925
    %6965 = vmatprep.subr.mxu0 0.0
    %6966 = vmatpush2.msra.mxu0 0.0
    %6967 = vmatprep.subr.mxu0 0.0
    %6968 = vmatpush2.msra.mxu0 0.0
    %6969 = vmatprep.subr.mxu0 0.0
    %6970 = vmatpush2.msra.mxu0 0.0
    %6971 = vmatprep.subr.mxu0 0.0
    %6972 = vmatpush2.msra.mxu0 0.0
    %6973 = vmatprep.subr.mxu0 0.0
    %6974 = vmatpush2.msra.mxu0 0.0
    %6975 = vmatprep.subr.mxu0 0.0
    %6976 = vmatpush2.msra.mxu0 0.0
    %6977 = vmatprep.subr.mxu0 0.0
    %6978 = vmatpush2.msra.mxu0 0.0
    %6979 = vmatprep.subr.mxu0 0.0
    %6980 = vmatpush2.msra.mxu0 0.0
    %6981 = vmatprep.subr.mxu0 0.0
    %6982 = vmatpush2.msra.mxu0 0.0
    %6983 = vmatprep.subr.mxu0 0.0
    %6984 = vmatpush2.msra.mxu0 0.0
    %6985 = vmatprep.subr.mxu0 0.0
    %6986 = vmatpush2.msra.mxu0 0.0
    %6987 = vmatprep.subr.mxu0 0.0
    %6988 = vmatpush2.msra.mxu0 0.0
    %6989 = vmatprep.subr.mxu0 0.0
    %6990 = vmatpush2.msra.mxu0 0.0
    %6991 = vmatprep.subr.mxu0 0.0
    %6992 = vmatpush2.msra.mxu0 0.0
    %6993 = vmatprep.subr.mxu0 0.0
    %6994 = vmatpush2.msra.mxu0 0.0
    %6995 = vmatprep.subr.mxu0 0.0
    %6996 = vmatpush2.msra.mxu0 0.0
    %6997 = vmatprep.mubr.f32.mxu0 0.0
    %6998 = vmatmul.mubr.f32.gmra.mxu0 %v5749
    %v6999 = vpop.f32.mrf.mxu0
    %v7000 = vadd.f32 0.0, %v6999
    %v7001 = vpop.f32.mrf.mxu0
    %7002 = vdwg.mxu0
    %7003 = vmatprep.subr.mxu0 0.0
    %7004 = vmatpush1.msra.mxu0 %v5019
    %7005 = vmatprep.subr.mxu0 0.0
    %7006 = vmatpush1.msra.mxu0 %v5018
    %7007 = vmatprep.subr.mxu0 0.0
    %7008 = vmatpush1.msra.mxu0 %v5017
    %7009 = vmatprep.subr.mxu0 0.0
    %7010 = vmatpush1.msra.mxu0 %v5016
    %7011 = vmatprep.subr.mxu0 0.0
    %7012 = vmatpush1.msra.mxu0 %v5015
    %7013 = vmatprep.subr.mxu0 0.0
    %7014 = vmatpush1.msra.mxu0 %v5014
    %7015 = vmatprep.subr.mxu0 0.0
    %7016 = vmatpush1.msra.mxu0 %v5013
    %7017 = vmatprep.subr.mxu0 0.0
    %7018 = vmatpush1.msra.mxu0 %v5012
    %7019 = vmatprep.subr.mxu0 0.0
    %7020 = vmatpush1.msra.mxu0 %v5011
    %7021 = vmatprep.subr.mxu0 0.0
    %7022 = vmatpush1.msra.mxu0 %v5010
    %7023 = vmatprep.subr.mxu0 0.0
    %7024 = vmatpush1.msra.mxu0 %v5009
    %7025 = vmatprep.subr.mxu0 0.0
    %7026 = vmatpush1.msra.mxu0 %v5008
    %7027 = vmatprep.subr.mxu0 0.0
    %7028 = vmatpush1.msra.mxu0 %v5007
    %7029 = vmatprep.subr.mxu0 0.0
    %7030 = vmatpush1.msra.mxu0 %v5006
    %7031 = vmatprep.subr.mxu0 0.0
    %7032 = vmatpush1.msra.mxu0 %v5005
    %7033 = vmatprep.subr.mxu0 0.0
    %7034 = vmatpush1.msra.mxu0 %v5004
    %7035 = vmatprep.subr.mxu0 0.0
    %7036 = vmatpush2.msra.mxu0 0.0
    %7037 = vmatprep.subr.mxu0 0.0
    %7038 = vmatpush2.msra.mxu0 0.0
    %7039 = vmatprep.subr.mxu0 0.0
    %7040 = vmatpush2.msra.mxu0 0.0
    %7041 = vmatprep.subr.mxu0 0.0
    %7042 = vmatpush2.msra.mxu0 0.0
    %7043 = vmatprep.subr.mxu0 0.0
    %7044 = vmatpush2.msra.mxu0 0.0
    %7045 = vmatprep.subr.mxu0 0.0
    %7046 = vmatpush2.msra.mxu0 0.0
    %7047 = vmatprep.subr.mxu0 0.0
    %7048 = vmatpush2.msra.mxu0 0.0
    %7049 = vmatprep.subr.mxu0 0.0
    %7050 = vmatpush2.msra.mxu0 0.0
    %7051 = vmatprep.subr.mxu0 0.0
    %7052 = vmatpush2.msra.mxu0 0.0
    %7053 = vmatprep.subr.mxu0 0.0
    %7054 = vmatpush2.msra.mxu0 0.0
    %7055 = vmatprep.subr.mxu0 0.0
    %7056 = vmatpush2.msra.mxu0 0.0
    %7057 = vmatprep.subr.mxu0 0.0
    %7058 = vmatpush2.msra.mxu0 0.0
    %7059 = vmatprep.subr.mxu0 0.0
    %7060 = vmatpush2.msra.mxu0 0.0
    %7061 = vmatprep.subr.mxu0 0.0
    %7062 = vmatpush2.msra.mxu0 0.0
    %7063 = vmatprep.subr.mxu0 0.0
    %7064 = vmatpush2.msra.mxu0 0.0
    %7065 = vmatprep.subr.mxu0 0.0
    %7066 = vmatpush2.msra.mxu0 0.0
    %7067 = vmatprep.mubr.f32.mxu0 0.0
    %7068 = vmatmul.mubr.f32.gmra.mxu0 %v7000
    %v7069 = vpop.f32.mrf.mxu0
    %v7070 = vadd.f32 0.0, %v7069
    %v7071 = vpop.f32.mrf.mxu0
    %7072 = vdwg.mxu0
    %v7073 = vsel %vm1281, %v6470, 0
    %7075 = vmatprep.subr.mxu0 0.0
    %7076 = vmatpush1.msra.mxu0 0.0
    %7077 = vmatprep.subr.mxu0 0.0
    %7078 = vmatpush1.msra.mxu0 0.0
    %7079 = vmatprep.subr.mxu0 0.0
    %7080 = vmatpush1.msra.mxu0 0.0
    %7081 = vmatprep.subr.mxu0 0.0
    %7082 = vmatpush1.msra.mxu0 0.0
    %7083 = vmatprep.subr.mxu0 0.0
    %7084 = vmatpush1.msra.mxu0 0.0
    %7085 = vmatprep.subr.mxu0 0.0
    %7086 = vmatpush1.msra.mxu0 0.0
    %7087 = vmatprep.subr.mxu0 0.0
    %7088 = vmatpush1.msra.mxu0 0.0
    %7089 = vmatprep.subr.mxu0 0.0
    %7090 = vmatpush1.msra.mxu0 0.0
    %7091 = vmatprep.subr.mxu0 0.0
    %7092 = vmatpush1.msra.mxu0 0.0
    %7093 = vmatprep.subr.mxu0 0.0
    %7094 = vmatpush1.msra.mxu0 0.0
    %7095 = vmatprep.subr.mxu0 0.0
    %7096 = vmatpush1.msra.mxu0 0.0
    %7097 = vmatprep.subr.mxu0 0.0
    %7098 = vmatpush1.msra.mxu0 0.0
    %7099 = vmatprep.subr.mxu0 0.0
    %7100 = vmatpush1.msra.mxu0 %v5003
    %7101 = vmatprep.subr.mxu0 0.0
    %7102 = vmatpush1.msra.mxu0 %v5002
    %7103 = vmatprep.subr.mxu0 0.0
    %7104 = vmatpush1.msra.mxu0 %v5001
    %7105 = vmatprep.subr.mxu0 0.0
    %7106 = vmatpush1.msra.mxu0 %v5000
    %7107 = vmatprep.subr.mxu0 0.0
    %7108 = vmatpush2.msra.mxu0 0.0
    %7109 = vmatprep.subr.mxu0 0.0
    %7110 = vmatpush2.msra.mxu0 0.0
    %7111 = vmatprep.subr.mxu0 0.0
    %7112 = vmatpush2.msra.mxu0 0.0
    %7113 = vmatprep.subr.mxu0 0.0
    %7114 = vmatpush2.msra.mxu0 0.0
    %7115 = vmatprep.subr.mxu0 0.0
    %7116 = vmatpush2.msra.mxu0 0.0
    %7117 = vmatprep.subr.mxu0 0.0
    %7118 = vmatpush2.msra.mxu0 0.0
    %7119 = vmatprep.subr.mxu0 0.0
    %7120 = vmatpush2.msra.mxu0 0.0
    %7121 = vmatprep.subr.mxu0 0.0
    %7122 = vmatpush2.msra.mxu0 0.0
    %7123 = vmatprep.subr.mxu0 0.0
    %7124 = vmatpush2.msra.mxu0 0.0
    %7125 = vmatprep.subr.mxu0 0.0
    %7126 = vmatpush2.msra.mxu0 0.0
    %7127 = vmatprep.subr.mxu0 0.0
    %7128 = vmatpush2.msra.mxu0 0.0
    %7129 = vmatprep.subr.mxu0 0.0
    %7130 = vmatpush2.msra.mxu0 0.0
    %7131 = vmatprep.subr.mxu0 0.0
    %7132 = vmatpush2.msra.mxu0 0.0
    %7133 = vmatprep.subr.mxu0 0.0
    %7134 = vmatpush2.msra.mxu0 0.0
    %7135 = vmatprep.subr.mxu0 0.0
    %7136 = vmatpush2.msra.mxu0 0.0
    %7137 = vmatprep.subr.mxu0 0.0
    %7138 = vmatpush2.msra.mxu0 0.0
    %7139 = vmatprep.mubr.f32.mxu0 0.0
    %7140 = vmatmul.mubr.f32.gmra.mxu0 %v7073
    %v7141 = vpop.f32.mrf.mxu0
    %v7142 = vadd.f32 %v7070, %v7141
    %v7143 = vpop.f32.mrf.mxu0
    %7144 = vdwg.mxu0
    %7145 = vmatprep.subr.mxu0 0.0
    %7146 = vmatpush1.msra.mxu0 0.0
    %7147 = vmatprep.subr.mxu0 0.0
    %7148 = vmatpush1.msra.mxu0 0.0
    %7149 = vmatprep.subr.mxu0 0.0
    %7150 = vmatpush1.msra.mxu0 0.0
    %7151 = vmatprep.subr.mxu0 0.0
    %7152 = vmatpush1.msra.mxu0 0.0
    %7153 = vmatprep.subr.mxu0 0.0
    %7154 = vmatpush1.msra.mxu0 0.0
    %7155 = vmatprep.subr.mxu0 0.0
    %7156 = vmatpush1.msra.mxu0 0.0
    %7157 = vmatprep.subr.mxu0 0.0
    %7158 = vmatpush1.msra.mxu0 0.0
    %7159 = vmatprep.subr.mxu0 0.0
    %7160 = vmatpush1.msra.mxu0 0.0
    %7161 = vmatprep.subr.mxu0 0.0
    %7162 = vmatpush1.msra.mxu0 0.0
    %7163 = vmatprep.subr.mxu0 0.0
    %7164 = vmatpush1.msra.mxu0 0.0
    %7165 = vmatprep.subr.mxu0 0.0
    %7166 = vmatpush1.msra.mxu0 0.0
    %7167 = vmatprep.subr.mxu0 0.0
    %7168 = vmatpush1.msra.mxu0 0.0
    %7169 = vmatprep.subr.mxu0 0.0
    %7170 = vmatpush1.msra.mxu0 %v5023
    %7171 = vmatprep.subr.mxu0 0.0
    %7172 = vmatpush1.msra.mxu0 %v5022
    %7173 = vmatprep.subr.mxu0 0.0
    %7174 = vmatpush1.msra.mxu0 %v5021
    %7175 = vmatprep.subr.mxu0 0.0
    %7176 = vmatpush1.msra.mxu0 %v5020
    %7177 = vmatprep.subr.mxu0 0.0
    %7178 = vmatpush2.msra.mxu0 0.0
    %7179 = vmatprep.subr.mxu0 0.0
    %7180 = vmatpush2.msra.mxu0 0.0
    %7181 = vmatprep.subr.mxu0 0.0
    %7182 = vmatpush2.msra.mxu0 0.0
    %7183 = vmatprep.subr.mxu0 0.0
    %7184 = vmatpush2.msra.mxu0 0.0
    %7185 = vmatprep.subr.mxu0 0.0
    %7186 = vmatpush2.msra.mxu0 0.0
    %7187 = vmatprep.subr.mxu0 0.0
    %7188 = vmatpush2.msra.mxu0 0.0
    %7189 = vmatprep.subr.mxu0 0.0
    %7190 = vmatpush2.msra.mxu0 0.0
    %7191 = vmatprep.subr.mxu0 0.0
    %7192 = vmatpush2.msra.mxu0 0.0
    %7193 = vmatprep.subr.mxu0 0.0
    %7194 = vmatpush2.msra.mxu0 0.0
    %7195 = vmatprep.subr.mxu0 0.0
    %7196 = vmatpush2.msra.mxu0 0.0
    %7197 = vmatprep.subr.mxu0 0.0
    %7198 = vmatpush2.msra.mxu0 0.0
    %7199 = vmatprep.subr.mxu0 0.0
    %7200 = vmatpush2.msra.mxu0 0.0
    %7201 = vmatprep.subr.mxu0 0.0
    %7202 = vmatpush2.msra.mxu0 0.0
    %7203 = vmatprep.subr.mxu0 0.0
    %7204 = vmatpush2.msra.mxu0 0.0
    %7205 = vmatprep.subr.mxu0 0.0
    %7206 = vmatpush2.msra.mxu0 0.0
    %7207 = vmatprep.subr.mxu0 0.0
    %7208 = vmatpush2.msra.mxu0 0.0
    %7209 = vmatprep.mubr.f32.mxu0 0.0
    %7210 = vmatmul.mubr.f32.gmra.mxu0 %v6371
    %v7211 = vpop.f32.mrf.mxu0
    %v7212 = vadd.f32 0.0, %v7211
    %v7213 = vpop.f32.mrf.mxu0
    %7214 = vdwg.mxu0
    %v7215 = vadd.f32 %v7142, %v7212
    %v7216 = vadd.f32 %v7215, %v5297
    %v7217 = vxor.u32 %v7216, 2147483648
    %v7218 = vmul.f32 %v7217, 1.442695
    %v7219 = vpow.pop %v7218
    %v7220 = vadd.f32 %v7219, 1.0
    %v7221 = vrcp.pop %v7220
    %v7222 = vmul.f32 1.0, %v7221
    %v7223 = vtanh.pop %v7216
    %v7224 = vmul.f32 %v7222, %v6291
    %7226 = vrot.lane.b32.xlu0 %v7223, 64
    %v7227 = vpop.permute.xlu0 %7226
    %v7229 = vmul.f32 %v7222, %v7227
    %7231 = vrot.lane.b32.xlu0 %v7229, 32
    %v7232 = vpop.permute.xlu0 %7231
    %v7234 = vadd.f32 %v7224, %v7232
    %v7235 = vtanh.pop %v7234
    %7237 = vrot.lane.b32.xlu0 %v7235, 64
    %v7238 = vpop.permute.xlu0 %7237
    %v7240 = vmul.f32 %v7222, %v7238
    %7241 = vmatprep.subr.mxu0 0.0
    %7242 = vmatpush1.msra.mxu0 0.0
    %7243 = vmatprep.subr.mxu0 0.0
    %7244 = vmatpush1.msra.mxu0 0.0
    %7245 = vmatprep.subr.mxu0 0.0
    %7246 = vmatpush1.msra.mxu0 0.0
    %7247 = vmatprep.subr.mxu0 0.0
    %7248 = vmatpush1.msra.mxu0 0.0
    %7249 = vmatprep.subr.mxu0 0.0
    %7250 = vmatpush1.msra.mxu0 0.0
    %7251 = vmatprep.subr.mxu0 0.0
    %7252 = vmatpush1.msra.mxu0 0.0
    %7253 = vmatprep.subr.mxu0 0.0
    %7254 = vmatpush1.msra.mxu0 0.0
    %7255 = vmatprep.subr.mxu0 0.0
    %7256 = vmatpush1.msra.mxu0 0.0
    %7257 = vmatprep.subr.mxu0 0.0
    %7258 = vmatpush1.msra.mxu0 0.0
    %7259 = vmatprep.subr.mxu0 0.0
    %7260 = vmatpush1.msra.mxu0 0.0
    %7261 = vmatprep.subr.mxu0 0.0
    %7262 = vmatpush1.msra.mxu0 0.0
    %7263 = vmatprep.subr.mxu0 0.0
    %7264 = vmatpush1.msra.mxu0 0.0
    %7265 = vmatprep.subr.mxu0 0.0
    %7266 = vmatpush1.msra.mxu0 %v5032
    %7267 = vmatprep.subr.mxu0 0.0
    %7268 = vmatpush1.msra.mxu0 %v5031
    %7269 = vmatprep.subr.mxu0 0.0
    %7270 = vmatpush1.msra.mxu0 %v5030
    %7271 = vmatprep.subr.mxu0 0.0
    %7272 = vmatpush1.msra.mxu0 %v5029
    %7273 = vmatprep.subr.mxu0 0.0
    %7274 = vmatpush2.msra.mxu0 0.0
    %7275 = vmatprep.subr.mxu0 0.0
    %7276 = vmatpush2.msra.mxu0 0.0
    %7277 = vmatprep.subr.mxu0 0.0
    %7278 = vmatpush2.msra.mxu0 0.0
    %7279 = vmatprep.subr.mxu0 0.0
    %7280 = vmatpush2.msra.mxu0 0.0
    %7281 = vmatprep.subr.mxu0 0.0
    %7282 = vmatpush2.msra.mxu0 0.0
    %7283 = vmatprep.subr.mxu0 0.0
    %7284 = vmatpush2.msra.mxu0 0.0
    %7285 = vmatprep.subr.mxu0 0.0
    %7286 = vmatpush2.msra.mxu0 0.0
    %7287 = vmatprep.subr.mxu0 0.0
    %7288 = vmatpush2.msra.mxu0 0.0
    %7289 = vmatprep.subr.mxu0 0.0
    %7290 = vmatpush2.msra.mxu0 0.0
    %7291 = vmatprep.subr.mxu0 0.0
    %7292 = vmatpush2.msra.mxu0 0.0
    %7293 = vmatprep.subr.mxu0 0.0
    %7294 = vmatpush2.msra.mxu0 0.0
    %7295 = vmatprep.subr.mxu0 0.0
    %7296 = vmatpush2.msra.mxu0 0.0
    %7297 = vmatprep.subr.mxu0 0.0
    %7298 = vmatpush2.msra.mxu0 0.0
    %7299 = vmatprep.subr.mxu0 0.0
    %7300 = vmatpush2.msra.mxu0 0.0
    %7301 = vmatprep.subr.mxu0 0.0
    %7302 = vmatpush2.msra.mxu0 0.0
    %7303 = vmatprep.subr.mxu0 0.0
    %7304 = vmatpush2.msra.mxu0 0.0
    %7305 = vmatprep.mubr.f32.mxu0 0.0
    %7306 = vmatmul.mubr.f32.gmra.mxu0 %v7073
    %v7307 = vpop.f32.mrf.mxu0
    %v7308 = vadd.f32 0.0, %v7307
    %v7309 = vpop.f32.mrf.mxu0
    %7310 = vdwg.mxu0
    %7312 = vrot.lane.b32.xlu0 %v7240, 32
    %v7313 = vpop.permute.xlu0 %7312
    %v7314 = vsel %vm1281, %v7313, 0
    %7316 = vmatprep.subr.mxu0 0.0
    %7317 = vmatpush1.msra.mxu0 0.0
    %7318 = vmatprep.subr.mxu0 0.0
    %7319 = vmatpush1.msra.mxu0 0.0
    %7320 = vmatprep.subr.mxu0 0.0
    %7321 = vmatpush1.msra.mxu0 0.0
    %7322 = vmatprep.subr.mxu0 0.0
    %7323 = vmatpush1.msra.mxu0 0.0
    %7324 = vmatprep.subr.mxu0 0.0
    %7325 = vmatpush1.msra.mxu0 0.0
    %7326 = vmatprep.subr.mxu0 0.0
    %7327 = vmatpush1.msra.mxu0 0.0
    %7328 = vmatprep.subr.mxu0 0.0
    %7329 = vmatpush1.msra.mxu0 0.0
    %7330 = vmatprep.subr.mxu0 0.0
    %7331 = vmatpush1.msra.mxu0 0.0
    %7332 = vmatprep.subr.mxu0 0.0
    %7333 = vmatpush1.msra.mxu0 0.0
    %7334 = vmatprep.subr.mxu0 0.0
    %7335 = vmatpush1.msra.mxu0 0.0
    %7336 = vmatprep.subr.mxu0 0.0
    %7337 = vmatpush1.msra.mxu0 0.0
    %7338 = vmatprep.subr.mxu0 0.0
    %7339 = vmatpush1.msra.mxu0 0.0
    %7340 = vmatprep.subr.mxu0 0.0
    %7341 = vmatpush1.msra.mxu0 %v5028
    %7342 = vmatprep.subr.mxu0 0.0
    %7343 = vmatpush1.msra.mxu0 %v5027
    %7344 = vmatprep.subr.mxu0 0.0
    %7345 = vmatpush1.msra.mxu0 %v5026
    %7346 = vmatprep.subr.mxu0 0.0
    %7347 = vmatpush1.msra.mxu0 %v5025
    %7348 = vmatprep.subr.mxu0 0.0
    %7349 = vmatpush2.msra.mxu0 0.0
    %7350 = vmatprep.subr.mxu0 0.0
    %7351 = vmatpush2.msra.mxu0 0.0
    %7352 = vmatprep.subr.mxu0 0.0
    %7353 = vmatpush2.msra.mxu0 0.0
    %7354 = vmatprep.subr.mxu0 0.0
    %7355 = vmatpush2.msra.mxu0 0.0
    %7356 = vmatprep.subr.mxu0 0.0
    %7357 = vmatpush2.msra.mxu0 0.0
    %7358 = vmatprep.subr.mxu0 0.0
    %7359 = vmatpush2.msra.mxu0 0.0
    %7360 = vmatprep.subr.mxu0 0.0
    %7361 = vmatpush2.msra.mxu0 0.0
    %7362 = vmatprep.subr.mxu0 0.0
    %7363 = vmatpush2.msra.mxu0 0.0
    %7364 = vmatprep.subr.mxu0 0.0
    %7365 = vmatpush2.msra.mxu0 0.0
    %7366 = vmatprep.subr.mxu0 0.0
    %7367 = vmatpush2.msra.mxu0 0.0
    %7368 = vmatprep.subr.mxu0 0.0
    %7369 = vmatpush2.msra.mxu0 0.0
    %7370 = vmatprep.subr.mxu0 0.0
    %7371 = vmatpush2.msra.mxu0 0.0
    %7372 = vmatprep.subr.mxu0 0.0
    %7373 = vmatpush2.msra.mxu0 0.0
    %7374 = vmatprep.subr.mxu0 0.0
    %7375 = vmatpush2.msra.mxu0 0.0
    %7376 = vmatprep.subr.mxu0 0.0
    %7377 = vmatpush2.msra.mxu0 0.0
    %7378 = vmatprep.subr.mxu0 0.0
    %7379 = vmatpush2.msra.mxu0 0.0
    %7380 = vmatprep.mubr.f32.mxu0 0.0
    %7381 = vmatmul.mubr.f32.gmra.mxu0 %v7314
    %v7382 = vpop.f32.mrf.mxu0
    %v7383 = vadd.f32 %v7308, %v7382
    %v7384 = vpop.f32.mrf.mxu0
    %7385 = vdwg.mxu0
    %v7386 = vadd.f32 %v7383, %v5471
    %v7387 = vxor.u32 %v7386, 2147483648
    %v7388 = vmul.f32 %v7387, 1.442695
    %v7389 = vpow.pop %v7388
    %v7390 = vadd.f32 %v7389, 1.0
    %v7391 = vrcp.pop %v7390
    %v7392 = vmul.f32 1.0, %v7391
    %v7393 = vtanh.pop %v7386
    %v7394 = vmul.f32 %v7392, %v6461
    %7396 = vrot.lane.b32.xlu0 %v7393, 64
    %v7397 = vpop.permute.xlu0 %7396
    %v7399 = vmul.f32 %v7392, %v7397
    %7401 = vrot.lane.b32.xlu0 %v7399, 32
    %v7402 = vpop.permute.xlu0 %7401
    %v7404 = vadd.f32 %v7394, %v7402
    %v7405 = vtanh.pop %v7404
    %7407 = vrot.lane.b32.xlu0 %v7405, 64
    %v7408 = vpop.permute.xlu0 %7407
    %v7410 = vmul.f32 %v7392, %v7408
    %7412 = vrot.lane.b32.xlu0 %v7410, 32
    %v7413 = vpop.permute.xlu0 %7412
    %7415 = vmatprep.subr.mxu0 0.0
    %7416 = vmatpush1.msra.mxu0 0.0
    %7417 = vmatprep.subr.mxu0 0.0
    %7418 = vmatpush1.msra.mxu0 0.0
    %7419 = vmatprep.subr.mxu0 0.0
    %7420 = vmatpush1.msra.mxu0 0.0
    %7421 = vmatprep.subr.mxu0 0.0
    %7422 = vmatpush1.msra.mxu0 0.0
    %7423 = vmatprep.subr.mxu0 0.0
    %7424 = vmatpush1.msra.mxu0 0.0
    %7425 = vmatprep.subr.mxu0 0.0
    %7426 = vmatpush1.msra.mxu0 0.0
    %7427 = vmatprep.subr.mxu0 0.0
    %7428 = vmatpush1.msra.mxu0 0.0
    %7429 = vmatprep.subr.mxu0 0.0
    %7430 = vmatpush1.msra.mxu0 0.0
    %7431 = vmatprep.subr.mxu0 0.0
    %7432 = vmatpush1.msra.mxu0 0.0
    %7433 = vmatprep.subr.mxu0 0.0
    %7434 = vmatpush1.msra.mxu0 0.0
    %7435 = vmatprep.subr.mxu0 0.0
    %7436 = vmatpush1.msra.mxu0 0.0
    %7437 = vmatprep.subr.mxu0 0.0
    %7438 = vmatpush1.msra.mxu0 0.0
    %7439 = vmatprep.subr.mxu0 0.0
    %7440 = vmatpush1.msra.mxu0 0.0
    %7441 = vmatprep.subr.mxu0 0.0
    %7442 = vmatpush1.msra.mxu0 0.0
    %7443 = vmatprep.subr.mxu0 0.0
    %7444 = vmatpush1.msra.mxu0 0.0
    %7445 = vmatprep.subr.mxu0 0.0
    %7446 = vmatpush1.msra.mxu0 %v7413
    %7447 = vmatprep.subr.mxu0 0.0
    %7448 = vmatpush2.msra.mxu0 0.0
    %7449 = vmatprep.subr.mxu0 0.0
    %7450 = vmatpush2.msra.mxu0 0.0
    %7451 = vmatprep.subr.mxu0 0.0
    %7452 = vmatpush2.msra.mxu0 0.0
    %7453 = vmatprep.subr.mxu0 0.0
    %7454 = vmatpush2.msra.mxu0 0.0
    %7455 = vmatprep.subr.mxu0 0.0
    %7456 = vmatpush2.msra.mxu0 0.0
    %7457 = vmatprep.subr.mxu0 0.0
    %7458 = vmatpush2.msra.mxu0 0.0
    %7459 = vmatprep.subr.mxu0 0.0
    %7460 = vmatpush2.msra.mxu0 0.0
    %7461 = vmatprep.subr.mxu0 0.0
    %7462 = vmatpush2.msra.mxu0 0.0
    %7463 = vmatprep.subr.mxu0 0.0
    %7464 = vmatpush2.msra.mxu0 0.0
    %7465 = vmatprep.subr.mxu0 0.0
    %7466 = vmatpush2.msra.mxu0 0.0
    %7467 = vmatprep.subr.mxu0 0.0
    %7468 = vmatpush2.msra.mxu0 0.0
    %7469 = vmatprep.subr.mxu0 0.0
    %7470 = vmatpush2.msra.mxu0 0.0
    %7471 = vmatprep.subr.mxu0 0.0
    %7472 = vmatpush2.msra.mxu0 0.0
    %7473 = vmatprep.subr.mxu0 0.0
    %7474 = vmatpush2.msra.mxu0 0.0
    %7475 = vmatprep.subr.mxu0 0.0
    %7476 = vmatpush2.msra.mxu0 0.0
    %7477 = vmatprep.subr.mxu0 0.0
    %7478 = vmatpush2.msra.mxu0 0.0
    %7479 = vmatprep.mubr.f32.mxu0 0.0
    %7480 = vmatmul.mubr.f32.gmra.mxu0 %v5503
    %v7481 = vpop.f32.mrf.mxu0
    %v7482 = vadd.f32 0.0, %v7481
    %v7483 = vpop.f32.mrf.mxu0
    %7484 = vmatprep.mubr.f32.mxu0 0.0
    %7485 = vmatmul.mubr.f32.gmra.mxu0 %v5506
    %v7486 = vpop.f32.mrf.mxu0
    %v7487 = vadd.f32 0.0, %v7486
    %v7488 = vpop.f32.mrf.mxu0
    %7489 = vmatprep.mubr.f32.mxu0 0.0
    %7490 = vmatmul.mubr.f32.gmra.mxu0 %v5509
    %v7491 = vpop.f32.mrf.mxu0
    %v7492 = vadd.f32 0.0, %v7491
    %v7493 = vpop.f32.mrf.mxu0
    %7494 = vmatprep.mubr.f32.mxu0 0.0
    %7495 = vmatmul.mubr.f32.gmra.mxu0 %v5512
    %v7496 = vpop.f32.mrf.mxu0
    %v7497 = vadd.f32 0.0, %v7496
    %v7498 = vpop.f32.mrf.mxu0
    %7499 = vmatprep.mubr.f32.mxu0 0.0
    %7500 = vmatmul.mubr.f32.gmra.mxu0 %v5515
    %v7501 = vpop.f32.mrf.mxu0
    %v7502 = vadd.f32 0.0, %v7501
    %v7503 = vpop.f32.mrf.mxu0
    %7504 = vmatprep.mubr.f32.mxu0 0.0
    %7505 = vmatmul.mubr.f32.gmra.mxu0 %v5518
    %v7506 = vpop.f32.mrf.mxu0
    %v7507 = vadd.f32 0.0, %v7506
    %v7508 = vpop.f32.mrf.mxu0
    %7509 = vmatprep.mubr.f32.mxu0 0.0
    %7510 = vmatmul.mubr.f32.gmra.mxu0 %v5521
    %v7511 = vpop.f32.mrf.mxu0
    %v7512 = vadd.f32 0.0, %v7511
    %v7513 = vpop.f32.mrf.mxu0
    %7514 = vmatprep.mubr.f32.mxu0 0.0
    %7515 = vmatmul.mubr.f32.gmra.mxu0 %v5524
    %v7516 = vpop.f32.mrf.mxu0
    %v7517 = vadd.f32 0.0, %v7516
    %v7518 = vpop.f32.mrf.mxu0
    %7519 = vdwg.mxu0
    %v7520 = vmul.f32 %v4992, %v7482
    %v7521 = vmul.f32 %v4993, %v7487
    %v7522 = vmul.f32 %v4994, %v7492
    %v7523 = vmul.f32 %v4995, %v7497
    %v7524 = vmul.f32 %v4996, %v7502
    %v7525 = vmul.f32 %v4997, %v7507
    %v7526 = vmul.f32 %v4998, %v7512
    %v7527 = vmul.f32 %v4999, %v7517
    %v7528 = vsel %vm1281, %v7520, 0.0
    %7529 = vadd.xlane.f32.xlu0 %v7528
    %v7530 = vpop.xlane.xlu0 %7529
    %v7531 = vsel %vm1281, %v7521, 0.0
    %7532 = vadd.xlane.f32.xlu0 %v7531
    %v7533 = vpop.xlane.xlu0 %7532
    %v7534 = vsel %vm1281, %v7522, 0.0
    %7535 = vadd.xlane.f32.xlu0 %v7534
    %v7536 = vpop.xlane.xlu0 %7535
    %v7537 = vsel %vm1281, %v7523, 0.0
    %7538 = vadd.xlane.f32.xlu0 %v7537
    %v7539 = vpop.xlane.xlu0 %7538
    %v7540 = vsel %vm1281, %v7524, 0.0
    %7541 = vadd.xlane.f32.xlu0 %v7540
    %v7542 = vpop.xlane.xlu0 %7541
    %v7543 = vsel %vm1281, %v7525, 0.0
    %7544 = vadd.xlane.f32.xlu0 %v7543
    %v7545 = vpop.xlane.xlu0 %7544
    %v7546 = vsel %vm1281, %v7526, 0.0
    %7547 = vadd.xlane.f32.xlu0 %v7546
    %v7548 = vpop.xlane.xlu0 %7547
    %v7549 = vsel %vm1281, %v7527, 0.0
    %7550 = vadd.xlane.f32.xlu0 %v7549
    %v7551 = vpop.xlane.xlu0 %7550
    %v7552 = vsel %vm5072, %v7530, -1e+30
    %v7553 = vsel %vm5073, %v7533, -1e+30
    %v7554 = vsel %vm5074, %v7536, -1e+30
    %v7555 = vsel %vm5075, %v7539, -1e+30
    %v7556 = vsel %vm5076, %v7542, -1e+30
    %v7557 = vsel %vm5077, %v7545, -1e+30
    %v7558 = vsel %vm5078, %v7548, -1e+30
    %v7559 = vsel %vm5079, %v7551, -1e+30
    %v7560 = vsel %vm5501, %v7552, -inf
    %v7561 = vsel %vm5501, %v7553, -inf
    %v7562 = vsel %vm5501, %v7554, -inf
    %v7563 = vsel %vm5501, %v7555, -inf
    %v7564 = vsel %vm5501, %v7556, -inf
    %v7565 = vmax.f32 %v7560, %v7564
    %v7566 = vsel %vm5501, %v7557, -inf
    %v7567 = vmax.f32 %v7561, %v7566
    %v7568 = vsel %vm5501, %v7558, -inf
    %v7569 = vmax.f32 %v7562, %v7568
    %v7570 = vsel %vm5501, %v7559, -inf
    %v7571 = vmax.f32 %v7563, %v7570
    %v7572 = vmax.f32 %v7565, %v7567
    %v7573 = vmax.f32 %v7569, %v7571
    %v7574 = vmax.f32 %v7572, %v7573
    %v7575 = vrot.slane %v7574, 4
    %v7576 = vmax.f32 %v7574, %v7575
    %v7577 = vrot.slane %v7576, 2
    %v7578 = vmax.f32 %v7576, %v7577
    %v7579 = vrot.slane %v7578, 1
    %v7580 = vmax.f32 %v7578, %v7579
    %v7581 = vmul.f32 %v157, %v7580
    %v7582 = vmul.f32 %v158, %v7580
    %v7583 = vmul.f32 %v159, %v7580
    %v7584 = vmul.f32 %v160, %v7580
    %v7585 = vmul.f32 %v161, %v7580
    %v7586 = vmul.f32 %v162, %v7580
    %v7587 = vmul.f32 %v163, %v7580
    %v7588 = vmul.f32 %v164, %v7580
    %v7589 = vsel %vm5501, %v7581, 0.0
    %7590 = vadd.xlane.f32.xlu0 %v7589
    %v7591 = vpop.xlane.xlu0 %7590
    %v7592 = vsel %vm5501, %v7582, 0.0
    %7593 = vadd.xlane.f32.xlu0 %v7592
    %v7594 = vpop.xlane.xlu0 %7593
    %v7595 = vsel %vm5501, %v7583, 0.0
    %7596 = vadd.xlane.f32.xlu0 %v7595
    %v7597 = vpop.xlane.xlu0 %7596
    %v7598 = vsel %vm5501, %v7584, 0.0
    %7599 = vadd.xlane.f32.xlu0 %v7598
    %v7600 = vpop.xlane.xlu0 %7599
    %v7601 = vsel %vm5501, %v7585, 0.0
    %7602 = vadd.xlane.f32.xlu0 %v7601
    %v7603 = vpop.xlane.xlu0 %7602
    %v7604 = vsel %vm5501, %v7586, 0.0
    %7605 = vadd.xlane.f32.xlu0 %v7604
    %v7606 = vpop.xlane.xlu0 %7605
    %v7607 = vsel %vm5501, %v7587, 0.0
    %7608 = vadd.xlane.f32.xlu0 %v7607
    %v7609 = vpop.xlane.xlu0 %7608
    %v7610 = vsel %vm5501, %v7588, 0.0
    %7611 = vadd.xlane.f32.xlu0 %v7610
    %v7612 = vpop.xlane.xlu0 %7611
    %v7613 = vsub.f32 %v7530, %v7591
    %v7614 = vsub.f32 %v7533, %v7594
    %v7615 = vsub.f32 %v7536, %v7597
    %v7616 = vsub.f32 %v7539, %v7600
    %v7617 = vsub.f32 %v7542, %v7603
    %v7618 = vsub.f32 %v7545, %v7606
    %v7619 = vsub.f32 %v7548, %v7609
    %v7620 = vsub.f32 %v7551, %v7612
    %v7621 = vmul.f32 %v7613, 1.442695
    %v7622 = vpow.pop %v7621
    %v7623 = vmul.f32 %v7614, 1.442695
    %v7624 = vpow.pop %v7623
    %v7625 = vmul.f32 %v7615, 1.442695
    %v7626 = vpow.pop %v7625
    %v7627 = vmul.f32 %v7616, 1.442695
    %v7628 = vpow.pop %v7627
    %v7629 = vmul.f32 %v7617, 1.442695
    %v7630 = vpow.pop %v7629
    %v7631 = vmul.f32 %v7618, 1.442695
    %v7632 = vpow.pop %v7631
    %v7633 = vmul.f32 %v7619, 1.442695
    %v7634 = vpow.pop %v7633
    %v7635 = vmul.f32 %v7620, 1.442695
    %v7636 = vpow.pop %v7635
    %7637 = vmatprep.subr.mxu0 0.0
    %7638 = vmatpush1.msra.mxu0 0.0
    %7639 = vmatprep.subr.mxu0 0.0
    %7640 = vmatpush1.msra.mxu0 0.0
    %7641 = vmatprep.subr.mxu0 0.0
    %7642 = vmatpush1.msra.mxu0 0.0
    %7643 = vmatprep.subr.mxu0 0.0
    %7644 = vmatpush1.msra.mxu0 0.0
    %7645 = vmatprep.subr.mxu0 0.0
    %7646 = vmatpush1.msra.mxu0 0.0
    %7647 = vmatprep.subr.mxu0 0.0
    %7648 = vmatpush1.msra.mxu0 0.0
    %7649 = vmatprep.subr.mxu0 0.0
    %7650 = vmatpush1.msra.mxu0 0.0
    %7651 = vmatprep.subr.mxu0 0.0
    %7652 = vmatpush1.msra.mxu0 0.0
    %7653 = vmatprep.subr.mxu0 0.0
    %7654 = vmatpush1.msra.mxu0 %v7636
    %7655 = vmatprep.subr.mxu0 0.0
    %7656 = vmatpush1.msra.mxu0 %v7634
    %7657 = vmatprep.subr.mxu0 0.0
    %7658 = vmatpush1.msra.mxu0 %v7632
    %7659 = vmatprep.subr.mxu0 0.0
    %7660 = vmatpush1.msra.mxu0 %v7630
    %7661 = vmatprep.subr.mxu0 0.0
    %7662 = vmatpush1.msra.mxu0 %v7628
    %7663 = vmatprep.subr.mxu0 0.0
    %7664 = vmatpush1.msra.mxu0 %v7626
    %7665 = vmatprep.subr.mxu0 0.0
    %7666 = vmatpush1.msra.mxu0 %v7624
    %7667 = vmatprep.subr.mxu0 0.0
    %7668 = vmatpush1.msra.mxu0 %v7622
    %7669 = vmatprep.subr.mxu0 0.0
    %7670 = vmatpush2.msra.mxu0 0.0
    %7671 = vmatprep.subr.mxu0 0.0
    %7672 = vmatpush2.msra.mxu0 0.0
    %7673 = vmatprep.subr.mxu0 0.0
    %7674 = vmatpush2.msra.mxu0 0.0
    %7675 = vmatprep.subr.mxu0 0.0
    %7676 = vmatpush2.msra.mxu0 0.0
    %7677 = vmatprep.subr.mxu0 0.0
    %7678 = vmatpush2.msra.mxu0 0.0
    %7679 = vmatprep.subr.mxu0 0.0
    %7680 = vmatpush2.msra.mxu0 0.0
    %7681 = vmatprep.subr.mxu0 0.0
    %7682 = vmatpush2.msra.mxu0 0.0
    %7683 = vmatprep.subr.mxu0 0.0
    %7684 = vmatpush2.msra.mxu0 0.0
    %7685 = vmatprep.subr.mxu0 0.0
    %7686 = vmatpush2.msra.mxu0 0.0
    %7687 = vmatprep.subr.mxu0 0.0
    %7688 = vmatpush2.msra.mxu0 0.0
    %7689 = vmatprep.subr.mxu0 0.0
    %7690 = vmatpush2.msra.mxu0 0.0
    %7691 = vmatprep.subr.mxu0 0.0
    %7692 = vmatpush2.msra.mxu0 0.0
    %7693 = vmatprep.subr.mxu0 0.0
    %7694 = vmatpush2.msra.mxu0 0.0
    %7695 = vmatprep.subr.mxu0 0.0
    %7696 = vmatpush2.msra.mxu0 0.0
    %7697 = vmatprep.subr.mxu0 0.0
    %7698 = vmatpush2.msra.mxu0 0.0
    %7699 = vmatprep.subr.mxu0 0.0
    %7700 = vmatpush2.msra.mxu0 0.0
    %7701 = vmatprep.mubr.f32.mxu0 0.0
    %7702 = vmatmul.mubr.f32.gmra.mxu0 %v5749
    %v7703 = vpop.f32.mrf.mxu0
    %v7704 = vadd.f32 0.0, %v7703
    %v7705 = vpop.f32.mrf.mxu0
    %7706 = vdwg.mxu0
    %7707 = vmatprep.subr.mxu0 0.0
    %7708 = vmatpush1.msra.mxu0 0.0
    %7709 = vmatprep.subr.mxu0 0.0
    %7710 = vmatpush1.msra.mxu0 0.0
    %7711 = vmatprep.subr.mxu0 0.0
    %7712 = vmatpush1.msra.mxu0 0.0
    %7713 = vmatprep.subr.mxu0 0.0
    %7714 = vmatpush1.msra.mxu0 0.0
    %7715 = vmatprep.subr.mxu0 0.0
    %7716 = vmatpush1.msra.mxu0 0.0
    %7717 = vmatprep.subr.mxu0 0.0
    %7718 = vmatpush1.msra.mxu0 0.0
    %7719 = vmatprep.subr.mxu0 0.0
    %7720 = vmatpush1.msra.mxu0 0.0
    %7721 = vmatprep.subr.mxu0 0.0
    %7722 = vmatpush1.msra.mxu0 0.0
    %7723 = vmatprep.subr.mxu0 0.0
    %7724 = vmatpush1.msra.mxu0 0.0
    %7725 = vmatprep.subr.mxu0 0.0
    %7726 = vmatpush1.msra.mxu0 0.0
    %7727 = vmatprep.subr.mxu0 0.0
    %7728 = vmatpush1.msra.mxu0 0.0
    %7729 = vmatprep.subr.mxu0 0.0
    %7730 = vmatpush1.msra.mxu0 0.0
    %7731 = vmatprep.subr.mxu0 0.0
    %7732 = vmatpush1.msra.mxu0 0.0
    %7733 = vmatprep.subr.mxu0 0.0
    %7734 = vmatpush1.msra.mxu0 0.0
    %7735 = vmatprep.subr.mxu0 0.0
    %7736 = vmatpush1.msra.mxu0 0.0
    %7737 = vmatprep.subr.mxu0 0.0
    %7738 = vmatpush1.msra.mxu0 %v7704
    %7739 = vmatprep.subr.mxu0 0.0
    %7740 = vmatpush2.msra.mxu0 0.0
    %7741 = vmatprep.subr.mxu0 0.0
    %7742 = vmatpush2.msra.mxu0 0.0
    %7743 = vmatprep.subr.mxu0 0.0
    %7744 = vmatpush2.msra.mxu0 0.0
    %7745 = vmatprep.subr.mxu0 0.0
    %7746 = vmatpush2.msra.mxu0 0.0
    %7747 = vmatprep.subr.mxu0 0.0
    %7748 = vmatpush2.msra.mxu0 0.0
    %7749 = vmatprep.subr.mxu0 0.0
    %7750 = vmatpush2.msra.mxu0 0.0
    %7751 = vmatprep.subr.mxu0 0.0
    %7752 = vmatpush2.msra.mxu0 0.0
    %7753 = vmatprep.subr.mxu0 0.0
    %7754 = vmatpush2.msra.mxu0 0.0
    %7755 = vmatprep.subr.mxu0 0.0
    %7756 = vmatpush2.msra.mxu0 0.0
    %7757 = vmatprep.subr.mxu0 0.0
    %7758 = vmatpush2.msra.mxu0 0.0
    %7759 = vmatprep.subr.mxu0 0.0
    %7760 = vmatpush2.msra.mxu0 0.0
    %7761 = vmatprep.subr.mxu0 0.0
    %7762 = vmatpush2.msra.mxu0 0.0
    %7763 = vmatprep.subr.mxu0 0.0
    %7764 = vmatpush2.msra.mxu0 0.0
    %7765 = vmatprep.subr.mxu0 0.0
    %7766 = vmatpush2.msra.mxu0 0.0
    %7767 = vmatprep.subr.mxu0 0.0
    %7768 = vmatpush2.msra.mxu0 0.0
    %7769 = vmatprep.subr.mxu0 0.0
    %7770 = vmatpush2.msra.mxu0 0.0
    %7771 = vmatprep.mubr.f32.mxu0 0.0
    %7772 = vmatmul.mubr.f32.gmra.mxu0 %v5503
    %v7773 = vpop.f32.mrf.mxu0
    %v7774 = vadd.f32 1e-16, %v7773
    %v7775 = vpop.f32.mrf.mxu0
    %7776 = vmatprep.mubr.f32.mxu0 0.0
    %7777 = vmatmul.mubr.f32.gmra.mxu0 %v5506
    %v7778 = vpop.f32.mrf.mxu0
    %v7779 = vadd.f32 1e-16, %v7778
    %v7780 = vpop.f32.mrf.mxu0
    %7781 = vmatprep.mubr.f32.mxu0 0.0
    %7782 = vmatmul.mubr.f32.gmra.mxu0 %v5509
    %v7783 = vpop.f32.mrf.mxu0
    %v7784 = vadd.f32 1e-16, %v7783
    %v7785 = vpop.f32.mrf.mxu0
    %7786 = vmatprep.mubr.f32.mxu0 0.0
    %7787 = vmatmul.mubr.f32.gmra.mxu0 %v5512
    %v7788 = vpop.f32.mrf.mxu0
    %v7789 = vadd.f32 1e-16, %v7788
    %v7790 = vpop.f32.mrf.mxu0
    %7791 = vmatprep.mubr.f32.mxu0 0.0
    %7792 = vmatmul.mubr.f32.gmra.mxu0 %v5515
    %v7793 = vpop.f32.mrf.mxu0
    %v7794 = vadd.f32 1e-16, %v7793
    %v7795 = vpop.f32.mrf.mxu0
    %7796 = vmatprep.mubr.f32.mxu0 0.0
    %7797 = vmatmul.mubr.f32.gmra.mxu0 %v5518
    %v7798 = vpop.f32.mrf.mxu0
    %v7799 = vadd.f32 1e-16, %v7798
    %v7800 = vpop.f32.mrf.mxu0
    %7801 = vmatprep.mubr.f32.mxu0 0.0
    %7802 = vmatmul.mubr.f32.gmra.mxu0 %v5521
    %v7803 = vpop.f32.mrf.mxu0
    %v7804 = vadd.f32 1e-16, %v7803
    %v7805 = vpop.f32.mrf.mxu0
    %7806 = vmatprep.mubr.f32.mxu0 0.0
    %7807 = vmatmul.mubr.f32.gmra.mxu0 %v5524
    %v7808 = vpop.f32.mrf.mxu0
    %v7809 = vadd.f32 1e-16, %v7808
    %v7810 = vpop.f32.mrf.mxu0
    %7811 = vdwg.mxu0
    %v7812 = vrcp.pop %v7774
    %v7813 = vrcp.pop %v7779
    %v7814 = vrcp.pop %v7784
    %v7815 = vrcp.pop %v7789
    %v7816 = vrcp.pop %v7794
    %v7817 = vrcp.pop %v7799
    %v7818 = vrcp.pop %v7804
    %v7819 = vrcp.pop %v7809
    %v7820 = vmul.f32 %v7622, %v7812
    %v7821 = vmul.f32 %v7624, %v7813
    %v7822 = vmul.f32 %v7626, %v7814
    %v7823 = vmul.f32 %v7628, %v7815
    %v7824 = vmul.f32 %v7630, %v7816
    %v7825 = vmul.f32 %v7632, %v7817
    %v7826 = vmul.f32 %v7634, %v7818
    %v7827 = vmul.f32 %v7636, %v7819
    %7829 = vset.pattern.permute.xlu0 0
    %7830 = vperm.xlu0 %7829, %v7820
    %v7831 = vpop.permute.xlu0 %7830
    %7834 = vset.pattern.permute.xlu0 0
    %7835 = vperm.xlu0 %7834, %v7821
    %v7836 = vpop.permute.xlu0 %7835
    %7839 = vset.pattern.permute.xlu0 0
    %7840 = vperm.xlu0 %7839, %v7822
    %v7841 = vpop.permute.xlu0 %7840
    %7844 = vset.pattern.permute.xlu0 0
    %7845 = vperm.xlu0 %7844, %v7823
    %v7846 = vpop.permute.xlu0 %7845
    %7849 = vset.pattern.permute.xlu0 0
    %7850 = vperm.xlu0 %7849, %v7824
    %v7851 = vpop.permute.xlu0 %7850
    %7854 = vset.pattern.permute.xlu0 0
    %7855 = vperm.xlu0 %7854, %v7825
    %v7856 = vpop.permute.xlu0 %7855
    %7859 = vset.pattern.permute.xlu0 0
    %7860 = vperm.xlu0 %7859, %v7826
    %v7861 = vpop.permute.xlu0 %7860
    %7864 = vset.pattern.permute.xlu0 0
    %7865 = vperm.xlu0 %7864, %v7827
    %v7866 = vpop.permute.xlu0 %7865
    %v7868 = vmul.f32 %v7831, %v4992
    %v7869 = vmul.f32 %v7836, %v4993
    %v7870 = vmul.f32 %v7841, %v4994
    %v7871 = vmul.f32 %v7846, %v4995
    %v7872 = vmul.f32 %v7851, %v4996
    %v7873 = vmul.f32 %v7856, %v4997
    %v7874 = vmul.f32 %v7861, %v4998
    %v7875 = vmul.f32 %v7866, %v4999
    %7876 = vmatprep.subr.mxu0 0.0
    %7877 = vmatpush1.msra.mxu0 0.0
    %7878 = vmatprep.subr.mxu0 0.0
    %7879 = vmatpush1.msra.mxu0 0.0
    %7880 = vmatprep.subr.mxu0 0.0
    %7881 = vmatpush1.msra.mxu0 0.0
    %7882 = vmatprep.subr.mxu0 0.0
    %7883 = vmatpush1.msra.mxu0 0.0
    %7884 = vmatprep.subr.mxu0 0.0
    %7885 = vmatpush1.msra.mxu0 0.0
    %7886 = vmatprep.subr.mxu0 0.0
    %7887 = vmatpush1.msra.mxu0 0.0
    %7888 = vmatprep.subr.mxu0 0.0
    %7889 = vmatpush1.msra.mxu0 0.0
    %7890 = vmatprep.subr.mxu0 0.0
    %7891 = vmatpush1.msra.mxu0 0.0
    %7892 = vmatprep.subr.mxu0 0.0
    %7893 = vmatpush1.msra.mxu0 %v7875
    %7894 = vmatprep.subr.mxu0 0.0
    %7895 = vmatpush1.msra.mxu0 %v7874
    %7896 = vmatprep.subr.mxu0 0.0
    %7897 = vmatpush1.msra.mxu0 %v7873
    %7898 = vmatprep.subr.mxu0 0.0
    %7899 = vmatpush1.msra.mxu0 %v7872
    %7900 = vmatprep.subr.mxu0 0.0
    %7901 = vmatpush1.msra.mxu0 %v7871
    %7902 = vmatprep.subr.mxu0 0.0
    %7903 = vmatpush1.msra.mxu0 %v7870
    %7904 = vmatprep.subr.mxu0 0.0
    %7905 = vmatpush1.msra.mxu0 %v7869
    %7906 = vmatprep.subr.mxu0 0.0
    %7907 = vmatpush1.msra.mxu0 %v7868
    %7908 = vmatprep.subr.mxu0 0.0
    %7909 = vmatpush2.msra.mxu0 0.0
    %7910 = vmatprep.subr.mxu0 0.0
    %7911 = vmatpush2.msra.mxu0 0.0
    %7912 = vmatprep.subr.mxu0 0.0
    %7913 = vmatpush2.msra.mxu0 0.0
    %7914 = vmatprep.subr.mxu0 0.0
    %7915 = vmatpush2.msra.mxu0 0.0
    %7916 = vmatprep.subr.mxu0 0.0
    %7917 = vmatpush2.msra.mxu0 0.0
    %7918 = vmatprep.subr.mxu0 0.0
    %7919 = vmatpush2.msra.mxu0 0.0
    %7920 = vmatprep.subr.mxu0 0.0
    %7921 = vmatpush2.msra.mxu0 0.0
    %7922 = vmatprep.subr.mxu0 0.0
    %7923 = vmatpush2.msra.mxu0 0.0
    %7924 = vmatprep.subr.mxu0 0.0
    %7925 = vmatpush2.msra.mxu0 0.0
    %7926 = vmatprep.subr.mxu0 0.0
    %7927 = vmatpush2.msra.mxu0 0.0
    %7928 = vmatprep.subr.mxu0 0.0
    %7929 = vmatpush2.msra.mxu0 0.0
    %7930 = vmatprep.subr.mxu0 0.0
    %7931 = vmatpush2.msra.mxu0 0.0
    %7932 = vmatprep.subr.mxu0 0.0
    %7933 = vmatpush2.msra.mxu0 0.0
    %7934 = vmatprep.subr.mxu0 0.0
    %7935 = vmatpush2.msra.mxu0 0.0
    %7936 = vmatprep.subr.mxu0 0.0
    %7937 = vmatpush2.msra.mxu0 0.0
    %7938 = vmatprep.subr.mxu0 0.0
    %7939 = vmatpush2.msra.mxu0 0.0
    %7940 = vmatprep.mubr.f32.mxu0 0.0
    %7941 = vmatmul.mubr.f32.gmra.mxu0 %v5749
    %v7942 = vpop.f32.mrf.mxu0
    %v7943 = vadd.f32 0.0, %v7942
    %v7944 = vpop.f32.mrf.mxu0
    %7945 = vdwg.mxu0
    %7946 = vmatprep.subr.mxu0 0.0
    %7947 = vmatpush1.msra.mxu0 %v5019
    %7948 = vmatprep.subr.mxu0 0.0
    %7949 = vmatpush1.msra.mxu0 %v5018
    %7950 = vmatprep.subr.mxu0 0.0
    %7951 = vmatpush1.msra.mxu0 %v5017
    %7952 = vmatprep.subr.mxu0 0.0
    %7953 = vmatpush1.msra.mxu0 %v5016
    %7954 = vmatprep.subr.mxu0 0.0
    %7955 = vmatpush1.msra.mxu0 %v5015
    %7956 = vmatprep.subr.mxu0 0.0
    %7957 = vmatpush1.msra.mxu0 %v5014
    %7958 = vmatprep.subr.mxu0 0.0
    %7959 = vmatpush1.msra.mxu0 %v5013
    %7960 = vmatprep.subr.mxu0 0.0
    %7961 = vmatpush1.msra.mxu0 %v5012
    %7962 = vmatprep.subr.mxu0 0.0
    %7963 = vmatpush1.msra.mxu0 %v5011
    %7964 = vmatprep.subr.mxu0 0.0
    %7965 = vmatpush1.msra.mxu0 %v5010
    %7966 = vmatprep.subr.mxu0 0.0
    %7967 = vmatpush1.msra.mxu0 %v5009
    %7968 = vmatprep.subr.mxu0 0.0
    %7969 = vmatpush1.msra.mxu0 %v5008
    %7970 = vmatprep.subr.mxu0 0.0
    %7971 = vmatpush1.msra.mxu0 %v5007
    %7972 = vmatprep.subr.mxu0 0.0
    %7973 = vmatpush1.msra.mxu0 %v5006
    %7974 = vmatprep.subr.mxu0 0.0
    %7975 = vmatpush1.msra.mxu0 %v5005
    %7976 = vmatprep.subr.mxu0 0.0
    %7977 = vmatpush1.msra.mxu0 %v5004
    %7978 = vmatprep.subr.mxu0 0.0
    %7979 = vmatpush2.msra.mxu0 0.0
    %7980 = vmatprep.subr.mxu0 0.0
    %7981 = vmatpush2.msra.mxu0 0.0
    %7982 = vmatprep.subr.mxu0 0.0
    %7983 = vmatpush2.msra.mxu0 0.0
    %7984 = vmatprep.subr.mxu0 0.0
    %7985 = vmatpush2.msra.mxu0 0.0
    %7986 = vmatprep.subr.mxu0 0.0
    %7987 = vmatpush2.msra.mxu0 0.0
    %7988 = vmatprep.subr.mxu0 0.0
    %7989 = vmatpush2.msra.mxu0 0.0
    %7990 = vmatprep.subr.mxu0 0.0
    %7991 = vmatpush2.msra.mxu0 0.0
    %7992 = vmatprep.subr.mxu0 0.0
    %7993 = vmatpush2.msra.mxu0 0.0
    %7994 = vmatprep.subr.mxu0 0.0
    %7995 = vmatpush2.msra.mxu0 0.0
    %7996 = vmatprep.subr.mxu0 0.0
    %7997 = vmatpush2.msra.mxu0 0.0
    %7998 = vmatprep.subr.mxu0 0.0
    %7999 = vmatpush2.msra.mxu0 0.0
    %8000 = vmatprep.subr.mxu0 0.0
    %8001 = vmatpush2.msra.mxu0 0.0
    %8002 = vmatprep.subr.mxu0 0.0
    %8003 = vmatpush2.msra.mxu0 0.0
    %8004 = vmatprep.subr.mxu0 0.0
    %8005 = vmatpush2.msra.mxu0 0.0
    %8006 = vmatprep.subr.mxu0 0.0
    %8007 = vmatpush2.msra.mxu0 0.0
    %8008 = vmatprep.subr.mxu0 0.0
    %8009 = vmatpush2.msra.mxu0 0.0
    %8010 = vmatprep.mubr.f32.mxu0 0.0
    %8011 = vmatmul.mubr.f32.gmra.mxu0 %v7943
    %v8012 = vpop.f32.mrf.mxu0
    %v8013 = vadd.f32 0.0, %v8012
    %v8014 = vpop.f32.mrf.mxu0
    %8015 = vdwg.mxu0
    %v8016 = vsel %vm1281, %v7413, 0
    %8018 = vmatprep.subr.mxu0 0.0
    %8019 = vmatpush1.msra.mxu0 0.0
    %8020 = vmatprep.subr.mxu0 0.0
    %8021 = vmatpush1.msra.mxu0 0.0
    %8022 = vmatprep.subr.mxu0 0.0
    %8023 = vmatpush1.msra.mxu0 0.0
    %8024 = vmatprep.subr.mxu0 0.0
    %8025 = vmatpush1.msra.mxu0 0.0
    %8026 = vmatprep.subr.mxu0 0.0
    %8027 = vmatpush1.msra.mxu0 0.0
    %8028 = vmatprep.subr.mxu0 0.0
    %8029 = vmatpush1.msra.mxu0 0.0
    %8030 = vmatprep.subr.mxu0 0.0
    %8031 = vmatpush1.msra.mxu0 0.0
    %8032 = vmatprep.subr.mxu0 0.0
    %8033 = vmatpush1.msra.mxu0 0.0
    %8034 = vmatprep.subr.mxu0 0.0
    %8035 = vmatpush1.msra.mxu0 0.0
    %8036 = vmatprep.subr.mxu0 0.0
    %8037 = vmatpush1.msra.mxu0 0.0
    %8038 = vmatprep.subr.mxu0 0.0
    %8039 = vmatpush1.msra.mxu0 0.0
    %8040 = vmatprep.subr.mxu0 0.0
    %8041 = vmatpush1.msra.mxu0 0.0
    %8042 = vmatprep.subr.mxu0 0.0
    %8043 = vmatpush1.msra.mxu0 %v5003
    %8044 = vmatprep.subr.mxu0 0.0
    %8045 = vmatpush1.msra.mxu0 %v5002
    %8046 = vmatprep.subr.mxu0 0.0
    %8047 = vmatpush1.msra.mxu0 %v5001
    %8048 = vmatprep.subr.mxu0 0.0
    %8049 = vmatpush1.msra.mxu0 %v5000
    %8050 = vmatprep.subr.mxu0 0.0
    %8051 = vmatpush2.msra.mxu0 0.0
    %8052 = vmatprep.subr.mxu0 0.0
    %8053 = vmatpush2.msra.mxu0 0.0
    %8054 = vmatprep.subr.mxu0 0.0
    %8055 = vmatpush2.msra.mxu0 0.0
    %8056 = vmatprep.subr.mxu0 0.0
    %8057 = vmatpush2.msra.mxu0 0.0
    %8058 = vmatprep.subr.mxu0 0.0
    %8059 = vmatpush2.msra.mxu0 0.0
    %8060 = vmatprep.subr.mxu0 0.0
    %8061 = vmatpush2.msra.mxu0 0.0
    %8062 = vmatprep.subr.mxu0 0.0
    %8063 = vmatpush2.msra.mxu0 0.0
    %8064 = vmatprep.subr.mxu0 0.0
    %8065 = vmatpush2.msra.mxu0 0.0
    %8066 = vmatprep.subr.mxu0 0.0
    %8067 = vmatpush2.msra.mxu0 0.0
    %8068 = vmatprep.subr.mxu0 0.0
    %8069 = vmatpush2.msra.mxu0 0.0
    %8070 = vmatprep.subr.mxu0 0.0
    %8071 = vmatpush2.msra.mxu0 0.0
    %8072 = vmatprep.subr.mxu0 0.0
    %8073 = vmatpush2.msra.mxu0 0.0
    %8074 = vmatprep.subr.mxu0 0.0
    %8075 = vmatpush2.msra.mxu0 0.0
    %8076 = vmatprep.subr.mxu0 0.0
    %8077 = vmatpush2.msra.mxu0 0.0
    %8078 = vmatprep.subr.mxu0 0.0
    %8079 = vmatpush2.msra.mxu0 0.0
    %8080 = vmatprep.subr.mxu0 0.0
    %8081 = vmatpush2.msra.mxu0 0.0
    %8082 = vmatprep.mubr.f32.mxu0 0.0
    %8083 = vmatmul.mubr.f32.gmra.mxu0 %v8016
    %v8084 = vpop.f32.mrf.mxu0
    %v8085 = vadd.f32 %v8013, %v8084
    %v8086 = vpop.f32.mrf.mxu0
    %8087 = vdwg.mxu0
    %8088 = vmatprep.subr.mxu0 0.0
    %8089 = vmatpush1.msra.mxu0 0.0
    %8090 = vmatprep.subr.mxu0 0.0
    %8091 = vmatpush1.msra.mxu0 0.0
    %8092 = vmatprep.subr.mxu0 0.0
    %8093 = vmatpush1.msra.mxu0 0.0
    %8094 = vmatprep.subr.mxu0 0.0
    %8095 = vmatpush1.msra.mxu0 0.0
    %8096 = vmatprep.subr.mxu0 0.0
    %8097 = vmatpush1.msra.mxu0 0.0
    %8098 = vmatprep.subr.mxu0 0.0
    %8099 = vmatpush1.msra.mxu0 0.0
    %8100 = vmatprep.subr.mxu0 0.0
    %8101 = vmatpush1.msra.mxu0 0.0
    %8102 = vmatprep.subr.mxu0 0.0
    %8103 = vmatpush1.msra.mxu0 0.0
    %8104 = vmatprep.subr.mxu0 0.0
    %8105 = vmatpush1.msra.mxu0 0.0
    %8106 = vmatprep.subr.mxu0 0.0
    %8107 = vmatpush1.msra.mxu0 0.0
    %8108 = vmatprep.subr.mxu0 0.0
    %8109 = vmatpush1.msra.mxu0 0.0
    %8110 = vmatprep.subr.mxu0 0.0
    %8111 = vmatpush1.msra.mxu0 0.0
    %8112 = vmatprep.subr.mxu0 0.0
    %8113 = vmatpush1.msra.mxu0 %v5023
    %8114 = vmatprep.subr.mxu0 0.0
    %8115 = vmatpush1.msra.mxu0 %v5022
    %8116 = vmatprep.subr.mxu0 0.0
    %8117 = vmatpush1.msra.mxu0 %v5021
    %8118 = vmatprep.subr.mxu0 0.0
    %8119 = vmatpush1.msra.mxu0 %v5020
    %8120 = vmatprep.subr.mxu0 0.0
    %8121 = vmatpush2.msra.mxu0 0.0
    %8122 = vmatprep.subr.mxu0 0.0
    %8123 = vmatpush2.msra.mxu0 0.0
    %8124 = vmatprep.subr.mxu0 0.0
    %8125 = vmatpush2.msra.mxu0 0.0
    %8126 = vmatprep.subr.mxu0 0.0
    %8127 = vmatpush2.msra.mxu0 0.0
    %8128 = vmatprep.subr.mxu0 0.0
    %8129 = vmatpush2.msra.mxu0 0.0
    %8130 = vmatprep.subr.mxu0 0.0
    %8131 = vmatpush2.msra.mxu0 0.0
    %8132 = vmatprep.subr.mxu0 0.0
    %8133 = vmatpush2.msra.mxu0 0.0
    %8134 = vmatprep.subr.mxu0 0.0
    %8135 = vmatpush2.msra.mxu0 0.0
    %8136 = vmatprep.subr.mxu0 0.0
    %8137 = vmatpush2.msra.mxu0 0.0
    %8138 = vmatprep.subr.mxu0 0.0
    %8139 = vmatpush2.msra.mxu0 0.0
    %8140 = vmatprep.subr.mxu0 0.0
    %8141 = vmatpush2.msra.mxu0 0.0
    %8142 = vmatprep.subr.mxu0 0.0
    %8143 = vmatpush2.msra.mxu0 0.0
    %8144 = vmatprep.subr.mxu0 0.0
    %8145 = vmatpush2.msra.mxu0 0.0
    %8146 = vmatprep.subr.mxu0 0.0
    %8147 = vmatpush2.msra.mxu0 0.0
    %8148 = vmatprep.subr.mxu0 0.0
    %8149 = vmatpush2.msra.mxu0 0.0
    %8150 = vmatprep.subr.mxu0 0.0
    %8151 = vmatpush2.msra.mxu0 0.0
    %8152 = vmatprep.mubr.f32.mxu0 0.0
    %8153 = vmatmul.mubr.f32.gmra.mxu0 %v7314
    %v8154 = vpop.f32.mrf.mxu0
    %v8155 = vadd.f32 0.0, %v8154
    %v8156 = vpop.f32.mrf.mxu0
    %8157 = vdwg.mxu0
    %v8158 = vadd.f32 %v8085, %v8155
    %v8159 = vadd.f32 %v8158, %v5297
    %v8160 = vxor.u32 %v8159, 2147483648
    %v8161 = vmul.f32 %v8160, 1.442695
    %v8162 = vpow.pop %v8161
    %v8163 = vadd.f32 %v8162, 1.0
    %v8164 = vrcp.pop %v8163
    %v8165 = vmul.f32 1.0, %v8164
    %v8166 = vtanh.pop %v8159
    %v8167 = vmul.f32 %v8165, %v7234
    %8169 = vrot.lane.b32.xlu0 %v8166, 64
    %v8170 = vpop.permute.xlu0 %8169
    %v8172 = vmul.f32 %v8165, %v8170
    %8174 = vrot.lane.b32.xlu0 %v8172, 32
    %v8175 = vpop.permute.xlu0 %8174
    %v8177 = vadd.f32 %v8167, %v8175
    %v8178 = vtanh.pop %v8177
    %8180 = vrot.lane.b32.xlu0 %v8178, 64
    %v8181 = vpop.permute.xlu0 %8180
    %v8183 = vmul.f32 %v8165, %v8181
    %8184 = vmatprep.subr.mxu0 0.0
    %8185 = vmatpush1.msra.mxu0 0.0
    %8186 = vmatprep.subr.mxu0 0.0
    %8187 = vmatpush1.msra.mxu0 0.0
    %8188 = vmatprep.subr.mxu0 0.0
    %8189 = vmatpush1.msra.mxu0 0.0
    %8190 = vmatprep.subr.mxu0 0.0
    %8191 = vmatpush1.msra.mxu0 0.0
    %8192 = vmatprep.subr.mxu0 0.0
    %8193 = vmatpush1.msra.mxu0 0.0
    %8194 = vmatprep.subr.mxu0 0.0
    %8195 = vmatpush1.msra.mxu0 0.0
    %8196 = vmatprep.subr.mxu0 0.0
    %8197 = vmatpush1.msra.mxu0 0.0
    %8198 = vmatprep.subr.mxu0 0.0
    %8199 = vmatpush1.msra.mxu0 0.0
    %8200 = vmatprep.subr.mxu0 0.0
    %8201 = vmatpush1.msra.mxu0 0.0
    %8202 = vmatprep.subr.mxu0 0.0
    %8203 = vmatpush1.msra.mxu0 0.0
    %8204 = vmatprep.subr.mxu0 0.0
    %8205 = vmatpush1.msra.mxu0 0.0
    %8206 = vmatprep.subr.mxu0 0.0
    %8207 = vmatpush1.msra.mxu0 0.0
    %8208 = vmatprep.subr.mxu0 0.0
    %8209 = vmatpush1.msra.mxu0 %v5032
    %8210 = vmatprep.subr.mxu0 0.0
    %8211 = vmatpush1.msra.mxu0 %v5031
    %8212 = vmatprep.subr.mxu0 0.0
    %8213 = vmatpush1.msra.mxu0 %v5030
    %8214 = vmatprep.subr.mxu0 0.0
    %8215 = vmatpush1.msra.mxu0 %v5029
    %8216 = vmatprep.subr.mxu0 0.0
    %8217 = vmatpush2.msra.mxu0 0.0
    %8218 = vmatprep.subr.mxu0 0.0
    %8219 = vmatpush2.msra.mxu0 0.0
    %8220 = vmatprep.subr.mxu0 0.0
    %8221 = vmatpush2.msra.mxu0 0.0
    %8222 = vmatprep.subr.mxu0 0.0
    %8223 = vmatpush2.msra.mxu0 0.0
    %8224 = vmatprep.subr.mxu0 0.0
    %8225 = vmatpush2.msra.mxu0 0.0
    %8226 = vmatprep.subr.mxu0 0.0
    %8227 = vmatpush2.msra.mxu0 0.0
    %8228 = vmatprep.subr.mxu0 0.0
    %8229 = vmatpush2.msra.mxu0 0.0
    %8230 = vmatprep.subr.mxu0 0.0
    %8231 = vmatpush2.msra.mxu0 0.0
    %8232 = vmatprep.subr.mxu0 0.0
    %8233 = vmatpush2.msra.mxu0 0.0
    %8234 = vmatprep.subr.mxu0 0.0
    %8235 = vmatpush2.msra.mxu0 0.0
    %8236 = vmatprep.subr.mxu0 0.0
    %8237 = vmatpush2.msra.mxu0 0.0
    %8238 = vmatprep.subr.mxu0 0.0
    %8239 = vmatpush2.msra.mxu0 0.0
    %8240 = vmatprep.subr.mxu0 0.0
    %8241 = vmatpush2.msra.mxu0 0.0
    %8242 = vmatprep.subr.mxu0 0.0
    %8243 = vmatpush2.msra.mxu0 0.0
    %8244 = vmatprep.subr.mxu0 0.0
    %8245 = vmatpush2.msra.mxu0 0.0
    %8246 = vmatprep.subr.mxu0 0.0
    %8247 = vmatpush2.msra.mxu0 0.0
    %8248 = vmatprep.mubr.f32.mxu0 0.0
    %8249 = vmatmul.mubr.f32.gmra.mxu0 %v8016
    %v8250 = vpop.f32.mrf.mxu0
    %v8251 = vadd.f32 0.0, %v8250
    %v8252 = vpop.f32.mrf.mxu0
    %8253 = vdwg.mxu0
    %8255 = vrot.lane.b32.xlu0 %v8183, 32
    %v8256 = vpop.permute.xlu0 %8255
    %v8257 = vsel %vm1281, %v8256, 0
    %8259 = vmatprep.subr.mxu0 0.0
    %8260 = vmatpush1.msra.mxu0 0.0
    %8261 = vmatprep.subr.mxu0 0.0
    %8262 = vmatpush1.msra.mxu0 0.0
    %8263 = vmatprep.subr.mxu0 0.0
    %8264 = vmatpush1.msra.mxu0 0.0
    %8265 = vmatprep.subr.mxu0 0.0
    %8266 = vmatpush1.msra.mxu0 0.0
    %8267 = vmatprep.subr.mxu0 0.0
    %8268 = vmatpush1.msra.mxu0 0.0
    %8269 = vmatprep.subr.mxu0 0.0
    %8270 = vmatpush1.msra.mxu0 0.0
    %8271 = vmatprep.subr.mxu0 0.0
    %8272 = vmatpush1.msra.mxu0 0.0
    %8273 = vmatprep.subr.mxu0 0.0
    %8274 = vmatpush1.msra.mxu0 0.0
    %8275 = vmatprep.subr.mxu0 0.0
    %8276 = vmatpush1.msra.mxu0 0.0
    %8277 = vmatprep.subr.mxu0 0.0
    %8278 = vmatpush1.msra.mxu0 0.0
    %8279 = vmatprep.subr.mxu0 0.0
    %8280 = vmatpush1.msra.mxu0 0.0
    %8281 = vmatprep.subr.mxu0 0.0
    %8282 = vmatpush1.msra.mxu0 0.0
    %8283 = vmatprep.subr.mxu0 0.0
    %8284 = vmatpush1.msra.mxu0 %v5028
    %8285 = vmatprep.subr.mxu0 0.0
    %8286 = vmatpush1.msra.mxu0 %v5027
    %8287 = vmatprep.subr.mxu0 0.0
    %8288 = vmatpush1.msra.mxu0 %v5026
    %8289 = vmatprep.subr.mxu0 0.0
    %8290 = vmatpush1.msra.mxu0 %v5025
    %8291 = vmatprep.subr.mxu0 0.0
    %8292 = vmatpush2.msra.mxu0 0.0
    %8293 = vmatprep.subr.mxu0 0.0
    %8294 = vmatpush2.msra.mxu0 0.0
    %8295 = vmatprep.subr.mxu0 0.0
    %8296 = vmatpush2.msra.mxu0 0.0
    %8297 = vmatprep.subr.mxu0 0.0
    %8298 = vmatpush2.msra.mxu0 0.0
    %8299 = vmatprep.subr.mxu0 0.0
    %8300 = vmatpush2.msra.mxu0 0.0
    %8301 = vmatprep.subr.mxu0 0.0
    %8302 = vmatpush2.msra.mxu0 0.0
    %8303 = vmatprep.subr.mxu0 0.0
    %8304 = vmatpush2.msra.mxu0 0.0
    %8305 = vmatprep.subr.mxu0 0.0
    %8306 = vmatpush2.msra.mxu0 0.0
    %8307 = vmatprep.subr.mxu0 0.0
    %8308 = vmatpush2.msra.mxu0 0.0
    %8309 = vmatprep.subr.mxu0 0.0
    %8310 = vmatpush2.msra.mxu0 0.0
    %8311 = vmatprep.subr.mxu0 0.0
    %8312 = vmatpush2.msra.mxu0 0.0
    %8313 = vmatprep.subr.mxu0 0.0
    %8314 = vmatpush2.msra.mxu0 0.0
    %8315 = vmatprep.subr.mxu0 0.0
    %8316 = vmatpush2.msra.mxu0 0.0
    %8317 = vmatprep.subr.mxu0 0.0
    %8318 = vmatpush2.msra.mxu0 0.0
    %8319 = vmatprep.subr.mxu0 0.0
    %8320 = vmatpush2.msra.mxu0 0.0
    %8321 = vmatprep.subr.mxu0 0.0
    %8322 = vmatpush2.msra.mxu0 0.0
    %8323 = vmatprep.mubr.f32.mxu0 0.0
    %8324 = vmatmul.mubr.f32.gmra.mxu0 %v8257
    %v8325 = vpop.f32.mrf.mxu0
    %v8326 = vadd.f32 %v8251, %v8325
    %v8327 = vpop.f32.mrf.mxu0
    %8328 = vdwg.mxu0
    %v8329 = vadd.f32 %v8326, %v5471
    %v8330 = vxor.u32 %v8329, 2147483648
    %v8331 = vmul.f32 %v8330, 1.442695
    %v8332 = vpow.pop %v8331
    %v8333 = vadd.f32 %v8332, 1.0
    %v8334 = vrcp.pop %v8333
    %v8335 = vmul.f32 1.0, %v8334
    %v8336 = vtanh.pop %v8329
    %v8337 = vmul.f32 %v8335, %v7404
    %8339 = vrot.lane.b32.xlu0 %v8336, 64
    %v8340 = vpop.permute.xlu0 %8339
    %v8342 = vmul.f32 %v8335, %v8340
    %8344 = vrot.lane.b32.xlu0 %v8342, 32
    %v8345 = vpop.permute.xlu0 %8344
    %v8347 = vadd.f32 %v8337, %v8345
    %v8348 = vtanh.pop %v8347
    %8350 = vrot.lane.b32.xlu0 %v8348, 64
    %v8351 = vpop.permute.xlu0 %8350
    %v8353 = vmul.f32 %v8335, %v8351
    %8355 = vrot.lane.b32.xlu0 %v8353, 32
    %v8356 = vpop.permute.xlu0 %8355
    %8358 = vmatprep.subr.mxu0 0.0
    %8359 = vmatpush1.msra.mxu0 0.0
    %8360 = vmatprep.subr.mxu0 0.0
    %8361 = vmatpush1.msra.mxu0 0.0
    %8362 = vmatprep.subr.mxu0 0.0
    %8363 = vmatpush1.msra.mxu0 0.0
    %8364 = vmatprep.subr.mxu0 0.0
    %8365 = vmatpush1.msra.mxu0 0.0
    %8366 = vmatprep.subr.mxu0 0.0
    %8367 = vmatpush1.msra.mxu0 0.0
    %8368 = vmatprep.subr.mxu0 0.0
    %8369 = vmatpush1.msra.mxu0 0.0
    %8370 = vmatprep.subr.mxu0 0.0
    %8371 = vmatpush1.msra.mxu0 0.0
    %8372 = vmatprep.subr.mxu0 0.0
    %8373 = vmatpush1.msra.mxu0 0.0
    %8374 = vmatprep.subr.mxu0 0.0
    %8375 = vmatpush1.msra.mxu0 0.0
    %8376 = vmatprep.subr.mxu0 0.0
    %8377 = vmatpush1.msra.mxu0 0.0
    %8378 = vmatprep.subr.mxu0 0.0
    %8379 = vmatpush1.msra.mxu0 0.0
    %8380 = vmatprep.subr.mxu0 0.0
    %8381 = vmatpush1.msra.mxu0 0.0
    %8382 = vmatprep.subr.mxu0 0.0
    %8383 = vmatpush1.msra.mxu0 0.0
    %8384 = vmatprep.subr.mxu0 0.0
    %8385 = vmatpush1.msra.mxu0 0.0
    %8386 = vmatprep.subr.mxu0 0.0
    %8387 = vmatpush1.msra.mxu0 0.0
    %8388 = vmatprep.subr.mxu0 0.0
    %8389 = vmatpush1.msra.mxu0 %v8356
    %8390 = vmatprep.subr.mxu0 0.0
    %8391 = vmatpush2.msra.mxu0 0.0
    %8392 = vmatprep.subr.mxu0 0.0
    %8393 = vmatpush2.msra.mxu0 0.0
    %8394 = vmatprep.subr.mxu0 0.0
    %8395 = vmatpush2.msra.mxu0 0.0
    %8396 = vmatprep.subr.mxu0 0.0
    %8397 = vmatpush2.msra.mxu0 0.0
    %8398 = vmatprep.subr.mxu0 0.0
    %8399 = vmatpush2.msra.mxu0 0.0
    %8400 = vmatprep.subr.mxu0 0.0
    %8401 = vmatpush2.msra.mxu0 0.0
    %8402 = vmatprep.subr.mxu0 0.0
    %8403 = vmatpush2.msra.mxu0 0.0
    %8404 = vmatprep.subr.mxu0 0.0
    %8405 = vmatpush2.msra.mxu0 0.0
    %8406 = vmatprep.subr.mxu0 0.0
    %8407 = vmatpush2.msra.mxu0 0.0
    %8408 = vmatprep.subr.mxu0 0.0
    %8409 = vmatpush2.msra.mxu0 0.0
    %8410 = vmatprep.subr.mxu0 0.0
    %8411 = vmatpush2.msra.mxu0 0.0
    %8412 = vmatprep.subr.mxu0 0.0
    %8413 = vmatpush2.msra.mxu0 0.0
    %8414 = vmatprep.subr.mxu0 0.0
    %8415 = vmatpush2.msra.mxu0 0.0
    %8416 = vmatprep.subr.mxu0 0.0
    %8417 = vmatpush2.msra.mxu0 0.0
    %8418 = vmatprep.subr.mxu0 0.0
    %8419 = vmatpush2.msra.mxu0 0.0
    %8420 = vmatprep.subr.mxu0 0.0
    %8421 = vmatpush2.msra.mxu0 0.0
    %8422 = vmatprep.mubr.f32.mxu0 0.0
    %8423 = vmatmul.mubr.f32.gmra.mxu0 %v5503
    %v8424 = vpop.f32.mrf.mxu0
    %v8425 = vadd.f32 0.0, %v8424
    %v8426 = vpop.f32.mrf.mxu0
    %8427 = vmatprep.mubr.f32.mxu0 0.0
    %8428 = vmatmul.mubr.f32.gmra.mxu0 %v5506
    %v8429 = vpop.f32.mrf.mxu0
    %v8430 = vadd.f32 0.0, %v8429
    %v8431 = vpop.f32.mrf.mxu0
    %8432 = vmatprep.mubr.f32.mxu0 0.0
    %8433 = vmatmul.mubr.f32.gmra.mxu0 %v5509
    %v8434 = vpop.f32.mrf.mxu0
    %v8435 = vadd.f32 0.0, %v8434
    %v8436 = vpop.f32.mrf.mxu0
    %8437 = vmatprep.mubr.f32.mxu0 0.0
    %8438 = vmatmul.mubr.f32.gmra.mxu0 %v5512
    %v8439 = vpop.f32.mrf.mxu0
    %v8440 = vadd.f32 0.0, %v8439
    %v8441 = vpop.f32.mrf.mxu0
    %8442 = vmatprep.mubr.f32.mxu0 0.0
    %8443 = vmatmul.mubr.f32.gmra.mxu0 %v5515
    %v8444 = vpop.f32.mrf.mxu0
    %v8445 = vadd.f32 0.0, %v8444
    %v8446 = vpop.f32.mrf.mxu0
    %8447 = vmatprep.mubr.f32.mxu0 0.0
    %8448 = vmatmul.mubr.f32.gmra.mxu0 %v5518
    %v8449 = vpop.f32.mrf.mxu0
    %v8450 = vadd.f32 0.0, %v8449
    %v8451 = vpop.f32.mrf.mxu0
    %8452 = vmatprep.mubr.f32.mxu0 0.0
    %8453 = vmatmul.mubr.f32.gmra.mxu0 %v5521
    %v8454 = vpop.f32.mrf.mxu0
    %v8455 = vadd.f32 0.0, %v8454
    %v8456 = vpop.f32.mrf.mxu0
    %8457 = vmatprep.mubr.f32.mxu0 0.0
    %8458 = vmatmul.mubr.f32.gmra.mxu0 %v5524
    %v8459 = vpop.f32.mrf.mxu0
    %v8460 = vadd.f32 0.0, %v8459
    %v8461 = vpop.f32.mrf.mxu0
    %8462 = vdwg.mxu0
    %v8463 = vmul.f32 %v4992, %v8425
    %v8464 = vmul.f32 %v4993, %v8430
    %v8465 = vmul.f32 %v4994, %v8435
    %v8466 = vmul.f32 %v4995, %v8440
    %v8467 = vmul.f32 %v4996, %v8445
    %v8468 = vmul.f32 %v4997, %v8450
    %v8469 = vmul.f32 %v4998, %v8455
    %v8470 = vmul.f32 %v4999, %v8460
    %v8471 = vsel %vm1281, %v8463, 0.0
    %8472 = vadd.xlane.f32.xlu0 %v8471
    %v8473 = vpop.xlane.xlu0 %8472
    %v8474 = vsel %vm1281, %v8464, 0.0
    %8475 = vadd.xlane.f32.xlu0 %v8474
    %v8476 = vpop.xlane.xlu0 %8475
    %v8477 = vsel %vm1281, %v8465, 0.0
    %8478 = vadd.xlane.f32.xlu0 %v8477
    %v8479 = vpop.xlane.xlu0 %8478
    %v8480 = vsel %vm1281, %v8466, 0.0
    %8481 = vadd.xlane.f32.xlu0 %v8480
    %v8482 = vpop.xlane.xlu0 %8481
    %v8483 = vsel %vm1281, %v8467, 0.0
    %8484 = vadd.xlane.f32.xlu0 %v8483
    %v8485 = vpop.xlane.xlu0 %8484
    %v8486 = vsel %vm1281, %v8468, 0.0
    %8487 = vadd.xlane.f32.xlu0 %v8486
    %v8488 = vpop.xlane.xlu0 %8487
    %v8489 = vsel %vm1281, %v8469, 0.0
    %8490 = vadd.xlane.f32.xlu0 %v8489
    %v8491 = vpop.xlane.xlu0 %8490
    %v8492 = vsel %vm1281, %v8470, 0.0
    %8493 = vadd.xlane.f32.xlu0 %v8492
    %v8494 = vpop.xlane.xlu0 %8493
    %v8495 = vsel %vm5072, %v8473, -1e+30
    %v8496 = vsel %vm5073, %v8476, -1e+30
    %v8497 = vsel %vm5074, %v8479, -1e+30
    %v8498 = vsel %vm5075, %v8482, -1e+30
    %v8499 = vsel %vm5076, %v8485, -1e+30
    %v8500 = vsel %vm5077, %v8488, -1e+30
    %v8501 = vsel %vm5078, %v8491, -1e+30
    %v8502 = vsel %vm5079, %v8494, -1e+30
    %v8503 = vsel %vm5501, %v8495, -inf
    %v8504 = vsel %vm5501, %v8496, -inf
    %v8505 = vsel %vm5501, %v8497, -inf
    %v8506 = vsel %vm5501, %v8498, -inf
    %v8507 = vsel %vm5501, %v8499, -inf
    %v8508 = vmax.f32 %v8503, %v8507
    %v8509 = vsel %vm5501, %v8500, -inf
    %v8510 = vmax.f32 %v8504, %v8509
    %v8511 = vsel %vm5501, %v8501, -inf
    %v8512 = vmax.f32 %v8505, %v8511
    %v8513 = vsel %vm5501, %v8502, -inf
    %v8514 = vmax.f32 %v8506, %v8513
    %v8515 = vmax.f32 %v8508, %v8510
    %v8516 = vmax.f32 %v8512, %v8514
    %v8517 = vmax.f32 %v8515, %v8516
    %v8518 = vrot.slane %v8517, 4
    %v8519 = vmax.f32 %v8517, %v8518
    %v8520 = vrot.slane %v8519, 2
    %v8521 = vmax.f32 %v8519, %v8520
    %v8522 = vrot.slane %v8521, 1
    %v8523 = vmax.f32 %v8521, %v8522
    %v8524 = vmul.f32 %v157, %v8523
    %v8525 = vmul.f32 %v158, %v8523
    %v8526 = vmul.f32 %v159, %v8523
    %v8527 = vmul.f32 %v160, %v8523
    %v8528 = vmul.f32 %v161, %v8523
    %v8529 = vmul.f32 %v162, %v8523
    %v8530 = vmul.f32 %v163, %v8523
    %v8531 = vmul.f32 %v164, %v8523
    %v8532 = vsel %vm5501, %v8524, 0.0
    %8533 = vadd.xlane.f32.xlu0 %v8532
    %v8534 = vpop.xlane.xlu0 %8533
    %v8535 = vsel %vm5501, %v8525, 0.0
    %8536 = vadd.xlane.f32.xlu0 %v8535
    %v8537 = vpop.xlane.xlu0 %8536
    %v8538 = vsel %vm5501, %v8526, 0.0
    %8539 = vadd.xlane.f32.xlu0 %v8538
    %v8540 = vpop.xlane.xlu0 %8539
    %v8541 = vsel %vm5501, %v8527, 0.0
    %8542 = vadd.xlane.f32.xlu0 %v8541
    %v8543 = vpop.xlane.xlu0 %8542
    %v8544 = vsel %vm5501, %v8528, 0.0
    %8545 = vadd.xlane.f32.xlu0 %v8544
    %v8546 = vpop.xlane.xlu0 %8545
    %v8547 = vsel %vm5501, %v8529, 0.0
    %8548 = vadd.xlane.f32.xlu0 %v8547
    %v8549 = vpop.xlane.xlu0 %8548
    %v8550 = vsel %vm5501, %v8530, 0.0
    %8551 = vadd.xlane.f32.xlu0 %v8550
    %v8552 = vpop.xlane.xlu0 %8551
    %v8553 = vsel %vm5501, %v8531, 0.0
    %8554 = vadd.xlane.f32.xlu0 %v8553
    %v8555 = vpop.xlane.xlu0 %8554
    %v8556 = vsub.f32 %v8473, %v8534
    %v8557 = vsub.f32 %v8476, %v8537
    %v8558 = vsub.f32 %v8479, %v8540
    %v8559 = vsub.f32 %v8482, %v8543
    %v8560 = vsub.f32 %v8485, %v8546
    %v8561 = vsub.f32 %v8488, %v8549
    %v8562 = vsub.f32 %v8491, %v8552
    %v8563 = vsub.f32 %v8494, %v8555
    %v8564 = vmul.f32 %v8556, 1.442695
    %v8565 = vpow.pop %v8564
    %v8566 = vmul.f32 %v8557, 1.442695
    %v8567 = vpow.pop %v8566
    %v8568 = vmul.f32 %v8558, 1.442695
    %v8569 = vpow.pop %v8568
    %v8570 = vmul.f32 %v8559, 1.442695
    %v8571 = vpow.pop %v8570
    %v8572 = vmul.f32 %v8560, 1.442695
    %v8573 = vpow.pop %v8572
    %v8574 = vmul.f32 %v8561, 1.442695
    %v8575 = vpow.pop %v8574
    %v8576 = vmul.f32 %v8562, 1.442695
    %v8577 = vpow.pop %v8576
    %v8578 = vmul.f32 %v8563, 1.442695
    %v8579 = vpow.pop %v8578
    %8580 = vmatprep.subr.mxu0 0.0
    %8581 = vmatpush1.msra.mxu0 0.0
    %8582 = vmatprep.subr.mxu0 0.0
    %8583 = vmatpush1.msra.mxu0 0.0
    %8584 = vmatprep.subr.mxu0 0.0
    %8585 = vmatpush1.msra.mxu0 0.0
    %8586 = vmatprep.subr.mxu0 0.0
    %8587 = vmatpush1.msra.mxu0 0.0
    %8588 = vmatprep.subr.mxu0 0.0
    %8589 = vmatpush1.msra.mxu0 0.0
    %8590 = vmatprep.subr.mxu0 0.0
    %8591 = vmatpush1.msra.mxu0 0.0
    %8592 = vmatprep.subr.mxu0 0.0
    %8593 = vmatpush1.msra.mxu0 0.0
    %8594 = vmatprep.subr.mxu0 0.0
    %8595 = vmatpush1.msra.mxu0 0.0
    %8596 = vmatprep.subr.mxu0 0.0
    %8597 = vmatpush1.msra.mxu0 %v8579
    %8598 = vmatprep.subr.mxu0 0.0
    %8599 = vmatpush1.msra.mxu0 %v8577
    %8600 = vmatprep.subr.mxu0 0.0
    %8601 = vmatpush1.msra.mxu0 %v8575
    %8602 = vmatprep.subr.mxu0 0.0
    %8603 = vmatpush1.msra.mxu0 %v8573
    %8604 = vmatprep.subr.mxu0 0.0
    %8605 = vmatpush1.msra.mxu0 %v8571
    %8606 = vmatprep.subr.mxu0 0.0
    %8607 = vmatpush1.msra.mxu0 %v8569
    %8608 = vmatprep.subr.mxu0 0.0
    %8609 = vmatpush1.msra.mxu0 %v8567
    %8610 = vmatprep.subr.mxu0 0.0
    %8611 = vmatpush1.msra.mxu0 %v8565
    %8612 = vmatprep.subr.mxu0 0.0
    %8613 = vmatpush2.msra.mxu0 0.0
    %8614 = vmatprep.subr.mxu0 0.0
    %8615 = vmatpush2.msra.mxu0 0.0
    %8616 = vmatprep.subr.mxu0 0.0
    %8617 = vmatpush2.msra.mxu0 0.0
    %8618 = vmatprep.subr.mxu0 0.0
    %8619 = vmatpush2.msra.mxu0 0.0
    %8620 = vmatprep.subr.mxu0 0.0
    %8621 = vmatpush2.msra.mxu0 0.0
    %8622 = vmatprep.subr.mxu0 0.0
    %8623 = vmatpush2.msra.mxu0 0.0
    %8624 = vmatprep.subr.mxu0 0.0
    %8625 = vmatpush2.msra.mxu0 0.0
    %8626 = vmatprep.subr.mxu0 0.0
    %8627 = vmatpush2.msra.mxu0 0.0
    %8628 = vmatprep.subr.mxu0 0.0
    %8629 = vmatpush2.msra.mxu0 0.0
    %8630 = vmatprep.subr.mxu0 0.0
    %8631 = vmatpush2.msra.mxu0 0.0
    %8632 = vmatprep.subr.mxu0 0.0
    %8633 = vmatpush2.msra.mxu0 0.0
    %8634 = vmatprep.subr.mxu0 0.0
    %8635 = vmatpush2.msra.mxu0 0.0
    %8636 = vmatprep.subr.mxu0 0.0
    %8637 = vmatpush2.msra.mxu0 0.0
    %8638 = vmatprep.subr.mxu0 0.0
    %8639 = vmatpush2.msra.mxu0 0.0
    %8640 = vmatprep.subr.mxu0 0.0
    %8641 = vmatpush2.msra.mxu0 0.0
    %8642 = vmatprep.subr.mxu0 0.0
    %8643 = vmatpush2.msra.mxu0 0.0
    %8644 = vmatprep.mubr.f32.mxu0 0.0
    %8645 = vmatmul.mubr.f32.gmra.mxu0 %v5749
    %v8646 = vpop.f32.mrf.mxu0
    %v8647 = vadd.f32 0.0, %v8646
    %v8648 = vpop.f32.mrf.mxu0
    %8649 = vdwg.mxu0
    %8650 = vmatprep.subr.mxu0 0.0
    %8651 = vmatpush1.msra.mxu0 0.0
    %8652 = vmatprep.subr.mxu0 0.0
    %8653 = vmatpush1.msra.mxu0 0.0
    %8654 = vmatprep.subr.mxu0 0.0
    %8655 = vmatpush1.msra.mxu0 0.0
    %8656 = vmatprep.subr.mxu0 0.0
    %8657 = vmatpush1.msra.mxu0 0.0
    %8658 = vmatprep.subr.mxu0 0.0
    %8659 = vmatpush1.msra.mxu0 0.0
    %8660 = vmatprep.subr.mxu0 0.0
    %8661 = vmatpush1.msra.mxu0 0.0
    %8662 = vmatprep.subr.mxu0 0.0
    %8663 = vmatpush1.msra.mxu0 0.0
    %8664 = vmatprep.subr.mxu0 0.0
    %8665 = vmatpush1.msra.mxu0 0.0
    %8666 = vmatprep.subr.mxu0 0.0
    %8667 = vmatpush1.msra.mxu0 0.0
    %8668 = vmatprep.subr.mxu0 0.0
    %8669 = vmatpush1.msra.mxu0 0.0
    %8670 = vmatprep.subr.mxu0 0.0
    %8671 = vmatpush1.msra.mxu0 0.0
    %8672 = vmatprep.subr.mxu0 0.0
    %8673 = vmatpush1.msra.mxu0 0.0
    %8674 = vmatprep.subr.mxu0 0.0
    %8675 = vmatpush1.msra.mxu0 0.0
    %8676 = vmatprep.subr.mxu0 0.0
    %8677 = vmatpush1.msra.mxu0 0.0
    %8678 = vmatprep.subr.mxu0 0.0
    %8679 = vmatpush1.msra.mxu0 0.0
    %8680 = vmatprep.subr.mxu0 0.0
    %8681 = vmatpush1.msra.mxu0 %v8647
    %8682 = vmatprep.subr.mxu0 0.0
    %8683 = vmatpush2.msra.mxu0 0.0
    %8684 = vmatprep.subr.mxu0 0.0
    %8685 = vmatpush2.msra.mxu0 0.0
    %8686 = vmatprep.subr.mxu0 0.0
    %8687 = vmatpush2.msra.mxu0 0.0
    %8688 = vmatprep.subr.mxu0 0.0
    %8689 = vmatpush2.msra.mxu0 0.0
    %8690 = vmatprep.subr.mxu0 0.0
    %8691 = vmatpush2.msra.mxu0 0.0
    %8692 = vmatprep.subr.mxu0 0.0
    %8693 = vmatpush2.msra.mxu0 0.0
    %8694 = vmatprep.subr.mxu0 0.0
    %8695 = vmatpush2.msra.mxu0 0.0
    %8696 = vmatprep.subr.mxu0 0.0
    %8697 = vmatpush2.msra.mxu0 0.0
    %8698 = vmatprep.subr.mxu0 0.0
    %8699 = vmatpush2.msra.mxu0 0.0
    %8700 = vmatprep.subr.mxu0 0.0
    %8701 = vmatpush2.msra.mxu0 0.0
    %8702 = vmatprep.subr.mxu0 0.0
    %8703 = vmatpush2.msra.mxu0 0.0
    %8704 = vmatprep.subr.mxu0 0.0
    %8705 = vmatpush2.msra.mxu0 0.0
    %8706 = vmatprep.subr.mxu0 0.0
    %8707 = vmatpush2.msra.mxu0 0.0
    %8708 = vmatprep.subr.mxu0 0.0
    %8709 = vmatpush2.msra.mxu0 0.0
    %8710 = vmatprep.subr.mxu0 0.0
    %8711 = vmatpush2.msra.mxu0 0.0
    %8712 = vmatprep.subr.mxu0 0.0
    %8713 = vmatpush2.msra.mxu0 0.0
    %8714 = vmatprep.mubr.f32.mxu0 0.0
    %8715 = vmatmul.mubr.f32.gmra.mxu0 %v5503
    %v8716 = vpop.f32.mrf.mxu0
    %v8717 = vadd.f32 1e-16, %v8716
    %v8718 = vpop.f32.mrf.mxu0
    %8719 = vmatprep.mubr.f32.mxu0 0.0
    %8720 = vmatmul.mubr.f32.gmra.mxu0 %v5506
    %v8721 = vpop.f32.mrf.mxu0
    %v8722 = vadd.f32 1e-16, %v8721
    %v8723 = vpop.f32.mrf.mxu0
    %8724 = vmatprep.mubr.f32.mxu0 0.0
    %8725 = vmatmul.mubr.f32.gmra.mxu0 %v5509
    %v8726 = vpop.f32.mrf.mxu0
    %v8727 = vadd.f32 1e-16, %v8726
    %v8728 = vpop.f32.mrf.mxu0
    %8729 = vmatprep.mubr.f32.mxu0 0.0
    %8730 = vmatmul.mubr.f32.gmra.mxu0 %v5512
    %v8731 = vpop.f32.mrf.mxu0
    %v8732 = vadd.f32 1e-16, %v8731
    %v8733 = vpop.f32.mrf.mxu0
    %8734 = vmatprep.mubr.f32.mxu0 0.0
    %8735 = vmatmul.mubr.f32.gmra.mxu0 %v5515
    %v8736 = vpop.f32.mrf.mxu0
    %v8737 = vadd.f32 1e-16, %v8736
    %v8738 = vpop.f32.mrf.mxu0
    %8739 = vmatprep.mubr.f32.mxu0 0.0
    %8740 = vmatmul.mubr.f32.gmra.mxu0 %v5518
    %v8741 = vpop.f32.mrf.mxu0
    %v8742 = vadd.f32 1e-16, %v8741
    %v8743 = vpop.f32.mrf.mxu0
    %8744 = vmatprep.mubr.f32.mxu0 0.0
    %8745 = vmatmul.mubr.f32.gmra.mxu0 %v5521
    %v8746 = vpop.f32.mrf.mxu0
    %v8747 = vadd.f32 1e-16, %v8746
    %v8748 = vpop.f32.mrf.mxu0
    %8749 = vmatprep.mubr.f32.mxu0 0.0
    %8750 = vmatmul.mubr.f32.gmra.mxu0 %v5524
    %v8751 = vpop.f32.mrf.mxu0
    %v8752 = vadd.f32 1e-16, %v8751
    %v8753 = vpop.f32.mrf.mxu0
    %8754 = vdwg.mxu0
    %v8755 = vrcp.pop %v8717
    %v8756 = vrcp.pop %v8722
    %v8757 = vrcp.pop %v8727
    %v8758 = vrcp.pop %v8732
    %v8759 = vrcp.pop %v8737
    %v8760 = vrcp.pop %v8742
    %v8761 = vrcp.pop %v8747
    %v8762 = vrcp.pop %v8752
    %v8763 = vmul.f32 %v8565, %v8755
    %v8764 = vmul.f32 %v8567, %v8756
    %v8765 = vmul.f32 %v8569, %v8757
    %v8766 = vmul.f32 %v8571, %v8758
    %v8767 = vmul.f32 %v8573, %v8759
    %v8768 = vmul.f32 %v8575, %v8760
    %v8769 = vmul.f32 %v8577, %v8761
    %v8770 = vmul.f32 %v8579, %v8762
    %8772 = vset.pattern.permute.xlu0 0
    %8773 = vperm.xlu0 %8772, %v8763
    %v8774 = vpop.permute.xlu0 %8773
    %8777 = vset.pattern.permute.xlu0 0
    %8778 = vperm.xlu0 %8777, %v8764
    %v8779 = vpop.permute.xlu0 %8778
    %8782 = vset.pattern.permute.xlu0 0
    %8783 = vperm.xlu0 %8782, %v8765
    %v8784 = vpop.permute.xlu0 %8783
    %8787 = vset.pattern.permute.xlu0 0
    %8788 = vperm.xlu0 %8787, %v8766
    %v8789 = vpop.permute.xlu0 %8788
    %8792 = vset.pattern.permute.xlu0 0
    %8793 = vperm.xlu0 %8792, %v8767
    %v8794 = vpop.permute.xlu0 %8793
    %8797 = vset.pattern.permute.xlu0 0
    %8798 = vperm.xlu0 %8797, %v8768
    %v8799 = vpop.permute.xlu0 %8798
    %8802 = vset.pattern.permute.xlu0 0
    %8803 = vperm.xlu0 %8802, %v8769
    %v8804 = vpop.permute.xlu0 %8803
    %8807 = vset.pattern.permute.xlu0 0
    %8808 = vperm.xlu0 %8807, %v8770
    %v8809 = vpop.permute.xlu0 %8808
    %v8811 = vmul.f32 %v8774, %v4992
    %v8812 = vmul.f32 %v8779, %v4993
    %v8813 = vmul.f32 %v8784, %v4994
    %v8814 = vmul.f32 %v8789, %v4995
    %v8815 = vmul.f32 %v8794, %v4996
    %v8816 = vmul.f32 %v8799, %v4997
    %v8817 = vmul.f32 %v8804, %v4998
    %v8818 = vmul.f32 %v8809, %v4999
    %8819 = vmatprep.subr.mxu0 0.0
    %8820 = vmatpush1.msra.mxu0 0.0
    %8821 = vmatprep.subr.mxu0 0.0
    %8822 = vmatpush1.msra.mxu0 0.0
    %8823 = vmatprep.subr.mxu0 0.0
    %8824 = vmatpush1.msra.mxu0 0.0
    %8825 = vmatprep.subr.mxu0 0.0
    %8826 = vmatpush1.msra.mxu0 0.0
    %8827 = vmatprep.subr.mxu0 0.0
    %8828 = vmatpush1.msra.mxu0 0.0
    %8829 = vmatprep.subr.mxu0 0.0
    %8830 = vmatpush1.msra.mxu0 0.0
    %8831 = vmatprep.subr.mxu0 0.0
    %8832 = vmatpush1.msra.mxu0 0.0
    %8833 = vmatprep.subr.mxu0 0.0
    %8834 = vmatpush1.msra.mxu0 0.0
    %8835 = vmatprep.subr.mxu0 0.0
    %8836 = vmatpush1.msra.mxu0 %v8818
    %8837 = vmatprep.subr.mxu0 0.0
    %8838 = vmatpush1.msra.mxu0 %v8817
    %8839 = vmatprep.subr.mxu0 0.0
    %8840 = vmatpush1.msra.mxu0 %v8816
    %8841 = vmatprep.subr.mxu0 0.0
    %8842 = vmatpush1.msra.mxu0 %v8815
    %8843 = vmatprep.subr.mxu0 0.0
    %8844 = vmatpush1.msra.mxu0 %v8814
    %8845 = vmatprep.subr.mxu0 0.0
    %8846 = vmatpush1.msra.mxu0 %v8813
    %8847 = vmatprep.subr.mxu0 0.0
    %8848 = vmatpush1.msra.mxu0 %v8812
    %8849 = vmatprep.subr.mxu0 0.0
    %8850 = vmatpush1.msra.mxu0 %v8811
    %8851 = vmatprep.subr.mxu0 0.0
    %8852 = vmatpush2.msra.mxu0 0.0
    %8853 = vmatprep.subr.mxu0 0.0
    %8854 = vmatpush2.msra.mxu0 0.0
    %8855 = vmatprep.subr.mxu0 0.0
    %8856 = vmatpush2.msra.mxu0 0.0
    %8857 = vmatprep.subr.mxu0 0.0
    %8858 = vmatpush2.msra.mxu0 0.0
    %8859 = vmatprep.subr.mxu0 0.0
    %8860 = vmatpush2.msra.mxu0 0.0
    %8861 = vmatprep.subr.mxu0 0.0
    %8862 = vmatpush2.msra.mxu0 0.0
    %8863 = vmatprep.subr.mxu0 0.0
    %8864 = vmatpush2.msra.mxu0 0.0
    %8865 = vmatprep.subr.mxu0 0.0
    %8866 = vmatpush2.msra.mxu0 0.0
    %8867 = vmatprep.subr.mxu0 0.0
    %8868 = vmatpush2.msra.mxu0 0.0
    %8869 = vmatprep.subr.mxu0 0.0
    %8870 = vmatpush2.msra.mxu0 0.0
    %8871 = vmatprep.subr.mxu0 0.0
    %8872 = vmatpush2.msra.mxu0 0.0
    %8873 = vmatprep.subr.mxu0 0.0
    %8874 = vmatpush2.msra.mxu0 0.0
    %8875 = vmatprep.subr.mxu0 0.0
    %8876 = vmatpush2.msra.mxu0 0.0
    %8877 = vmatprep.subr.mxu0 0.0
    %8878 = vmatpush2.msra.mxu0 0.0
    %8879 = vmatprep.subr.mxu0 0.0
    %8880 = vmatpush2.msra.mxu0 0.0
    %8881 = vmatprep.subr.mxu0 0.0
    %8882 = vmatpush2.msra.mxu0 0.0
    %8883 = vmatprep.mubr.f32.mxu0 0.0
    %8884 = vmatmul.mubr.f32.gmra.mxu0 %v5749
    %v8885 = vpop.f32.mrf.mxu0
    %v8886 = vadd.f32 0.0, %v8885
    %v8887 = vpop.f32.mrf.mxu0
    %8888 = vdwg.mxu0
    %8889 = vmatprep.subr.mxu0 0.0
    %8890 = vmatpush1.msra.mxu0 %v5019
    %8891 = vmatprep.subr.mxu0 0.0
    %8892 = vmatpush1.msra.mxu0 %v5018
    %8893 = vmatprep.subr.mxu0 0.0
    %8894 = vmatpush1.msra.mxu0 %v5017
    %8895 = vmatprep.subr.mxu0 0.0
    %8896 = vmatpush1.msra.mxu0 %v5016
    %8897 = vmatprep.subr.mxu0 0.0
    %8898 = vmatpush1.msra.mxu0 %v5015
    %8899 = vmatprep.subr.mxu0 0.0
    %8900 = vmatpush1.msra.mxu0 %v5014
    %8901 = vmatprep.subr.mxu0 0.0
    %8902 = vmatpush1.msra.mxu0 %v5013
    %8903 = vmatprep.subr.mxu0 0.0
    %8904 = vmatpush1.msra.mxu0 %v5012
    %8905 = vmatprep.subr.mxu0 0.0
    %8906 = vmatpush1.msra.mxu0 %v5011
    %8907 = vmatprep.subr.mxu0 0.0
    %8908 = vmatpush1.msra.mxu0 %v5010
    %8909 = vmatprep.subr.mxu0 0.0
    %8910 = vmatpush1.msra.mxu0 %v5009
    %8911 = vmatprep.subr.mxu0 0.0
    %8912 = vmatpush1.msra.mxu0 %v5008
    %8913 = vmatprep.subr.mxu0 0.0
    %8914 = vmatpush1.msra.mxu0 %v5007
    %8915 = vmatprep.subr.mxu0 0.0
    %8916 = vmatpush1.msra.mxu0 %v5006
    %8917 = vmatprep.subr.mxu0 0.0
    %8918 = vmatpush1.msra.mxu0 %v5005
    %8919 = vmatprep.subr.mxu0 0.0
    %8920 = vmatpush1.msra.mxu0 %v5004
    %8921 = vmatprep.subr.mxu0 0.0
    %8922 = vmatpush2.msra.mxu0 0.0
    %8923 = vmatprep.subr.mxu0 0.0
    %8924 = vmatpush2.msra.mxu0 0.0
    %8925 = vmatprep.subr.mxu0 0.0
    %8926 = vmatpush2.msra.mxu0 0.0
    %8927 = vmatprep.subr.mxu0 0.0
    %8928 = vmatpush2.msra.mxu0 0.0
    %8929 = vmatprep.subr.mxu0 0.0
    %8930 = vmatpush2.msra.mxu0 0.0
    %8931 = vmatprep.subr.mxu0 0.0
    %8932 = vmatpush2.msra.mxu0 0.0
    %8933 = vmatprep.subr.mxu0 0.0
    %8934 = vmatpush2.msra.mxu0 0.0
    %8935 = vmatprep.subr.mxu0 0.0
    %8936 = vmatpush2.msra.mxu0 0.0
    %8937 = vmatprep.subr.mxu0 0.0
    %8938 = vmatpush2.msra.mxu0 0.0
    %8939 = vmatprep.subr.mxu0 0.0
    %8940 = vmatpush2.msra.mxu0 0.0
    %8941 = vmatprep.subr.mxu0 0.0
    %8942 = vmatpush2.msra.mxu0 0.0
    %8943 = vmatprep.subr.mxu0 0.0
    %8944 = vmatpush2.msra.mxu0 0.0
    %8945 = vmatprep.subr.mxu0 0.0
    %8946 = vmatpush2.msra.mxu0 0.0
    %8947 = vmatprep.subr.mxu0 0.0
    %8948 = vmatpush2.msra.mxu0 0.0
    %8949 = vmatprep.subr.mxu0 0.0
    %8950 = vmatpush2.msra.mxu0 0.0
    %8951 = vmatprep.subr.mxu0 0.0
    %8952 = vmatpush2.msra.mxu0 0.0
    %8953 = vmatprep.mubr.f32.mxu0 0.0
    %8954 = vmatmul.mubr.f32.gmra.mxu0 %v8886
    %v8955 = vpop.f32.mrf.mxu0
    %v8956 = vadd.f32 0.0, %v8955
    %v8957 = vpop.f32.mrf.mxu0
    %8958 = vdwg.mxu0
    %v8959 = vsel %vm1281, %v8356, 0
    %8961 = vmatprep.subr.mxu0 0.0
    %8962 = vmatpush1.msra.mxu0 0.0
    %8963 = vmatprep.subr.mxu0 0.0
    %8964 = vmatpush1.msra.mxu0 0.0
    %8965 = vmatprep.subr.mxu0 0.0
    %8966 = vmatpush1.msra.mxu0 0.0
    %8967 = vmatprep.subr.mxu0 0.0
    %8968 = vmatpush1.msra.mxu0 0.0
    %8969 = vmatprep.subr.mxu0 0.0
    %8970 = vmatpush1.msra.mxu0 0.0
    %8971 = vmatprep.subr.mxu0 0.0
    %8972 = vmatpush1.msra.mxu0 0.0
    %8973 = vmatprep.subr.mxu0 0.0
    %8974 = vmatpush1.msra.mxu0 0.0
    %8975 = vmatprep.subr.mxu0 0.0
    %8976 = vmatpush1.msra.mxu0 0.0
    %8977 = vmatprep.subr.mxu0 0.0
    %8978 = vmatpush1.msra.mxu0 0.0
    %8979 = vmatprep.subr.mxu0 0.0
    %8980 = vmatpush1.msra.mxu0 0.0
    %8981 = vmatprep.subr.mxu0 0.0
    %8982 = vmatpush1.msra.mxu0 0.0
    %8983 = vmatprep.subr.mxu0 0.0
    %8984 = vmatpush1.msra.mxu0 0.0
    %8985 = vmatprep.subr.mxu0 0.0
    %8986 = vmatpush1.msra.mxu0 %v5003
    %8987 = vmatprep.subr.mxu0 0.0
    %8988 = vmatpush1.msra.mxu0 %v5002
    %8989 = vmatprep.subr.mxu0 0.0
    %8990 = vmatpush1.msra.mxu0 %v5001
    %8991 = vmatprep.subr.mxu0 0.0
    %8992 = vmatpush1.msra.mxu0 %v5000
    %8993 = vmatprep.subr.mxu0 0.0
    %8994 = vmatpush2.msra.mxu0 0.0
    %8995 = vmatprep.subr.mxu0 0.0
    %8996 = vmatpush2.msra.mxu0 0.0
    %8997 = vmatprep.subr.mxu0 0.0
    %8998 = vmatpush2.msra.mxu0 0.0
    %8999 = vmatprep.subr.mxu0 0.0
    %9000 = vmatpush2.msra.mxu0 0.0
    %9001 = vmatprep.subr.mxu0 0.0
    %9002 = vmatpush2.msra.mxu0 0.0
    %9003 = vmatprep.subr.mxu0 0.0
    %9004 = vmatpush2.msra.mxu0 0.0
    %9005 = vmatprep.subr.mxu0 0.0
    %9006 = vmatpush2.msra.mxu0 0.0
    %9007 = vmatprep.subr.mxu0 0.0
    %9008 = vmatpush2.msra.mxu0 0.0
    %9009 = vmatprep.subr.mxu0 0.0
    %9010 = vmatpush2.msra.mxu0 0.0
    %9011 = vmatprep.subr.mxu0 0.0
    %9012 = vmatpush2.msra.mxu0 0.0
    %9013 = vmatprep.subr.mxu0 0.0
    %9014 = vmatpush2.msra.mxu0 0.0
    %9015 = vmatprep.subr.mxu0 0.0
    %9016 = vmatpush2.msra.mxu0 0.0
    %9017 = vmatprep.subr.mxu0 0.0
    %9018 = vmatpush2.msra.mxu0 0.0
    %9019 = vmatprep.subr.mxu0 0.0
    %9020 = vmatpush2.msra.mxu0 0.0
    %9021 = vmatprep.subr.mxu0 0.0
    %9022 = vmatpush2.msra.mxu0 0.0
    %9023 = vmatprep.subr.mxu0 0.0
    %9024 = vmatpush2.msra.mxu0 0.0
    %9025 = vmatprep.mubr.f32.mxu0 0.0
    %9026 = vmatmul.mubr.f32.gmra.mxu0 %v8959
    %v9027 = vpop.f32.mrf.mxu0
    %v9028 = vadd.f32 %v8956, %v9027
    %v9029 = vpop.f32.mrf.mxu0
    %9030 = vdwg.mxu0
    %9031 = vmatprep.subr.mxu0 0.0
    %9032 = vmatpush1.msra.mxu0 0.0
    %9033 = vmatprep.subr.mxu0 0.0
    %9034 = vmatpush1.msra.mxu0 0.0
    %9035 = vmatprep.subr.mxu0 0.0
    %9036 = vmatpush1.msra.mxu0 0.0
    %9037 = vmatprep.subr.mxu0 0.0
    %9038 = vmatpush1.msra.mxu0 0.0
    %9039 = vmatprep.subr.mxu0 0.0
    %9040 = vmatpush1.msra.mxu0 0.0
    %9041 = vmatprep.subr.mxu0 0.0
    %9042 = vmatpush1.msra.mxu0 0.0
    %9043 = vmatprep.subr.mxu0 0.0
    %9044 = vmatpush1.msra.mxu0 0.0
    %9045 = vmatprep.subr.mxu0 0.0
    %9046 = vmatpush1.msra.mxu0 0.0
    %9047 = vmatprep.subr.mxu0 0.0
    %9048 = vmatpush1.msra.mxu0 0.0
    %9049 = vmatprep.subr.mxu0 0.0
    %9050 = vmatpush1.msra.mxu0 0.0
    %9051 = vmatprep.subr.mxu0 0.0
    %9052 = vmatpush1.msra.mxu0 0.0
    %9053 = vmatprep.subr.mxu0 0.0
    %9054 = vmatpush1.msra.mxu0 0.0
    %9055 = vmatprep.subr.mxu0 0.0
    %9056 = vmatpush1.msra.mxu0 %v5023
    %9057 = vmatprep.subr.mxu0 0.0
    %9058 = vmatpush1.msra.mxu0 %v5022
    %9059 = vmatprep.subr.mxu0 0.0
    %9060 = vmatpush1.msra.mxu0 %v5021
    %9061 = vmatprep.subr.mxu0 0.0
    %9062 = vmatpush1.msra.mxu0 %v5020
    %9063 = vmatprep.subr.mxu0 0.0
    %9064 = vmatpush2.msra.mxu0 0.0
    %9065 = vmatprep.subr.mxu0 0.0
    %9066 = vmatpush2.msra.mxu0 0.0
    %9067 = vmatprep.subr.mxu0 0.0
    %9068 = vmatpush2.msra.mxu0 0.0
    %9069 = vmatprep.subr.mxu0 0.0
    %9070 = vmatpush2.msra.mxu0 0.0
    %9071 = vmatprep.subr.mxu0 0.0
    %9072 = vmatpush2.msra.mxu0 0.0
    %9073 = vmatprep.subr.mxu0 0.0
    %9074 = vmatpush2.msra.mxu0 0.0
    %9075 = vmatprep.subr.mxu0 0.0
    %9076 = vmatpush2.msra.mxu0 0.0
    %9077 = vmatprep.subr.mxu0 0.0
    %9078 = vmatpush2.msra.mxu0 0.0
    %9079 = vmatprep.subr.mxu0 0.0
    %9080 = vmatpush2.msra.mxu0 0.0
    %9081 = vmatprep.subr.mxu0 0.0
    %9082 = vmatpush2.msra.mxu0 0.0
    %9083 = vmatprep.subr.mxu0 0.0
    %9084 = vmatpush2.msra.mxu0 0.0
    %9085 = vmatprep.subr.mxu0 0.0
    %9086 = vmatpush2.msra.mxu0 0.0
    %9087 = vmatprep.subr.mxu0 0.0
    %9088 = vmatpush2.msra.mxu0 0.0
    %9089 = vmatprep.subr.mxu0 0.0
    %9090 = vmatpush2.msra.mxu0 0.0
    %9091 = vmatprep.subr.mxu0 0.0
    %9092 = vmatpush2.msra.mxu0 0.0
    %9093 = vmatprep.subr.mxu0 0.0
    %9094 = vmatpush2.msra.mxu0 0.0
    %9095 = vmatprep.mubr.f32.mxu0 0.0
    %9096 = vmatmul.mubr.f32.gmra.mxu0 %v8257
    %v9097 = vpop.f32.mrf.mxu0
    %v9098 = vadd.f32 0.0, %v9097
    %v9099 = vpop.f32.mrf.mxu0
    %9100 = vdwg.mxu0
    %v9101 = vadd.f32 %v9028, %v9098
    %v9102 = vadd.f32 %v9101, %v5297
    %v9103 = vxor.u32 %v9102, 2147483648
    %v9104 = vmul.f32 %v9103, 1.442695
    %v9105 = vpow.pop %v9104
    %v9106 = vadd.f32 %v9105, 1.0
    %v9107 = vrcp.pop %v9106
    %v9108 = vmul.f32 1.0, %v9107
    %v9109 = vtanh.pop %v9102
    %v9110 = vmul.f32 %v9108, %v8177
    %9112 = vrot.lane.b32.xlu0 %v9109, 64
    %v9113 = vpop.permute.xlu0 %9112
    %v9115 = vmul.f32 %v9108, %v9113
    %9117 = vrot.lane.b32.xlu0 %v9115, 32
    %v9118 = vpop.permute.xlu0 %9117
    %v9120 = vadd.f32 %v9110, %v9118
    %v9121 = vtanh.pop %v9120
    %9123 = vrot.lane.b32.xlu0 %v9121, 64
    %v9124 = vpop.permute.xlu0 %9123
    %v9126 = vmul.f32 %v9108, %v9124
    %9127 = vmatprep.subr.mxu0 0.0
    %9128 = vmatpush1.msra.mxu0 0.0
    %9129 = vmatprep.subr.mxu0 0.0
    %9130 = vmatpush1.msra.mxu0 0.0
    %9131 = vmatprep.subr.mxu0 0.0
    %9132 = vmatpush1.msra.mxu0 0.0
    %9133 = vmatprep.subr.mxu0 0.0
    %9134 = vmatpush1.msra.mxu0 0.0
    %9135 = vmatprep.subr.mxu0 0.0
    %9136 = vmatpush1.msra.mxu0 0.0
    %9137 = vmatprep.subr.mxu0 0.0
    %9138 = vmatpush1.msra.mxu0 0.0
    %9139 = vmatprep.subr.mxu0 0.0
    %9140 = vmatpush1.msra.mxu0 0.0
    %9141 = vmatprep.subr.mxu0 0.0
    %9142 = vmatpush1.msra.mxu0 0.0
    %9143 = vmatprep.subr.mxu0 0.0
    %9144 = vmatpush1.msra.mxu0 0.0
    %9145 = vmatprep.subr.mxu0 0.0
    %9146 = vmatpush1.msra.mxu0 0.0
    %9147 = vmatprep.subr.mxu0 0.0
    %9148 = vmatpush1.msra.mxu0 0.0
    %9149 = vmatprep.subr.mxu0 0.0
    %9150 = vmatpush1.msra.mxu0 0.0
    %9151 = vmatprep.subr.mxu0 0.0
    %9152 = vmatpush1.msra.mxu0 %v5032
    %9153 = vmatprep.subr.mxu0 0.0
    %9154 = vmatpush1.msra.mxu0 %v5031
    %9155 = vmatprep.subr.mxu0 0.0
    %9156 = vmatpush1.msra.mxu0 %v5030
    %9157 = vmatprep.subr.mxu0 0.0
    %9158 = vmatpush1.msra.mxu0 %v5029
    %9159 = vmatprep.subr.mxu0 0.0
    %9160 = vmatpush2.msra.mxu0 0.0
    %9161 = vmatprep.subr.mxu0 0.0
    %9162 = vmatpush2.msra.mxu0 0.0
    %9163 = vmatprep.subr.mxu0 0.0
    %9164 = vmatpush2.msra.mxu0 0.0
    %9165 = vmatprep.subr.mxu0 0.0
    %9166 = vmatpush2.msra.mxu0 0.0
    %9167 = vmatprep.subr.mxu0 0.0
    %9168 = vmatpush2.msra.mxu0 0.0
    %9169 = vmatprep.subr.mxu0 0.0
    %9170 = vmatpush2.msra.mxu0 0.0
    %9171 = vmatprep.subr.mxu0 0.0
    %9172 = vmatpush2.msra.mxu0 0.0
    %9173 = vmatprep.subr.mxu0 0.0
    %9174 = vmatpush2.msra.mxu0 0.0
    %9175 = vmatprep.subr.mxu0 0.0
    %9176 = vmatpush2.msra.mxu0 0.0
    %9177 = vmatprep.subr.mxu0 0.0
    %9178 = vmatpush2.msra.mxu0 0.0
    %9179 = vmatprep.subr.mxu0 0.0
    %9180 = vmatpush2.msra.mxu0 0.0
    %9181 = vmatprep.subr.mxu0 0.0
    %9182 = vmatpush2.msra.mxu0 0.0
    %9183 = vmatprep.subr.mxu0 0.0
    %9184 = vmatpush2.msra.mxu0 0.0
    %9185 = vmatprep.subr.mxu0 0.0
    %9186 = vmatpush2.msra.mxu0 0.0
    %9187 = vmatprep.subr.mxu0 0.0
    %9188 = vmatpush2.msra.mxu0 0.0
    %9189 = vmatprep.subr.mxu0 0.0
    %9190 = vmatpush2.msra.mxu0 0.0
    %9191 = vmatprep.mubr.f32.mxu0 0.0
    %9192 = vmatmul.mubr.f32.gmra.mxu0 %v8959
    %v9193 = vpop.f32.mrf.mxu0
    %v9194 = vadd.f32 0.0, %v9193
    %v9195 = vpop.f32.mrf.mxu0
    %9196 = vdwg.mxu0
    %9198 = vrot.lane.b32.xlu0 %v9126, 32
    %v9199 = vpop.permute.xlu0 %9198
    %v9200 = vsel %vm1281, %v9199, 0
    %9202 = vmatprep.subr.mxu0 0.0
    %9203 = vmatpush1.msra.mxu0 0.0
    %9204 = vmatprep.subr.mxu0 0.0
    %9205 = vmatpush1.msra.mxu0 0.0
    %9206 = vmatprep.subr.mxu0 0.0
    %9207 = vmatpush1.msra.mxu0 0.0
    %9208 = vmatprep.subr.mxu0 0.0
    %9209 = vmatpush1.msra.mxu0 0.0
    %9210 = vmatprep.subr.mxu0 0.0
    %9211 = vmatpush1.msra.mxu0 0.0
    %9212 = vmatprep.subr.mxu0 0.0
    %9213 = vmatpush1.msra.mxu0 0.0
    %9214 = vmatprep.subr.mxu0 0.0
    %9215 = vmatpush1.msra.mxu0 0.0
    %9216 = vmatprep.subr.mxu0 0.0
    %9217 = vmatpush1.msra.mxu0 0.0
    %9218 = vmatprep.subr.mxu0 0.0
    %9219 = vmatpush1.msra.mxu0 0.0
    %9220 = vmatprep.subr.mxu0 0.0
    %9221 = vmatpush1.msra.mxu0 0.0
    %9222 = vmatprep.subr.mxu0 0.0
    %9223 = vmatpush1.msra.mxu0 0.0
    %9224 = vmatprep.subr.mxu0 0.0
    %9225 = vmatpush1.msra.mxu0 0.0
    %9226 = vmatprep.subr.mxu0 0.0
    %9227 = vmatpush1.msra.mxu0 %v5028
    %9228 = vmatprep.subr.mxu0 0.0
    %9229 = vmatpush1.msra.mxu0 %v5027
    %9230 = vmatprep.subr.mxu0 0.0
    %9231 = vmatpush1.msra.mxu0 %v5026
    %9232 = vmatprep.subr.mxu0 0.0
    %9233 = vmatpush1.msra.mxu0 %v5025
    %9234 = vmatprep.subr.mxu0 0.0
    %9235 = vmatpush2.msra.mxu0 0.0
    %9236 = vmatprep.subr.mxu0 0.0
    %9237 = vmatpush2.msra.mxu0 0.0
    %9238 = vmatprep.subr.mxu0 0.0
    %9239 = vmatpush2.msra.mxu0 0.0
    %9240 = vmatprep.subr.mxu0 0.0
    %9241 = vmatpush2.msra.mxu0 0.0
    %9242 = vmatprep.subr.mxu0 0.0
    %9243 = vmatpush2.msra.mxu0 0.0
    %9244 = vmatprep.subr.mxu0 0.0
    %9245 = vmatpush2.msra.mxu0 0.0
    %9246 = vmatprep.subr.mxu0 0.0
    %9247 = vmatpush2.msra.mxu0 0.0
    %9248 = vmatprep.subr.mxu0 0.0
    %9249 = vmatpush2.msra.mxu0 0.0
    %9250 = vmatprep.subr.mxu0 0.0
    %9251 = vmatpush2.msra.mxu0 0.0
    %9252 = vmatprep.subr.mxu0 0.0
    %9253 = vmatpush2.msra.mxu0 0.0
    %9254 = vmatprep.subr.mxu0 0.0
    %9255 = vmatpush2.msra.mxu0 0.0
    %9256 = vmatprep.subr.mxu0 0.0
    %9257 = vmatpush2.msra.mxu0 0.0
    %9258 = vmatprep.subr.mxu0 0.0
    %9259 = vmatpush2.msra.mxu0 0.0
    %9260 = vmatprep.subr.mxu0 0.0
    %9261 = vmatpush2.msra.mxu0 0.0
    %9262 = vmatprep.subr.mxu0 0.0
    %9263 = vmatpush2.msra.mxu0 0.0
    %9264 = vmatprep.subr.mxu0 0.0
    %9265 = vmatpush2.msra.mxu0 0.0
    %9266 = vmatprep.mubr.f32.mxu0 0.0
    %9267 = vmatmul.mubr.f32.gmra.mxu0 %v9200
    %v9268 = vpop.f32.mrf.mxu0
    %v9269 = vadd.f32 %v9194, %v9268
    %v9270 = vpop.f32.mrf.mxu0
    %9271 = vdwg.mxu0
    %v9272 = vadd.f32 %v9269, %v5471
    %v9273 = vxor.u32 %v9272, 2147483648
    %v9274 = vmul.f32 %v9273, 1.442695
    %v9275 = vpow.pop %v9274
    %v9276 = vadd.f32 %v9275, 1.0
    %v9277 = vrcp.pop %v9276
    %v9278 = vmul.f32 1.0, %v9277
    %v9279 = vtanh.pop %v9272
    %v9280 = vmul.f32 %v9278, %v8347
    %9282 = vrot.lane.b32.xlu0 %v9279, 64
    %v9283 = vpop.permute.xlu0 %9282
    %v9285 = vmul.f32 %v9278, %v9283
    %9287 = vrot.lane.b32.xlu0 %v9285, 32
    %v9288 = vpop.permute.xlu0 %9287
    %v9290 = vadd.f32 %v9280, %v9288
    %v9291 = vtanh.pop %v9290
    %9293 = vrot.lane.b32.xlu0 %v9291, 64
    %v9294 = vpop.permute.xlu0 %9293
    %v9296 = vmul.f32 %v9278, %v9294
    %9298 = vrot.lane.b32.xlu0 %v9296, 32
    %v9299 = vpop.permute.xlu0 %9298
    %9301 = vmatprep.subr.mxu0 0.0
    %9302 = vmatpush1.msra.mxu0 0.0
    %9303 = vmatprep.subr.mxu0 0.0
    %9304 = vmatpush1.msra.mxu0 0.0
    %9305 = vmatprep.subr.mxu0 0.0
    %9306 = vmatpush1.msra.mxu0 0.0
    %9307 = vmatprep.subr.mxu0 0.0
    %9308 = vmatpush1.msra.mxu0 0.0
    %9309 = vmatprep.subr.mxu0 0.0
    %9310 = vmatpush1.msra.mxu0 0.0
    %9311 = vmatprep.subr.mxu0 0.0
    %9312 = vmatpush1.msra.mxu0 0.0
    %9313 = vmatprep.subr.mxu0 0.0
    %9314 = vmatpush1.msra.mxu0 0.0
    %9315 = vmatprep.subr.mxu0 0.0
    %9316 = vmatpush1.msra.mxu0 0.0
    %9317 = vmatprep.subr.mxu0 0.0
    %9318 = vmatpush1.msra.mxu0 0.0
    %9319 = vmatprep.subr.mxu0 0.0
    %9320 = vmatpush1.msra.mxu0 0.0
    %9321 = vmatprep.subr.mxu0 0.0
    %9322 = vmatpush1.msra.mxu0 0.0
    %9323 = vmatprep.subr.mxu0 0.0
    %9324 = vmatpush1.msra.mxu0 0.0
    %9325 = vmatprep.subr.mxu0 0.0
    %9326 = vmatpush1.msra.mxu0 0.0
    %9327 = vmatprep.subr.mxu0 0.0
    %9328 = vmatpush1.msra.mxu0 0.0
    %9329 = vmatprep.subr.mxu0 0.0
    %9330 = vmatpush1.msra.mxu0 0.0
    %9331 = vmatprep.subr.mxu0 0.0
    %9332 = vmatpush1.msra.mxu0 %v9299
    %9333 = vmatprep.subr.mxu0 0.0
    %9334 = vmatpush2.msra.mxu0 0.0
    %9335 = vmatprep.subr.mxu0 0.0
    %9336 = vmatpush2.msra.mxu0 0.0
    %9337 = vmatprep.subr.mxu0 0.0
    %9338 = vmatpush2.msra.mxu0 0.0
    %9339 = vmatprep.subr.mxu0 0.0
    %9340 = vmatpush2.msra.mxu0 0.0
    %9341 = vmatprep.subr.mxu0 0.0
    %9342 = vmatpush2.msra.mxu0 0.0
    %9343 = vmatprep.subr.mxu0 0.0
    %9344 = vmatpush2.msra.mxu0 0.0
    %9345 = vmatprep.subr.mxu0 0.0
    %9346 = vmatpush2.msra.mxu0 0.0
    %9347 = vmatprep.subr.mxu0 0.0
    %9348 = vmatpush2.msra.mxu0 0.0
    %9349 = vmatprep.subr.mxu0 0.0
    %9350 = vmatpush2.msra.mxu0 0.0
    %9351 = vmatprep.subr.mxu0 0.0
    %9352 = vmatpush2.msra.mxu0 0.0
    %9353 = vmatprep.subr.mxu0 0.0
    %9354 = vmatpush2.msra.mxu0 0.0
    %9355 = vmatprep.subr.mxu0 0.0
    %9356 = vmatpush2.msra.mxu0 0.0
    %9357 = vmatprep.subr.mxu0 0.0
    %9358 = vmatpush2.msra.mxu0 0.0
    %9359 = vmatprep.subr.mxu0 0.0
    %9360 = vmatpush2.msra.mxu0 0.0
    %9361 = vmatprep.subr.mxu0 0.0
    %9362 = vmatpush2.msra.mxu0 0.0
    %9363 = vmatprep.subr.mxu0 0.0
    %9364 = vmatpush2.msra.mxu0 0.0
    %9365 = vmatprep.mubr.f32.mxu0 0.0
    %9366 = vmatmul.mubr.f32.gmra.mxu0 %v5503
    %v9367 = vpop.f32.mrf.mxu0
    %v9368 = vadd.f32 0.0, %v9367
    %v9369 = vpop.f32.mrf.mxu0
    %9370 = vmatprep.mubr.f32.mxu0 0.0
    %9371 = vmatmul.mubr.f32.gmra.mxu0 %v5506
    %v9372 = vpop.f32.mrf.mxu0
    %v9373 = vadd.f32 0.0, %v9372
    %v9374 = vpop.f32.mrf.mxu0
    %9375 = vmatprep.mubr.f32.mxu0 0.0
    %9376 = vmatmul.mubr.f32.gmra.mxu0 %v5509
    %v9377 = vpop.f32.mrf.mxu0
    %v9378 = vadd.f32 0.0, %v9377
    %v9379 = vpop.f32.mrf.mxu0
    %9380 = vmatprep.mubr.f32.mxu0 0.0
    %9381 = vmatmul.mubr.f32.gmra.mxu0 %v5512
    %v9382 = vpop.f32.mrf.mxu0
    %v9383 = vadd.f32 0.0, %v9382
    %v9384 = vpop.f32.mrf.mxu0
    %9385 = vmatprep.mubr.f32.mxu0 0.0
    %9386 = vmatmul.mubr.f32.gmra.mxu0 %v5515
    %v9387 = vpop.f32.mrf.mxu0
    %v9388 = vadd.f32 0.0, %v9387
    %v9389 = vpop.f32.mrf.mxu0
    %9390 = vmatprep.mubr.f32.mxu0 0.0
    %9391 = vmatmul.mubr.f32.gmra.mxu0 %v5518
    %v9392 = vpop.f32.mrf.mxu0
    %v9393 = vadd.f32 0.0, %v9392
    %v9394 = vpop.f32.mrf.mxu0
    %9395 = vmatprep.mubr.f32.mxu0 0.0
    %9396 = vmatmul.mubr.f32.gmra.mxu0 %v5521
    %v9397 = vpop.f32.mrf.mxu0
    %v9398 = vadd.f32 0.0, %v9397
    %v9399 = vpop.f32.mrf.mxu0
    %9400 = vmatprep.mubr.f32.mxu0 0.0
    %9401 = vmatmul.mubr.f32.gmra.mxu0 %v5524
    %v9402 = vpop.f32.mrf.mxu0
    %v9403 = vadd.f32 0.0, %v9402
    %v9404 = vpop.f32.mrf.mxu0
    %9405 = vdwg.mxu0
    %v9406 = vmul.f32 %v4992, %v9368
    %v9407 = vmul.f32 %v4993, %v9373
    %v9408 = vmul.f32 %v4994, %v9378
    %v9409 = vmul.f32 %v4995, %v9383
    %v9410 = vmul.f32 %v4996, %v9388
    %v9411 = vmul.f32 %v4997, %v9393
    %v9412 = vmul.f32 %v4998, %v9398
    %v9413 = vmul.f32 %v4999, %v9403
    %v9414 = vsel %vm1281, %v9406, 0.0
    %9415 = vadd.xlane.f32.xlu0 %v9414
    %v9416 = vpop.xlane.xlu0 %9415
    %v9417 = vsel %vm1281, %v9407, 0.0
    %9418 = vadd.xlane.f32.xlu0 %v9417
    %v9419 = vpop.xlane.xlu0 %9418
    %v9420 = vsel %vm1281, %v9408, 0.0
    %9421 = vadd.xlane.f32.xlu0 %v9420
    %v9422 = vpop.xlane.xlu0 %9421
    %v9423 = vsel %vm1281, %v9409, 0.0
    %9424 = vadd.xlane.f32.xlu0 %v9423
    %v9425 = vpop.xlane.xlu0 %9424
    %v9426 = vsel %vm1281, %v9410, 0.0
    %9427 = vadd.xlane.f32.xlu0 %v9426
    %v9428 = vpop.xlane.xlu0 %9427
    %v9429 = vsel %vm1281, %v9411, 0.0
    %9430 = vadd.xlane.f32.xlu0 %v9429
    %v9431 = vpop.xlane.xlu0 %9430
    %v9432 = vsel %vm1281, %v9412, 0.0
    %9433 = vadd.xlane.f32.xlu0 %v9432
    %v9434 = vpop.xlane.xlu0 %9433
    %v9435 = vsel %vm1281, %v9413, 0.0
    %9436 = vadd.xlane.f32.xlu0 %v9435
    %v9437 = vpop.xlane.xlu0 %9436
    %v9438 = vsel %vm5072, %v9416, -1e+30
    %v9439 = vsel %vm5073, %v9419, -1e+30
    %v9440 = vsel %vm5074, %v9422, -1e+30
    %v9441 = vsel %vm5075, %v9425, -1e+30
    %v9442 = vsel %vm5076, %v9428, -1e+30
    %v9443 = vsel %vm5077, %v9431, -1e+30
    %v9444 = vsel %vm5078, %v9434, -1e+30
    %v9445 = vsel %vm5079, %v9437, -1e+30
    %v9446 = vsel %vm5501, %v9438, -inf
    %v9447 = vsel %vm5501, %v9439, -inf
    %v9448 = vsel %vm5501, %v9440, -inf
    %v9449 = vsel %vm5501, %v9441, -inf
    %v9450 = vsel %vm5501, %v9442, -inf
    %v9451 = vmax.f32 %v9446, %v9450
    %v9452 = vsel %vm5501, %v9443, -inf
    %v9453 = vmax.f32 %v9447, %v9452
    %v9454 = vsel %vm5501, %v9444, -inf
    %v9455 = vmax.f32 %v9448, %v9454
    %v9456 = vsel %vm5501, %v9445, -inf
    %v9457 = vmax.f32 %v9449, %v9456
    %v9458 = vmax.f32 %v9451, %v9453
    %v9459 = vmax.f32 %v9455, %v9457
    %v9460 = vmax.f32 %v9458, %v9459
    %v9461 = vrot.slane %v9460, 4
    %v9462 = vmax.f32 %v9460, %v9461
    %v9463 = vrot.slane %v9462, 2
    %v9464 = vmax.f32 %v9462, %v9463
    %v9465 = vrot.slane %v9464, 1
    %v9466 = vmax.f32 %v9464, %v9465
    %v9467 = vmul.f32 %v157, %v9466
    %v9468 = vmul.f32 %v158, %v9466
    %v9469 = vmul.f32 %v159, %v9466
    %v9470 = vmul.f32 %v160, %v9466
    %v9471 = vmul.f32 %v161, %v9466
    %v9472 = vmul.f32 %v162, %v9466
    %v9473 = vmul.f32 %v163, %v9466
    %v9474 = vmul.f32 %v164, %v9466
    %v9475 = vsel %vm5501, %v9467, 0.0
    %9476 = vadd.xlane.f32.xlu0 %v9475
    %v9477 = vpop.xlane.xlu0 %9476
    %v9478 = vsel %vm5501, %v9468, 0.0
    %9479 = vadd.xlane.f32.xlu0 %v9478
    %v9480 = vpop.xlane.xlu0 %9479
    %v9481 = vsel %vm5501, %v9469, 0.0
    %9482 = vadd.xlane.f32.xlu0 %v9481
    %v9483 = vpop.xlane.xlu0 %9482
    %v9484 = vsel %vm5501, %v9470, 0.0
    %9485 = vadd.xlane.f32.xlu0 %v9484
    %v9486 = vpop.xlane.xlu0 %9485
    %v9487 = vsel %vm5501, %v9471, 0.0
    %9488 = vadd.xlane.f32.xlu0 %v9487
    %v9489 = vpop.xlane.xlu0 %9488
    %v9490 = vsel %vm5501, %v9472, 0.0
    %9491 = vadd.xlane.f32.xlu0 %v9490
    %v9492 = vpop.xlane.xlu0 %9491
    %v9493 = vsel %vm5501, %v9473, 0.0
    %9494 = vadd.xlane.f32.xlu0 %v9493
    %v9495 = vpop.xlane.xlu0 %9494
    %v9496 = vsel %vm5501, %v9474, 0.0
    %9497 = vadd.xlane.f32.xlu0 %v9496
    %v9498 = vpop.xlane.xlu0 %9497
    %v9499 = vsub.f32 %v9416, %v9477
    %v9500 = vsub.f32 %v9419, %v9480
    %v9501 = vsub.f32 %v9422, %v9483
    %v9502 = vsub.f32 %v9425, %v9486
    %v9503 = vsub.f32 %v9428, %v9489
    %v9504 = vsub.f32 %v9431, %v9492
    %v9505 = vsub.f32 %v9434, %v9495
    %v9506 = vsub.f32 %v9437, %v9498
    %v9507 = vmul.f32 %v9499, 1.442695
    %v9508 = vpow.pop %v9507
    %v9509 = vmul.f32 %v9500, 1.442695
    %v9510 = vpow.pop %v9509
    %v9511 = vmul.f32 %v9501, 1.442695
    %v9512 = vpow.pop %v9511
    %v9513 = vmul.f32 %v9502, 1.442695
    %v9514 = vpow.pop %v9513
    %v9515 = vmul.f32 %v9503, 1.442695
    %v9516 = vpow.pop %v9515
    %v9517 = vmul.f32 %v9504, 1.442695
    %v9518 = vpow.pop %v9517
    %v9519 = vmul.f32 %v9505, 1.442695
    %v9520 = vpow.pop %v9519
    %v9521 = vmul.f32 %v9506, 1.442695
    %v9522 = vpow.pop %v9521
    %9523 = vmatprep.subr.mxu0 0.0
    %9524 = vmatpush1.msra.mxu0 0.0
    %9525 = vmatprep.subr.mxu0 0.0
    %9526 = vmatpush1.msra.mxu0 0.0
    %9527 = vmatprep.subr.mxu0 0.0
    %9528 = vmatpush1.msra.mxu0 0.0
    %9529 = vmatprep.subr.mxu0 0.0
    %9530 = vmatpush1.msra.mxu0 0.0
    %9531 = vmatprep.subr.mxu0 0.0
    %9532 = vmatpush1.msra.mxu0 0.0
    %9533 = vmatprep.subr.mxu0 0.0
    %9534 = vmatpush1.msra.mxu0 0.0
    %9535 = vmatprep.subr.mxu0 0.0
    %9536 = vmatpush1.msra.mxu0 0.0
    %9537 = vmatprep.subr.mxu0 0.0
    %9538 = vmatpush1.msra.mxu0 0.0
    %9539 = vmatprep.subr.mxu0 0.0
    %9540 = vmatpush1.msra.mxu0 %v9522
    %9541 = vmatprep.subr.mxu0 0.0
    %9542 = vmatpush1.msra.mxu0 %v9520
    %9543 = vmatprep.subr.mxu0 0.0
    %9544 = vmatpush1.msra.mxu0 %v9518
    %9545 = vmatprep.subr.mxu0 0.0
    %9546 = vmatpush1.msra.mxu0 %v9516
    %9547 = vmatprep.subr.mxu0 0.0
    %9548 = vmatpush1.msra.mxu0 %v9514
    %9549 = vmatprep.subr.mxu0 0.0
    %9550 = vmatpush1.msra.mxu0 %v9512
    %9551 = vmatprep.subr.mxu0 0.0
    %9552 = vmatpush1.msra.mxu0 %v9510
    %9553 = vmatprep.subr.mxu0 0.0
    %9554 = vmatpush1.msra.mxu0 %v9508
    %9555 = vmatprep.subr.mxu0 0.0
    %9556 = vmatpush2.msra.mxu0 0.0
    %9557 = vmatprep.subr.mxu0 0.0
    %9558 = vmatpush2.msra.mxu0 0.0
    %9559 = vmatprep.subr.mxu0 0.0
    %9560 = vmatpush2.msra.mxu0 0.0
    %9561 = vmatprep.subr.mxu0 0.0
    %9562 = vmatpush2.msra.mxu0 0.0
    %9563 = vmatprep.subr.mxu0 0.0
    %9564 = vmatpush2.msra.mxu0 0.0
    %9565 = vmatprep.subr.mxu0 0.0
    %9566 = vmatpush2.msra.mxu0 0.0
    %9567 = vmatprep.subr.mxu0 0.0
    %9568 = vmatpush2.msra.mxu0 0.0
    %9569 = vmatprep.subr.mxu0 0.0
    %9570 = vmatpush2.msra.mxu0 0.0
    %9571 = vmatprep.subr.mxu0 0.0
    %9572 = vmatpush2.msra.mxu0 0.0
    %9573 = vmatprep.subr.mxu0 0.0
    %9574 = vmatpush2.msra.mxu0 0.0
    %9575 = vmatprep.subr.mxu0 0.0
    %9576 = vmatpush2.msra.mxu0 0.0
    %9577 = vmatprep.subr.mxu0 0.0
    %9578 = vmatpush2.msra.mxu0 0.0
    %9579 = vmatprep.subr.mxu0 0.0
    %9580 = vmatpush2.msra.mxu0 0.0
    %9581 = vmatprep.subr.mxu0 0.0
    %9582 = vmatpush2.msra.mxu0 0.0
    %9583 = vmatprep.subr.mxu0 0.0
    %9584 = vmatpush2.msra.mxu0 0.0
    %9585 = vmatprep.subr.mxu0 0.0
    %9586 = vmatpush2.msra.mxu0 0.0
    %9587 = vmatprep.mubr.f32.mxu0 0.0
    %9588 = vmatmul.mubr.f32.gmra.mxu0 %v5749
    %v9589 = vpop.f32.mrf.mxu0
    %v9590 = vadd.f32 0.0, %v9589
    %v9591 = vpop.f32.mrf.mxu0
    %9592 = vdwg.mxu0
    %9593 = vmatprep.subr.mxu0 0.0
    %9594 = vmatpush1.msra.mxu0 0.0
    %9595 = vmatprep.subr.mxu0 0.0
    %9596 = vmatpush1.msra.mxu0 0.0
    %9597 = vmatprep.subr.mxu0 0.0
    %9598 = vmatpush1.msra.mxu0 0.0
    %9599 = vmatprep.subr.mxu0 0.0
    %9600 = vmatpush1.msra.mxu0 0.0
    %9601 = vmatprep.subr.mxu0 0.0
    %9602 = vmatpush1.msra.mxu0 0.0
    %9603 = vmatprep.subr.mxu0 0.0
    %9604 = vmatpush1.msra.mxu0 0.0
    %9605 = vmatprep.subr.mxu0 0.0
    %9606 = vmatpush1.msra.mxu0 0.0
    %9607 = vmatprep.subr.mxu0 0.0
    %9608 = vmatpush1.msra.mxu0 0.0
    %9609 = vmatprep.subr.mxu0 0.0
    %9610 = vmatpush1.msra.mxu0 0.0
    %9611 = vmatprep.subr.mxu0 0.0
    %9612 = vmatpush1.msra.mxu0 0.0
    %9613 = vmatprep.subr.mxu0 0.0
    %9614 = vmatpush1.msra.mxu0 0.0
    %9615 = vmatprep.subr.mxu0 0.0
    %9616 = vmatpush1.msra.mxu0 0.0
    %9617 = vmatprep.subr.mxu0 0.0
    %9618 = vmatpush1.msra.mxu0 0.0
    %9619 = vmatprep.subr.mxu0 0.0
    %9620 = vmatpush1.msra.mxu0 0.0
    %9621 = vmatprep.subr.mxu0 0.0
    %9622 = vmatpush1.msra.mxu0 0.0
    %9623 = vmatprep.subr.mxu0 0.0
    %9624 = vmatpush1.msra.mxu0 %v9590
    %9625 = vmatprep.subr.mxu0 0.0
    %9626 = vmatpush2.msra.mxu0 0.0
    %9627 = vmatprep.subr.mxu0 0.0
    %9628 = vmatpush2.msra.mxu0 0.0
    %9629 = vmatprep.subr.mxu0 0.0
    %9630 = vmatpush2.msra.mxu0 0.0
    %9631 = vmatprep.subr.mxu0 0.0
    %9632 = vmatpush2.msra.mxu0 0.0
    %9633 = vmatprep.subr.mxu0 0.0
    %9634 = vmatpush2.msra.mxu0 0.0
    %9635 = vmatprep.subr.mxu0 0.0
    %9636 = vmatpush2.msra.mxu0 0.0
    %9637 = vmatprep.subr.mxu0 0.0
    %9638 = vmatpush2.msra.mxu0 0.0
    %9639 = vmatprep.subr.mxu0 0.0
    %9640 = vmatpush2.msra.mxu0 0.0
    %9641 = vmatprep.subr.mxu0 0.0
    %9642 = vmatpush2.msra.mxu0 0.0
    %9643 = vmatprep.subr.mxu0 0.0
    %9644 = vmatpush2.msra.mxu0 0.0
    %9645 = vmatprep.subr.mxu0 0.0
    %9646 = vmatpush2.msra.mxu0 0.0
    %9647 = vmatprep.subr.mxu0 0.0
    %9648 = vmatpush2.msra.mxu0 0.0
    %9649 = vmatprep.subr.mxu0 0.0
    %9650 = vmatpush2.msra.mxu0 0.0
    %9651 = vmatprep.subr.mxu0 0.0
    %9652 = vmatpush2.msra.mxu0 0.0
    %9653 = vmatprep.subr.mxu0 0.0
    %9654 = vmatpush2.msra.mxu0 0.0
    %9655 = vmatprep.subr.mxu0 0.0
    %9656 = vmatpush2.msra.mxu0 0.0
    %9657 = vmatprep.mubr.f32.mxu0 0.0
    %9658 = vmatmul.mubr.f32.gmra.mxu0 %v5503
    %v9659 = vpop.f32.mrf.mxu0
    %v9660 = vadd.f32 1e-16, %v9659
    %v9661 = vpop.f32.mrf.mxu0
    %9662 = vmatprep.mubr.f32.mxu0 0.0
    %9663 = vmatmul.mubr.f32.gmra.mxu0 %v5506
    %v9664 = vpop.f32.mrf.mxu0
    %v9665 = vadd.f32 1e-16, %v9664
    %v9666 = vpop.f32.mrf.mxu0
    %9667 = vmatprep.mubr.f32.mxu0 0.0
    %9668 = vmatmul.mubr.f32.gmra.mxu0 %v5509
    %v9669 = vpop.f32.mrf.mxu0
    %v9670 = vadd.f32 1e-16, %v9669
    %v9671 = vpop.f32.mrf.mxu0
    %9672 = vmatprep.mubr.f32.mxu0 0.0
    %9673 = vmatmul.mubr.f32.gmra.mxu0 %v5512
    %v9674 = vpop.f32.mrf.mxu0
    %v9675 = vadd.f32 1e-16, %v9674
    %v9676 = vpop.f32.mrf.mxu0
    %9677 = vmatprep.mubr.f32.mxu0 0.0
    %9678 = vmatmul.mubr.f32.gmra.mxu0 %v5515
    %v9679 = vpop.f32.mrf.mxu0
    %v9680 = vadd.f32 1e-16, %v9679
    %v9681 = vpop.f32.mrf.mxu0
    %9682 = vmatprep.mubr.f32.mxu0 0.0
    %9683 = vmatmul.mubr.f32.gmra.mxu0 %v5518
    %v9684 = vpop.f32.mrf.mxu0
    %v9685 = vadd.f32 1e-16, %v9684
    %v9686 = vpop.f32.mrf.mxu0
    %9687 = vmatprep.mubr.f32.mxu0 0.0
    %9688 = vmatmul.mubr.f32.gmra.mxu0 %v5521
    %v9689 = vpop.f32.mrf.mxu0
    %v9690 = vadd.f32 1e-16, %v9689
    %v9691 = vpop.f32.mrf.mxu0
    %9692 = vmatprep.mubr.f32.mxu0 0.0
    %9693 = vmatmul.mubr.f32.gmra.mxu0 %v5524
    %v9694 = vpop.f32.mrf.mxu0
    %v9695 = vadd.f32 1e-16, %v9694
    %v9696 = vpop.f32.mrf.mxu0
    %9697 = vdwg.mxu0
    %v9698 = vrcp.pop %v9660
    %v9699 = vrcp.pop %v9665
    %v9700 = vrcp.pop %v9670
    %v9701 = vrcp.pop %v9675
    %v9702 = vrcp.pop %v9680
    %v9703 = vrcp.pop %v9685
    %v9704 = vrcp.pop %v9690
    %v9705 = vrcp.pop %v9695
    %v9706 = vmul.f32 %v9508, %v9698
    %v9707 = vmul.f32 %v9510, %v9699
    %v9708 = vmul.f32 %v9512, %v9700
    %v9709 = vmul.f32 %v9514, %v9701
    %v9710 = vmul.f32 %v9516, %v9702
    %v9711 = vmul.f32 %v9518, %v9703
    %v9712 = vmul.f32 %v9520, %v9704
    %v9713 = vmul.f32 %v9522, %v9705
    %9715 = vset.pattern.permute.xlu0 0
    %9716 = vperm.xlu0 %9715, %v9706
    %v9717 = vpop.permute.xlu0 %9716
    %9720 = vset.pattern.permute.xlu0 0
    %9721 = vperm.xlu0 %9720, %v9707
    %v9722 = vpop.permute.xlu0 %9721
    %9725 = vset.pattern.permute.xlu0 0
    %9726 = vperm.xlu0 %9725, %v9708
    %v9727 = vpop.permute.xlu0 %9726
    %9730 = vset.pattern.permute.xlu0 0
    %9731 = vperm.xlu0 %9730, %v9709
    %v9732 = vpop.permute.xlu0 %9731
    %9735 = vset.pattern.permute.xlu0 0
    %9736 = vperm.xlu0 %9735, %v9710
    %v9737 = vpop.permute.xlu0 %9736
    %9740 = vset.pattern.permute.xlu0 0
    %9741 = vperm.xlu0 %9740, %v9711
    %v9742 = vpop.permute.xlu0 %9741
    %9745 = vset.pattern.permute.xlu0 0
    %9746 = vperm.xlu0 %9745, %v9712
    %v9747 = vpop.permute.xlu0 %9746
    %9750 = vset.pattern.permute.xlu0 0
    %9751 = vperm.xlu0 %9750, %v9713
    %v9752 = vpop.permute.xlu0 %9751
    %v9754 = vmul.f32 %v9717, %v4992
    %v9755 = vmul.f32 %v9722, %v4993
    %v9756 = vmul.f32 %v9727, %v4994
    %v9757 = vmul.f32 %v9732, %v4995
    %v9758 = vmul.f32 %v9737, %v4996
    %v9759 = vmul.f32 %v9742, %v4997
    %v9760 = vmul.f32 %v9747, %v4998
    %v9761 = vmul.f32 %v9752, %v4999
    %9762 = vmatprep.subr.mxu0 0.0
    %9763 = vmatpush1.msra.mxu0 0.0
    %9764 = vmatprep.subr.mxu0 0.0
    %9765 = vmatpush1.msra.mxu0 0.0
    %9766 = vmatprep.subr.mxu0 0.0
    %9767 = vmatpush1.msra.mxu0 0.0
    %9768 = vmatprep.subr.mxu0 0.0
    %9769 = vmatpush1.msra.mxu0 0.0
    %9770 = vmatprep.subr.mxu0 0.0
    %9771 = vmatpush1.msra.mxu0 0.0
    %9772 = vmatprep.subr.mxu0 0.0
    %9773 = vmatpush1.msra.mxu0 0.0
    %9774 = vmatprep.subr.mxu0 0.0
    %9775 = vmatpush1.msra.mxu0 0.0
    %9776 = vmatprep.subr.mxu0 0.0
    %9777 = vmatpush1.msra.mxu0 0.0
    %9778 = vmatprep.subr.mxu0 0.0
    %9779 = vmatpush1.msra.mxu0 %v9761
    %9780 = vmatprep.subr.mxu0 0.0
    %9781 = vmatpush1.msra.mxu0 %v9760
    %9782 = vmatprep.subr.mxu0 0.0
    %9783 = vmatpush1.msra.mxu0 %v9759
    %9784 = vmatprep.subr.mxu0 0.0
    %9785 = vmatpush1.msra.mxu0 %v9758
    %9786 = vmatprep.subr.mxu0 0.0
    %9787 = vmatpush1.msra.mxu0 %v9757
    %9788 = vmatprep.subr.mxu0 0.0
    %9789 = vmatpush1.msra.mxu0 %v9756
    %9790 = vmatprep.subr.mxu0 0.0
    %9791 = vmatpush1.msra.mxu0 %v9755
    %9792 = vmatprep.subr.mxu0 0.0
    %9793 = vmatpush1.msra.mxu0 %v9754
    %9794 = vmatprep.subr.mxu0 0.0
    %9795 = vmatpush2.msra.mxu0 0.0
    %9796 = vmatprep.subr.mxu0 0.0
    %9797 = vmatpush2.msra.mxu0 0.0
    %9798 = vmatprep.subr.mxu0 0.0
    %9799 = vmatpush2.msra.mxu0 0.0
    %9800 = vmatprep.subr.mxu0 0.0
    %9801 = vmatpush2.msra.mxu0 0.0
    %9802 = vmatprep.subr.mxu0 0.0
    %9803 = vmatpush2.msra.mxu0 0.0
    %9804 = vmatprep.subr.mxu0 0.0
    %9805 = vmatpush2.msra.mxu0 0.0
    %9806 = vmatprep.subr.mxu0 0.0
    %9807 = vmatpush2.msra.mxu0 0.0
    %9808 = vmatprep.subr.mxu0 0.0
    %9809 = vmatpush2.msra.mxu0 0.0
    %9810 = vmatprep.subr.mxu0 0.0
    %9811 = vmatpush2.msra.mxu0 0.0
    %9812 = vmatprep.subr.mxu0 0.0
    %9813 = vmatpush2.msra.mxu0 0.0
    %9814 = vmatprep.subr.mxu0 0.0
    %9815 = vmatpush2.msra.mxu0 0.0
    %9816 = vmatprep.subr.mxu0 0.0
    %9817 = vmatpush2.msra.mxu0 0.0
    %9818 = vmatprep.subr.mxu0 0.0
    %9819 = vmatpush2.msra.mxu0 0.0
    %9820 = vmatprep.subr.mxu0 0.0
    %9821 = vmatpush2.msra.mxu0 0.0
    %9822 = vmatprep.subr.mxu0 0.0
    %9823 = vmatpush2.msra.mxu0 0.0
    %9824 = vmatprep.subr.mxu0 0.0
    %9825 = vmatpush2.msra.mxu0 0.0
    %9826 = vmatprep.mubr.f32.mxu0 0.0
    %9827 = vmatmul.mubr.f32.gmra.mxu0 %v5749
    %v9828 = vpop.f32.mrf.mxu0
    %v9829 = vadd.f32 0.0, %v9828
    %v9830 = vpop.f32.mrf.mxu0
    %9831 = vdwg.mxu0
    %9832 = vmatprep.subr.mxu0 0.0
    %9833 = vmatpush1.msra.mxu0 %v5053
    %9834 = vmatprep.subr.mxu0 0.0
    %9835 = vmatpush1.msra.mxu0 %v5052
    %9836 = vmatprep.subr.mxu0 0.0
    %9837 = vmatpush1.msra.mxu0 %v5051
    %9838 = vmatprep.subr.mxu0 0.0
    %9839 = vmatpush1.msra.mxu0 %v5050
    %9840 = vmatprep.subr.mxu0 0.0
    %9841 = vmatpush1.msra.mxu0 %v5049
    %9842 = vmatprep.subr.mxu0 0.0
    %9843 = vmatpush1.msra.mxu0 %v5048
    %9844 = vmatprep.subr.mxu0 0.0
    %9845 = vmatpush1.msra.mxu0 %v5047
    %9846 = vmatprep.subr.mxu0 0.0
    %9847 = vmatpush1.msra.mxu0 %v5046
    %9848 = vmatprep.subr.mxu0 0.0
    %9849 = vmatpush1.msra.mxu0 %v5045
    %9850 = vmatprep.subr.mxu0 0.0
    %9851 = vmatpush1.msra.mxu0 %v5044
    %9852 = vmatprep.subr.mxu0 0.0
    %9853 = vmatpush1.msra.mxu0 %v5043
    %9854 = vmatprep.subr.mxu0 0.0
    %9855 = vmatpush1.msra.mxu0 %v5042
    %9856 = vmatprep.subr.mxu0 0.0
    %9857 = vmatpush1.msra.mxu0 %v5041
    %9858 = vmatprep.subr.mxu0 0.0
    %9859 = vmatpush1.msra.mxu0 %v5040
    %9860 = vmatprep.subr.mxu0 0.0
    %9861 = vmatpush1.msra.mxu0 %v5039
    %9862 = vmatprep.subr.mxu0 0.0
    %9863 = vmatpush1.msra.mxu0 %v5038
    %9864 = vmatprep.subr.mxu0 0.0
    %9865 = vmatpush2.msra.mxu0 0.0
    %9866 = vmatprep.subr.mxu0 0.0
    %9867 = vmatpush2.msra.mxu0 0.0
    %9868 = vmatprep.subr.mxu0 0.0
    %9869 = vmatpush2.msra.mxu0 0.0
    %9870 = vmatprep.subr.mxu0 0.0
    %9871 = vmatpush2.msra.mxu0 0.0
    %9872 = vmatprep.subr.mxu0 0.0
    %9873 = vmatpush2.msra.mxu0 0.0
    %9874 = vmatprep.subr.mxu0 0.0
    %9875 = vmatpush2.msra.mxu0 0.0
    %9876 = vmatprep.subr.mxu0 0.0
    %9877 = vmatpush2.msra.mxu0 0.0
    %9878 = vmatprep.subr.mxu0 0.0
    %9879 = vmatpush2.msra.mxu0 0.0
    %9880 = vmatprep.subr.mxu0 0.0
    %9881 = vmatpush2.msra.mxu0 0.0
    %9882 = vmatprep.subr.mxu0 0.0
    %9883 = vmatpush2.msra.mxu0 0.0
    %9884 = vmatprep.subr.mxu0 0.0
    %9885 = vmatpush2.msra.mxu0 0.0
    %9886 = vmatprep.subr.mxu0 0.0
    %9887 = vmatpush2.msra.mxu0 0.0
    %9888 = vmatprep.subr.mxu0 0.0
    %9889 = vmatpush2.msra.mxu0 0.0
    %9890 = vmatprep.subr.mxu0 0.0
    %9891 = vmatpush2.msra.mxu0 0.0
    %9892 = vmatprep.subr.mxu0 0.0
    %9893 = vmatpush2.msra.mxu0 0.0
    %9894 = vmatprep.subr.mxu0 0.0
    %9895 = vmatpush2.msra.mxu0 0.0
    %9896 = vmatprep.mubr.f32.mxu0 0.0
    %9897 = vmatmul.mubr.f32.gmra.mxu0 %v9829
    %v9898 = vpop.f32.mrf.mxu0
    %v9899 = vadd.f32 0.0, %v9898
    %v9900 = vpop.f32.mrf.mxu0
    %9901 = vdwg.mxu0
    %v9902 = vsel %vm1281, %v9299, 0
    %9904 = vmatprep.subr.mxu0 0.0
    %9905 = vmatpush1.msra.mxu0 0.0
    %9906 = vmatprep.subr.mxu0 0.0
    %9907 = vmatpush1.msra.mxu0 0.0
    %9908 = vmatprep.subr.mxu0 0.0
    %9909 = vmatpush1.msra.mxu0 0.0
    %9910 = vmatprep.subr.mxu0 0.0
    %9911 = vmatpush1.msra.mxu0 0.0
    %9912 = vmatprep.subr.mxu0 0.0
    %9913 = vmatpush1.msra.mxu0 0.0
    %9914 = vmatprep.subr.mxu0 0.0
    %9915 = vmatpush1.msra.mxu0 0.0
    %9916 = vmatprep.subr.mxu0 0.0
    %9917 = vmatpush1.msra.mxu0 0.0
    %9918 = vmatprep.subr.mxu0 0.0
    %9919 = vmatpush1.msra.mxu0 0.0
    %9920 = vmatprep.subr.mxu0 0.0
    %9921 = vmatpush1.msra.mxu0 0.0
    %9922 = vmatprep.subr.mxu0 0.0
    %9923 = vmatpush1.msra.mxu0 0.0
    %9924 = vmatprep.subr.mxu0 0.0
    %9925 = vmatpush1.msra.mxu0 0.0
    %9926 = vmatprep.subr.mxu0 0.0
    %9927 = vmatpush1.msra.mxu0 0.0
    %9928 = vmatprep.subr.mxu0 0.0
    %9929 = vmatpush1.msra.mxu0 %v5037
    %9930 = vmatprep.subr.mxu0 0.0
    %9931 = vmatpush1.msra.mxu0 %v5036
    %9932 = vmatprep.subr.mxu0 0.0
    %9933 = vmatpush1.msra.mxu0 %v5035
    %9934 = vmatprep.subr.mxu0 0.0
    %9935 = vmatpush1.msra.mxu0 %v5034
    %9936 = vmatprep.subr.mxu0 0.0
    %9937 = vmatpush2.msra.mxu0 0.0
    %9938 = vmatprep.subr.mxu0 0.0
    %9939 = vmatpush2.msra.mxu0 0.0
    %9940 = vmatprep.subr.mxu0 0.0
    %9941 = vmatpush2.msra.mxu0 0.0
    %9942 = vmatprep.subr.mxu0 0.0
    %9943 = vmatpush2.msra.mxu0 0.0
    %9944 = vmatprep.subr.mxu0 0.0
    %9945 = vmatpush2.msra.mxu0 0.0
    %9946 = vmatprep.subr.mxu0 0.0
    %9947 = vmatpush2.msra.mxu0 0.0
    %9948 = vmatprep.subr.mxu0 0.0
    %9949 = vmatpush2.msra.mxu0 0.0
    %9950 = vmatprep.subr.mxu0 0.0
    %9951 = vmatpush2.msra.mxu0 0.0
    %9952 = vmatprep.subr.mxu0 0.0
    %9953 = vmatpush2.msra.mxu0 0.0
    %9954 = vmatprep.subr.mxu0 0.0
    %9955 = vmatpush2.msra.mxu0 0.0
    %9956 = vmatprep.subr.mxu0 0.0
    %9957 = vmatpush2.msra.mxu0 0.0
    %9958 = vmatprep.subr.mxu0 0.0
    %9959 = vmatpush2.msra.mxu0 0.0
    %9960 = vmatprep.subr.mxu0 0.0
    %9961 = vmatpush2.msra.mxu0 0.0
    %9962 = vmatprep.subr.mxu0 0.0
    %9963 = vmatpush2.msra.mxu0 0.0
    %9964 = vmatprep.subr.mxu0 0.0
    %9965 = vmatpush2.msra.mxu0 0.0
    %9966 = vmatprep.subr.mxu0 0.0
    %9967 = vmatpush2.msra.mxu0 0.0
    %9968 = vmatprep.mubr.f32.mxu0 0.0
    %9969 = vmatmul.mubr.f32.gmra.mxu0 %v9902
    %v9970 = vpop.f32.mrf.mxu0
    %v9971 = vadd.f32 %v9899, %v9970
    %v9972 = vpop.f32.mrf.mxu0
    %9973 = vdwg.mxu0
    %v9974 = vlaneseq
    %v9975 = vshrl.u32 %v9974, 7
    %v9976 = vsub.s32 0, %v9975
    %v9977 = vrot.slane %v5054, %v9976
    %v9978 = vadd.f32 %v9971, %v9977
    %vm9979 = vcmp.gt.f32.partialorder %v9978, 0.0
    %v9980 = vmul.f32 %v9978, 0.01
    %v9981 = vsel %vm9979, %v9978, %v9980
    %v9982 = vlaneseq
    %v9983 = vshrl.u32 %v9982, 7
    %v9984 = vsub.s32 0, %v9983
    %v9985 = vrot.slane %v5071, %v9984
    %9986 = vmatprep.subr.mxu0 0.0
    %9987 = vmatpush1.msra.mxu0 %v5070
    %9988 = vmatprep.subr.mxu0 0.0
    %9989 = vmatpush1.msra.mxu0 %v5069
    %9990 = vmatprep.subr.mxu0 0.0
    %9991 = vmatpush1.msra.mxu0 %v5068
    %9992 = vmatprep.subr.mxu0 0.0
    %9993 = vmatpush1.msra.mxu0 %v5067
    %9994 = vmatprep.subr.mxu0 0.0
    %9995 = vmatpush1.msra.mxu0 %v5066
    %9996 = vmatprep.subr.mxu0 0.0
    %9997 = vmatpush1.msra.mxu0 %v5065
    %9998 = vmatprep.subr.mxu0 0.0
    %9999 = vmatpush1.msra.mxu0 %v5064
    %10000 = vmatprep.subr.mxu0 0.0
    %10001 = vmatpush1.msra.mxu0 %v5063
    %10002 = vmatprep.subr.mxu0 0.0
    %10003 = vmatpush1.msra.mxu0 %v5062
    %10004 = vmatprep.subr.mxu0 0.0
    %10005 = vmatpush1.msra.mxu0 %v5061
    %10006 = vmatprep.subr.mxu0 0.0
    %10007 = vmatpush1.msra.mxu0 %v5060
    %10008 = vmatprep.subr.mxu0 0.0
    %10009 = vmatpush1.msra.mxu0 %v5059
    %10010 = vmatprep.subr.mxu0 0.0
    %10011 = vmatpush1.msra.mxu0 %v5058
    %10012 = vmatprep.subr.mxu0 0.0
    %10013 = vmatpush1.msra.mxu0 %v5057
    %10014 = vmatprep.subr.mxu0 0.0
    %10015 = vmatpush1.msra.mxu0 %v5056
    %10016 = vmatprep.subr.mxu0 0.0
    %10017 = vmatpush1.msra.mxu0 %v5055
    %10018 = vmatprep.subr.mxu0 0.0
    %10019 = vmatpush2.msra.mxu0 0.0
    %10020 = vmatprep.subr.mxu0 0.0
    %10021 = vmatpush2.msra.mxu0 0.0
    %10022 = vmatprep.subr.mxu0 0.0
    %10023 = vmatpush2.msra.mxu0 0.0
    %10024 = vmatprep.subr.mxu0 0.0
    %10025 = vmatpush2.msra.mxu0 0.0
    %10026 = vmatprep.subr.mxu0 0.0
    %10027 = vmatpush2.msra.mxu0 0.0
    %10028 = vmatprep.subr.mxu0 0.0
    %10029 = vmatpush2.msra.mxu0 0.0
    %10030 = vmatprep.subr.mxu0 0.0
    %10031 = vmatpush2.msra.mxu0 0.0
    %10032 = vmatprep.subr.mxu0 0.0
    %10033 = vmatpush2.msra.mxu0 0.0
    %10034 = vmatprep.subr.mxu0 0.0
    %10035 = vmatpush2.msra.mxu0 0.0
    %10036 = vmatprep.subr.mxu0 0.0
    %10037 = vmatpush2.msra.mxu0 0.0
    %10038 = vmatprep.subr.mxu0 0.0
    %10039 = vmatpush2.msra.mxu0 0.0
    %10040 = vmatprep.subr.mxu0 0.0
    %10041 = vmatpush2.msra.mxu0 0.0
    %10042 = vmatprep.subr.mxu0 0.0
    %10043 = vmatpush2.msra.mxu0 0.0
    %10044 = vmatprep.subr.mxu0 0.0
    %10045 = vmatpush2.msra.mxu0 0.0
    %10046 = vmatprep.subr.mxu0 0.0
    %10047 = vmatpush2.msra.mxu0 0.0
    %10048 = vmatprep.subr.mxu0 0.0
    %10049 = vmatpush2.msra.mxu0 0.0
    %10050 = vmatprep.mubr.f32.mxu0 0.0
    %10051 = vmatmul.mubr.f32.gmra.mxu0 %v9981
    %v10052 = vpop.f32.mrf.mxu0
    %v10053 = vadd.f32 %v9985, %v10052
    %v10054 = vpop.f32.mrf.mxu0
    %10055 = vdwg.mxu0
    %10056 = vst [vmem:[%s7] sm:$0xff] %v10053
    // Predicated region
    $region50: #{_lambda_.1} parent=1 // pred_check
      _
    $region51: #{_lambda_.1} parent=1 // pred_check_branch
      %10058 = sbr.rel (0) target = $region53
    $region52: #{_lambda_.1} parent=1 // pred_region
      _
    $region53: #{_lambda_.1} parent=1 // pred_fallthru
      _
    // Predicated region
    $region54: #{_lambda_.1} parent=1 // pred_check
      _
    $region55: #{_lambda_.1} parent=1 // pred_check_branch
      %10060 = sbr.rel (0) target = $region57
    $region56: #{_lambda_.1} parent=1 // pred_region
      _
    $region57: #{_lambda_.1} parent=1 // pred_fallthru
      _
    %10061 = vsyncpa [#allocation3], 1
    %10062 = vsyncpa [#allocation5], 1
    %10063 = vsyncpa [#allocation8], 1

</llo_original>
